<compile_context>
chip_gen: v7x
topology: tpu7x:2x2x1
jax: 0.10.0
libtpu: 0.0.40
codegen_flags: <defaults>
</compile_context>

<pallas_src>
import numpy as np

import jax
import jax.numpy as jnp
from jax.experimental import pallas as pl
from jax.experimental.pallas import tpu as pltpu

# ----------------------------- configuration -----------------------------
B = 2            # batch
IN_CH = 2        # real / imag channels of the radar cube
N_CHIRPS = 4     # in_chirps_mnet   (mnet_cfg[0])
OUT_MNET = 8     # out_channels_mnet (mnet_cfg[1])
H = W = 16       # range / angle spatial extent
FEAT = 16        # hourglass conv feature channels
PATCH = 4        # patch_size (scaled down from 8 for the small example)
NPATCH = (H // PATCH) * (W // PATCH)        # 16 tokens per image
HIDDEN = 32      # hidden_size (scaled down from 516)
MLP_DIM = 64     # mlp_dim     (scaled down from 3072)
NUM_LAYERS = 2   # num_layers  (scaled down from 12)
NUM_HEADS = 4    # num_heads   (scaled down from 12)
HEAD_DIM = HIDDEN // NUM_HEADS
N_CLASS = 3      # n_class


# ----------------------------- fused kernel -----------------------------
def _fused_kernel(
    x_ref, gmat_ref, smat_ref,
    mnet_w_ref, mnet_b_ref, conv_w_ref, conv_b_ref,
    patch_w_ref, patch_b_ref, pos_ref,
    ln1_g_ref, ln1_b_ref, qkv_w_ref, qkv_b_ref,
    proj_w_ref, proj_b_ref, ln2_g_ref, ln2_b_ref,
    mlp1_w_ref, mlp1_b_ref, mlp2_w_ref, mlp2_b_ref,
    dec_w_ref, dec_b_ref, head_wt_ref, head_bt_ref,
    o_ref,
):
    """Entire HRFormer2d forward for one batch element, fully VMEM-resident."""
    f32 = jnp.float32
    HW = H * W

    def ln(x, g, b):
        mu = jnp.mean(x, axis=-1, keepdims=True)
        var = jnp.mean(jnp.square(x - mu), axis=-1, keepdims=True)
        return (x - mu) * jax.lax.rsqrt(var + 1e-5) * g + b

    # ---------------- MNet: per-pixel chirp merge (1x1) ----------------
    xh = x_ref[0]                                                  # (HW, 8)
    feat_m = jnp.dot(xh, mnet_w_ref[...], preferred_element_type=f32)
    feat_m = jnp.maximum(feat_m + mnet_b_ref[...], 0.0)            # (HW, OUT_MNET)

    # -------- 3x3 'same' conv: in-VMEM im2col (shift + mask) + matmul --------
    w_idx = jax.lax.broadcasted_iota(jnp.int32, (HW, OUT_MNET), 0) % W
    cols = []
    for dh in (-1, 0, 1):
        for dw in (-1, 0, 1):
            s = dh * W + dw                     # out[r] takes in[r + s]
            if s > 0:
                sh = jnp.concatenate(
                    [feat_m[s:, :], jnp.zeros((s, OUT_MNET), f32)], axis=0)
            elif s < 0:
                sh = jnp.concatenate(
                    [jnp.zeros((-s, OUT_MNET), f32), feat_m[:HW + s, :]], axis=0)
            else:
                sh = feat_m
            if dw != 0:
                valid = jnp.logical_and(w_idx + dw >= 0, w_idx + dw < W)
                sh = jnp.where(valid, sh, 0.0)
            cols.append(sh)
    cols = jnp.concatenate(cols, axis=1)                           # (HW, 9*OUT_MNET)
    feat = jnp.dot(cols, conv_w_ref[...], preferred_element_type=f32)
    feat = jnp.maximum(feat + conv_b_ref[...], 0.0)                # (HW, FEAT)

    # -------- patch embedding: constant permutation matmul + lane fold --------
    reord = jnp.dot(gmat_ref[...], feat, preferred_element_type=f32)   # (HW, FEAT)
    patches = jnp.concatenate(
        [reord[k * NPATCH:(k + 1) * NPATCH, :] for k in range(PATCH * PATCH)],
        axis=1)                                                    # (NPATCH, P*P*FEAT)
    tokens = jnp.dot(patches, patch_w_ref[...], preferred_element_type=f32)
    tokens = tokens + patch_b_ref[...] + pos_ref[...]              # (NPATCH, HIDDEN)

    # ----------------------- transformer encoder -----------------------
    scale = 1.0 / (HEAD_DIM ** 0.5)
    for l in range(NUM_LAYERS):
        # pre-LN fused straight into the qkv projection
        h = ln(tokens, ln1_g_ref[l], ln1_b_ref[l])
        qkv = jnp.dot(h, qkv_w_ref[l], preferred_element_type=f32) + qkv_b_ref[l]
        heads = []
        for hh in range(NUM_HEADS):
            q = qkv[:, hh * HEAD_DIM:(hh + 1) * HEAD_DIM]
            k = qkv[:, HIDDEN + hh * HEAD_DIM:HIDDEN + (hh + 1) * HEAD_DIM]
            v = qkv[:, 2 * HIDDEN + hh * HEAD_DIM:2 * HIDDEN + (hh + 1) * HEAD_DIM]
            s_att = jnp.dot(q, k.T, preferred_element_type=f32) * scale
            s_att = s_att - jnp.max(s_att, axis=-1, keepdims=True)
            p_att = jnp.exp(s_att)
            p_att = p_att * pl.reciprocal(
                jnp.sum(p_att, axis=-1, keepdims=True), approx=True)
            heads.append(jnp.dot(p_att, v, preferred_element_type=f32))
        attn = jnp.concatenate(heads, axis=1)                      # (NPATCH, HIDDEN)
        attn = jnp.dot(attn, proj_w_ref[l], preferred_element_type=f32) + proj_b_ref[l]
        tokens = tokens + attn

        h = ln(tokens, ln2_g_ref[l], ln2_b_ref[l])
        h = jnp.dot(h, mlp1_w_ref[l], preferred_element_type=f32) + mlp1_b_ref[l]
        h = jax.nn.gelu(h)
        h = jnp.dot(h, mlp2_w_ref[l], preferred_element_type=f32) + mlp2_b_ref[l]
        tokens = tokens + h

    # -------- patch decode + hourglass skip connection + class head --------
    dec = jnp.dot(tokens, dec_w_ref[...], preferred_element_type=f32) + dec_b_ref[...]
    dec = jnp.maximum(dec, 0.0)                                    # (NPATCH, P*P*FEAT)
    reord_dec = jnp.concatenate(
        [dec[:, k * FEAT:(k + 1) * FEAT] for k in range(PATCH * PATCH)],
        axis=0)                                                    # (HW, FEAT) in (pos, patch) order
    pix = jnp.dot(smat_ref[...], reord_dec, preferred_element_type=f32)  # (HW, FEAT) row-major
    pix = pix + feat                                               # encoder skip connection

    # 1x1 head, computed directly in (n_class, HW) layout for a lane-dense store
    logits_t = jax.lax.dot_general(
        head_wt_ref[...], pix, (((1,), (1,)), ((), ())),
        preferred_element_type=f32) + head_bt_ref[...]             # (N_CLASS, HW)
    o_ref[0] = jax.nn.sigmoid(logits_t).astype(o_ref.dtype)


# ----------------------------- parameters -----------------------------
def _normal(key, shape, scale=0.02):
    return scale * jax.random.normal(key, shape, dtype=jnp.float32)


def _patch_perm():
    """Constant 0/1 matrices for patch gather (image -> patches) and scatter back."""
    pw = W // PATCH
    n = PATCH * PATCH * NPATCH            # == H * W
    gmat = np.zeros((n, H * W), np.float32)
    for k in range(PATCH * PATCH):
        py, px = divmod(k, PATCH)
        for p in range(NPATCH):
            ph_i, pw_i = divmod(p, pw)
            q = (ph_i * PATCH + py) * W + (pw_i * PATCH + px)
            gmat[k * NPATCH + p, q] = 1.0
    return jnp.asarray(gmat), jnp.asarray(gmat.T)


def init_params(key):
    ks = jax.random.split(key, 12)
    L = NUM_LAYERS
    p = {}
    p["gmat"], p["smat"] = _patch_perm()
    # MNet: merge (real/imag x chirps) per pixel into OUT_MNET features.
    p["mnet_w"] = _normal(ks[0], (IN_CH * N_CHIRPS, OUT_MNET))
    p["mnet_b"] = jnp.zeros((1, OUT_MNET), jnp.float32)
    # hourglass front 3x3 conv (im2col rows ordered (tap, channel))
    p["conv_w"] = _normal(ks[1], (9 * OUT_MNET, FEAT))
    p["conv_b"] = jnp.zeros((1, FEAT), jnp.float32)
    # patch embedding + learned positional embedding
    p["patch_w"] = _normal(ks[2], (PATCH * PATCH * FEAT, HIDDEN))
    p["patch_b"] = jnp.zeros((1, HIDDEN), jnp.float32)
    p["pos_emb"] = _normal(ks[3], (NPATCH, HIDDEN))
    # transformer layers, stacked along a leading layer axis
    p["ln1_g"] = jnp.ones((L, 1, HIDDEN), jnp.float32)
    p["ln1_b"] = jnp.zeros((L, 1, HIDDEN), jnp.float32)
    p["qkv_w"] = _normal(ks[4], (L, HIDDEN, 3 * HIDDEN))
    p["qkv_b"] = jnp.zeros((L, 1, 3 * HIDDEN), jnp.float32)
    p["proj_w"] = _normal(ks[5], (L, HIDDEN, HIDDEN))
    p["proj_b"] = jnp.zeros((L, 1, HIDDEN), jnp.float32)
    p["ln2_g"] = jnp.ones((L, 1, HIDDEN), jnp.float32)
    p["ln2_b"] = jnp.zeros((L, 1, HIDDEN), jnp.float32)
    p["mlp1_w"] = _normal(ks[6], (L, HIDDEN, MLP_DIM))
    p["mlp1_b"] = jnp.zeros((L, 1, MLP_DIM), jnp.float32)
    p["mlp2_w"] = _normal(ks[7], (L, MLP_DIM, HIDDEN))
    p["mlp2_b"] = jnp.zeros((L, 1, HIDDEN), jnp.float32)
    # patch decoder back to pixel features
    p["dec_w"] = _normal(ks[8], (HIDDEN, PATCH * PATCH * FEAT))
    p["dec_b"] = jnp.zeros((1, PATCH * PATCH * FEAT), jnp.float32)
    # class head (1x1 conv), stored transposed for a lane-dense output
    p["head_wt"] = _normal(ks[9], (N_CLASS, FEAT))
    p["head_bt"] = jnp.zeros((N_CLASS, 1), jnp.float32)
    return p


# ----------------------------- forward wrapper -----------------------------
_PARAM_ORDER = (
    "gmat", "smat", "mnet_w", "mnet_b", "conv_w", "conv_b",
    "patch_w", "patch_b", "pos_emb",
    "ln1_g", "ln1_b", "qkv_w", "qkv_b", "proj_w", "proj_b",
    "ln2_g", "ln2_b", "mlp1_w", "mlp1_b", "mlp2_w", "mlp2_b",
    "dec_w", "dec_b", "head_wt", "head_bt",
)


def _const_spec(shape):
    """Full-array block, constant index map -> loaded once, stays VMEM-resident."""
    n = len(shape)
    return pl.BlockSpec(shape, lambda b, _n=n: (0,) * _n)


def hrformer2d_forward(params, x):
    """x: (B, 2, chirps, H, W) -> sigmoid confidence maps (B, n_class, H, W)."""
    Bn = x.shape[0]
    # one-time input layout conversion to channels-last pixel rows
    xp = jnp.transpose(x, (0, 3, 4, 1, 2)).reshape(
        Bn, H * W, IN_CH * N_CHIRPS).astype(jnp.float32)

    weights = [params[k] for k in _PARAM_ORDER]
    in_specs = [pl.BlockSpec((1, H * W, IN_CH * N_CHIRPS), lambda b: (b, 0, 0))]
    in_specs += [_const_spec(w.shape) for w in weights]

    out = pl.pallas_call(
        _fused_kernel,
        out_shape=jax.ShapeDtypeStruct((Bn, N_CLASS, H * W), jnp.float32),
        grid=(Bn,),
        in_specs=in_specs,
        out_specs=pl.BlockSpec((1, N_CLASS, H * W), lambda b: (b, 0, 0)),
        compiler_params=pltpu.CompilerParams(
            dimension_semantics=("parallel",)),
    )(xp, *weights)

    # TODO(synk): stacked_num > 1 would return one confidence map per stack.
    return out.reshape(Bn, N_CLASS, H, W)


# ----------------------------- driver -----------------------------
if __name__ == "__main__":
    key = jax.random.PRNGKey(0)
    pkey, xkey = jax.random.split(key)
    params = init_params(pkey)
    x = jax.random.normal(xkey, (B, IN_CH, N_CHIRPS, H, W), dtype=jnp.float32)

    out = jax.jit(hrformer2d_forward)(params, x)
    out = jax.block_until_ready(out)
    assert out.shape == (B, N_CLASS, H, W), out.shape
    assert bool(jnp.all(jnp.isfinite(out)))
    print("KERNEL_OK")
</pallas_src>

<mosaic_0001>
module attributes {stable_mosaic.version = 11 : i64} {
  func.func @_fused_kernel(%arg0: i32, %arg1: memref<1x256x8xf32, #tpu.memory_space<vmem>>, %arg2: memref<256x256xf32, #tpu.memory_space<vmem>>, %arg3: memref<256x256xf32, #tpu.memory_space<vmem>>, %arg4: memref<8x8xf32, #tpu.memory_space<vmem>>, %arg5: memref<1x8xf32, #tpu.memory_space<vmem>>, %arg6: memref<72x16xf32, #tpu.memory_space<vmem>>, %arg7: memref<1x16xf32, #tpu.memory_space<vmem>>, %arg8: memref<256x32xf32, #tpu.memory_space<vmem>>, %arg9: memref<1x32xf32, #tpu.memory_space<vmem>>, %arg10: memref<16x32xf32, #tpu.memory_space<vmem>>, %arg11: memref<2x1x32xf32, #tpu.memory_space<vmem>>, %arg12: memref<2x1x32xf32, #tpu.memory_space<vmem>>, %arg13: memref<2x32x96xf32, #tpu.memory_space<vmem>>, %arg14: memref<2x1x96xf32, #tpu.memory_space<vmem>>, %arg15: memref<2x32x32xf32, #tpu.memory_space<vmem>>, %arg16: memref<2x1x32xf32, #tpu.memory_space<vmem>>, %arg17: memref<2x1x32xf32, #tpu.memory_space<vmem>>, %arg18: memref<2x1x32xf32, #tpu.memory_space<vmem>>, %arg19: memref<2x32x64xf32, #tpu.memory_space<vmem>>, %arg20: memref<2x1x64xf32, #tpu.memory_space<vmem>>, %arg21: memref<2x64x32xf32, #tpu.memory_space<vmem>>, %arg22: memref<2x1x32xf32, #tpu.memory_space<vmem>>, %arg23: memref<32x256xf32, #tpu.memory_space<vmem>>, %arg24: memref<1x256xf32, #tpu.memory_space<vmem>>, %arg25: memref<3x16xf32, #tpu.memory_space<vmem>>, %arg26: memref<3x1xf32, #tpu.memory_space<vmem>>, %arg27: memref<1x3x256xf32, #tpu.memory_space<vmem>>) attributes {dimension_semantics = [#tpu.dimension_semantics<parallel>], iteration_bounds = array<i64: 2>, scalar_prefetch = 0 : i64, scratch_operands = 0 : i64, tpu.core_type = #tpu.core_type<tc>, window_params = [{transform_indices = @transform_0, window_bounds = array<i64: 1, 256, 8>}, {pipeline_mode = #tpu.pipeline_mode<synchronous>, transform_indices = @transform_1, window_bounds = array<i64: 256, 256>}, {pipeline_mode = #tpu.pipeline_mode<synchronous>, transform_indices = @transform_2, window_bounds = array<i64: 256, 256>}, {pipeline_mode = #tpu.pipeline_mode<synchronous>, transform_indices = @transform_3, window_bounds = array<i64: 8, 8>}, {pipeline_mode = #tpu.pipeline_mode<synchronous>, transform_indices = @transform_4, window_bounds = array<i64: 1, 8>}, {pipeline_mode = #tpu.pipeline_mode<synchronous>, transform_indices = @transform_5, window_bounds = array<i64: 72, 16>}, {pipeline_mode = #tpu.pipeline_mode<synchronous>, transform_indices = @transform_6, window_bounds = array<i64: 1, 16>}, {pipeline_mode = #tpu.pipeline_mode<synchronous>, transform_indices = @transform_7, window_bounds = array<i64: 256, 32>}, {pipeline_mode = #tpu.pipeline_mode<synchronous>, transform_indices = @transform_8, window_bounds = array<i64: 1, 32>}, {pipeline_mode = #tpu.pipeline_mode<synchronous>, transform_indices = @transform_9, window_bounds = array<i64: 16, 32>}, {pipeline_mode = #tpu.pipeline_mode<synchronous>, transform_indices = @transform_10, window_bounds = array<i64: 2, 1, 32>}, {pipeline_mode = #tpu.pipeline_mode<synchronous>, transform_indices = @transform_11, window_bounds = array<i64: 2, 1, 32>}, {pipeline_mode = #tpu.pipeline_mode<synchronous>, transform_indices = @transform_12, window_bounds = array<i64: 2, 32, 96>}, {pipeline_mode = #tpu.pipeline_mode<synchronous>, transform_indices = @transform_13, window_bounds = array<i64: 2, 1, 96>}, {pipeline_mode = #tpu.pipeline_mode<synchronous>, transform_indices = @transform_14, window_bounds = array<i64: 2, 32, 32>}, {pipeline_mode = #tpu.pipeline_mode<synchronous>, transform_indices = @transform_15, window_bounds = array<i64: 2, 1, 32>}, {pipeline_mode = #tpu.pipeline_mode<synchronous>, transform_indices = @transform_16, window_bounds = array<i64: 2, 1, 32>}, {pipeline_mode = #tpu.pipeline_mode<synchronous>, transform_indices = @transform_17, window_bounds = array<i64: 2, 1, 32>}, {pipeline_mode = #tpu.pipeline_mode<synchronous>, transform_indices = @transform_18, window_bounds = array<i64: 2, 32, 64>}, {pipeline_mode = #tpu.pipeline_mode<synchronous>, transform_indices = @transform_19, window_bounds = array<i64: 2, 1, 64>}, {pipeline_mode = #tpu.pipeline_mode<synchronous>, transform_indices = @transform_20, window_bounds = array<i64: 2, 64, 32>}, {pipeline_mode = #tpu.pipeline_mode<synchronous>, transform_indices = @transform_21, window_bounds = array<i64: 2, 1, 32>}, {pipeline_mode = #tpu.pipeline_mode<synchronous>, transform_indices = @transform_22, window_bounds = array<i64: 32, 256>}, {pipeline_mode = #tpu.pipeline_mode<synchronous>, transform_indices = @transform_23, window_bounds = array<i64: 1, 256>}, {pipeline_mode = #tpu.pipeline_mode<synchronous>, transform_indices = @transform_24, window_bounds = array<i64: 3, 16>}, {pipeline_mode = #tpu.pipeline_mode<synchronous>, transform_indices = @transform_25, window_bounds = array<i64: 3, 1>}, {transform_indices = @transform_26, window_bounds = array<i64: 1, 3, 256>}]} {
    %c0 = arith.constant 0 : index
    %c0_0 = arith.constant 0 : index
    %c0_1 = arith.constant 0 : index
    %0 = vector.load %arg1[%c0, %c0_0, %c0_1] : memref<1x256x8xf32, #tpu.memory_space<vmem>>, vector<1x256x8xf32>
    %1 = vector.shape_cast %0 : vector<1x256x8xf32> to vector<256x8xf32>
    %c0_2 = arith.constant 0 : index
    %c0_3 = arith.constant 0 : index
    %2 = vector.load %arg4[%c0_2, %c0_3] : memref<8x8xf32, #tpu.memory_space<vmem>>, vector<8x8xf32>
    %cst = arith.constant dense<0.000000e+00> : vector<256x8xf32>
    %3 = tpu.matmul %1, %2, %cst {dimension_numbers = #tpu.dot_dimension_numbers<[1], [0], [0], [1], [0, 0, 1, 1], [], []>} : vector<256x8xf32>, vector<8x8xf32>, vector<256x8xf32> -> vector<256x8xf32>
    %c0_4 = arith.constant 0 : index
    %c0_5 = arith.constant 0 : index
    %4 = vector.load %arg5[%c0_4, %c0_5] : memref<1x8xf32, #tpu.memory_space<vmem>>, vector<1x8xf32>
    %5 = vector.broadcast %4 : vector<1x8xf32> to vector<256x8xf32>
    %6 = arith.addf %3, %5 : vector<256x8xf32>
    %cst_6 = arith.constant 0.000000e+00 : f32
    %7 = vector.broadcast %cst_6 : f32 to vector<256x8xf32>
    %8 = arith.maximumf %6, %7 : vector<256x8xf32>
    %9 = tpu.iota {dimensions = array<i32: 0>} : vector<256x8xi32>
    %c16_i32 = arith.constant 16 : i32
    %c0_i32 = arith.constant 0 : i32
    %10 = arith.cmpi eq, %c16_i32, %c0_i32 : i32
    %c1_i32 = arith.constant 1 : i32
    %11 = arith.select %10, %c1_i32, %c16_i32 : i32
    %12 = vector.broadcast %11 : i32 to vector<256x8xi32>
    %13 = arith.remsi %9, %12 : vector<256x8xi32>
    %c0_i32_7 = arith.constant 0 : i32
    %14 = vector.broadcast %c0_i32_7 : i32 to vector<256x8xi32>
    %15 = arith.cmpi ne, %13, %14 : vector<256x8xi32>
    %c0_i32_8 = arith.constant 0 : i32
    %16 = vector.broadcast %c0_i32_8 : i32 to vector<256x8xi32>
    %17 = arith.cmpi slt, %13, %16 : vector<256x8xi32>
    %c0_i32_9 = arith.constant 0 : i32
    %18 = arith.cmpi slt, %11, %c0_i32_9 : i32
    %19 = vector.broadcast %18 : i1 to vector<256x8xi1>
    %20 = vector.broadcast %19 : vector<256x8xi1> to vector<256x8xi1>
    %21 = arith.xori %17, %20 : vector<256x8xi1>
    %22 = arith.andi %21, %15 : vector<256x8xi1>
    %23 = vector.broadcast %11 : i32 to vector<256x8xi32>
    %24 = arith.addi %13, %23 : vector<256x8xi32>
    %25 = arith.select %22, %24, %13 : vector<256x8xi1>, vector<256x8xi32>
    %cst_10 = arith.constant 0.000000e+00 : f32
    %26 = vector.broadcast %cst_10 : f32 to vector<17x8xf32>
    %27 = vector.extract_strided_slice %8 {offsets = [0, 0], sizes = [239, 8], strides = [1, 1]} : vector<256x8xf32> to vector<239x8xf32>
    %28 = tpu.concatenate %26, %27 in 0 : vector<17x8xf32>, vector<239x8xf32> -> vector<256x8xf32>
    %c-1_i32 = arith.constant -1 : i32
    %29 = vector.broadcast %c-1_i32 : i32 to vector<256x8xi32>
    %30 = arith.addi %25, %29 : vector<256x8xi32>
    %c0_i32_11 = arith.constant 0 : i32
    %31 = vector.broadcast %c0_i32_11 : i32 to vector<256x8xi32>
    %32 = arith.cmpi sge, %30, %31 : vector<256x8xi32>
    %c-1_i32_12 = arith.constant -1 : i32
    %33 = vector.broadcast %c-1_i32_12 : i32 to vector<256x8xi32>
    %34 = arith.addi %25, %33 : vector<256x8xi32>
    %c16_i32_13 = arith.constant 16 : i32
    %35 = vector.broadcast %c16_i32_13 : i32 to vector<256x8xi32>
    %36 = arith.cmpi slt, %34, %35 : vector<256x8xi32>
    %37 = arith.andi %32, %36 : vector<256x8xi1>
    %cst_14 = arith.constant 0.000000e+00 : f32
    %38 = vector.broadcast %cst_14 : f32 to vector<256x8xf32>
    %39 = arith.select %37, %28, %38 : vector<256x8xi1>, vector<256x8xf32>
    %cst_15 = arith.constant 0.000000e+00 : f32
    %40 = vector.broadcast %cst_15 : f32 to vector<16x8xf32>
    %41 = vector.extract_strided_slice %8 {offsets = [0, 0], sizes = [240, 8], strides = [1, 1]} : vector<256x8xf32> to vector<240x8xf32>
    %42 = tpu.concatenate %40, %41 in 0 : vector<16x8xf32>, vector<240x8xf32> -> vector<256x8xf32>
    %cst_16 = arith.constant 0.000000e+00 : f32
    %43 = vector.broadcast %cst_16 : f32 to vector<15x8xf32>
    %44 = vector.extract_strided_slice %8 {offsets = [0, 0], sizes = [241, 8], strides = [1, 1]} : vector<256x8xf32> to vector<241x8xf32>
    %45 = tpu.concatenate %43, %44 in 0 : vector<15x8xf32>, vector<241x8xf32> -> vector<256x8xf32>
    %c1_i32_17 = arith.constant 1 : i32
    %46 = vector.broadcast %c1_i32_17 : i32 to vector<256x8xi32>
    %47 = arith.addi %25, %46 : vector<256x8xi32>
    %c0_i32_18 = arith.constant 0 : i32
    %48 = vector.broadcast %c0_i32_18 : i32 to vector<256x8xi32>
    %49 = arith.cmpi sge, %47, %48 : vector<256x8xi32>
    %c1_i32_19 = arith.constant 1 : i32
    %50 = vector.broadcast %c1_i32_19 : i32 to vector<256x8xi32>
    %51 = arith.addi %25, %50 : vector<256x8xi32>
    %c16_i32_20 = arith.constant 16 : i32
    %52 = vector.broadcast %c16_i32_20 : i32 to vector<256x8xi32>
    %53 = arith.cmpi slt, %51, %52 : vector<256x8xi32>
    %54 = arith.andi %49, %53 : vector<256x8xi1>
    %cst_21 = arith.constant 0.000000e+00 : f32
    %55 = vector.broadcast %cst_21 : f32 to vector<256x8xf32>
    %56 = arith.select %54, %45, %55 : vector<256x8xi1>, vector<256x8xf32>
    %cst_22 = arith.constant 0.000000e+00 : f32
    %57 = vector.broadcast %cst_22 : f32 to vector<1x8xf32>
    %58 = vector.extract_strided_slice %8 {offsets = [0, 0], sizes = [255, 8], strides = [1, 1]} : vector<256x8xf32> to vector<255x8xf32>
    %59 = tpu.concatenate %57, %58 in 0 : vector<1x8xf32>, vector<255x8xf32> -> vector<256x8xf32>
    %c-1_i32_23 = arith.constant -1 : i32
    %60 = vector.broadcast %c-1_i32_23 : i32 to vector<256x8xi32>
    %61 = arith.addi %25, %60 : vector<256x8xi32>
    %c0_i32_24 = arith.constant 0 : i32
    %62 = vector.broadcast %c0_i32_24 : i32 to vector<256x8xi32>
    %63 = arith.cmpi sge, %61, %62 : vector<256x8xi32>
    %c-1_i32_25 = arith.constant -1 : i32
    %64 = vector.broadcast %c-1_i32_25 : i32 to vector<256x8xi32>
    %65 = arith.addi %25, %64 : vector<256x8xi32>
    %c16_i32_26 = arith.constant 16 : i32
    %66 = vector.broadcast %c16_i32_26 : i32 to vector<256x8xi32>
    %67 = arith.cmpi slt, %65, %66 : vector<256x8xi32>
    %68 = arith.andi %63, %67 : vector<256x8xi1>
    %cst_27 = arith.constant 0.000000e+00 : f32
    %69 = vector.broadcast %cst_27 : f32 to vector<256x8xf32>
    %70 = arith.select %68, %59, %69 : vector<256x8xi1>, vector<256x8xf32>
    %71 = vector.extract_strided_slice %8 {offsets = [1, 0], sizes = [255, 8], strides = [1, 1]} : vector<256x8xf32> to vector<255x8xf32>
    %cst_28 = arith.constant 0.000000e+00 : f32
    %72 = vector.broadcast %cst_28 : f32 to vector<1x8xf32>
    %73 = tpu.concatenate %71, %72 in 0 : vector<255x8xf32>, vector<1x8xf32> -> vector<256x8xf32>
    %c1_i32_29 = arith.constant 1 : i32
    %74 = vector.broadcast %c1_i32_29 : i32 to vector<256x8xi32>
    %75 = arith.addi %25, %74 : vector<256x8xi32>
    %c0_i32_30 = arith.constant 0 : i32
    %76 = vector.broadcast %c0_i32_30 : i32 to vector<256x8xi32>
    %77 = arith.cmpi sge, %75, %76 : vector<256x8xi32>
    %c1_i32_31 = arith.constant 1 : i32
    %78 = vector.broadcast %c1_i32_31 : i32 to vector<256x8xi32>
    %79 = arith.addi %25, %78 : vector<256x8xi32>
    %c16_i32_32 = arith.constant 16 : i32
    %80 = vector.broadcast %c16_i32_32 : i32 to vector<256x8xi32>
    %81 = arith.cmpi slt, %79, %80 : vector<256x8xi32>
    %82 = arith.andi %77, %81 : vector<256x8xi1>
    %cst_33 = arith.constant 0.000000e+00 : f32
    %83 = vector.broadcast %cst_33 : f32 to vector<256x8xf32>
    %84 = arith.select %82, %73, %83 : vector<256x8xi1>, vector<256x8xf32>
    %85 = vector.extract_strided_slice %8 {offsets = [15, 0], sizes = [241, 8], strides = [1, 1]} : vector<256x8xf32> to vector<241x8xf32>
    %cst_34 = arith.constant 0.000000e+00 : f32
    %86 = vector.broadcast %cst_34 : f32 to vector<15x8xf32>
    %87 = tpu.concatenate %85, %86 in 0 : vector<241x8xf32>, vector<15x8xf32> -> vector<256x8xf32>
    %c-1_i32_35 = arith.constant -1 : i32
    %88 = vector.broadcast %c-1_i32_35 : i32 to vector<256x8xi32>
    %89 = arith.addi %25, %88 : vector<256x8xi32>
    %c0_i32_36 = arith.constant 0 : i32
    %90 = vector.broadcast %c0_i32_36 : i32 to vector<256x8xi32>
    %91 = arith.cmpi sge, %89, %90 : vector<256x8xi32>
    %c-1_i32_37 = arith.constant -1 : i32
    %92 = vector.broadcast %c-1_i32_37 : i32 to vector<256x8xi32>
    %93 = arith.addi %25, %92 : vector<256x8xi32>
    %c16_i32_38 = arith.constant 16 : i32
    %94 = vector.broadcast %c16_i32_38 : i32 to vector<256x8xi32>
    %95 = arith.cmpi slt, %93, %94 : vector<256x8xi32>
    %96 = arith.andi %91, %95 : vector<256x8xi1>
    %cst_39 = arith.constant 0.000000e+00 : f32
    %97 = vector.broadcast %cst_39 : f32 to vector<256x8xf32>
    %98 = arith.select %96, %87, %97 : vector<256x8xi1>, vector<256x8xf32>
    %99 = vector.extract_strided_slice %8 {offsets = [16, 0], sizes = [240, 8], strides = [1, 1]} : vector<256x8xf32> to vector<240x8xf32>
    %cst_40 = arith.constant 0.000000e+00 : f32
    %100 = vector.broadcast %cst_40 : f32 to vector<16x8xf32>
    %101 = tpu.concatenate %99, %100 in 0 : vector<240x8xf32>, vector<16x8xf32> -> vector<256x8xf32>
    %102 = vector.extract_strided_slice %8 {offsets = [17, 0], sizes = [239, 8], strides = [1, 1]} : vector<256x8xf32> to vector<239x8xf32>
    %cst_41 = arith.constant 0.000000e+00 : f32
    %103 = vector.broadcast %cst_41 : f32 to vector<17x8xf32>
    %104 = tpu.concatenate %102, %103 in 0 : vector<239x8xf32>, vector<17x8xf32> -> vector<256x8xf32>
    %c1_i32_42 = arith.constant 1 : i32
    %105 = vector.broadcast %c1_i32_42 : i32 to vector<256x8xi32>
    %106 = arith.addi %25, %105 : vector<256x8xi32>
    %c0_i32_43 = arith.constant 0 : i32
    %107 = vector.broadcast %c0_i32_43 : i32 to vector<256x8xi32>
    %108 = arith.cmpi sge, %106, %107 : vector<256x8xi32>
    %c1_i32_44 = arith.constant 1 : i32
    %109 = vector.broadcast %c1_i32_44 : i32 to vector<256x8xi32>
    %110 = arith.addi %25, %109 : vector<256x8xi32>
    %c16_i32_45 = arith.constant 16 : i32
    %111 = vector.broadcast %c16_i32_45 : i32 to vector<256x8xi32>
    %112 = arith.cmpi slt, %110, %111 : vector<256x8xi32>
    %113 = arith.andi %108, %112 : vector<256x8xi1>
    %cst_46 = arith.constant 0.000000e+00 : f32
    %114 = vector.broadcast %cst_46 : f32 to vector<256x8xf32>
    %115 = arith.select %113, %104, %114 : vector<256x8xi1>, vector<256x8xf32>
    %116 = tpu.concatenate %39, %42, %56, %70, %8, %84, %98, %101, %115 in 1 : vector<256x8xf32>, vector<256x8xf32>, vector<256x8xf32>, vector<256x8xf32>, vector<256x8xf32>, vector<256x8xf32>, vector<256x8xf32>, vector<256x8xf32>, vector<256x8xf32> -> vector<256x72xf32>
    %c0_47 = arith.constant 0 : index
    %c0_48 = arith.constant 0 : index
    %117 = vector.load %arg6[%c0_47, %c0_48] : memref<72x16xf32, #tpu.memory_space<vmem>>, vector<72x16xf32>
    %cst_49 = arith.constant dense<0.000000e+00> : vector<256x16xf32>
    %118 = tpu.matmul %116, %117, %cst_49 {dimension_numbers = #tpu.dot_dimension_numbers<[1], [0], [0], [1], [0, 0, 1, 1], [], []>} : vector<256x72xf32>, vector<72x16xf32>, vector<256x16xf32> -> vector<256x16xf32>
    %c0_50 = arith.constant 0 : index
    %c0_51 = arith.constant 0 : index
    %119 = vector.load %arg7[%c0_50, %c0_51] : memref<1x16xf32, #tpu.memory_space<vmem>>, vector<1x16xf32>
    %120 = vector.broadcast %119 : vector<1x16xf32> to vector<256x16xf32>
    %121 = arith.addf %118, %120 : vector<256x16xf32>
    %cst_52 = arith.constant 0.000000e+00 : f32
    %122 = vector.broadcast %cst_52 : f32 to vector<256x16xf32>
    %123 = arith.maximumf %121, %122 : vector<256x16xf32>
    %c0_53 = arith.constant 0 : index
    %c0_54 = arith.constant 0 : index
    %124 = vector.load %arg2[%c0_53, %c0_54] : memref<256x256xf32, #tpu.memory_space<vmem>>, vector<256x256xf32>
    %cst_55 = arith.constant dense<0.000000e+00> : vector<256x16xf32>
    %125 = tpu.matmul %124, %123, %cst_55 {dimension_numbers = #tpu.dot_dimension_numbers<[1], [0], [0], [1], [0, 0, 1, 1], [], []>} : vector<256x256xf32>, vector<256x16xf32>, vector<256x16xf32> -> vector<256x16xf32>
    %126 = vector.extract_strided_slice %125 {offsets = [0, 0], sizes = [16, 16], strides = [1, 1]} : vector<256x16xf32> to vector<16x16xf32>
    %127 = vector.extract_strided_slice %125 {offsets = [16, 0], sizes = [16, 16], strides = [1, 1]} : vector<256x16xf32> to vector<16x16xf32>
    %128 = vector.extract_strided_slice %125 {offsets = [32, 0], sizes = [16, 16], strides = [1, 1]} : vector<256x16xf32> to vector<16x16xf32>
    %129 = vector.extract_strided_slice %125 {offsets = [48, 0], sizes = [16, 16], strides = [1, 1]} : vector<256x16xf32> to vector<16x16xf32>
    %130 = vector.extract_strided_slice %125 {offsets = [64, 0], sizes = [16, 16], strides = [1, 1]} : vector<256x16xf32> to vector<16x16xf32>
    %131 = vector.extract_strided_slice %125 {offsets = [80, 0], sizes = [16, 16], strides = [1, 1]} : vector<256x16xf32> to vector<16x16xf32>
    %132 = vector.extract_strided_slice %125 {offsets = [96, 0], sizes = [16, 16], strides = [1, 1]} : vector<256x16xf32> to vector<16x16xf32>
    %133 = vector.extract_strided_slice %125 {offsets = [112, 0], sizes = [16, 16], strides = [1, 1]} : vector<256x16xf32> to vector<16x16xf32>
    %134 = vector.extract_strided_slice %125 {offsets = [128, 0], sizes = [16, 16], strides = [1, 1]} : vector<256x16xf32> to vector<16x16xf32>
    %135 = vector.extract_strided_slice %125 {offsets = [144, 0], sizes = [16, 16], strides = [1, 1]} : vector<256x16xf32> to vector<16x16xf32>
    %136 = vector.extract_strided_slice %125 {offsets = [160, 0], sizes = [16, 16], strides = [1, 1]} : vector<256x16xf32> to vector<16x16xf32>
    %137 = vector.extract_strided_slice %125 {offsets = [176, 0], sizes = [16, 16], strides = [1, 1]} : vector<256x16xf32> to vector<16x16xf32>
    %138 = vector.extract_strided_slice %125 {offsets = [192, 0], sizes = [16, 16], strides = [1, 1]} : vector<256x16xf32> to vector<16x16xf32>
    %139 = vector.extract_strided_slice %125 {offsets = [208, 0], sizes = [16, 16], strides = [1, 1]} : vector<256x16xf32> to vector<16x16xf32>
    %140 = vector.extract_strided_slice %125 {offsets = [224, 0], sizes = [16, 16], strides = [1, 1]} : vector<256x16xf32> to vector<16x16xf32>
    %141 = vector.extract_strided_slice %125 {offsets = [240, 0], sizes = [16, 16], strides = [1, 1]} : vector<256x16xf32> to vector<16x16xf32>
    %142 = tpu.concatenate %126, %127, %128, %129, %130, %131, %132, %133, %134, %135, %136, %137, %138, %139, %140, %141 in 1 : vector<16x16xf32>, vector<16x16xf32>, vector<16x16xf32>, vector<16x16xf32>, vector<16x16xf32>, vector<16x16xf32>, vector<16x16xf32>, vector<16x16xf32>, vector<16x16xf32>, vector<16x16xf32>, vector<16x16xf32>, vector<16x16xf32>, vector<16x16xf32>, vector<16x16xf32>, vector<16x16xf32>, vector<16x16xf32> -> vector<16x256xf32>
    %c0_56 = arith.constant 0 : index
    %c0_57 = arith.constant 0 : index
    %143 = vector.load %arg8[%c0_56, %c0_57] : memref<256x32xf32, #tpu.memory_space<vmem>>, vector<256x32xf32>
    %cst_58 = arith.constant dense<0.000000e+00> : vector<16x32xf32>
    %144 = tpu.matmul %142, %143, %cst_58 {dimension_numbers = #tpu.dot_dimension_numbers<[1], [0], [0], [1], [0, 0, 1, 1], [], []>} : vector<16x256xf32>, vector<256x32xf32>, vector<16x32xf32> -> vector<16x32xf32>
    %c0_59 = arith.constant 0 : index
    %c0_60 = arith.constant 0 : index
    %145 = vector.load %arg9[%c0_59, %c0_60] : memref<1x32xf32, #tpu.memory_space<vmem>>, vector<1x32xf32>
    %146 = vector.broadcast %145 : vector<1x32xf32> to vector<16x32xf32>
    %147 = arith.addf %144, %146 : vector<16x32xf32>
    %c0_61 = arith.constant 0 : index
    %c0_62 = arith.constant 0 : index
    %148 = vector.load %arg10[%c0_61, %c0_62] : memref<16x32xf32, #tpu.memory_space<vmem>>, vector<16x32xf32>
    %149 = arith.addf %147, %148 : vector<16x32xf32>
    %c0_63 = arith.constant 0 : index
    %c0_64 = arith.constant 0 : index
    %c0_65 = arith.constant 0 : index
    %150 = vector.load %arg11[%c0_63, %c0_64, %c0_65] : memref<2x1x32xf32, #tpu.memory_space<vmem>>, vector<1x1x32xf32>
    %151 = vector.shape_cast %150 : vector<1x1x32xf32> to vector<1x32xf32>
    %c0_66 = arith.constant 0 : index
    %c0_67 = arith.constant 0 : index
    %c0_68 = arith.constant 0 : index
    %152 = vector.load %arg12[%c0_66, %c0_67, %c0_68] : memref<2x1x32xf32, #tpu.memory_space<vmem>>, vector<1x1x32xf32>
    %153 = vector.shape_cast %152 : vector<1x1x32xf32> to vector<1x32xf32>
    %cst_69 = arith.constant dense<0.000000e+00> : vector<16xf32>
    %154 = vector.multi_reduction <add>, %149, %cst_69 [1] : vector<16x32xf32> to vector<16xf32>
    %155 = vector.shape_cast %154 : vector<16xf32> to vector<16x1xf32>
    %cst_70 = arith.constant 3.200000e+01 : f32
    %156 = vector.broadcast %cst_70 : f32 to vector<16x1xf32>
    %157 = arith.divf %155, %156 : vector<16x1xf32>
    %158 = vector.broadcast %157 : vector<16x1xf32> to vector<16x32xf32>
    %159 = arith.subf %149, %158 : vector<16x32xf32>
    %160 = arith.mulf %159, %159 : vector<16x32xf32>
    %cst_71 = arith.constant dense<0.000000e+00> : vector<16xf32>
    %161 = vector.multi_reduction <add>, %160, %cst_71 [1] : vector<16x32xf32> to vector<16xf32>
    %162 = vector.shape_cast %161 : vector<16xf32> to vector<16x1xf32>
    %cst_72 = arith.constant 3.200000e+01 : f32
    %163 = vector.broadcast %cst_72 : f32 to vector<16x1xf32>
    %164 = arith.divf %162, %163 : vector<16x1xf32>
    %165 = vector.broadcast %157 : vector<16x1xf32> to vector<16x32xf32>
    %166 = arith.subf %149, %165 : vector<16x32xf32>
    %cst_73 = arith.constant 9.99999974E-6 : f32
    %167 = vector.broadcast %cst_73 : f32 to vector<16x1xf32>
    %168 = arith.addf %164, %167 : vector<16x1xf32>
    %169 = math.rsqrt %168 : vector<16x1xf32>
    %170 = vector.broadcast %169 : vector<16x1xf32> to vector<16x32xf32>
    %171 = arith.mulf %166, %170 : vector<16x32xf32>
    %172 = vector.broadcast %151 : vector<1x32xf32> to vector<16x32xf32>
    %173 = arith.mulf %171, %172 : vector<16x32xf32>
    %174 = vector.broadcast %153 : vector<1x32xf32> to vector<16x32xf32>
    %175 = arith.addf %173, %174 : vector<16x32xf32>
    %c0_74 = arith.constant 0 : index
    %c0_75 = arith.constant 0 : index
    %c0_76 = arith.constant 0 : index
    %176 = vector.load %arg13[%c0_74, %c0_75, %c0_76] : memref<2x32x96xf32, #tpu.memory_space<vmem>>, vector<1x32x96xf32>
    %177 = vector.shape_cast %176 : vector<1x32x96xf32> to vector<32x96xf32>
    %cst_77 = arith.constant dense<0.000000e+00> : vector<16x96xf32>
    %178 = tpu.matmul %175, %177, %cst_77 {dimension_numbers = #tpu.dot_dimension_numbers<[1], [0], [0], [1], [0, 0, 1, 1], [], []>} : vector<16x32xf32>, vector<32x96xf32>, vector<16x96xf32> -> vector<16x96xf32>
    %c0_78 = arith.constant 0 : index
    %c0_79 = arith.constant 0 : index
    %c0_80 = arith.constant 0 : index
    %179 = vector.load %arg14[%c0_78, %c0_79, %c0_80] : memref<2x1x96xf32, #tpu.memory_space<vmem>>, vector<1x1x96xf32>
    %180 = vector.shape_cast %179 : vector<1x1x96xf32> to vector<1x96xf32>
    %181 = vector.broadcast %180 : vector<1x96xf32> to vector<16x96xf32>
    %182 = arith.addf %178, %181 : vector<16x96xf32>
    %183 = vector.extract_strided_slice %182 {offsets = [0, 0], sizes = [16, 8], strides = [1, 1]} : vector<16x96xf32> to vector<16x8xf32>
    %184 = vector.extract_strided_slice %182 {offsets = [0, 32], sizes = [16, 8], strides = [1, 1]} : vector<16x96xf32> to vector<16x8xf32>
    %185 = vector.extract_strided_slice %182 {offsets = [0, 64], sizes = [16, 8], strides = [1, 1]} : vector<16x96xf32> to vector<16x8xf32>
    %186 = tpu.transpose %184, [1, 0] : vector<16x8xf32> -> vector<8x16xf32>
    %cst_81 = arith.constant dense<0.000000e+00> : vector<16x16xf32>
    %187 = tpu.matmul %183, %186, %cst_81 {dimension_numbers = #tpu.dot_dimension_numbers<[1], [0], [0], [1], [0, 0, 1, 1], [], []>} : vector<16x8xf32>, vector<8x16xf32>, vector<16x16xf32> -> vector<16x16xf32>
    %cst_82 = arith.constant 0.353553385 : f32
    %188 = vector.broadcast %cst_82 : f32 to vector<16x16xf32>
    %189 = arith.mulf %187, %188 : vector<16x16xf32>
    %cst_83 = arith.constant dense<0xFF800000> : vector<16xf32>
    %190 = vector.multi_reduction <maximumf>, %189, %cst_83 [1] : vector<16x16xf32> to vector<16xf32>
    %191 = vector.shape_cast %190 : vector<16xf32> to vector<16x1xf32>
    %192 = vector.broadcast %191 : vector<16x1xf32> to vector<16x16xf32>
    %193 = arith.subf %189, %192 : vector<16x16xf32>
    %194 = math.exp %193 : vector<16x16xf32>
    %cst_84 = arith.constant dense<0.000000e+00> : vector<16xf32>
    %195 = vector.multi_reduction <add>, %194, %cst_84 [1] : vector<16x16xf32> to vector<16xf32>
    %196 = vector.shape_cast %195 : vector<16xf32> to vector<16x1xf32>
    %197 = tpu.reciprocal %196 {approx = true} : vector<16x1xf32> -> vector<16x1xf32>
    %198 = vector.broadcast %197 : vector<16x1xf32> to vector<16x16xf32>
    %199 = arith.mulf %194, %198 : vector<16x16xf32>
    %cst_85 = arith.constant dense<0.000000e+00> : vector<16x8xf32>
    %200 = tpu.matmul %199, %185, %cst_85 {dimension_numbers = #tpu.dot_dimension_numbers<[1], [0], [0], [1], [0, 0, 1, 1], [], []>} : vector<16x16xf32>, vector<16x8xf32>, vector<16x8xf32> -> vector<16x8xf32>
    %201 = vector.extract_strided_slice %182 {offsets = [0, 8], sizes = [16, 8], strides = [1, 1]} : vector<16x96xf32> to vector<16x8xf32>
    %202 = vector.extract_strided_slice %182 {offsets = [0, 40], sizes = [16, 8], strides = [1, 1]} : vector<16x96xf32> to vector<16x8xf32>
    %203 = vector.extract_strided_slice %182 {offsets = [0, 72], sizes = [16, 8], strides = [1, 1]} : vector<16x96xf32> to vector<16x8xf32>
    %204 = tpu.transpose %202, [1, 0] : vector<16x8xf32> -> vector<8x16xf32>
    %cst_86 = arith.constant dense<0.000000e+00> : vector<16x16xf32>
    %205 = tpu.matmul %201, %204, %cst_86 {dimension_numbers = #tpu.dot_dimension_numbers<[1], [0], [0], [1], [0, 0, 1, 1], [], []>} : vector<16x8xf32>, vector<8x16xf32>, vector<16x16xf32> -> vector<16x16xf32>
    %cst_87 = arith.constant 0.353553385 : f32
    %206 = vector.broadcast %cst_87 : f32 to vector<16x16xf32>
    %207 = arith.mulf %205, %206 : vector<16x16xf32>
    %cst_88 = arith.constant dense<0xFF800000> : vector<16xf32>
    %208 = vector.multi_reduction <maximumf>, %207, %cst_88 [1] : vector<16x16xf32> to vector<16xf32>
    %209 = vector.shape_cast %208 : vector<16xf32> to vector<16x1xf32>
    %210 = vector.broadcast %209 : vector<16x1xf32> to vector<16x16xf32>
    %211 = arith.subf %207, %210 : vector<16x16xf32>
    %212 = math.exp %211 : vector<16x16xf32>
    %cst_89 = arith.constant dense<0.000000e+00> : vector<16xf32>
    %213 = vector.multi_reduction <add>, %212, %cst_89 [1] : vector<16x16xf32> to vector<16xf32>
    %214 = vector.shape_cast %213 : vector<16xf32> to vector<16x1xf32>
    %215 = tpu.reciprocal %214 {approx = true} : vector<16x1xf32> -> vector<16x1xf32>
    %216 = vector.broadcast %215 : vector<16x1xf32> to vector<16x16xf32>
    %217 = arith.mulf %212, %216 : vector<16x16xf32>
    %cst_90 = arith.constant dense<0.000000e+00> : vector<16x8xf32>
    %218 = tpu.matmul %217, %203, %cst_90 {dimension_numbers = #tpu.dot_dimension_numbers<[1], [0], [0], [1], [0, 0, 1, 1], [], []>} : vector<16x16xf32>, vector<16x8xf32>, vector<16x8xf32> -> vector<16x8xf32>
    %219 = vector.extract_strided_slice %182 {offsets = [0, 16], sizes = [16, 8], strides = [1, 1]} : vector<16x96xf32> to vector<16x8xf32>
    %220 = vector.extract_strided_slice %182 {offsets = [0, 48], sizes = [16, 8], strides = [1, 1]} : vector<16x96xf32> to vector<16x8xf32>
    %221 = vector.extract_strided_slice %182 {offsets = [0, 80], sizes = [16, 8], strides = [1, 1]} : vector<16x96xf32> to vector<16x8xf32>
    %222 = tpu.transpose %220, [1, 0] : vector<16x8xf32> -> vector<8x16xf32>
    %cst_91 = arith.constant dense<0.000000e+00> : vector<16x16xf32>
    %223 = tpu.matmul %219, %222, %cst_91 {dimension_numbers = #tpu.dot_dimension_numbers<[1], [0], [0], [1], [0, 0, 1, 1], [], []>} : vector<16x8xf32>, vector<8x16xf32>, vector<16x16xf32> -> vector<16x16xf32>
    %cst_92 = arith.constant 0.353553385 : f32
    %224 = vector.broadcast %cst_92 : f32 to vector<16x16xf32>
    %225 = arith.mulf %223, %224 : vector<16x16xf32>
    %cst_93 = arith.constant dense<0xFF800000> : vector<16xf32>
    %226 = vector.multi_reduction <maximumf>, %225, %cst_93 [1] : vector<16x16xf32> to vector<16xf32>
    %227 = vector.shape_cast %226 : vector<16xf32> to vector<16x1xf32>
    %228 = vector.broadcast %227 : vector<16x1xf32> to vector<16x16xf32>
    %229 = arith.subf %225, %228 : vector<16x16xf32>
    %230 = math.exp %229 : vector<16x16xf32>
    %cst_94 = arith.constant dense<0.000000e+00> : vector<16xf32>
    %231 = vector.multi_reduction <add>, %230, %cst_94 [1] : vector<16x16xf32> to vector<16xf32>
    %232 = vector.shape_cast %231 : vector<16xf32> to vector<16x1xf32>
    %233 = tpu.reciprocal %232 {approx = true} : vector<16x1xf32> -> vector<16x1xf32>
    %234 = vector.broadcast %233 : vector<16x1xf32> to vector<16x16xf32>
    %235 = arith.mulf %230, %234 : vector<16x16xf32>
    %cst_95 = arith.constant dense<0.000000e+00> : vector<16x8xf32>
    %236 = tpu.matmul %235, %221, %cst_95 {dimension_numbers = #tpu.dot_dimension_numbers<[1], [0], [0], [1], [0, 0, 1, 1], [], []>} : vector<16x16xf32>, vector<16x8xf32>, vector<16x8xf32> -> vector<16x8xf32>
    %237 = vector.extract_strided_slice %182 {offsets = [0, 24], sizes = [16, 8], strides = [1, 1]} : vector<16x96xf32> to vector<16x8xf32>
    %238 = vector.extract_strided_slice %182 {offsets = [0, 56], sizes = [16, 8], strides = [1, 1]} : vector<16x96xf32> to vector<16x8xf32>
    %239 = vector.extract_strided_slice %182 {offsets = [0, 88], sizes = [16, 8], strides = [1, 1]} : vector<16x96xf32> to vector<16x8xf32>
    %240 = tpu.transpose %238, [1, 0] : vector<16x8xf32> -> vector<8x16xf32>
    %cst_96 = arith.constant dense<0.000000e+00> : vector<16x16xf32>
    %241 = tpu.matmul %237, %240, %cst_96 {dimension_numbers = #tpu.dot_dimension_numbers<[1], [0], [0], [1], [0, 0, 1, 1], [], []>} : vector<16x8xf32>, vector<8x16xf32>, vector<16x16xf32> -> vector<16x16xf32>
    %cst_97 = arith.constant 0.353553385 : f32
    %242 = vector.broadcast %cst_97 : f32 to vector<16x16xf32>
    %243 = arith.mulf %241, %242 : vector<16x16xf32>
    %cst_98 = arith.constant dense<0xFF800000> : vector<16xf32>
    %244 = vector.multi_reduction <maximumf>, %243, %cst_98 [1] : vector<16x16xf32> to vector<16xf32>
    %245 = vector.shape_cast %244 : vector<16xf32> to vector<16x1xf32>
    %246 = vector.broadcast %245 : vector<16x1xf32> to vector<16x16xf32>
    %247 = arith.subf %243, %246 : vector<16x16xf32>
    %248 = math.exp %247 : vector<16x16xf32>
    %cst_99 = arith.constant dense<0.000000e+00> : vector<16xf32>
    %249 = vector.multi_reduction <add>, %248, %cst_99 [1] : vector<16x16xf32> to vector<16xf32>
    %250 = vector.shape_cast %249 : vector<16xf32> to vector<16x1xf32>
    %251 = tpu.reciprocal %250 {approx = true} : vector<16x1xf32> -> vector<16x1xf32>
    %252 = vector.broadcast %251 : vector<16x1xf32> to vector<16x16xf32>
    %253 = arith.mulf %248, %252 : vector<16x16xf32>
    %cst_100 = arith.constant dense<0.000000e+00> : vector<16x8xf32>
    %254 = tpu.matmul %253, %239, %cst_100 {dimension_numbers = #tpu.dot_dimension_numbers<[1], [0], [0], [1], [0, 0, 1, 1], [], []>} : vector<16x16xf32>, vector<16x8xf32>, vector<16x8xf32> -> vector<16x8xf32>
    %255 = tpu.concatenate %200, %218, %236, %254 in 1 : vector<16x8xf32>, vector<16x8xf32>, vector<16x8xf32>, vector<16x8xf32> -> vector<16x32xf32>
    %c0_101 = arith.constant 0 : index
    %c0_102 = arith.constant 0 : index
    %c0_103 = arith.constant 0 : index
    %256 = vector.load %arg15[%c0_101, %c0_102, %c0_103] : memref<2x32x32xf32, #tpu.memory_space<vmem>>, vector<1x32x32xf32>
    %257 = vector.shape_cast %256 : vector<1x32x32xf32> to vector<32x32xf32>
    %cst_104 = arith.constant dense<0.000000e+00> : vector<16x32xf32>
    %258 = tpu.matmul %255, %257, %cst_104 {dimension_numbers = #tpu.dot_dimension_numbers<[1], [0], [0], [1], [0, 0, 1, 1], [], []>} : vector<16x32xf32>, vector<32x32xf32>, vector<16x32xf32> -> vector<16x32xf32>
    %c0_105 = arith.constant 0 : index
    %c0_106 = arith.constant 0 : index
    %c0_107 = arith.constant 0 : index
    %259 = vector.load %arg16[%c0_105, %c0_106, %c0_107] : memref<2x1x32xf32, #tpu.memory_space<vmem>>, vector<1x1x32xf32>
    %260 = vector.shape_cast %259 : vector<1x1x32xf32> to vector<1x32xf32>
    %261 = vector.broadcast %260 : vector<1x32xf32> to vector<16x32xf32>
    %262 = arith.addf %258, %261 : vector<16x32xf32>
    %263 = arith.addf %149, %262 : vector<16x32xf32>
    %c0_108 = arith.constant 0 : index
    %c0_109 = arith.constant 0 : index
    %c0_110 = arith.constant 0 : index
    %264 = vector.load %arg17[%c0_108, %c0_109, %c0_110] : memref<2x1x32xf32, #tpu.memory_space<vmem>>, vector<1x1x32xf32>
    %265 = vector.shape_cast %264 : vector<1x1x32xf32> to vector<1x32xf32>
    %c0_111 = arith.constant 0 : index
    %c0_112 = arith.constant 0 : index
    %c0_113 = arith.constant 0 : index
    %266 = vector.load %arg18[%c0_111, %c0_112, %c0_113] : memref<2x1x32xf32, #tpu.memory_space<vmem>>, vector<1x1x32xf32>
    %267 = vector.shape_cast %266 : vector<1x1x32xf32> to vector<1x32xf32>
    %cst_114 = arith.constant dense<0.000000e+00> : vector<16xf32>
    %268 = vector.multi_reduction <add>, %263, %cst_114 [1] : vector<16x32xf32> to vector<16xf32>
    %269 = vector.shape_cast %268 : vector<16xf32> to vector<16x1xf32>
    %cst_115 = arith.constant 3.200000e+01 : f32
    %270 = vector.broadcast %cst_115 : f32 to vector<16x1xf32>
    %271 = arith.divf %269, %270 : vector<16x1xf32>
    %272 = vector.broadcast %271 : vector<16x1xf32> to vector<16x32xf32>
    %273 = arith.subf %263, %272 : vector<16x32xf32>
    %274 = arith.mulf %273, %273 : vector<16x32xf32>
    %cst_116 = arith.constant dense<0.000000e+00> : vector<16xf32>
    %275 = vector.multi_reduction <add>, %274, %cst_116 [1] : vector<16x32xf32> to vector<16xf32>
    %276 = vector.shape_cast %275 : vector<16xf32> to vector<16x1xf32>
    %cst_117 = arith.constant 3.200000e+01 : f32
    %277 = vector.broadcast %cst_117 : f32 to vector<16x1xf32>
    %278 = arith.divf %276, %277 : vector<16x1xf32>
    %279 = vector.broadcast %271 : vector<16x1xf32> to vector<16x32xf32>
    %280 = arith.subf %263, %279 : vector<16x32xf32>
    %cst_118 = arith.constant 9.99999974E-6 : f32
    %281 = vector.broadcast %cst_118 : f32 to vector<16x1xf32>
    %282 = arith.addf %278, %281 : vector<16x1xf32>
    %283 = math.rsqrt %282 : vector<16x1xf32>
    %284 = vector.broadcast %283 : vector<16x1xf32> to vector<16x32xf32>
    %285 = arith.mulf %280, %284 : vector<16x32xf32>
    %286 = vector.broadcast %265 : vector<1x32xf32> to vector<16x32xf32>
    %287 = arith.mulf %285, %286 : vector<16x32xf32>
    %288 = vector.broadcast %267 : vector<1x32xf32> to vector<16x32xf32>
    %289 = arith.addf %287, %288 : vector<16x32xf32>
    %c0_119 = arith.constant 0 : index
    %c0_120 = arith.constant 0 : index
    %c0_121 = arith.constant 0 : index
    %290 = vector.load %arg19[%c0_119, %c0_120, %c0_121] : memref<2x32x64xf32, #tpu.memory_space<vmem>>, vector<1x32x64xf32>
    %291 = vector.shape_cast %290 : vector<1x32x64xf32> to vector<32x64xf32>
    %cst_122 = arith.constant dense<0.000000e+00> : vector<16x64xf32>
    %292 = tpu.matmul %289, %291, %cst_122 {dimension_numbers = #tpu.dot_dimension_numbers<[1], [0], [0], [1], [0, 0, 1, 1], [], []>} : vector<16x32xf32>, vector<32x64xf32>, vector<16x64xf32> -> vector<16x64xf32>
    %c0_123 = arith.constant 0 : index
    %c0_124 = arith.constant 0 : index
    %c0_125 = arith.constant 0 : index
    %293 = vector.load %arg20[%c0_123, %c0_124, %c0_125] : memref<2x1x64xf32, #tpu.memory_space<vmem>>, vector<1x1x64xf32>
    %294 = vector.shape_cast %293 : vector<1x1x64xf32> to vector<1x64xf32>
    %295 = vector.broadcast %294 : vector<1x64xf32> to vector<16x64xf32>
    %296 = arith.addf %292, %295 : vector<16x64xf32>
    %297 = arith.mulf %296, %296 : vector<16x64xf32>
    %298 = arith.mulf %296, %297 : vector<16x64xf32>
    %cst_126 = arith.constant 4.471500e-02 : f32
    %299 = vector.broadcast %cst_126 : f32 to vector<16x64xf32>
    %300 = arith.mulf %299, %298 : vector<16x64xf32>
    %301 = arith.addf %296, %300 : vector<16x64xf32>
    %cst_127 = arith.constant 0.797884583 : f32
    %302 = vector.broadcast %cst_127 : f32 to vector<16x64xf32>
    %303 = arith.mulf %302, %301 : vector<16x64xf32>
    %304 = math.tanh %303 : vector<16x64xf32>
    %cst_128 = arith.constant 1.000000e+00 : f32
    %305 = vector.broadcast %cst_128 : f32 to vector<16x64xf32>
    %306 = arith.addf %305, %304 : vector<16x64xf32>
    %cst_129 = arith.constant 5.000000e-01 : f32
    %307 = vector.broadcast %cst_129 : f32 to vector<16x64xf32>
    %308 = arith.mulf %307, %306 : vector<16x64xf32>
    %309 = arith.mulf %296, %308 : vector<16x64xf32>
    %c0_130 = arith.constant 0 : index
    %c0_131 = arith.constant 0 : index
    %c0_132 = arith.constant 0 : index
    %310 = vector.load %arg21[%c0_130, %c0_131, %c0_132] : memref<2x64x32xf32, #tpu.memory_space<vmem>>, vector<1x64x32xf32>
    %311 = vector.shape_cast %310 : vector<1x64x32xf32> to vector<64x32xf32>
    %cst_133 = arith.constant dense<0.000000e+00> : vector<16x32xf32>
    %312 = tpu.matmul %309, %311, %cst_133 {dimension_numbers = #tpu.dot_dimension_numbers<[1], [0], [0], [1], [0, 0, 1, 1], [], []>} : vector<16x64xf32>, vector<64x32xf32>, vector<16x32xf32> -> vector<16x32xf32>
    %c0_134 = arith.constant 0 : index
    %c0_135 = arith.constant 0 : index
    %c0_136 = arith.constant 0 : index
    %313 = vector.load %arg22[%c0_134, %c0_135, %c0_136] : memref<2x1x32xf32, #tpu.memory_space<vmem>>, vector<1x1x32xf32>
    %314 = vector.shape_cast %313 : vector<1x1x32xf32> to vector<1x32xf32>
    %315 = vector.broadcast %314 : vector<1x32xf32> to vector<16x32xf32>
    %316 = arith.addf %312, %315 : vector<16x32xf32>
    %317 = arith.addf %263, %316 : vector<16x32xf32>
    %c1 = arith.constant 1 : index
    %c0_137 = arith.constant 0 : index
    %c0_138 = arith.constant 0 : index
    %318 = vector.load %arg11[%c1, %c0_137, %c0_138] : memref<2x1x32xf32, #tpu.memory_space<vmem>>, vector<1x1x32xf32>
    %319 = vector.shape_cast %318 : vector<1x1x32xf32> to vector<1x32xf32>
    %c1_139 = arith.constant 1 : index
    %c0_140 = arith.constant 0 : index
    %c0_141 = arith.constant 0 : index
    %320 = vector.load %arg12[%c1_139, %c0_140, %c0_141] : memref<2x1x32xf32, #tpu.memory_space<vmem>>, vector<1x1x32xf32>
    %321 = vector.shape_cast %320 : vector<1x1x32xf32> to vector<1x32xf32>
    %cst_142 = arith.constant dense<0.000000e+00> : vector<16xf32>
    %322 = vector.multi_reduction <add>, %317, %cst_142 [1] : vector<16x32xf32> to vector<16xf32>
    %323 = vector.shape_cast %322 : vector<16xf32> to vector<16x1xf32>
    %cst_143 = arith.constant 3.200000e+01 : f32
    %324 = vector.broadcast %cst_143 : f32 to vector<16x1xf32>
    %325 = arith.divf %323, %324 : vector<16x1xf32>
    %326 = vector.broadcast %325 : vector<16x1xf32> to vector<16x32xf32>
    %327 = arith.subf %317, %326 : vector<16x32xf32>
    %328 = arith.mulf %327, %327 : vector<16x32xf32>
    %cst_144 = arith.constant dense<0.000000e+00> : vector<16xf32>
    %329 = vector.multi_reduction <add>, %328, %cst_144 [1] : vector<16x32xf32> to vector<16xf32>
    %330 = vector.shape_cast %329 : vector<16xf32> to vector<16x1xf32>
    %cst_145 = arith.constant 3.200000e+01 : f32
    %331 = vector.broadcast %cst_145 : f32 to vector<16x1xf32>
    %332 = arith.divf %330, %331 : vector<16x1xf32>
    %333 = vector.broadcast %325 : vector<16x1xf32> to vector<16x32xf32>
    %334 = arith.subf %317, %333 : vector<16x32xf32>
    %cst_146 = arith.constant 9.99999974E-6 : f32
    %335 = vector.broadcast %cst_146 : f32 to vector<16x1xf32>
    %336 = arith.addf %332, %335 : vector<16x1xf32>
    %337 = math.rsqrt %336 : vector<16x1xf32>
    %338 = vector.broadcast %337 : vector<16x1xf32> to vector<16x32xf32>
    %339 = arith.mulf %334, %338 : vector<16x32xf32>
    %340 = vector.broadcast %319 : vector<1x32xf32> to vector<16x32xf32>
    %341 = arith.mulf %339, %340 : vector<16x32xf32>
    %342 = vector.broadcast %321 : vector<1x32xf32> to vector<16x32xf32>
    %343 = arith.addf %341, %342 : vector<16x32xf32>
    %c1_147 = arith.constant 1 : index
    %c0_148 = arith.constant 0 : index
    %c0_149 = arith.constant 0 : index
    %344 = vector.load %arg13[%c1_147, %c0_148, %c0_149] : memref<2x32x96xf32, #tpu.memory_space<vmem>>, vector<1x32x96xf32>
    %345 = vector.shape_cast %344 : vector<1x32x96xf32> to vector<32x96xf32>
    %cst_150 = arith.constant dense<0.000000e+00> : vector<16x96xf32>
    %346 = tpu.matmul %343, %345, %cst_150 {dimension_numbers = #tpu.dot_dimension_numbers<[1], [0], [0], [1], [0, 0, 1, 1], [], []>} : vector<16x32xf32>, vector<32x96xf32>, vector<16x96xf32> -> vector<16x96xf32>
    %c1_151 = arith.constant 1 : index
    %c0_152 = arith.constant 0 : index
    %c0_153 = arith.constant 0 : index
    %347 = vector.load %arg14[%c1_151, %c0_152, %c0_153] : memref<2x1x96xf32, #tpu.memory_space<vmem>>, vector<1x1x96xf32>
    %348 = vector.shape_cast %347 : vector<1x1x96xf32> to vector<1x96xf32>
    %349 = vector.broadcast %348 : vector<1x96xf32> to vector<16x96xf32>
    %350 = arith.addf %346, %349 : vector<16x96xf32>
    %351 = vector.extract_strided_slice %350 {offsets = [0, 0], sizes = [16, 8], strides = [1, 1]} : vector<16x96xf32> to vector<16x8xf32>
    %352 = vector.extract_strided_slice %350 {offsets = [0, 32], sizes = [16, 8], strides = [1, 1]} : vector<16x96xf32> to vector<16x8xf32>
    %353 = vector.extract_strided_slice %350 {offsets = [0, 64], sizes = [16, 8], strides = [1, 1]} : vector<16x96xf32> to vector<16x8xf32>
    %354 = tpu.transpose %352, [1, 0] : vector<16x8xf32> -> vector<8x16xf32>
    %cst_154 = arith.constant dense<0.000000e+00> : vector<16x16xf32>
    %355 = tpu.matmul %351, %354, %cst_154 {dimension_numbers = #tpu.dot_dimension_numbers<[1], [0], [0], [1], [0, 0, 1, 1], [], []>} : vector<16x8xf32>, vector<8x16xf32>, vector<16x16xf32> -> vector<16x16xf32>
    %cst_155 = arith.constant 0.353553385 : f32
    %356 = vector.broadcast %cst_155 : f32 to vector<16x16xf32>
    %357 = arith.mulf %355, %356 : vector<16x16xf32>
    %cst_156 = arith.constant dense<0xFF800000> : vector<16xf32>
    %358 = vector.multi_reduction <maximumf>, %357, %cst_156 [1] : vector<16x16xf32> to vector<16xf32>
    %359 = vector.shape_cast %358 : vector<16xf32> to vector<16x1xf32>
    %360 = vector.broadcast %359 : vector<16x1xf32> to vector<16x16xf32>
    %361 = arith.subf %357, %360 : vector<16x16xf32>
    %362 = math.exp %361 : vector<16x16xf32>
    %cst_157 = arith.constant dense<0.000000e+00> : vector<16xf32>
    %363 = vector.multi_reduction <add>, %362, %cst_157 [1] : vector<16x16xf32> to vector<16xf32>
    %364 = vector.shape_cast %363 : vector<16xf32> to vector<16x1xf32>
    %365 = tpu.reciprocal %364 {approx = true} : vector<16x1xf32> -> vector<16x1xf32>
    %366 = vector.broadcast %365 : vector<16x1xf32> to vector<16x16xf32>
    %367 = arith.mulf %362, %366 : vector<16x16xf32>
    %cst_158 = arith.constant dense<0.000000e+00> : vector<16x8xf32>
    %368 = tpu.matmul %367, %353, %cst_158 {dimension_numbers = #tpu.dot_dimension_numbers<[1], [0], [0], [1], [0, 0, 1, 1], [], []>} : vector<16x16xf32>, vector<16x8xf32>, vector<16x8xf32> -> vector<16x8xf32>
    %369 = vector.extract_strided_slice %350 {offsets = [0, 8], sizes = [16, 8], strides = [1, 1]} : vector<16x96xf32> to vector<16x8xf32>
    %370 = vector.extract_strided_slice %350 {offsets = [0, 40], sizes = [16, 8], strides = [1, 1]} : vector<16x96xf32> to vector<16x8xf32>
    %371 = vector.extract_strided_slice %350 {offsets = [0, 72], sizes = [16, 8], strides = [1, 1]} : vector<16x96xf32> to vector<16x8xf32>
    %372 = tpu.transpose %370, [1, 0] : vector<16x8xf32> -> vector<8x16xf32>
    %cst_159 = arith.constant dense<0.000000e+00> : vector<16x16xf32>
    %373 = tpu.matmul %369, %372, %cst_159 {dimension_numbers = #tpu.dot_dimension_numbers<[1], [0], [0], [1], [0, 0, 1, 1], [], []>} : vector<16x8xf32>, vector<8x16xf32>, vector<16x16xf32> -> vector<16x16xf32>
    %cst_160 = arith.constant 0.353553385 : f32
    %374 = vector.broadcast %cst_160 : f32 to vector<16x16xf32>
    %375 = arith.mulf %373, %374 : vector<16x16xf32>
    %cst_161 = arith.constant dense<0xFF800000> : vector<16xf32>
    %376 = vector.multi_reduction <maximumf>, %375, %cst_161 [1] : vector<16x16xf32> to vector<16xf32>
    %377 = vector.shape_cast %376 : vector<16xf32> to vector<16x1xf32>
    %378 = vector.broadcast %377 : vector<16x1xf32> to vector<16x16xf32>
    %379 = arith.subf %375, %378 : vector<16x16xf32>
    %380 = math.exp %379 : vector<16x16xf32>
    %cst_162 = arith.constant dense<0.000000e+00> : vector<16xf32>
    %381 = vector.multi_reduction <add>, %380, %cst_162 [1] : vector<16x16xf32> to vector<16xf32>
    %382 = vector.shape_cast %381 : vector<16xf32> to vector<16x1xf32>
    %383 = tpu.reciprocal %382 {approx = true} : vector<16x1xf32> -> vector<16x1xf32>
    %384 = vector.broadcast %383 : vector<16x1xf32> to vector<16x16xf32>
    %385 = arith.mulf %380, %384 : vector<16x16xf32>
    %cst_163 = arith.constant dense<0.000000e+00> : vector<16x8xf32>
    %386 = tpu.matmul %385, %371, %cst_163 {dimension_numbers = #tpu.dot_dimension_numbers<[1], [0], [0], [1], [0, 0, 1, 1], [], []>} : vector<16x16xf32>, vector<16x8xf32>, vector<16x8xf32> -> vector<16x8xf32>
    %387 = vector.extract_strided_slice %350 {offsets = [0, 16], sizes = [16, 8], strides = [1, 1]} : vector<16x96xf32> to vector<16x8xf32>
    %388 = vector.extract_strided_slice %350 {offsets = [0, 48], sizes = [16, 8], strides = [1, 1]} : vector<16x96xf32> to vector<16x8xf32>
    %389 = vector.extract_strided_slice %350 {offsets = [0, 80], sizes = [16, 8], strides = [1, 1]} : vector<16x96xf32> to vector<16x8xf32>
    %390 = tpu.transpose %388, [1, 0] : vector<16x8xf32> -> vector<8x16xf32>
    %cst_164 = arith.constant dense<0.000000e+00> : vector<16x16xf32>
    %391 = tpu.matmul %387, %390, %cst_164 {dimension_numbers = #tpu.dot_dimension_numbers<[1], [0], [0], [1], [0, 0, 1, 1], [], []>} : vector<16x8xf32>, vector<8x16xf32>, vector<16x16xf32> -> vector<16x16xf32>
    %cst_165 = arith.constant 0.353553385 : f32
    %392 = vector.broadcast %cst_165 : f32 to vector<16x16xf32>
    %393 = arith.mulf %391, %392 : vector<16x16xf32>
    %cst_166 = arith.constant dense<0xFF800000> : vector<16xf32>
    %394 = vector.multi_reduction <maximumf>, %393, %cst_166 [1] : vector<16x16xf32> to vector<16xf32>
    %395 = vector.shape_cast %394 : vector<16xf32> to vector<16x1xf32>
    %396 = vector.broadcast %395 : vector<16x1xf32> to vector<16x16xf32>
    %397 = arith.subf %393, %396 : vector<16x16xf32>
    %398 = math.exp %397 : vector<16x16xf32>
    %cst_167 = arith.constant dense<0.000000e+00> : vector<16xf32>
    %399 = vector.multi_reduction <add>, %398, %cst_167 [1] : vector<16x16xf32> to vector<16xf32>
    %400 = vector.shape_cast %399 : vector<16xf32> to vector<16x1xf32>
    %401 = tpu.reciprocal %400 {approx = true} : vector<16x1xf32> -> vector<16x1xf32>
    %402 = vector.broadcast %401 : vector<16x1xf32> to vector<16x16xf32>
    %403 = arith.mulf %398, %402 : vector<16x16xf32>
    %cst_168 = arith.constant dense<0.000000e+00> : vector<16x8xf32>
    %404 = tpu.matmul %403, %389, %cst_168 {dimension_numbers = #tpu.dot_dimension_numbers<[1], [0], [0], [1], [0, 0, 1, 1], [], []>} : vector<16x16xf32>, vector<16x8xf32>, vector<16x8xf32> -> vector<16x8xf32>
    %405 = vector.extract_strided_slice %350 {offsets = [0, 24], sizes = [16, 8], strides = [1, 1]} : vector<16x96xf32> to vector<16x8xf32>
    %406 = vector.extract_strided_slice %350 {offsets = [0, 56], sizes = [16, 8], strides = [1, 1]} : vector<16x96xf32> to vector<16x8xf32>
    %407 = vector.extract_strided_slice %350 {offsets = [0, 88], sizes = [16, 8], strides = [1, 1]} : vector<16x96xf32> to vector<16x8xf32>
    %408 = tpu.transpose %406, [1, 0] : vector<16x8xf32> -> vector<8x16xf32>
    %cst_169 = arith.constant dense<0.000000e+00> : vector<16x16xf32>
    %409 = tpu.matmul %405, %408, %cst_169 {dimension_numbers = #tpu.dot_dimension_numbers<[1], [0], [0], [1], [0, 0, 1, 1], [], []>} : vector<16x8xf32>, vector<8x16xf32>, vector<16x16xf32> -> vector<16x16xf32>
    %cst_170 = arith.constant 0.353553385 : f32
    %410 = vector.broadcast %cst_170 : f32 to vector<16x16xf32>
    %411 = arith.mulf %409, %410 : vector<16x16xf32>
    %cst_171 = arith.constant dense<0xFF800000> : vector<16xf32>
    %412 = vector.multi_reduction <maximumf>, %411, %cst_171 [1] : vector<16x16xf32> to vector<16xf32>
    %413 = vector.shape_cast %412 : vector<16xf32> to vector<16x1xf32>
    %414 = vector.broadcast %413 : vector<16x1xf32> to vector<16x16xf32>
    %415 = arith.subf %411, %414 : vector<16x16xf32>
    %416 = math.exp %415 : vector<16x16xf32>
    %cst_172 = arith.constant dense<0.000000e+00> : vector<16xf32>
    %417 = vector.multi_reduction <add>, %416, %cst_172 [1] : vector<16x16xf32> to vector<16xf32>
    %418 = vector.shape_cast %417 : vector<16xf32> to vector<16x1xf32>
    %419 = tpu.reciprocal %418 {approx = true} : vector<16x1xf32> -> vector<16x1xf32>
    %420 = vector.broadcast %419 : vector<16x1xf32> to vector<16x16xf32>
    %421 = arith.mulf %416, %420 : vector<16x16xf32>
    %cst_173 = arith.constant dense<0.000000e+00> : vector<16x8xf32>
    %422 = tpu.matmul %421, %407, %cst_173 {dimension_numbers = #tpu.dot_dimension_numbers<[1], [0], [0], [1], [0, 0, 1, 1], [], []>} : vector<16x16xf32>, vector<16x8xf32>, vector<16x8xf32> -> vector<16x8xf32>
    %423 = tpu.concatenate %368, %386, %404, %422 in 1 : vector<16x8xf32>, vector<16x8xf32>, vector<16x8xf32>, vector<16x8xf32> -> vector<16x32xf32>
    %c1_174 = arith.constant 1 : index
    %c0_175 = arith.constant 0 : index
    %c0_176 = arith.constant 0 : index
    %424 = vector.load %arg15[%c1_174, %c0_175, %c0_176] : memref<2x32x32xf32, #tpu.memory_space<vmem>>, vector<1x32x32xf32>
    %425 = vector.shape_cast %424 : vector<1x32x32xf32> to vector<32x32xf32>
    %cst_177 = arith.constant dense<0.000000e+00> : vector<16x32xf32>
    %426 = tpu.matmul %423, %425, %cst_177 {dimension_numbers = #tpu.dot_dimension_numbers<[1], [0], [0], [1], [0, 0, 1, 1], [], []>} : vector<16x32xf32>, vector<32x32xf32>, vector<16x32xf32> -> vector<16x32xf32>
    %c1_178 = arith.constant 1 : index
    %c0_179 = arith.constant 0 : index
    %c0_180 = arith.constant 0 : index
    %427 = vector.load %arg16[%c1_178, %c0_179, %c0_180] : memref<2x1x32xf32, #tpu.memory_space<vmem>>, vector<1x1x32xf32>
    %428 = vector.shape_cast %427 : vector<1x1x32xf32> to vector<1x32xf32>
    %429 = vector.broadcast %428 : vector<1x32xf32> to vector<16x32xf32>
    %430 = arith.addf %426, %429 : vector<16x32xf32>
    %431 = arith.addf %317, %430 : vector<16x32xf32>
    %c1_181 = arith.constant 1 : index
    %c0_182 = arith.constant 0 : index
    %c0_183 = arith.constant 0 : index
    %432 = vector.load %arg17[%c1_181, %c0_182, %c0_183] : memref<2x1x32xf32, #tpu.memory_space<vmem>>, vector<1x1x32xf32>
    %433 = vector.shape_cast %432 : vector<1x1x32xf32> to vector<1x32xf32>
    %c1_184 = arith.constant 1 : index
    %c0_185 = arith.constant 0 : index
    %c0_186 = arith.constant 0 : index
    %434 = vector.load %arg18[%c1_184, %c0_185, %c0_186] : memref<2x1x32xf32, #tpu.memory_space<vmem>>, vector<1x1x32xf32>
    %435 = vector.shape_cast %434 : vector<1x1x32xf32> to vector<1x32xf32>
    %cst_187 = arith.constant dense<0.000000e+00> : vector<16xf32>
    %436 = vector.multi_reduction <add>, %431, %cst_187 [1] : vector<16x32xf32> to vector<16xf32>
    %437 = vector.shape_cast %436 : vector<16xf32> to vector<16x1xf32>
    %cst_188 = arith.constant 3.200000e+01 : f32
    %438 = vector.broadcast %cst_188 : f32 to vector<16x1xf32>
    %439 = arith.divf %437, %438 : vector<16x1xf32>
    %440 = vector.broadcast %439 : vector<16x1xf32> to vector<16x32xf32>
    %441 = arith.subf %431, %440 : vector<16x32xf32>
    %442 = arith.mulf %441, %441 : vector<16x32xf32>
    %cst_189 = arith.constant dense<0.000000e+00> : vector<16xf32>
    %443 = vector.multi_reduction <add>, %442, %cst_189 [1] : vector<16x32xf32> to vector<16xf32>
    %444 = vector.shape_cast %443 : vector<16xf32> to vector<16x1xf32>
    %cst_190 = arith.constant 3.200000e+01 : f32
    %445 = vector.broadcast %cst_190 : f32 to vector<16x1xf32>
    %446 = arith.divf %444, %445 : vector<16x1xf32>
    %447 = vector.broadcast %439 : vector<16x1xf32> to vector<16x32xf32>
    %448 = arith.subf %431, %447 : vector<16x32xf32>
    %cst_191 = arith.constant 9.99999974E-6 : f32
    %449 = vector.broadcast %cst_191 : f32 to vector<16x1xf32>
    %450 = arith.addf %446, %449 : vector<16x1xf32>
    %451 = math.rsqrt %450 : vector<16x1xf32>
    %452 = vector.broadcast %451 : vector<16x1xf32> to vector<16x32xf32>
    %453 = arith.mulf %448, %452 : vector<16x32xf32>
    %454 = vector.broadcast %433 : vector<1x32xf32> to vector<16x32xf32>
    %455 = arith.mulf %453, %454 : vector<16x32xf32>
    %456 = vector.broadcast %435 : vector<1x32xf32> to vector<16x32xf32>
    %457 = arith.addf %455, %456 : vector<16x32xf32>
    %c1_192 = arith.constant 1 : index
    %c0_193 = arith.constant 0 : index
    %c0_194 = arith.constant 0 : index
    %458 = vector.load %arg19[%c1_192, %c0_193, %c0_194] : memref<2x32x64xf32, #tpu.memory_space<vmem>>, vector<1x32x64xf32>
    %459 = vector.shape_cast %458 : vector<1x32x64xf32> to vector<32x64xf32>
    %cst_195 = arith.constant dense<0.000000e+00> : vector<16x64xf32>
    %460 = tpu.matmul %457, %459, %cst_195 {dimension_numbers = #tpu.dot_dimension_numbers<[1], [0], [0], [1], [0, 0, 1, 1], [], []>} : vector<16x32xf32>, vector<32x64xf32>, vector<16x64xf32> -> vector<16x64xf32>
    %c1_196 = arith.constant 1 : index
    %c0_197 = arith.constant 0 : index
    %c0_198 = arith.constant 0 : index
    %461 = vector.load %arg20[%c1_196, %c0_197, %c0_198] : memref<2x1x64xf32, #tpu.memory_space<vmem>>, vector<1x1x64xf32>
    %462 = vector.shape_cast %461 : vector<1x1x64xf32> to vector<1x64xf32>
    %463 = vector.broadcast %462 : vector<1x64xf32> to vector<16x64xf32>
    %464 = arith.addf %460, %463 : vector<16x64xf32>
    %465 = arith.mulf %464, %464 : vector<16x64xf32>
    %466 = arith.mulf %464, %465 : vector<16x64xf32>
    %cst_199 = arith.constant 4.471500e-02 : f32
    %467 = vector.broadcast %cst_199 : f32 to vector<16x64xf32>
    %468 = arith.mulf %467, %466 : vector<16x64xf32>
    %469 = arith.addf %464, %468 : vector<16x64xf32>
    %cst_200 = arith.constant 0.797884583 : f32
    %470 = vector.broadcast %cst_200 : f32 to vector<16x64xf32>
    %471 = arith.mulf %470, %469 : vector<16x64xf32>
    %472 = math.tanh %471 : vector<16x64xf32>
    %cst_201 = arith.constant 1.000000e+00 : f32
    %473 = vector.broadcast %cst_201 : f32 to vector<16x64xf32>
    %474 = arith.addf %473, %472 : vector<16x64xf32>
    %cst_202 = arith.constant 5.000000e-01 : f32
    %475 = vector.broadcast %cst_202 : f32 to vector<16x64xf32>
    %476 = arith.mulf %475, %474 : vector<16x64xf32>
    %477 = arith.mulf %464, %476 : vector<16x64xf32>
    %c1_203 = arith.constant 1 : index
    %c0_204 = arith.constant 0 : index
    %c0_205 = arith.constant 0 : index
    %478 = vector.load %arg21[%c1_203, %c0_204, %c0_205] : memref<2x64x32xf32, #tpu.memory_space<vmem>>, vector<1x64x32xf32>
    %479 = vector.shape_cast %478 : vector<1x64x32xf32> to vector<64x32xf32>
    %cst_206 = arith.constant dense<0.000000e+00> : vector<16x32xf32>
    %480 = tpu.matmul %477, %479, %cst_206 {dimension_numbers = #tpu.dot_dimension_numbers<[1], [0], [0], [1], [0, 0, 1, 1], [], []>} : vector<16x64xf32>, vector<64x32xf32>, vector<16x32xf32> -> vector<16x32xf32>
    %c1_207 = arith.constant 1 : index
    %c0_208 = arith.constant 0 : index
    %c0_209 = arith.constant 0 : index
    %481 = vector.load %arg22[%c1_207, %c0_208, %c0_209] : memref<2x1x32xf32, #tpu.memory_space<vmem>>, vector<1x1x32xf32>
    %482 = vector.shape_cast %481 : vector<1x1x32xf32> to vector<1x32xf32>
    %483 = vector.broadcast %482 : vector<1x32xf32> to vector<16x32xf32>
    %484 = arith.addf %480, %483 : vector<16x32xf32>
    %485 = arith.addf %431, %484 : vector<16x32xf32>
    %c0_210 = arith.constant 0 : index
    %c0_211 = arith.constant 0 : index
    %486 = vector.load %arg23[%c0_210, %c0_211] : memref<32x256xf32, #tpu.memory_space<vmem>>, vector<32x256xf32>
    %cst_212 = arith.constant dense<0.000000e+00> : vector<16x256xf32>
    %487 = tpu.matmul %485, %486, %cst_212 {dimension_numbers = #tpu.dot_dimension_numbers<[1], [0], [0], [1], [0, 0, 1, 1], [], []>} : vector<16x32xf32>, vector<32x256xf32>, vector<16x256xf32> -> vector<16x256xf32>
    %c0_213 = arith.constant 0 : index
    %c0_214 = arith.constant 0 : index
    %488 = vector.load %arg24[%c0_213, %c0_214] : memref<1x256xf32, #tpu.memory_space<vmem>>, vector<1x256xf32>
    %489 = vector.broadcast %488 : vector<1x256xf32> to vector<16x256xf32>
    %490 = arith.addf %487, %489 : vector<16x256xf32>
    %cst_215 = arith.constant 0.000000e+00 : f32
    %491 = vector.broadcast %cst_215 : f32 to vector<16x256xf32>
    %492 = arith.maximumf %490, %491 : vector<16x256xf32>
    %493 = vector.extract_strided_slice %492 {offsets = [0, 0], sizes = [16, 16], strides = [1, 1]} : vector<16x256xf32> to vector<16x16xf32>
    %494 = vector.extract_strided_slice %492 {offsets = [0, 16], sizes = [16, 16], strides = [1, 1]} : vector<16x256xf32> to vector<16x16xf32>
    %495 = vector.extract_strided_slice %492 {offsets = [0, 32], sizes = [16, 16], strides = [1, 1]} : vector<16x256xf32> to vector<16x16xf32>
    %496 = vector.extract_strided_slice %492 {offsets = [0, 48], sizes = [16, 16], strides = [1, 1]} : vector<16x256xf32> to vector<16x16xf32>
    %497 = vector.extract_strided_slice %492 {offsets = [0, 64], sizes = [16, 16], strides = [1, 1]} : vector<16x256xf32> to vector<16x16xf32>
    %498 = vector.extract_strided_slice %492 {offsets = [0, 80], sizes = [16, 16], strides = [1, 1]} : vector<16x256xf32> to vector<16x16xf32>
    %499 = vector.extract_strided_slice %492 {offsets = [0, 96], sizes = [16, 16], strides = [1, 1]} : vector<16x256xf32> to vector<16x16xf32>
    %500 = vector.extract_strided_slice %492 {offsets = [0, 112], sizes = [16, 16], strides = [1, 1]} : vector<16x256xf32> to vector<16x16xf32>
    %501 = vector.extract_strided_slice %492 {offsets = [0, 128], sizes = [16, 16], strides = [1, 1]} : vector<16x256xf32> to vector<16x16xf32>
    %502 = vector.extract_strided_slice %492 {offsets = [0, 144], sizes = [16, 16], strides = [1, 1]} : vector<16x256xf32> to vector<16x16xf32>
    %503 = vector.extract_strided_slice %492 {offsets = [0, 160], sizes = [16, 16], strides = [1, 1]} : vector<16x256xf32> to vector<16x16xf32>
    %504 = vector.extract_strided_slice %492 {offsets = [0, 176], sizes = [16, 16], strides = [1, 1]} : vector<16x256xf32> to vector<16x16xf32>
    %505 = vector.extract_strided_slice %492 {offsets = [0, 192], sizes = [16, 16], strides = [1, 1]} : vector<16x256xf32> to vector<16x16xf32>
    %506 = vector.extract_strided_slice %492 {offsets = [0, 208], sizes = [16, 16], strides = [1, 1]} : vector<16x256xf32> to vector<16x16xf32>
    %507 = vector.extract_strided_slice %492 {offsets = [0, 224], sizes = [16, 16], strides = [1, 1]} : vector<16x256xf32> to vector<16x16xf32>
    %508 = vector.extract_strided_slice %492 {offsets = [0, 240], sizes = [16, 16], strides = [1, 1]} : vector<16x256xf32> to vector<16x16xf32>
    %509 = tpu.concatenate %493, %494, %495, %496, %497, %498, %499, %500, %501, %502, %503, %504, %505, %506, %507, %508 in 0 : vector<16x16xf32>, vector<16x16xf32>, vector<16x16xf32>, vector<16x16xf32>, vector<16x16xf32>, vector<16x16xf32>, vector<16x16xf32>, vector<16x16xf32>, vector<16x16xf32>, vector<16x16xf32>, vector<16x16xf32>, vector<16x16xf32>, vector<16x16xf32>, vector<16x16xf32>, vector<16x16xf32>, vector<16x16xf32> -> vector<256x16xf32>
    %c0_216 = arith.constant 0 : index
    %c0_217 = arith.constant 0 : index
    %510 = vector.load %arg3[%c0_216, %c0_217] : memref<256x256xf32, #tpu.memory_space<vmem>>, vector<256x256xf32>
    %cst_218 = arith.constant dense<0.000000e+00> : vector<256x16xf32>
    %511 = tpu.matmul %510, %509, %cst_218 {dimension_numbers = #tpu.dot_dimension_numbers<[1], [0], [0], [1], [0, 0, 1, 1], [], []>} : vector<256x256xf32>, vector<256x16xf32>, vector<256x16xf32> -> vector<256x16xf32>
    %512 = arith.addf %511, %123 : vector<256x16xf32>
    %c0_219 = arith.constant 0 : index
    %c0_220 = arith.constant 0 : index
    %513 = vector.load %arg25[%c0_219, %c0_220] : memref<3x16xf32, #tpu.memory_space<vmem>>, vector<3x16xf32>
    %cst_221 = arith.constant dense<0.000000e+00> : vector<3x256xf32>
    %514 = tpu.matmul %513, %512, %cst_221 {dimension_numbers = #tpu.dot_dimension_numbers<[1], [1], [0], [0], [0, 0, 1, 0], [], []>} : vector<3x16xf32>, vector<256x16xf32>, vector<3x256xf32> -> vector<3x256xf32>
    %c0_222 = arith.constant 0 : index
    %c0_223 = arith.constant 0 : index
    %515 = vector.load %arg26[%c0_222, %c0_223] : memref<3x1xf32, #tpu.memory_space<vmem>>, vector<3x1xf32>
    %516 = vector.broadcast %515 : vector<3x1xf32> to vector<3x256xf32>
    %517 = arith.addf %514, %516 : vector<3x256xf32>
    %518 = arith.negf %517 : vector<3x256xf32>
    %519 = math.exp %518 : vector<3x256xf32>
    %cst_224 = arith.constant 1.000000e+00 : f32
    %520 = vector.broadcast %cst_224 : f32 to vector<3x256xf32>
    %521 = arith.addf %520, %519 : vector<3x256xf32>
    %522 = arith.divf %520, %521 : vector<3x256xf32>
    %c0_225 = arith.constant 0 : index
    %c0_226 = arith.constant 0 : index
    %c0_227 = arith.constant 0 : index
    %523 = vector.load %arg27[%c0_225, %c0_226, %c0_227] : memref<1x3x256xf32, #tpu.memory_space<vmem>>, vector<1x3x256xf32>
    %524 = vector.shape_cast %523 : vector<1x3x256xf32> to vector<3x256xf32>
    %525 = vector.shape_cast %522 : vector<3x256xf32> to vector<1x3x256xf32>
    tpu.vector_store %arg27[%c0_225, %c0_226, %c0_227], %525 {strides = array<i32>} : memref<1x3x256xf32, #tpu.memory_space<vmem>>, vector<1x3x256xf32>,
    return
  }
  func.func @transform_0(%arg0: i32) -> (i32, i32, i32) {
    %c0_i32 = arith.constant 0 : i32
    %c0_i32_0 = arith.constant 0 : i32
    %c0_i32_1 = arith.constant 0 : i32
    return %arg0, %c0_i32, %c0_i32_0 : i32, i32, i32
  }
  func.func @transform_1(%arg0: i32) -> (i32, i32) {
    %c0_i32 = arith.constant 0 : i32
    %c0_i32_0 = arith.constant 0 : i32
    %c0_i32_1 = arith.constant 0 : i32
    return %c0_i32, %c0_i32_0 : i32, i32
  }
  func.func @transform_2(%arg0: i32) -> (i32, i32) {
    %c0_i32 = arith.constant 0 : i32
    %c0_i32_0 = arith.constant 0 : i32
    %c0_i32_1 = arith.constant 0 : i32
    return %c0_i32, %c0_i32_0 : i32, i32
  }
  func.func @transform_3(%arg0: i32) -> (i32, i32) {
    %c0_i32 = arith.constant 0 : i32
    %c0_i32_0 = arith.constant 0 : i32
    %c0_i32_1 = arith.constant 0 : i32
    return %c0_i32, %c0_i32_0 : i32, i32
  }
  func.func @transform_4(%arg0: i32) -> (i32, i32) {
    %c0_i32 = arith.constant 0 : i32
    %c0_i32_0 = arith.constant 0 : i32
    %c0_i32_1 = arith.constant 0 : i32
    return %c0_i32, %c0_i32_0 : i32, i32
  }
  func.func @transform_5(%arg0: i32) -> (i32, i32) {
    %c0_i32 = arith.constant 0 : i32
    %c0_i32_0 = arith.constant 0 : i32
    %c0_i32_1 = arith.constant 0 : i32
    return %c0_i32, %c0_i32_0 : i32, i32
  }
  func.func @transform_6(%arg0: i32) -> (i32, i32) {
    %c0_i32 = arith.constant 0 : i32
    %c0_i32_0 = arith.constant 0 : i32
    %c0_i32_1 = arith.constant 0 : i32
    return %c0_i32, %c0_i32_0 : i32, i32
  }
  func.func @transform_7(%arg0: i32) -> (i32, i32) {
    %c0_i32 = arith.constant 0 : i32
    %c0_i32_0 = arith.constant 0 : i32
    %c0_i32_1 = arith.constant 0 : i32
    return %c0_i32, %c0_i32_0 : i32, i32
  }
  func.func @transform_8(%arg0: i32) -> (i32, i32) {
    %c0_i32 = arith.constant 0 : i32
    %c0_i32_0 = arith.constant 0 : i32
    %c0_i32_1 = arith.constant 0 : i32
    return %c0_i32, %c0_i32_0 : i32, i32
  }
  func.func @transform_9(%arg0: i32) -> (i32, i32) {
    %c0_i32 = arith.constant 0 : i32
    %c0_i32_0 = arith.constant 0 : i32
    %c0_i32_1 = arith.constant 0 : i32
    return %c0_i32, %c0_i32_0 : i32, i32
  }
  func.func @transform_10(%arg0: i32) -> (i32, i32, i32) {
    %c0_i32 = arith.constant 0 : i32
    %c0_i32_0 = arith.constant 0 : i32
    %c0_i32_1 = arith.constant 0 : i32
    %c0_i32_2 = arith.constant 0 : i32
    return %c0_i32, %c0_i32_0, %c0_i32_1 : i32, i32, i32
  }
  func.func @transform_11(%arg0: i32) -> (i32, i32, i32) {
    %c0_i32 = arith.constant 0 : i32
    %c0_i32_0 = arith.constant 0 : i32
    %c0_i32_1 = arith.constant 0 : i32
    %c0_i32_2 = arith.constant 0 : i32
    return %c0_i32, %c0_i32_0, %c0_i32_1 : i32, i32, i32
  }
  func.func @transform_12(%arg0: i32) -> (i32, i32, i32) {
    %c0_i32 = arith.constant 0 : i32
    %c0_i32_0 = arith.constant 0 : i32
    %c0_i32_1 = arith.constant 0 : i32
    %c0_i32_2 = arith.constant 0 : i32
    return %c0_i32, %c0_i32_0, %c0_i32_1 : i32, i32, i32
  }
  func.func @transform_13(%arg0: i32) -> (i32, i32, i32) {
    %c0_i32 = arith.constant 0 : i32
    %c0_i32_0 = arith.constant 0 : i32
    %c0_i32_1 = arith.constant 0 : i32
    %c0_i32_2 = arith.constant 0 : i32
    return %c0_i32, %c0_i32_0, %c0_i32_1 : i32, i32, i32
  }
  func.func @transform_14(%arg0: i32) -> (i32, i32, i32) {
    %c0_i32 = arith.constant 0 : i32
    %c0_i32_0 = arith.constant 0 : i32
    %c0_i32_1 = arith.constant 0 : i32
    %c0_i32_2 = arith.constant 0 : i32
    return %c0_i32, %c0_i32_0, %c0_i32_1 : i32, i32, i32
  }
  func.func @transform_15(%arg0: i32) -> (i32, i32, i32) {
    %c0_i32 = arith.constant 0 : i32
    %c0_i32_0 = arith.constant 0 : i32
    %c0_i32_1 = arith.constant 0 : i32
    %c0_i32_2 = arith.constant 0 : i32
    return %c0_i32, %c0_i32_0, %c0_i32_1 : i32, i32, i32
  }
  func.func @transform_16(%arg0: i32) -> (i32, i32, i32) {
    %c0_i32 = arith.constant 0 : i32
    %c0_i32_0 = arith.constant 0 : i32
    %c0_i32_1 = arith.constant 0 : i32
    %c0_i32_2 = arith.constant 0 : i32
    return %c0_i32, %c0_i32_0, %c0_i32_1 : i32, i32, i32
  }
  func.func @transform_17(%arg0: i32) -> (i32, i32, i32) {
    %c0_i32 = arith.constant 0 : i32
    %c0_i32_0 = arith.constant 0 : i32
    %c0_i32_1 = arith.constant 0 : i32
    %c0_i32_2 = arith.constant 0 : i32
    return %c0_i32, %c0_i32_0, %c0_i32_1 : i32, i32, i32
  }
  func.func @transform_18(%arg0: i32) -> (i32, i32, i32) {
    %c0_i32 = arith.constant 0 : i32
    %c0_i32_0 = arith.constant 0 : i32
    %c0_i32_1 = arith.constant 0 : i32
    %c0_i32_2 = arith.constant 0 : i32
    return %c0_i32, %c0_i32_0, %c0_i32_1 : i32, i32, i32
  }
  func.func @transform_19(%arg0: i32) -> (i32, i32, i32) {
    %c0_i32 = arith.constant 0 : i32
    %c0_i32_0 = arith.constant 0 : i32
    %c0_i32_1 = arith.constant 0 : i32
    %c0_i32_2 = arith.constant 0 : i32
    return %c0_i32, %c0_i32_0, %c0_i32_1 : i32, i32, i32
  }
  func.func @transform_20(%arg0: i32) -> (i32, i32, i32) {
    %c0_i32 = arith.constant 0 : i32
    %c0_i32_0 = arith.constant 0 : i32
    %c0_i32_1 = arith.constant 0 : i32
    %c0_i32_2 = arith.constant 0 : i32
    return %c0_i32, %c0_i32_0, %c0_i32_1 : i32, i32, i32
  }
  func.func @transform_21(%arg0: i32) -> (i32, i32, i32) {
    %c0_i32 = arith.constant 0 : i32
    %c0_i32_0 = arith.constant 0 : i32
    %c0_i32_1 = arith.constant 0 : i32
    %c0_i32_2 = arith.constant 0 : i32
    return %c0_i32, %c0_i32_0, %c0_i32_1 : i32, i32, i32
  }
  func.func @transform_22(%arg0: i32) -> (i32, i32) {
    %c0_i32 = arith.constant 0 : i32
    %c0_i32_0 = arith.constant 0 : i32
    %c0_i32_1 = arith.constant 0 : i32
    return %c0_i32, %c0_i32_0 : i32, i32
  }
  func.func @transform_23(%arg0: i32) -> (i32, i32) {
    %c0_i32 = arith.constant 0 : i32
    %c0_i32_0 = arith.constant 0 : i32
    %c0_i32_1 = arith.constant 0 : i32
    return %c0_i32, %c0_i32_0 : i32, i32
  }
  func.func @transform_24(%arg0: i32) -> (i32, i32) {
    %c0_i32 = arith.constant 0 : i32
    %c0_i32_0 = arith.constant 0 : i32
    %c0_i32_1 = arith.constant 0 : i32
    return %c0_i32, %c0_i32_0 : i32, i32
  }
  func.func @transform_25(%arg0: i32) -> (i32, i32) {
    %c0_i32 = arith.constant 0 : i32
    %c0_i32_0 = arith.constant 0 : i32
    %c0_i32_1 = arith.constant 0 : i32
    return %c0_i32, %c0_i32_0 : i32, i32
  }
  func.func @transform_26(%arg0: i32) -> (i32, i32, i32) {
    %c0_i32 = arith.constant 0 : i32
    %c0_i32_0 = arith.constant 0 : i32
    %c0_i32_1 = arith.constant 0 : i32
    return %arg0, %c0_i32, %c0_i32_0 : i32, i32, i32
  }
}

</mosaic_0001>

<llo_original>
// kernel: hrformer2d_forward.1
$region0: #{hrformer2d_forward.1}
  #allocation0 [shape = 'u32[]', space=smem, size = 0x4, offset = 0x4, fixed_abs, tag = 'smem constant byte address 0x4 - core index']
  #allocation1 [shape = 'u32[144,128]{1,0:T(1,128)}', space=vmem, size = 0x12000, scoped, tag = 'internal scratch']
  %s0 = inlined_call_operand.vmem [shape: f32[2,256,8], index: 0, kind: input, shape index: {}]
  %s1 = inlined_call_operand.vmem [shape: f32[256,256], index: 1, kind: input, shape index: {}]
  %s2 = inlined_call_operand.vmem [shape: f32[256,256], index: 2, kind: input, shape index: {}]
  %s3 = inlined_call_operand.vmem [shape: f32[8,8], index: 3, kind: input, shape index: {}]
  %s4 = inlined_call_operand.vmem [shape: f32[1,8], index: 4, kind: input, shape index: {}]
  %s5 = inlined_call_operand.vmem [shape: f32[72,16], index: 5, kind: input, shape index: {}]
  %s6 = inlined_call_operand.vmem [shape: f32[1,16], index: 6, kind: input, shape index: {}]
  %s7 = inlined_call_operand.vmem [shape: f32[256,32], index: 7, kind: input, shape index: {}]
  %s8 = inlined_call_operand.hbm [shape: f32[1,32], index: 8, kind: input, shape index: {}]
  %s9 = inlined_call_operand.vmem [shape: f32[16,32], index: 9, kind: input, shape index: {}]
  %s10 = inlined_call_operand.vmem [shape: f32[2,1,32], index: 10, kind: input, shape index: {}]
  %s11 = inlined_call_operand.vmem [shape: f32[2,1,32], index: 11, kind: input, shape index: {}]
  %s12 = inlined_call_operand.vmem [shape: f32[2,32,96], index: 12, kind: input, shape index: {}]
  %s13 = inlined_call_operand.hbm [shape: f32[2,1,96], index: 13, kind: input, shape index: {}]
  %s14 = inlined_call_operand.vmem [shape: f32[2,32,32], index: 14, kind: input, shape index: {}]
  %s15 = inlined_call_operand.hbm [shape: f32[2,1,32], index: 15, kind: input, shape index: {}]
  %s16 = inlined_call_operand.vmem [shape: f32[2,1,32], index: 16, kind: input, shape index: {}]
  %s17 = inlined_call_operand.vmem [shape: f32[2,1,32], index: 17, kind: input, shape index: {}]
  %s18 = inlined_call_operand.vmem [shape: f32[2,32,64], index: 18, kind: input, shape index: {}]
  %s19 = inlined_call_operand.vmem [shape: f32[2,1,64], index: 19, kind: input, shape index: {}]
  %s20 = inlined_call_operand.vmem [shape: f32[2,64,32], index: 20, kind: input, shape index: {}]
  %s21 = inlined_call_operand.vmem [shape: f32[2,1,32], index: 21, kind: input, shape index: {}]
  %s22 = inlined_call_operand.vmem [shape: f32[32,256], index: 22, kind: input, shape index: {}]
  %s23 = inlined_call_operand.vmem [shape: f32[1,256], index: 23, kind: input, shape index: {}]
  %s24 = inlined_call_operand.vmem [shape: f32[3,16], index: 24, kind: input, shape index: {}]
  %s25 = inlined_call_operand.vmem [shape: f32[3,1], index: 25, kind: input, shape index: {}]
  %s26 = inlined_call_operand.vmem [shape: f32[2,3,256], index: 26, kind: output, shape index: {}]
  %s27 = sld [smem:[#allocation0]]
  $region149: #{hrformer2d_forward.1} parent=0
    _
  %s29 = ssub.s32 1, %s27
  %s30 = scalar_select 0, %s29, %s27
  $region1: #{hrformer2d_forward.1} parent=0
    #allocation2 [shape = 'u8[512]{0}', space=vmem, size = 0x400, scoped, tag = 'input window, operand 8, single buffered']
    #allocation3 [shape = 's32[2]{0}', space=sflag, size = 0x8, scoped, tag = 'scoped memory for hrformer2d_forward.1']
    #allocation4 [shape = 'u8[1024]{0}', space=vmem, size = 0x400, scoped, tag = 'input window, operand 13, single buffered']
    #allocation5 [shape = 's32[1]{0}', space=sflag, size = 0x4, scoped, tag = 'scoped memory for hrformer2d_forward.1']
    #allocation6 [shape = 'u8[1024]{0}', space=vmem, size = 0x400, scoped, tag = 'input window, operand 15, single buffered']
    %31 = vsyncpa [#allocation3], 0
    %32 = vsyncpa [#allocation5], 0
    loop: start=0, step=1, limit=4
    $region2: #{hrformer2d_forward.1} parent=1 // loop_pre_header
      _
    $region3: #{hrformer2d_forward.1} parent=1 // loop_header
      %s34 = sphi 0, %s38
      %p35 = scmp.ge.s32.totalorder %s34, 4
      %s44 = sphi 0, %s46
      %s47 = sphi 0, %s44
      %s48 = sphi 0, %s47
      %s64 = sphi 0, %s48
      %s68 = sphi 0, %s68
      %s70 = sphi 0, %s68
      %s71 = sphi 0, %s70
      %s85 = sphi 0, %s71
      %s89 = sphi 0, %s89
      %s91 = sphi 0, %s89
      %s92 = sphi 0, %s91
      %s106 = sphi 0, %s92
      %s110 = sphi 0, %s110
      %s112 = sphi 0, %s110
      %s113 = sphi 0, %s112
      %s127 = sphi 0, %s113
      %s131 = sphi 0, %s131
      %s133 = sphi 0, %s131
      %s134 = sphi 0, %s133
      %s148 = sphi 0, %s134
      %s152 = sphi 0, %s152
      %s154 = sphi 0, %s152
      %s155 = sphi 0, %s154
      %s169 = sphi 0, %s155
      %s173 = sphi 0, %s173
      %s175 = sphi 0, %s173
      %s176 = sphi 0, %s175
      %s190 = sphi 0, %s176
      %s194 = sphi 0, %s194
      %s196 = sphi 0, %s194
      %s197 = sphi 0, %s196
      %s211 = sphi 0, %s197
      %s215 = sphi 0, %s215
      %s217 = sphi 0, %s215
      %s218 = sphi 0, %s217
      %s232 = sphi 0, %s218
      %s236 = sphi 0, %s236
      %s238 = sphi 0, %s236
      %s239 = sphi 0, %s238
      %s253 = sphi 0, %s239
      %s257 = sphi 0, %s257
      %s259 = sphi 0, %s257
      %s260 = sphi 0, %s259
      %s274 = sphi 0, %s260
      %s278 = sphi 0, %s278
      %s280 = sphi 0, %s278
      %s281 = sphi 0, %s280
      %s295 = sphi 0, %s281
      %s299 = sphi 0, %s299
      %s301 = sphi 0, %s299
      %s302 = sphi 0, %s301
      %s316 = sphi 0, %s302
      %s320 = sphi 0, %s320
      %s322 = sphi 0, %s320
      %s323 = sphi 0, %s322
      %s337 = sphi 0, %s323
      %s341 = sphi 0, %s341
      %s343 = sphi 0, %s341
      %s344 = sphi 0, %s343
      %s358 = sphi 0, %s344
      %s362 = sphi 0, %s362
      %s364 = sphi 0, %s362
      %s365 = sphi 0, %s364
      %s379 = sphi 0, %s365
      %s383 = sphi 0, %s383
      %s385 = sphi 0, %s383
      %s386 = sphi 0, %s385
      %s400 = sphi 0, %s386
      %s404 = sphi 0, %s404
      %s406 = sphi 0, %s404
      %s407 = sphi 0, %s406
      %s421 = sphi 0, %s407
      %s425 = sphi 0, %s425
      %s427 = sphi 0, %s425
      %s428 = sphi 0, %s427
      %s442 = sphi 0, %s428
      %s446 = sphi 0, %s446
      %s448 = sphi 0, %s446
      %s449 = sphi 0, %s448
      %s463 = sphi 0, %s449
      %s467 = sphi 0, %s467
      %s469 = sphi 0, %s467
      %s470 = sphi 0, %s469
      %s484 = sphi 0, %s470
      %s488 = sphi 0, %s488
      %s490 = sphi 0, %s488
      %s491 = sphi 0, %s490
      %s505 = sphi 0, %s491
      %s509 = sphi 0, %s509
      %s511 = sphi 0, %s509
      %s512 = sphi 0, %s511
      %s526 = sphi 0, %s512
      %s530 = sphi 0, %s530
      %s532 = sphi 0, %s530
      %s533 = sphi 0, %s532
      %s547 = sphi 0, %s533
      %s551 = sphi 0, %s551
      %s553 = sphi 0, %s551
      %s554 = sphi 0, %s553
      %s568 = sphi 0, %s554
      %s572 = sphi 0, %s572
      %s574 = sphi 0, %s572
      %s575 = sphi 0, %s574
      %s589 = sphi 0, %s575
      %s595 = sphi 0, %s597
      %s598 = sphi 0, %s595
      %s599 = sphi 0, %s598
      %s615 = sphi 0, %s599
    $region4: #{hrformer2d_forward.1} parent=1 // loop_header_branch
      %37 = sbr.rel (%p35) target = $region8
    $region5: #{hrformer2d_forward.1} parent=1 // loop_body
      %s39 = ssub.s32 %s34, 1
      %s40 = ssub.s32 %s34, 2
      %s41 = sadd.s32 %s34, 1
      %s42 = ssub.s32 %s34, %s41
      %p43 = scmp.eq.s32.totalorder %s42, 0
      %s45 = sadd.s32 %s44, 1
      %s46 = scalar_select %p43, %s44, %s45
      %p49 = pneg %p43
      %p50 = scmp.eq.s32.totalorder %s34, 1
      %p51 = por %p49, %p50
      %p52 = scmp.ne.s32.totalorder %s44, %s47
      %p53 = scmp.eq.s32.totalorder %s34, 0
      %p54 = por %p52, %p53
      %p55 = scmp.ne.s32.totalorder %s44, %s47
      %p56 = scmp.eq.s32.totalorder %s39, 1
      %p57 = por %p55, %p56
      %p58 = scmp.ne.s32.totalorder %s47, %s48
      %p59 = scmp.eq.s32.totalorder %s39, 0
      %p60 = por %p58, %p59
      %p61 = scmp.ne.s32.totalorder %s47, %s48
      %p62 = scmp.eq.s32.totalorder %s40, 1
      %p63 = por %p61, %p62
      %p65 = scmp.ne.s32.totalorder %s48, %s64
      %p66 = scmp.eq.s32.totalorder %s40, 0
      %p67 = por %p65, %p66
      %s69 = sadd.s32 %s68, 1
      %p72 = scmp.eq.s32.totalorder %s34, 1
      %p73 = scmp.ne.s32.totalorder %s68, %s70
      %p74 = scmp.eq.s32.totalorder %s34, 0
      %p75 = por %p73, %p74
      %p76 = scmp.ne.s32.totalorder %s68, %s70
      %p77 = scmp.eq.s32.totalorder %s39, 1
      %p78 = por %p76, %p77
      %p79 = scmp.ne.s32.totalorder %s70, %s71
      %p80 = scmp.eq.s32.totalorder %s39, 0
      %p81 = por %p79, %p80
      %p82 = scmp.ne.s32.totalorder %s70, %s71
      %p83 = scmp.eq.s32.totalorder %s40, 1
      %p84 = por %p82, %p83
      %p86 = scmp.ne.s32.totalorder %s71, %s85
      %p87 = scmp.eq.s32.totalorder %s40, 0
      %p88 = por %p86, %p87
      %s90 = sadd.s32 %s89, 1
      %p93 = scmp.eq.s32.totalorder %s34, 1
      %p94 = scmp.ne.s32.totalorder %s89, %s91
      %p95 = scmp.eq.s32.totalorder %s34, 0
      %p96 = por %p94, %p95
      %p97 = scmp.ne.s32.totalorder %s89, %s91
      %p98 = scmp.eq.s32.totalorder %s39, 1
      %p99 = por %p97, %p98
      %p100 = scmp.ne.s32.totalorder %s91, %s92
      %p101 = scmp.eq.s32.totalorder %s39, 0
      %p102 = por %p100, %p101
      %p103 = scmp.ne.s32.totalorder %s91, %s92
      %p104 = scmp.eq.s32.totalorder %s40, 1
      %p105 = por %p103, %p104
      %p107 = scmp.ne.s32.totalorder %s92, %s106
      %p108 = scmp.eq.s32.totalorder %s40, 0
      %p109 = por %p107, %p108
      %s111 = sadd.s32 %s110, 1
      %p114 = scmp.eq.s32.totalorder %s34, 1
      %p115 = scmp.ne.s32.totalorder %s110, %s112
      %p116 = scmp.eq.s32.totalorder %s34, 0
      %p117 = por %p115, %p116
      %p118 = scmp.ne.s32.totalorder %s110, %s112
      %p119 = scmp.eq.s32.totalorder %s39, 1
      %p120 = por %p118, %p119
      %p121 = scmp.ne.s32.totalorder %s112, %s113
      %p122 = scmp.eq.s32.totalorder %s39, 0
      %p123 = por %p121, %p122
      %p124 = scmp.ne.s32.totalorder %s112, %s113
      %p125 = scmp.eq.s32.totalorder %s40, 1
      %p126 = por %p124, %p125
      %p128 = scmp.ne.s32.totalorder %s113, %s127
      %p129 = scmp.eq.s32.totalorder %s40, 0
      %p130 = por %p128, %p129
      %s132 = sadd.s32 %s131, 1
      %p135 = scmp.eq.s32.totalorder %s34, 1
      %p136 = scmp.ne.s32.totalorder %s131, %s133
      %p137 = scmp.eq.s32.totalorder %s34, 0
      %p138 = por %p136, %p137
      %p139 = scmp.ne.s32.totalorder %s131, %s133
      %p140 = scmp.eq.s32.totalorder %s39, 1
      %p141 = por %p139, %p140
      %p142 = scmp.ne.s32.totalorder %s133, %s134
      %p143 = scmp.eq.s32.totalorder %s39, 0
      %p144 = por %p142, %p143
      %p145 = scmp.ne.s32.totalorder %s133, %s134
      %p146 = scmp.eq.s32.totalorder %s40, 1
      %p147 = por %p145, %p146
      %p149 = scmp.ne.s32.totalorder %s134, %s148
      %p150 = scmp.eq.s32.totalorder %s40, 0
      %p151 = por %p149, %p150
      %s153 = sadd.s32 %s152, 1
      %p156 = scmp.eq.s32.totalorder %s34, 1
      %p157 = scmp.ne.s32.totalorder %s152, %s154
      %p158 = scmp.eq.s32.totalorder %s34, 0
      %p159 = por %p157, %p158
      %p160 = scmp.ne.s32.totalorder %s152, %s154
      %p161 = scmp.eq.s32.totalorder %s39, 1
      %p162 = por %p160, %p161
      %p163 = scmp.ne.s32.totalorder %s154, %s155
      %p164 = scmp.eq.s32.totalorder %s39, 0
      %p165 = por %p163, %p164
      %p166 = scmp.ne.s32.totalorder %s154, %s155
      %p167 = scmp.eq.s32.totalorder %s40, 1
      %p168 = por %p166, %p167
      %p170 = scmp.ne.s32.totalorder %s155, %s169
      %p171 = scmp.eq.s32.totalorder %s40, 0
      %p172 = por %p170, %p171
      %s174 = sadd.s32 %s173, 1
      %p177 = scmp.eq.s32.totalorder %s34, 1
      %p178 = scmp.ne.s32.totalorder %s173, %s175
      %p179 = scmp.eq.s32.totalorder %s34, 0
      %p180 = por %p178, %p179
      %p181 = scmp.ne.s32.totalorder %s173, %s175
      %p182 = scmp.eq.s32.totalorder %s39, 1
      %p183 = por %p181, %p182
      %p184 = scmp.ne.s32.totalorder %s175, %s176
      %p185 = scmp.eq.s32.totalorder %s39, 0
      %p186 = por %p184, %p185
      %p187 = scmp.ne.s32.totalorder %s175, %s176
      %p188 = scmp.eq.s32.totalorder %s40, 1
      %p189 = por %p187, %p188
      %p191 = scmp.ne.s32.totalorder %s176, %s190
      %p192 = scmp.eq.s32.totalorder %s40, 0
      %p193 = por %p191, %p192
      %s195 = sadd.s32 %s194, 1
      %p198 = scmp.eq.s32.totalorder %s34, 1
      %p199 = scmp.ne.s32.totalorder %s194, %s196
      %p200 = scmp.eq.s32.totalorder %s34, 0
      %p201 = por %p199, %p200
      %p202 = scmp.ne.s32.totalorder %s194, %s196
      %p203 = scmp.eq.s32.totalorder %s39, 1
      %p204 = por %p202, %p203
      %p205 = scmp.ne.s32.totalorder %s196, %s197
      %p206 = scmp.eq.s32.totalorder %s39, 0
      %p207 = por %p205, %p206
      %p208 = scmp.ne.s32.totalorder %s196, %s197
      %p209 = scmp.eq.s32.totalorder %s40, 1
      %p210 = por %p208, %p209
      %p212 = scmp.ne.s32.totalorder %s197, %s211
      %p213 = scmp.eq.s32.totalorder %s40, 0
      %p214 = por %p212, %p213
      %s216 = sadd.s32 %s215, 1
      %p219 = scmp.eq.s32.totalorder %s34, 1
      %p220 = scmp.ne.s32.totalorder %s215, %s217
      %p221 = scmp.eq.s32.totalorder %s34, 0
      %p222 = por %p220, %p221
      %p223 = scmp.ne.s32.totalorder %s215, %s217
      %p224 = scmp.eq.s32.totalorder %s39, 1
      %p225 = por %p223, %p224
      %p226 = scmp.ne.s32.totalorder %s217, %s218
      %p227 = scmp.eq.s32.totalorder %s39, 0
      %p228 = por %p226, %p227
      %p229 = scmp.ne.s32.totalorder %s217, %s218
      %p230 = scmp.eq.s32.totalorder %s40, 1
      %p231 = por %p229, %p230
      %p233 = scmp.ne.s32.totalorder %s218, %s232
      %p234 = scmp.eq.s32.totalorder %s40, 0
      %p235 = por %p233, %p234
      %s237 = sadd.s32 %s236, 1
      %p240 = scmp.eq.s32.totalorder %s34, 1
      %p241 = scmp.ne.s32.totalorder %s236, %s238
      %p242 = scmp.eq.s32.totalorder %s34, 0
      %p243 = por %p241, %p242
      %p244 = scmp.ne.s32.totalorder %s236, %s238
      %p245 = scmp.eq.s32.totalorder %s39, 1
      %p246 = por %p244, %p245
      %p247 = scmp.ne.s32.totalorder %s238, %s239
      %p248 = scmp.eq.s32.totalorder %s39, 0
      %p249 = por %p247, %p248
      %p250 = scmp.ne.s32.totalorder %s238, %s239
      %p251 = scmp.eq.s32.totalorder %s40, 1
      %p252 = por %p250, %p251
      %p254 = scmp.ne.s32.totalorder %s239, %s253
      %p255 = scmp.eq.s32.totalorder %s40, 0
      %p256 = por %p254, %p255
      %s258 = sadd.s32 %s257, 1
      %p261 = scmp.eq.s32.totalorder %s34, 1
      %p262 = scmp.ne.s32.totalorder %s257, %s259
      %p263 = scmp.eq.s32.totalorder %s34, 0
      %p264 = por %p262, %p263
      %p265 = scmp.ne.s32.totalorder %s257, %s259
      %p266 = scmp.eq.s32.totalorder %s39, 1
      %p267 = por %p265, %p266
      %p268 = scmp.ne.s32.totalorder %s259, %s260
      %p269 = scmp.eq.s32.totalorder %s39, 0
      %p270 = por %p268, %p269
      %p271 = scmp.ne.s32.totalorder %s259, %s260
      %p272 = scmp.eq.s32.totalorder %s40, 1
      %p273 = por %p271, %p272
      %p275 = scmp.ne.s32.totalorder %s260, %s274
      %p276 = scmp.eq.s32.totalorder %s40, 0
      %p277 = por %p275, %p276
      %s279 = sadd.s32 %s278, 1
      %p282 = scmp.eq.s32.totalorder %s34, 1
      %p283 = scmp.ne.s32.totalorder %s278, %s280
      %p284 = scmp.eq.s32.totalorder %s34, 0
      %p285 = por %p283, %p284
      %p286 = scmp.ne.s32.totalorder %s278, %s280
      %p287 = scmp.eq.s32.totalorder %s39, 1
      %p288 = por %p286, %p287
      %p289 = scmp.ne.s32.totalorder %s280, %s281
      %p290 = scmp.eq.s32.totalorder %s39, 0
      %p291 = por %p289, %p290
      %p292 = scmp.ne.s32.totalorder %s280, %s281
      %p293 = scmp.eq.s32.totalorder %s40, 1
      %p294 = por %p292, %p293
      %p296 = scmp.ne.s32.totalorder %s281, %s295
      %p297 = scmp.eq.s32.totalorder %s40, 0
      %p298 = por %p296, %p297
      %s300 = sadd.s32 %s299, 1
      %p303 = scmp.eq.s32.totalorder %s34, 1
      %p304 = scmp.ne.s32.totalorder %s299, %s301
      %p305 = scmp.eq.s32.totalorder %s34, 0
      %p306 = por %p304, %p305
      %p307 = scmp.ne.s32.totalorder %s299, %s301
      %p308 = scmp.eq.s32.totalorder %s39, 1
      %p309 = por %p307, %p308
      %p310 = scmp.ne.s32.totalorder %s301, %s302
      %p311 = scmp.eq.s32.totalorder %s39, 0
      %p312 = por %p310, %p311
      %p313 = scmp.ne.s32.totalorder %s301, %s302
      %p314 = scmp.eq.s32.totalorder %s40, 1
      %p315 = por %p313, %p314
      %p317 = scmp.ne.s32.totalorder %s302, %s316
      %p318 = scmp.eq.s32.totalorder %s40, 0
      %p319 = por %p317, %p318
      %s321 = sadd.s32 %s320, 1
      %p324 = scmp.eq.s32.totalorder %s34, 1
      %p325 = scmp.ne.s32.totalorder %s320, %s322
      %p326 = scmp.eq.s32.totalorder %s34, 0
      %p327 = por %p325, %p326
      %p328 = scmp.ne.s32.totalorder %s320, %s322
      %p329 = scmp.eq.s32.totalorder %s39, 1
      %p330 = por %p328, %p329
      %p331 = scmp.ne.s32.totalorder %s322, %s323
      %p332 = scmp.eq.s32.totalorder %s39, 0
      %p333 = por %p331, %p332
      %p334 = scmp.ne.s32.totalorder %s322, %s323
      %p335 = scmp.eq.s32.totalorder %s40, 1
      %p336 = por %p334, %p335
      %p338 = scmp.ne.s32.totalorder %s323, %s337
      %p339 = scmp.eq.s32.totalorder %s40, 0
      %p340 = por %p338, %p339
      %s342 = sadd.s32 %s341, 1
      %p345 = scmp.eq.s32.totalorder %s34, 1
      %p346 = scmp.ne.s32.totalorder %s341, %s343
      %p347 = scmp.eq.s32.totalorder %s34, 0
      %p348 = por %p346, %p347
      %p349 = scmp.ne.s32.totalorder %s341, %s343
      %p350 = scmp.eq.s32.totalorder %s39, 1
      %p351 = por %p349, %p350
      %p352 = scmp.ne.s32.totalorder %s343, %s344
      %p353 = scmp.eq.s32.totalorder %s39, 0
      %p354 = por %p352, %p353
      %p355 = scmp.ne.s32.totalorder %s343, %s344
      %p356 = scmp.eq.s32.totalorder %s40, 1
      %p357 = por %p355, %p356
      %p359 = scmp.ne.s32.totalorder %s344, %s358
      %p360 = scmp.eq.s32.totalorder %s40, 0
      %p361 = por %p359, %p360
      %s363 = sadd.s32 %s362, 1
      %p366 = scmp.eq.s32.totalorder %s34, 1
      %p367 = scmp.ne.s32.totalorder %s362, %s364
      %p368 = scmp.eq.s32.totalorder %s34, 0
      %p369 = por %p367, %p368
      %p370 = scmp.ne.s32.totalorder %s362, %s364
      %p371 = scmp.eq.s32.totalorder %s39, 1
      %p372 = por %p370, %p371
      %p373 = scmp.ne.s32.totalorder %s364, %s365
      %p374 = scmp.eq.s32.totalorder %s39, 0
      %p375 = por %p373, %p374
      %p376 = scmp.ne.s32.totalorder %s364, %s365
      %p377 = scmp.eq.s32.totalorder %s40, 1
      %p378 = por %p376, %p377
      %p380 = scmp.ne.s32.totalorder %s365, %s379
      %p381 = scmp.eq.s32.totalorder %s40, 0
      %p382 = por %p380, %p381
      %s384 = sadd.s32 %s383, 1
      %p387 = scmp.eq.s32.totalorder %s34, 1
      %p388 = scmp.ne.s32.totalorder %s383, %s385
      %p389 = scmp.eq.s32.totalorder %s34, 0
      %p390 = por %p388, %p389
      %p391 = scmp.ne.s32.totalorder %s383, %s385
      %p392 = scmp.eq.s32.totalorder %s39, 1
      %p393 = por %p391, %p392
      %p394 = scmp.ne.s32.totalorder %s385, %s386
      %p395 = scmp.eq.s32.totalorder %s39, 0
      %p396 = por %p394, %p395
      %p397 = scmp.ne.s32.totalorder %s385, %s386
      %p398 = scmp.eq.s32.totalorder %s40, 1
      %p399 = por %p397, %p398
      %p401 = scmp.ne.s32.totalorder %s386, %s400
      %p402 = scmp.eq.s32.totalorder %s40, 0
      %p403 = por %p401, %p402
      %s405 = sadd.s32 %s404, 1
      %p408 = scmp.eq.s32.totalorder %s34, 1
      %p409 = scmp.ne.s32.totalorder %s404, %s406
      %p410 = scmp.eq.s32.totalorder %s34, 0
      %p411 = por %p409, %p410
      %p412 = scmp.ne.s32.totalorder %s404, %s406
      %p413 = scmp.eq.s32.totalorder %s39, 1
      %p414 = por %p412, %p413
      %p415 = scmp.ne.s32.totalorder %s406, %s407
      %p416 = scmp.eq.s32.totalorder %s39, 0
      %p417 = por %p415, %p416
      %p418 = scmp.ne.s32.totalorder %s406, %s407
      %p419 = scmp.eq.s32.totalorder %s40, 1
      %p420 = por %p418, %p419
      %p422 = scmp.ne.s32.totalorder %s407, %s421
      %p423 = scmp.eq.s32.totalorder %s40, 0
      %p424 = por %p422, %p423
      %s426 = sadd.s32 %s425, 1
      %p429 = scmp.eq.s32.totalorder %s34, 1
      %p430 = scmp.ne.s32.totalorder %s425, %s427
      %p431 = scmp.eq.s32.totalorder %s34, 0
      %p432 = por %p430, %p431
      %p433 = scmp.ne.s32.totalorder %s425, %s427
      %p434 = scmp.eq.s32.totalorder %s39, 1
      %p435 = por %p433, %p434
      %p436 = scmp.ne.s32.totalorder %s427, %s428
      %p437 = scmp.eq.s32.totalorder %s39, 0
      %p438 = por %p436, %p437
      %p439 = scmp.ne.s32.totalorder %s427, %s428
      %p440 = scmp.eq.s32.totalorder %s40, 1
      %p441 = por %p439, %p440
      %p443 = scmp.ne.s32.totalorder %s428, %s442
      %p444 = scmp.eq.s32.totalorder %s40, 0
      %p445 = por %p443, %p444
      %s447 = sadd.s32 %s446, 1
      %p450 = scmp.eq.s32.totalorder %s34, 1
      %p451 = scmp.ne.s32.totalorder %s446, %s448
      %p452 = scmp.eq.s32.totalorder %s34, 0
      %p453 = por %p451, %p452
      %p454 = scmp.ne.s32.totalorder %s446, %s448
      %p455 = scmp.eq.s32.totalorder %s39, 1
      %p456 = por %p454, %p455
      %p457 = scmp.ne.s32.totalorder %s448, %s449
      %p458 = scmp.eq.s32.totalorder %s39, 0
      %p459 = por %p457, %p458
      %p460 = scmp.ne.s32.totalorder %s448, %s449
      %p461 = scmp.eq.s32.totalorder %s40, 1
      %p462 = por %p460, %p461
      %p464 = scmp.ne.s32.totalorder %s449, %s463
      %p465 = scmp.eq.s32.totalorder %s40, 0
      %p466 = por %p464, %p465
      %s468 = sadd.s32 %s467, 1
      %p471 = scmp.eq.s32.totalorder %s34, 1
      %p472 = scmp.ne.s32.totalorder %s467, %s469
      %p473 = scmp.eq.s32.totalorder %s34, 0
      %p474 = por %p472, %p473
      %p475 = scmp.ne.s32.totalorder %s467, %s469
      %p476 = scmp.eq.s32.totalorder %s39, 1
      %p477 = por %p475, %p476
      %p478 = scmp.ne.s32.totalorder %s469, %s470
      %p479 = scmp.eq.s32.totalorder %s39, 0
      %p480 = por %p478, %p479
      %p481 = scmp.ne.s32.totalorder %s469, %s470
      %p482 = scmp.eq.s32.totalorder %s40, 1
      %p483 = por %p481, %p482
      %p485 = scmp.ne.s32.totalorder %s470, %s484
      %p486 = scmp.eq.s32.totalorder %s40, 0
      %p487 = por %p485, %p486
      %s489 = sadd.s32 %s488, 1
      %p492 = scmp.eq.s32.totalorder %s34, 1
      %p493 = scmp.ne.s32.totalorder %s488, %s490
      %p494 = scmp.eq.s32.totalorder %s34, 0
      %p495 = por %p493, %p494
      %p496 = scmp.ne.s32.totalorder %s488, %s490
      %p497 = scmp.eq.s32.totalorder %s39, 1
      %p498 = por %p496, %p497
      %p499 = scmp.ne.s32.totalorder %s490, %s491
      %p500 = scmp.eq.s32.totalorder %s39, 0
      %p501 = por %p499, %p500
      %p502 = scmp.ne.s32.totalorder %s490, %s491
      %p503 = scmp.eq.s32.totalorder %s40, 1
      %p504 = por %p502, %p503
      %p506 = scmp.ne.s32.totalorder %s491, %s505
      %p507 = scmp.eq.s32.totalorder %s40, 0
      %p508 = por %p506, %p507
      %s510 = sadd.s32 %s509, 1
      %p513 = scmp.eq.s32.totalorder %s34, 1
      %p514 = scmp.ne.s32.totalorder %s509, %s511
      %p515 = scmp.eq.s32.totalorder %s34, 0
      %p516 = por %p514, %p515
      %p517 = scmp.ne.s32.totalorder %s509, %s511
      %p518 = scmp.eq.s32.totalorder %s39, 1
      %p519 = por %p517, %p518
      %p520 = scmp.ne.s32.totalorder %s511, %s512
      %p521 = scmp.eq.s32.totalorder %s39, 0
      %p522 = por %p520, %p521
      %p523 = scmp.ne.s32.totalorder %s511, %s512
      %p524 = scmp.eq.s32.totalorder %s40, 1
      %p525 = por %p523, %p524
      %p527 = scmp.ne.s32.totalorder %s512, %s526
      %p528 = scmp.eq.s32.totalorder %s40, 0
      %p529 = por %p527, %p528
      %s531 = sadd.s32 %s530, 1
      %p534 = scmp.eq.s32.totalorder %s34, 1
      %p535 = scmp.ne.s32.totalorder %s530, %s532
      %p536 = scmp.eq.s32.totalorder %s34, 0
      %p537 = por %p535, %p536
      %p538 = scmp.ne.s32.totalorder %s530, %s532
      %p539 = scmp.eq.s32.totalorder %s39, 1
      %p540 = por %p538, %p539
      %p541 = scmp.ne.s32.totalorder %s532, %s533
      %p542 = scmp.eq.s32.totalorder %s39, 0
      %p543 = por %p541, %p542
      %p544 = scmp.ne.s32.totalorder %s532, %s533
      %p545 = scmp.eq.s32.totalorder %s40, 1
      %p546 = por %p544, %p545
      %p548 = scmp.ne.s32.totalorder %s533, %s547
      %p549 = scmp.eq.s32.totalorder %s40, 0
      %p550 = por %p548, %p549
      %s552 = sadd.s32 %s551, 1
      %p555 = scmp.eq.s32.totalorder %s34, 1
      %p556 = scmp.ne.s32.totalorder %s551, %s553
      %p557 = scmp.eq.s32.totalorder %s34, 0
      %p558 = por %p556, %p557
      %p559 = scmp.ne.s32.totalorder %s551, %s553
      %p560 = scmp.eq.s32.totalorder %s39, 1
      %p561 = por %p559, %p560
      %p562 = scmp.ne.s32.totalorder %s553, %s554
      %p563 = scmp.eq.s32.totalorder %s39, 0
      %p564 = por %p562, %p563
      %p565 = scmp.ne.s32.totalorder %s553, %s554
      %p566 = scmp.eq.s32.totalorder %s40, 1
      %p567 = por %p565, %p566
      %p569 = scmp.ne.s32.totalorder %s554, %s568
      %p570 = scmp.eq.s32.totalorder %s40, 0
      %p571 = por %p569, %p570
      %s573 = sadd.s32 %s572, 1
      %p576 = scmp.eq.s32.totalorder %s34, 1
      %p577 = scmp.ne.s32.totalorder %s572, %s574
      %p578 = scmp.eq.s32.totalorder %s34, 0
      %p579 = por %p577, %p578
      %p580 = scmp.ne.s32.totalorder %s572, %s574
      %p581 = scmp.eq.s32.totalorder %s39, 1
      %p582 = por %p580, %p581
      %p583 = scmp.ne.s32.totalorder %s574, %s575
      %p584 = scmp.eq.s32.totalorder %s39, 0
      %p585 = por %p583, %p584
      %p586 = scmp.ne.s32.totalorder %s574, %s575
      %p587 = scmp.eq.s32.totalorder %s40, 1
      %p588 = por %p586, %p587
      %p590 = scmp.ne.s32.totalorder %s575, %s589
      %p591 = scmp.eq.s32.totalorder %s40, 0
      %p592 = por %p590, %p591
      %s593 = ssub.s32 %s34, %s41
      %p594 = scmp.eq.s32.totalorder %s593, 0
      %s596 = sadd.s32 %s595, 1
      %s597 = scalar_select %p594, %s595, %s596
      %p600 = pneg %p594
      %p601 = scmp.eq.s32.totalorder %s34, 1
      %p602 = por %p600, %p601
      %p603 = scmp.ne.s32.totalorder %s595, %s598
      %p604 = scmp.eq.s32.totalorder %s34, 0
      %p605 = por %p603, %p604
      %p606 = scmp.ne.s32.totalorder %s595, %s598
      %p607 = scmp.eq.s32.totalorder %s39, 1
      %p608 = por %p606, %p607
      %p609 = scmp.ne.s32.totalorder %s598, %s599
      %p610 = scmp.eq.s32.totalorder %s39, 0
      %p611 = por %p609, %p610
      %p612 = scmp.ne.s32.totalorder %s598, %s599
      %p613 = scmp.eq.s32.totalorder %s40, 1
      %p614 = por %p612, %p613
      %p616 = scmp.ne.s32.totalorder %s599, %s615
      %p617 = scmp.eq.s32.totalorder %s40, 0
      %p618 = por %p616, %p617
      %p619 = scmp.le.s32.totalorder 1, %s34
      %p620 = scmp.lt.s32.totalorder %s34, 3
      %p621 = pnand %p619, %p620
      %p622 = pneg %p621
      // Predicated region
      $region9: #{hrformer2d_forward.1} parent=5 // pred_check
        _
      $region10: #{hrformer2d_forward.1} parent=5 // pred_check_branch
        %624 = sbr.rel (%p621) target = $region12
      $region11: #{hrformer2d_forward.1} parent=5 // pred_region
        %s625 = ssub.s32 %s34, 1
        // Predicated region
        $region13: #{hrformer2d_forward.1} parent=11 // pred_check
          %p626 = pneg %p81
        $region14: #{hrformer2d_forward.1} parent=11 // pred_check_branch
          %628 = sbr.rel (%p626) target = $region16
        $region15: #{hrformer2d_forward.1} parent=11 // pred_region
          _
        $region16: #{hrformer2d_forward.1} parent=11 // pred_fallthru
          _
        // Predicated region
        $region17: #{hrformer2d_forward.1} parent=11 // pred_check
          %p629 = pneg %p102
        $region18: #{hrformer2d_forward.1} parent=11 // pred_check_branch
          %631 = sbr.rel (%p629) target = $region20
        $region19: #{hrformer2d_forward.1} parent=11 // pred_region
          _
        $region20: #{hrformer2d_forward.1} parent=11 // pred_fallthru
          _
        // Predicated region
        $region21: #{hrformer2d_forward.1} parent=11 // pred_check
          %p632 = pneg %p123
        $region22: #{hrformer2d_forward.1} parent=11 // pred_check_branch
          %634 = sbr.rel (%p632) target = $region24
        $region23: #{hrformer2d_forward.1} parent=11 // pred_region
          _
        $region24: #{hrformer2d_forward.1} parent=11 // pred_fallthru
          _
        // Predicated region
        $region25: #{hrformer2d_forward.1} parent=11 // pred_check
          %p635 = pneg %p144
        $region26: #{hrformer2d_forward.1} parent=11 // pred_check_branch
          %637 = sbr.rel (%p635) target = $region28
        $region27: #{hrformer2d_forward.1} parent=11 // pred_region
          _
        $region28: #{hrformer2d_forward.1} parent=11 // pred_fallthru
          _
        // Predicated region
        $region29: #{hrformer2d_forward.1} parent=11 // pred_check
          %p638 = pneg %p165
        $region30: #{hrformer2d_forward.1} parent=11 // pred_check_branch
          %640 = sbr.rel (%p638) target = $region32
        $region31: #{hrformer2d_forward.1} parent=11 // pred_region
          _
        $region32: #{hrformer2d_forward.1} parent=11 // pred_fallthru
          _
        // Predicated region
        $region33: #{hrformer2d_forward.1} parent=11 // pred_check
          %p641 = pneg %p186
        $region34: #{hrformer2d_forward.1} parent=11 // pred_check_branch
          %643 = sbr.rel (%p641) target = $region36
        $region35: #{hrformer2d_forward.1} parent=11 // pred_region
          _
        $region36: #{hrformer2d_forward.1} parent=11 // pred_fallthru
          _
        // Predicated region
        $region37: #{hrformer2d_forward.1} parent=11 // pred_check
          %p644 = pneg %p207
        $region38: #{hrformer2d_forward.1} parent=11 // pred_check_branch
          %646 = sbr.rel (%p644) target = $region40
        $region39: #{hrformer2d_forward.1} parent=11 // pred_region
          _
        $region40: #{hrformer2d_forward.1} parent=11 // pred_fallthru
          _
        // Predicated region
        $region41: #{hrformer2d_forward.1} parent=11 // pred_check
          %p647 = pneg %p228
        $region42: #{hrformer2d_forward.1} parent=11 // pred_check_branch
          %649 = sbr.rel (%p647) target = $region44
        $region43: #{hrformer2d_forward.1} parent=11 // pred_region
          %s651 = ssub.s32 16, 16
          %652 = vsyncadd [#allocation3], %s651
          %s654 = sshll.u32 [#allocation2], 4
          %s655 = int_to_ptr.vmem [resolvable:$true] %s654
          %657 = dma.hbm_to_vmem [thread:$0]  %s8, 16, %s655, [#allocation3]
        $region44: #{hrformer2d_forward.1} parent=11 // pred_fallthru
          _
        // Predicated region
        $region45: #{hrformer2d_forward.1} parent=11 // pred_check
          %p658 = pneg %p249
        $region46: #{hrformer2d_forward.1} parent=11 // pred_check_branch
          %660 = sbr.rel (%p658) target = $region48
        $region47: #{hrformer2d_forward.1} parent=11 // pred_region
          _
        $region48: #{hrformer2d_forward.1} parent=11 // pred_fallthru
          _
        // Predicated region
        $region49: #{hrformer2d_forward.1} parent=11 // pred_check
          %p661 = pneg %p270
        $region50: #{hrformer2d_forward.1} parent=11 // pred_check_branch
          %663 = sbr.rel (%p661) target = $region52
        $region51: #{hrformer2d_forward.1} parent=11 // pred_region
          _
        $region52: #{hrformer2d_forward.1} parent=11 // pred_fallthru
          _
        // Predicated region
        $region53: #{hrformer2d_forward.1} parent=11 // pred_check
          %p664 = pneg %p291
        $region54: #{hrformer2d_forward.1} parent=11 // pred_check_branch
          %666 = sbr.rel (%p664) target = $region56
        $region55: #{hrformer2d_forward.1} parent=11 // pred_region
          _
        $region56: #{hrformer2d_forward.1} parent=11 // pred_fallthru
          _
        // Predicated region
        $region57: #{hrformer2d_forward.1} parent=11 // pred_check
          %p667 = pneg %p312
        $region58: #{hrformer2d_forward.1} parent=11 // pred_check_branch
          %669 = sbr.rel (%p667) target = $region60
        $region59: #{hrformer2d_forward.1} parent=11 // pred_region
          _
        $region60: #{hrformer2d_forward.1} parent=11 // pred_fallthru
          _
        // Predicated region
        $region61: #{hrformer2d_forward.1} parent=11 // pred_check
          %p670 = pneg %p333
        $region62: #{hrformer2d_forward.1} parent=11 // pred_check_branch
          %672 = sbr.rel (%p670) target = $region64
        $region63: #{hrformer2d_forward.1} parent=11 // pred_region
          %s674 = ssub.s32 32, 32
          %675 = vsyncadd [#allocation5], %s674
          %s676 = sshll.u32 [#allocation4], 4
          %s677 = int_to_ptr.vmem [resolvable:$true] %s676
          %682 = dma.hbm_to_vmem [thread:$0]  %s13, 32, %s677, [#allocation5], 16, 16, 1
        $region64: #{hrformer2d_forward.1} parent=11 // pred_fallthru
          _
        // Predicated region
        $region65: #{hrformer2d_forward.1} parent=11 // pred_check
          %p683 = pneg %p354
        $region66: #{hrformer2d_forward.1} parent=11 // pred_check_branch
          %685 = sbr.rel (%p683) target = $region68
        $region67: #{hrformer2d_forward.1} parent=11 // pred_region
          _
        $region68: #{hrformer2d_forward.1} parent=11 // pred_fallthru
          _
        // Predicated region
        $region69: #{hrformer2d_forward.1} parent=11 // pred_check
          %p686 = pneg %p375
        $region70: #{hrformer2d_forward.1} parent=11 // pred_check_branch
          %688 = sbr.rel (%p686) target = $region72
        $region71: #{hrformer2d_forward.1} parent=11 // pred_region
          %s690 = ssub.s32 32, 32
          %691 = vsyncadd [#allocation5], %s690
          %s692 = sshll.u32 [#allocation6], 4
          %s693 = int_to_ptr.vmem [resolvable:$true] %s692
          %698 = dma.hbm_to_vmem [thread:$0]  %s15, 32, %s693, [#allocation5], 16, 16, 1
        $region72: #{hrformer2d_forward.1} parent=11 // pred_fallthru
          _
        // Predicated region
        $region73: #{hrformer2d_forward.1} parent=11 // pred_check
          %p699 = pneg %p396
        $region74: #{hrformer2d_forward.1} parent=11 // pred_check_branch
          %701 = sbr.rel (%p699) target = $region76
        $region75: #{hrformer2d_forward.1} parent=11 // pred_region
          _
        $region76: #{hrformer2d_forward.1} parent=11 // pred_fallthru
          _
        // Predicated region
        $region77: #{hrformer2d_forward.1} parent=11 // pred_check
          %p702 = pneg %p417
        $region78: #{hrformer2d_forward.1} parent=11 // pred_check_branch
          %704 = sbr.rel (%p702) target = $region80
        $region79: #{hrformer2d_forward.1} parent=11 // pred_region
          _
        $region80: #{hrformer2d_forward.1} parent=11 // pred_fallthru
          _
        // Predicated region
        $region81: #{hrformer2d_forward.1} parent=11 // pred_check
          %p705 = pneg %p438
        $region82: #{hrformer2d_forward.1} parent=11 // pred_check_branch
          %707 = sbr.rel (%p705) target = $region84
        $region83: #{hrformer2d_forward.1} parent=11 // pred_region
          _
        $region84: #{hrformer2d_forward.1} parent=11 // pred_fallthru
          _
        // Predicated region
        $region85: #{hrformer2d_forward.1} parent=11 // pred_check
          %p708 = pneg %p459
        $region86: #{hrformer2d_forward.1} parent=11 // pred_check_branch
          %710 = sbr.rel (%p708) target = $region88
        $region87: #{hrformer2d_forward.1} parent=11 // pred_region
          _
        $region88: #{hrformer2d_forward.1} parent=11 // pred_fallthru
          _
        // Predicated region
        $region89: #{hrformer2d_forward.1} parent=11 // pred_check
          %p711 = pneg %p480
        $region90: #{hrformer2d_forward.1} parent=11 // pred_check_branch
          %713 = sbr.rel (%p711) target = $region92
        $region91: #{hrformer2d_forward.1} parent=11 // pred_region
          _
        $region92: #{hrformer2d_forward.1} parent=11 // pred_fallthru
          _
        // Predicated region
        $region93: #{hrformer2d_forward.1} parent=11 // pred_check
          %p714 = pneg %p501
        $region94: #{hrformer2d_forward.1} parent=11 // pred_check_branch
          %716 = sbr.rel (%p714) target = $region96
        $region95: #{hrformer2d_forward.1} parent=11 // pred_region
          _
        $region96: #{hrformer2d_forward.1} parent=11 // pred_fallthru
          _
        // Predicated region
        $region97: #{hrformer2d_forward.1} parent=11 // pred_check
          %p717 = pneg %p522
        $region98: #{hrformer2d_forward.1} parent=11 // pred_check_branch
          %719 = sbr.rel (%p717) target = $region100
        $region99: #{hrformer2d_forward.1} parent=11 // pred_region
          _
        $region100: #{hrformer2d_forward.1} parent=11 // pred_fallthru
          _
        // Predicated region
        $region101: #{hrformer2d_forward.1} parent=11 // pred_check
          %p720 = pneg %p543
        $region102: #{hrformer2d_forward.1} parent=11 // pred_check_branch
          %722 = sbr.rel (%p720) target = $region104
        $region103: #{hrformer2d_forward.1} parent=11 // pred_region
          _
        $region104: #{hrformer2d_forward.1} parent=11 // pred_fallthru
          _
        // Predicated region
        $region105: #{hrformer2d_forward.1} parent=11 // pred_check
          %p723 = pneg %p564
        $region106: #{hrformer2d_forward.1} parent=11 // pred_check_branch
          %725 = sbr.rel (%p723) target = $region108
        $region107: #{hrformer2d_forward.1} parent=11 // pred_region
          _
        $region108: #{hrformer2d_forward.1} parent=11 // pred_fallthru
          _
        // Predicated region
        $region109: #{hrformer2d_forward.1} parent=11 // pred_check
          %p726 = pneg %p585
        $region110: #{hrformer2d_forward.1} parent=11 // pred_check_branch
          %728 = sbr.rel (%p726) target = $region112
        $region111: #{hrformer2d_forward.1} parent=11 // pred_region
          _
        $region112: #{hrformer2d_forward.1} parent=11 // pred_fallthru
          _
      $region12: #{hrformer2d_forward.1} parent=5 // pred_fallthru
        _
      %p729 = scmp.lt.s32.totalorder %s34, 2
      // Predicated region
      $region113: #{hrformer2d_forward.1} parent=5 // pred_check
        %p730 = pneg %p729
      $region114: #{hrformer2d_forward.1} parent=5 // pred_check_branch
        %732 = sbr.rel (%p730) target = $region116
      $region115: #{hrformer2d_forward.1} parent=5 // pred_region
        // Predicated region
        $region117: #{hrformer2d_forward.1} parent=115 // pred_check
          %p733 = pneg %p54
        $region118: #{hrformer2d_forward.1} parent=115 // pred_check_branch
          %735 = sbr.rel (%p733) target = $region120
        $region119: #{hrformer2d_forward.1} parent=115 // pred_region
          %p736 = scmp.lt.s32.totalorder %s34, 1
          %s737 = scalar_select %p736, %s34, 1
          %s738 = smul.addr %s737, 32
          %s739 = smul.addr %s738, 8
          %s740 = scalar_lea.vmem %s0, %s739
        $region120: #{hrformer2d_forward.1} parent=115 // pred_fallthru
          _
      $region116: #{hrformer2d_forward.1} parent=5 // pred_fallthru
        _
      %p741 = scmp.le.s32.totalorder 1, %s34
      %p742 = scmp.lt.s32.totalorder %s34, 3
      %p743 = pnand %p741, %p742
      %p744 = pneg %p743
      // Predicated region
      $region121: #{hrformer2d_forward.1} parent=5 // pred_check
        _
      $region122: #{hrformer2d_forward.1} parent=5 // pred_check_branch
        %746 = sbr.rel (%p743) target = $region124
      $region123: #{hrformer2d_forward.1} parent=5 // pred_region
        %s747 = ssub.s32 %s34, 1
        // Predicated region
        $region125: #{hrformer2d_forward.1} parent=123 // pred_check
          %p748 = pneg %p228
        $region126: #{hrformer2d_forward.1} parent=123 // pred_check_branch
          %750 = sbr.rel (%p748) target = $region128
        $region127: #{hrformer2d_forward.1} parent=123 // pred_region
          %751 = dma.done [#allocation3], 16
        $region128: #{hrformer2d_forward.1} parent=123 // pred_fallthru
          _
        // Predicated region
        $region129: #{hrformer2d_forward.1} parent=123 // pred_check
          %p752 = pneg %p333
        $region130: #{hrformer2d_forward.1} parent=123 // pred_check_branch
          %754 = sbr.rel (%p752) target = $region132
        $region131: #{hrformer2d_forward.1} parent=123 // pred_region
          %755 = dma.done [#allocation5], 32
        $region132: #{hrformer2d_forward.1} parent=123 // pred_fallthru
          _
        // Predicated region
        $region133: #{hrformer2d_forward.1} parent=123 // pred_check
          %p756 = pneg %p375
        $region134: #{hrformer2d_forward.1} parent=123 // pred_check_branch
          %758 = sbr.rel (%p756) target = $region136
        $region135: #{hrformer2d_forward.1} parent=123 // pred_region
          %759 = dma.done [#allocation5], 32
        $region136: #{hrformer2d_forward.1} parent=123 // pred_fallthru
          _
        %p760 = scmp.lt.s32.totalorder %s39, 1
        %s761 = scalar_select %p760, %s39, 1
        %s762 = smul.addr %s761, 32
        %s763 = smul.addr %s762, 8
        %s764 = scalar_lea.vmem %s0, %s763
        %p765 = pneg %p60
        %p766 = pneg %p57
        %p767 = pneg %p81
        %p768 = pneg %p78
        %p769 = pneg %p102
        %p770 = pneg %p99
        %p771 = pneg %p123
        %p772 = pneg %p120
        %p773 = pneg %p144
        %p774 = pneg %p141
        %p775 = pneg %p165
        %p776 = pneg %p162
        %p777 = pneg %p186
        %p778 = pneg %p183
        %p779 = pneg %p207
        %p780 = pneg %p204
        %p781 = pneg %p228
        %p782 = pneg %p225
        %p783 = pneg %p249
        %p784 = pneg %p246
        %p785 = pneg %p270
        %p786 = pneg %p267
        %p787 = pneg %p291
        %p788 = pneg %p288
        %p789 = pneg %p312
        %p790 = pneg %p309
        %p791 = pneg %p333
        %p792 = pneg %p330
        %p793 = pneg %p354
        %p794 = pneg %p351
        %p795 = pneg %p375
        %p796 = pneg %p372
        %p797 = pneg %p396
        %p798 = pneg %p393
        %p799 = pneg %p417
        %p800 = pneg %p414
        %p801 = pneg %p438
        %p802 = pneg %p435
        %p803 = pneg %p459
        %p804 = pneg %p456
        %p805 = pneg %p480
        %p806 = pneg %p477
        %p807 = pneg %p501
        %p808 = pneg %p498
        %p809 = pneg %p522
        %p810 = pneg %p519
        %p811 = pneg %p543
        %p812 = pneg %p540
        %p813 = pneg %p564
        %p814 = pneg %p561
        %p815 = pneg %p585
        %p816 = pneg %p582
        %p817 = pneg %p611
        %p818 = pneg %p608
        %p819 = scmp.lt.s32.totalorder %s39, 1
        %s820 = scalar_select %p819, %s39, 1
        %s821 = smul.addr %s820, 2
        %s822 = smul.addr %s821, 4
        %s823 = scalar_lea.vmem %s26, %s822
        %p824 = scmp.lt.s32.totalorder %s39, 1
        %s825 = scalar_select %p824, %s39, 1
        %s826 = smul.addr %s825, 32
        %s827 = smul.addr %s826, 8
        %s828 = scalar_lea.vmem %s0, %s827
        %p829 = scmp.lt.s32.totalorder %s39, 1
        %s830 = scalar_select %p829, %s39, 1
        %s831 = smul.addr %s830, 2
        %s832 = smul.addr %s831, 4
        %s833 = scalar_lea.vmem %s26, %s832
        %v834 = vld [vmem:[%s828] sm:$0xff]
        %v835 = vld [vmem:[%s828 + $0x8] sm:$0xff]
        %v836 = vld [vmem:[%s828 + $0x10] sm:$0xff]
        %v837 = vld [vmem:[%s828 + $0x18] sm:$0xff]
        %v838 = vld [vmem:[%s828 + $0x20] sm:$0xff]
        %v839 = vld [vmem:[%s828 + $0x28] sm:$0xff]
        %v840 = vld [vmem:[%s828 + $0x30] sm:$0xff]
        %v841 = vld [vmem:[%s828 + $0x38] sm:$0xff]
        %v842 = vld [vmem:[%s828 + $0x40] sm:$0xff]
        %v843 = vld [vmem:[%s828 + $0x48] sm:$0xff]
        %v844 = vld [vmem:[%s828 + $0x50] sm:$0xff]
        %v845 = vld [vmem:[%s828 + $0x58] sm:$0xff]
        %v846 = vld [vmem:[%s828 + $0x60] sm:$0xff]
        %v847 = vld [vmem:[%s828 + $0x68] sm:$0xff]
        %v848 = vld [vmem:[%s828 + $0x70] sm:$0xff]
        %v849 = vld [vmem:[%s828 + $0x78] sm:$0xff]
        %v850 = vld [vmem:[%s828 + $0x80] sm:$0xff]
        %v851 = vld [vmem:[%s828 + $0x88] sm:$0xff]
        %v852 = vld [vmem:[%s828 + $0x90] sm:$0xff]
        %v853 = vld [vmem:[%s828 + $0x98] sm:$0xff]
        %v854 = vld [vmem:[%s828 + $0xa0] sm:$0xff]
        %v855 = vld [vmem:[%s828 + $0xa8] sm:$0xff]
        %v856 = vld [vmem:[%s828 + $0xb0] sm:$0xff]
        %v857 = vld [vmem:[%s828 + $0xb8] sm:$0xff]
        %v858 = vld [vmem:[%s828 + $0xc0] sm:$0xff]
        %v859 = vld [vmem:[%s828 + $0xc8] sm:$0xff]
        %v860 = vld [vmem:[%s828 + $0xd0] sm:$0xff]
        %v861 = vld [vmem:[%s828 + $0xd8] sm:$0xff]
        %v862 = vld [vmem:[%s828 + $0xe0] sm:$0xff]
        %v863 = vld [vmem:[%s828 + $0xe8] sm:$0xff]
        %v864 = vld [vmem:[%s828 + $0xf0] sm:$0xff]
        %v865 = vld [vmem:[%s828 + $0xf8] sm:$0xff]
        %v866 = vld [vmem:[%s3] sm:$0xff]
        %v867 = vld [vmem:[%s4] sm:$0x1]
        %v869 = vlaneseq
        %v870 = vshrl.u32 %v869, 7
        %v871 = vsub.s32 0, %v870
        %v872 = vrot.slane %v867, %v871
        %vm874 = vcmask 64512
        %v876 = vsel %vm874, %v834, 0
        %v879 = vsel %vm874, %v835, 0
        %v882 = vsel %vm874, %v836, 0
        %v885 = vsel %vm874, %v837, 0
        %v888 = vsel %vm874, %v838, 0
        %v891 = vsel %vm874, %v839, 0
        %v894 = vsel %vm874, %v840, 0
        %v897 = vsel %vm874, %v841, 0
        %v900 = vsel %vm874, %v842, 0
        %v903 = vsel %vm874, %v843, 0
        %v906 = vsel %vm874, %v844, 0
        %v909 = vsel %vm874, %v845, 0
        %v912 = vsel %vm874, %v846, 0
        %v915 = vsel %vm874, %v847, 0
        %v918 = vsel %vm874, %v848, 0
        %v921 = vsel %vm874, %v849, 0
        %v924 = vsel %vm874, %v850, 0
        %v927 = vsel %vm874, %v851, 0
        %v930 = vsel %vm874, %v852, 0
        %v933 = vsel %vm874, %v853, 0
        %v936 = vsel %vm874, %v854, 0
        %v939 = vsel %vm874, %v855, 0
        %v942 = vsel %vm874, %v856, 0
        %v945 = vsel %vm874, %v857, 0
        %v948 = vsel %vm874, %v858, 0
        %v951 = vsel %vm874, %v859, 0
        %v954 = vsel %vm874, %v860, 0
        %v957 = vsel %vm874, %v861, 0
        %v960 = vsel %vm874, %v862, 0
        %v963 = vsel %vm874, %v863, 0
        %v966 = vsel %vm874, %v864, 0
        %v969 = vsel %vm874, %v865, 0
        %971 = vmatprep.subr.mxu0 0.0
        %972 = vmatpush1.msra.mxu0 %v866
        %973 = vmatprep.subr.mxu0 0.0
        %974 = vmatpush1.msra.mxu0 0.0
        %975 = vmatprep.subr.mxu0 0.0
        %976 = vmatpush1.msra.mxu0 0.0
        %977 = vmatprep.subr.mxu0 0.0
        %978 = vmatpush1.msra.mxu0 0.0
        %979 = vmatprep.subr.mxu0 0.0
        %980 = vmatpush1.msra.mxu0 0.0
        %981 = vmatprep.subr.mxu0 0.0
        %982 = vmatpush1.msra.mxu0 0.0
        %983 = vmatprep.subr.mxu0 0.0
        %984 = vmatpush1.msra.mxu0 0.0
        %985 = vmatprep.subr.mxu0 0.0
        %986 = vmatpush1.msra.mxu0 0.0
        %987 = vmatprep.subr.mxu0 0.0
        %988 = vmatpush1.msra.mxu0 0.0
        %989 = vmatprep.subr.mxu0 0.0
        %990 = vmatpush1.msra.mxu0 0.0
        %991 = vmatprep.subr.mxu0 0.0
        %992 = vmatpush1.msra.mxu0 0.0
        %993 = vmatprep.subr.mxu0 0.0
        %994 = vmatpush1.msra.mxu0 0.0
        %995 = vmatprep.subr.mxu0 0.0
        %996 = vmatpush1.msra.mxu0 0.0
        %997 = vmatprep.subr.mxu0 0.0
        %998 = vmatpush1.msra.mxu0 0.0
        %999 = vmatprep.subr.mxu0 0.0
        %1000 = vmatpush1.msra.mxu0 0.0
        %1001 = vmatprep.subr.mxu0 0.0
        %1002 = vmatpush1.msra.mxu0 0.0
        %1003 = vmatprep.subr.mxu0 0.0
        %1004 = vmatpush1.msra.mxu0 0.0
        %1005 = vmatprep.subr.mxu0 0.0
        %1006 = vmatpush1.msra.mxu0 0.0
        %1007 = vmatprep.subr.mxu0 0.0
        %1008 = vmatpush1.msra.mxu0 0.0
        %1009 = vmatprep.subr.mxu0 0.0
        %1010 = vmatpush1.msra.mxu0 0.0
        %1011 = vmatprep.subr.mxu0 0.0
        %1012 = vmatpush1.msra.mxu0 0.0
        %1013 = vmatprep.subr.mxu0 0.0
        %1014 = vmatpush1.msra.mxu0 0.0
        %1015 = vmatprep.subr.mxu0 0.0
        %1016 = vmatpush1.msra.mxu0 0.0
        %1017 = vmatprep.subr.mxu0 0.0
        %1018 = vmatpush1.msra.mxu0 0.0
        %1019 = vmatprep.subr.mxu0 0.0
        %1020 = vmatpush1.msra.mxu0 0.0
        %1021 = vmatprep.subr.mxu0 0.0
        %1022 = vmatpush1.msra.mxu0 0.0
        %1023 = vmatprep.subr.mxu0 0.0
        %1024 = vmatpush1.msra.mxu0 0.0
        %1025 = vmatprep.subr.mxu0 0.0
        %1026 = vmatpush1.msra.mxu0 0.0
        %1027 = vmatprep.subr.mxu0 0.0
        %1028 = vmatpush1.msra.mxu0 0.0
        %1029 = vmatprep.subr.mxu0 0.0
        %1030 = vmatpush1.msra.mxu0 0.0
        %1031 = vmatprep.subr.mxu0 0.0
        %1032 = vmatpush1.msra.mxu0 0.0
        %1033 = vmatprep.subr.mxu0 0.0
        %1034 = vmatpush1.msra.mxu0 0.0
        %1035 = vmatprep.mubr.f32.mxu0 0.0
        %1036 = vmatmul.mubr.f32.gmra.mrb[0].mxu0 %v876
        %v1037 = vpop.f32.mrb[0].mxu0
        %v1038 = vadd.f32 %v872, %v1037
        %v1039 = vpop.f32.mrb[0].mxu0
        %1040 = vmatprep.mubr.f32.mxu0 0.0
        %1041 = vmatmul.mubr.f32.gmra.mrb[0].mxu0 %v879
        %v1042 = vpop.f32.mrb[0].mxu0
        %v1043 = vadd.f32 %v872, %v1042
        %v1044 = vpop.f32.mrb[0].mxu0
        %1045 = vmatprep.mubr.f32.mxu0 0.0
        %1046 = vmatmul.mubr.f32.gmra.mrb[0].mxu0 %v882
        %v1047 = vpop.f32.mrb[0].mxu0
        %v1048 = vadd.f32 %v872, %v1047
        %v1049 = vpop.f32.mrb[0].mxu0
        %1050 = vmatprep.mubr.f32.mxu0 0.0
        %1051 = vmatmul.mubr.f32.gmra.mrb[0].mxu0 %v885
        %v1052 = vpop.f32.mrb[0].mxu0
        %v1053 = vadd.f32 %v872, %v1052
        %v1054 = vpop.f32.mrb[0].mxu0
        %1055 = vmatprep.mubr.f32.mxu0 0.0
        %1056 = vmatmul.mubr.f32.gmra.mrb[0].mxu0 %v888
        %v1057 = vpop.f32.mrb[0].mxu0
        %v1058 = vadd.f32 %v872, %v1057
        %v1059 = vpop.f32.mrb[0].mxu0
        %1060 = vmatprep.mubr.f32.mxu0 0.0
        %1061 = vmatmul.mubr.f32.gmra.mrb[0].mxu0 %v891
        %v1062 = vpop.f32.mrb[0].mxu0
        %v1063 = vadd.f32 %v872, %v1062
        %v1064 = vpop.f32.mrb[0].mxu0
        %1065 = vmatprep.mubr.f32.mxu0 0.0
        %1066 = vmatmul.mubr.f32.gmra.mrb[0].mxu0 %v894
        %v1067 = vpop.f32.mrb[0].mxu0
        %v1068 = vadd.f32 %v872, %v1067
        %v1069 = vpop.f32.mrb[0].mxu0
        %1070 = vmatprep.mubr.f32.mxu0 0.0
        %1071 = vmatmul.mubr.f32.gmra.mrb[0].mxu0 %v897
        %v1072 = vpop.f32.mrb[0].mxu0
        %v1073 = vadd.f32 %v872, %v1072
        %v1074 = vpop.f32.mrb[0].mxu0
        %1075 = vmatprep.mubr.f32.mxu0 0.0
        %1076 = vmatmul.mubr.f32.gmra.mrb[0].mxu0 %v900
        %v1077 = vpop.f32.mrb[0].mxu0
        %v1078 = vadd.f32 %v872, %v1077
        %v1079 = vpop.f32.mrb[0].mxu0
        %1080 = vmatprep.mubr.f32.mxu0 0.0
        %1081 = vmatmul.mubr.f32.gmra.mrb[0].mxu0 %v903
        %v1082 = vpop.f32.mrb[0].mxu0
        %v1083 = vadd.f32 %v872, %v1082
        %v1084 = vpop.f32.mrb[0].mxu0
        %1085 = vmatprep.mubr.f32.mxu0 0.0
        %1086 = vmatmul.mubr.f32.gmra.mrb[0].mxu0 %v906
        %v1087 = vpop.f32.mrb[0].mxu0
        %v1088 = vadd.f32 %v872, %v1087
        %v1089 = vpop.f32.mrb[0].mxu0
        %1090 = vmatprep.mubr.f32.mxu0 0.0
        %1091 = vmatmul.mubr.f32.gmra.mrb[0].mxu0 %v909
        %v1092 = vpop.f32.mrb[0].mxu0
        %v1093 = vadd.f32 %v872, %v1092
        %v1094 = vpop.f32.mrb[0].mxu0
        %1095 = vmatprep.mubr.f32.mxu0 0.0
        %1096 = vmatmul.mubr.f32.gmra.mrb[0].mxu0 %v912
        %v1097 = vpop.f32.mrb[0].mxu0
        %v1098 = vadd.f32 %v872, %v1097
        %v1099 = vpop.f32.mrb[0].mxu0
        %1100 = vmatprep.mubr.f32.mxu0 0.0
        %1101 = vmatmul.mubr.f32.gmra.mrb[0].mxu0 %v915
        %v1102 = vpop.f32.mrb[0].mxu0
        %v1103 = vadd.f32 %v872, %v1102
        %v1104 = vpop.f32.mrb[0].mxu0
        %1105 = vmatprep.mubr.f32.mxu0 0.0
        %1106 = vmatmul.mubr.f32.gmra.mrb[0].mxu0 %v918
        %v1107 = vpop.f32.mrb[0].mxu0
        %v1108 = vadd.f32 %v872, %v1107
        %v1109 = vpop.f32.mrb[0].mxu0
        %1110 = vmatprep.mubr.f32.mxu0 0.0
        %1111 = vmatmul.mubr.f32.gmra.mrb[0].mxu0 %v921
        %v1112 = vpop.f32.mrb[0].mxu0
        %v1113 = vadd.f32 %v872, %v1112
        %v1114 = vpop.f32.mrb[0].mxu0
        %1115 = vmatprep.mubr.f32.mxu0 0.0
        %1116 = vmatmul.mubr.f32.gmra.mrb[0].mxu0 %v924
        %v1117 = vpop.f32.mrb[0].mxu0
        %v1118 = vadd.f32 %v872, %v1117
        %v1119 = vpop.f32.mrb[0].mxu0
        %1120 = vmatprep.mubr.f32.mxu0 0.0
        %1121 = vmatmul.mubr.f32.gmra.mrb[0].mxu0 %v927
        %v1122 = vpop.f32.mrb[0].mxu0
        %v1123 = vadd.f32 %v872, %v1122
        %v1124 = vpop.f32.mrb[0].mxu0
        %1125 = vmatprep.mubr.f32.mxu0 0.0
        %1126 = vmatmul.mubr.f32.gmra.mrb[0].mxu0 %v930
        %v1127 = vpop.f32.mrb[0].mxu0
        %v1128 = vadd.f32 %v872, %v1127
        %v1129 = vpop.f32.mrb[0].mxu0
        %1130 = vmatprep.mubr.f32.mxu0 0.0
        %1131 = vmatmul.mubr.f32.gmra.mrb[0].mxu0 %v933
        %v1132 = vpop.f32.mrb[0].mxu0
        %v1133 = vadd.f32 %v872, %v1132
        %v1134 = vpop.f32.mrb[0].mxu0
        %1135 = vmatprep.mubr.f32.mxu0 0.0
        %1136 = vmatmul.mubr.f32.gmra.mrb[0].mxu0 %v936
        %v1137 = vpop.f32.mrb[0].mxu0
        %v1138 = vadd.f32 %v872, %v1137
        %v1139 = vpop.f32.mrb[0].mxu0
        %1140 = vmatprep.mubr.f32.mxu0 0.0
        %1141 = vmatmul.mubr.f32.gmra.mrb[0].mxu0 %v939
        %v1142 = vpop.f32.mrb[0].mxu0
        %v1143 = vadd.f32 %v872, %v1142
        %v1144 = vpop.f32.mrb[0].mxu0
        %1145 = vmatprep.mubr.f32.mxu0 0.0
        %1146 = vmatmul.mubr.f32.gmra.mrb[0].mxu0 %v942
        %v1147 = vpop.f32.mrb[0].mxu0
        %v1148 = vadd.f32 %v872, %v1147
        %v1149 = vpop.f32.mrb[0].mxu0
        %1150 = vmatprep.mubr.f32.mxu0 0.0
        %1151 = vmatmul.mubr.f32.gmra.mrb[0].mxu0 %v945
        %v1152 = vpop.f32.mrb[0].mxu0
        %v1153 = vadd.f32 %v872, %v1152
        %v1154 = vpop.f32.mrb[0].mxu0
        %1155 = vmatprep.mubr.f32.mxu0 0.0
        %1156 = vmatmul.mubr.f32.gmra.mrb[0].mxu0 %v948
        %v1157 = vpop.f32.mrb[0].mxu0
        %v1158 = vadd.f32 %v872, %v1157
        %v1159 = vpop.f32.mrb[0].mxu0
        %1160 = vmatprep.mubr.f32.mxu0 0.0
        %1161 = vmatmul.mubr.f32.gmra.mrb[0].mxu0 %v951
        %v1162 = vpop.f32.mrb[0].mxu0
        %v1163 = vadd.f32 %v872, %v1162
        %v1164 = vpop.f32.mrb[0].mxu0
        %1165 = vmatprep.mubr.f32.mxu0 0.0
        %1166 = vmatmul.mubr.f32.gmra.mrb[0].mxu0 %v954
        %v1167 = vpop.f32.mrb[0].mxu0
        %v1168 = vadd.f32 %v872, %v1167
        %v1169 = vpop.f32.mrb[0].mxu0
        %1170 = vmatprep.mubr.f32.mxu0 0.0
        %1171 = vmatmul.mubr.f32.gmra.mrb[0].mxu0 %v957
        %v1172 = vpop.f32.mrb[0].mxu0
        %v1173 = vadd.f32 %v872, %v1172
        %v1174 = vpop.f32.mrb[0].mxu0
        %1175 = vmatprep.mubr.f32.mxu0 0.0
        %1176 = vmatmul.mubr.f32.gmra.mrb[0].mxu0 %v960
        %v1177 = vpop.f32.mrb[0].mxu0
        %v1178 = vadd.f32 %v872, %v1177
        %v1179 = vpop.f32.mrb[0].mxu0
        %1180 = vmatprep.mubr.f32.mxu0 0.0
        %1181 = vmatmul.mubr.f32.gmra.mrb[0].mxu0 %v963
        %v1182 = vpop.f32.mrb[0].mxu0
        %v1183 = vadd.f32 %v872, %v1182
        %v1184 = vpop.f32.mrb[0].mxu0
        %1185 = vmatprep.mubr.f32.mxu0 0.0
        %1186 = vmatmul.mubr.f32.gmra.mrb[0].mxu0 %v966
        %v1187 = vpop.f32.mrb[0].mxu0
        %v1188 = vadd.f32 %v872, %v1187
        %v1189 = vpop.f32.mrb[0].mxu0
        %1190 = vmatprep.mubr.f32.mxu0 0.0
        %1191 = vmatmul.mubr.f32.gmra.mrb[0].mxu0 %v969
        %v1192 = vpop.f32.mrb[0].mxu0
        %v1193 = vadd.f32 %v872, %v1192
        %v1194 = vpop.f32.mrb[0].mxu0
        %1195 = vdwg.mxu0
        %v1196 = vmax.f32 %v1038, 0.0
        %v1197 = vmax.f32 %v1043, 0.0
        %v1198 = vmax.f32 %v1048, 0.0
        %v1199 = vmax.f32 %v1053, 0.0
        %v1200 = vmax.f32 %v1058, 0.0
        %v1201 = vmax.f32 %v1063, 0.0
        %v1202 = vmax.f32 %v1068, 0.0
        %v1203 = vmax.f32 %v1073, 0.0
        %v1204 = vmax.f32 %v1078, 0.0
        %v1205 = vmax.f32 %v1083, 0.0
        %v1206 = vmax.f32 %v1088, 0.0
        %v1207 = vmax.f32 %v1093, 0.0
        %v1208 = vmax.f32 %v1098, 0.0
        %v1209 = vmax.f32 %v1103, 0.0
        %v1210 = vmax.f32 %v1108, 0.0
        %v1211 = vmax.f32 %v1113, 0.0
        %v1212 = vmax.f32 %v1118, 0.0
        %v1213 = vmax.f32 %v1123, 0.0
        %v1214 = vmax.f32 %v1128, 0.0
        %v1215 = vmax.f32 %v1133, 0.0
        %v1216 = vmax.f32 %v1138, 0.0
        %v1217 = vmax.f32 %v1143, 0.0
        %v1218 = vmax.f32 %v1148, 0.0
        %v1219 = vmax.f32 %v1153, 0.0
        %v1220 = vmax.f32 %v1158, 0.0
        %v1221 = vmax.f32 %v1163, 0.0
        %v1222 = vmax.f32 %v1168, 0.0
        %v1223 = vmax.f32 %v1173, 0.0
        %v1224 = vmax.f32 %v1178, 0.0
        %v1225 = vmax.f32 %v1183, 0.0
        %v1226 = vmax.f32 %v1188, 0.0
        %v1227 = vmax.f32 %v1193, 0.0
        %v1228 = vlaneseq
        %v1229 = vshrl.u32 %v1228, 7
        %v1230 = vadd.s32 %v1229, 8
        %v1231 = vadd.s32 %v1229, 16
        %v1232 = vadd.s32 %v1229, 24
        %v1233 = vadd.s32 %v1229, 32
        %v1234 = vadd.s32 %v1229, 40
        %v1235 = vadd.s32 %v1229, 48
        %v1236 = vadd.s32 %v1229, 56
        %v1237 = vadd.s32 %v1229, 64
        %v1238 = vadd.s32 %v1229, 72
        %v1239 = vadd.s32 %v1229, 80
        %v1240 = vadd.s32 %v1229, 88
        %v1241 = vadd.s32 %v1229, 96
        %v1242 = vadd.s32 %v1229, 104
        %v1243 = vadd.s32 %v1229, 112
        %v1244 = vadd.s32 %v1229, 120
        %v1245 = vadd.s32 %v1229, 128
        %v1246 = vadd.s32 %v1229, 136
        %v1247 = vadd.s32 %v1229, 144
        %v1248 = vadd.s32 %v1229, 152
        %v1249 = vadd.s32 %v1229, 160
        %v1250 = vadd.s32 %v1229, 168
        %v1251 = vadd.s32 %v1229, 176
        %v1252 = vadd.s32 %v1229, 184
        %v1253 = vadd.s32 %v1229, 192
        %v1254 = vadd.s32 %v1229, 200
        %v1255 = vadd.s32 %v1229, 208
        %v1256 = vadd.s32 %v1229, 216
        %v1257 = vadd.s32 %v1229, 224
        %v1258 = vadd.s32 %v1229, 232
        %v1259 = vadd.s32 %v1229, 240
        %v1260 = vadd.s32 %v1229, 248
        %vm1261 = vcmp.lt.s32.totalorder %v1229, 0
        %v1262 = vsub.s32 0, %v1229
        %v1263 = vsel %vm1261, %v1262, %v1229
        %v1264 = vshrl.u32 %v1263, 4
        %v1265 = vand.u32 %v1263, 15
        %v1266 = vsub.s32 0, %v1265
        %v1267 = vsel %vm1261, %v1266, %v1265
        %vm1268 = vcmp.lt.s32.totalorder %v1230, 0
        %v1269 = vsub.s32 0, %v1230
        %v1270 = vsel %vm1268, %v1269, %v1230
        %v1271 = vshrl.u32 %v1270, 4
        %v1272 = vand.u32 %v1270, 15
        %v1273 = vsub.s32 0, %v1272
        %v1274 = vsel %vm1268, %v1273, %v1272
        %vm1275 = vcmp.lt.s32.totalorder %v1231, 0
        %v1276 = vsub.s32 0, %v1231
        %v1277 = vsel %vm1275, %v1276, %v1231
        %v1278 = vshrl.u32 %v1277, 4
        %v1279 = vand.u32 %v1277, 15
        %v1280 = vsub.s32 0, %v1279
        %v1281 = vsel %vm1275, %v1280, %v1279
        %vm1282 = vcmp.lt.s32.totalorder %v1232, 0
        %v1283 = vsub.s32 0, %v1232
        %v1284 = vsel %vm1282, %v1283, %v1232
        %v1285 = vshrl.u32 %v1284, 4
        %v1286 = vand.u32 %v1284, 15
        %v1287 = vsub.s32 0, %v1286
        %v1288 = vsel %vm1282, %v1287, %v1286
        %vm1289 = vcmp.lt.s32.totalorder %v1233, 0
        %v1290 = vsub.s32 0, %v1233
        %v1291 = vsel %vm1289, %v1290, %v1233
        %v1292 = vshrl.u32 %v1291, 4
        %v1293 = vand.u32 %v1291, 15
        %v1294 = vsub.s32 0, %v1293
        %v1295 = vsel %vm1289, %v1294, %v1293
        %vm1296 = vcmp.lt.s32.totalorder %v1234, 0
        %v1297 = vsub.s32 0, %v1234
        %v1298 = vsel %vm1296, %v1297, %v1234
        %v1299 = vshrl.u32 %v1298, 4
        %v1300 = vand.u32 %v1298, 15
        %v1301 = vsub.s32 0, %v1300
        %v1302 = vsel %vm1296, %v1301, %v1300
        %vm1303 = vcmp.lt.s32.totalorder %v1235, 0
        %v1304 = vsub.s32 0, %v1235
        %v1305 = vsel %vm1303, %v1304, %v1235
        %v1306 = vshrl.u32 %v1305, 4
        %v1307 = vand.u32 %v1305, 15
        %v1308 = vsub.s32 0, %v1307
        %v1309 = vsel %vm1303, %v1308, %v1307
        %vm1310 = vcmp.lt.s32.totalorder %v1236, 0
        %v1311 = vsub.s32 0, %v1236
        %v1312 = vsel %vm1310, %v1311, %v1236
        %v1313 = vshrl.u32 %v1312, 4
        %v1314 = vand.u32 %v1312, 15
        %v1315 = vsub.s32 0, %v1314
        %v1316 = vsel %vm1310, %v1315, %v1314
        %vm1317 = vcmp.lt.s32.totalorder %v1237, 0
        %v1318 = vsub.s32 0, %v1237
        %v1319 = vsel %vm1317, %v1318, %v1237
        %v1320 = vshrl.u32 %v1319, 4
        %v1321 = vand.u32 %v1319, 15
        %v1322 = vsub.s32 0, %v1321
        %v1323 = vsel %vm1317, %v1322, %v1321
        %vm1324 = vcmp.lt.s32.totalorder %v1238, 0
        %v1325 = vsub.s32 0, %v1238
        %v1326 = vsel %vm1324, %v1325, %v1238
        %v1327 = vshrl.u32 %v1326, 4
        %v1328 = vand.u32 %v1326, 15
        %v1329 = vsub.s32 0, %v1328
        %v1330 = vsel %vm1324, %v1329, %v1328
        %vm1331 = vcmp.lt.s32.totalorder %v1239, 0
        %v1332 = vsub.s32 0, %v1239
        %v1333 = vsel %vm1331, %v1332, %v1239
        %v1334 = vshrl.u32 %v1333, 4
        %v1335 = vand.u32 %v1333, 15
        %v1336 = vsub.s32 0, %v1335
        %v1337 = vsel %vm1331, %v1336, %v1335
        %vm1338 = vcmp.lt.s32.totalorder %v1240, 0
        %v1339 = vsub.s32 0, %v1240
        %v1340 = vsel %vm1338, %v1339, %v1240
        %v1341 = vshrl.u32 %v1340, 4
        %v1342 = vand.u32 %v1340, 15
        %v1343 = vsub.s32 0, %v1342
        %v1344 = vsel %vm1338, %v1343, %v1342
        %vm1345 = vcmp.lt.s32.totalorder %v1241, 0
        %v1346 = vsub.s32 0, %v1241
        %v1347 = vsel %vm1345, %v1346, %v1241
        %v1348 = vshrl.u32 %v1347, 4
        %v1349 = vand.u32 %v1347, 15
        %v1350 = vsub.s32 0, %v1349
        %v1351 = vsel %vm1345, %v1350, %v1349
        %vm1352 = vcmp.lt.s32.totalorder %v1242, 0
        %v1353 = vsub.s32 0, %v1242
        %v1354 = vsel %vm1352, %v1353, %v1242
        %v1355 = vshrl.u32 %v1354, 4
        %v1356 = vand.u32 %v1354, 15
        %v1357 = vsub.s32 0, %v1356
        %v1358 = vsel %vm1352, %v1357, %v1356
        %vm1359 = vcmp.lt.s32.totalorder %v1243, 0
        %v1360 = vsub.s32 0, %v1243
        %v1361 = vsel %vm1359, %v1360, %v1243
        %v1362 = vshrl.u32 %v1361, 4
        %v1363 = vand.u32 %v1361, 15
        %v1364 = vsub.s32 0, %v1363
        %v1365 = vsel %vm1359, %v1364, %v1363
        %vm1366 = vcmp.lt.s32.totalorder %v1244, 0
        %v1367 = vsub.s32 0, %v1244
        %v1368 = vsel %vm1366, %v1367, %v1244
        %v1369 = vshrl.u32 %v1368, 4
        %v1370 = vand.u32 %v1368, 15
        %v1371 = vsub.s32 0, %v1370
        %v1372 = vsel %vm1366, %v1371, %v1370
        %vm1373 = vcmp.lt.s32.totalorder %v1245, 0
        %v1374 = vsub.s32 0, %v1245
        %v1375 = vsel %vm1373, %v1374, %v1245
        %v1376 = vshrl.u32 %v1375, 4
        %v1377 = vand.u32 %v1375, 15
        %v1378 = vsub.s32 0, %v1377
        %v1379 = vsel %vm1373, %v1378, %v1377
        %vm1380 = vcmp.lt.s32.totalorder %v1246, 0
        %v1381 = vsub.s32 0, %v1246
        %v1382 = vsel %vm1380, %v1381, %v1246
        %v1383 = vshrl.u32 %v1382, 4
        %v1384 = vand.u32 %v1382, 15
        %v1385 = vsub.s32 0, %v1384
        %v1386 = vsel %vm1380, %v1385, %v1384
        %vm1387 = vcmp.lt.s32.totalorder %v1247, 0
        %v1388 = vsub.s32 0, %v1247
        %v1389 = vsel %vm1387, %v1388, %v1247
        %v1390 = vshrl.u32 %v1389, 4
        %v1391 = vand.u32 %v1389, 15
        %v1392 = vsub.s32 0, %v1391
        %v1393 = vsel %vm1387, %v1392, %v1391
        %vm1394 = vcmp.lt.s32.totalorder %v1248, 0
        %v1395 = vsub.s32 0, %v1248
        %v1396 = vsel %vm1394, %v1395, %v1248
        %v1397 = vshrl.u32 %v1396, 4
        %v1398 = vand.u32 %v1396, 15
        %v1399 = vsub.s32 0, %v1398
        %v1400 = vsel %vm1394, %v1399, %v1398
        %vm1401 = vcmp.lt.s32.totalorder %v1249, 0
        %v1402 = vsub.s32 0, %v1249
        %v1403 = vsel %vm1401, %v1402, %v1249
        %v1404 = vshrl.u32 %v1403, 4
        %v1405 = vand.u32 %v1403, 15
        %v1406 = vsub.s32 0, %v1405
        %v1407 = vsel %vm1401, %v1406, %v1405
        %vm1408 = vcmp.lt.s32.totalorder %v1250, 0
        %v1409 = vsub.s32 0, %v1250
        %v1410 = vsel %vm1408, %v1409, %v1250
        %v1411 = vshrl.u32 %v1410, 4
        %v1412 = vand.u32 %v1410, 15
        %v1413 = vsub.s32 0, %v1412
        %v1414 = vsel %vm1408, %v1413, %v1412
        %vm1415 = vcmp.lt.s32.totalorder %v1251, 0
        %v1416 = vsub.s32 0, %v1251
        %v1417 = vsel %vm1415, %v1416, %v1251
        %v1418 = vshrl.u32 %v1417, 4
        %v1419 = vand.u32 %v1417, 15
        %v1420 = vsub.s32 0, %v1419
        %v1421 = vsel %vm1415, %v1420, %v1419
        %vm1422 = vcmp.lt.s32.totalorder %v1252, 0
        %v1423 = vsub.s32 0, %v1252
        %v1424 = vsel %vm1422, %v1423, %v1252
        %v1425 = vshrl.u32 %v1424, 4
        %v1426 = vand.u32 %v1424, 15
        %v1427 = vsub.s32 0, %v1426
        %v1428 = vsel %vm1422, %v1427, %v1426
        %vm1429 = vcmp.lt.s32.totalorder %v1253, 0
        %v1430 = vsub.s32 0, %v1253
        %v1431 = vsel %vm1429, %v1430, %v1253
        %v1432 = vshrl.u32 %v1431, 4
        %v1433 = vand.u32 %v1431, 15
        %v1434 = vsub.s32 0, %v1433
        %v1435 = vsel %vm1429, %v1434, %v1433
        %vm1436 = vcmp.lt.s32.totalorder %v1254, 0
        %v1437 = vsub.s32 0, %v1254
        %v1438 = vsel %vm1436, %v1437, %v1254
        %v1439 = vshrl.u32 %v1438, 4
        %v1440 = vand.u32 %v1438, 15
        %v1441 = vsub.s32 0, %v1440
        %v1442 = vsel %vm1436, %v1441, %v1440
        %vm1443 = vcmp.lt.s32.totalorder %v1255, 0
        %v1444 = vsub.s32 0, %v1255
        %v1445 = vsel %vm1443, %v1444, %v1255
        %v1446 = vshrl.u32 %v1445, 4
        %v1447 = vand.u32 %v1445, 15
        %v1448 = vsub.s32 0, %v1447
        %v1449 = vsel %vm1443, %v1448, %v1447
        %vm1450 = vcmp.lt.s32.totalorder %v1256, 0
        %v1451 = vsub.s32 0, %v1256
        %v1452 = vsel %vm1450, %v1451, %v1256
        %v1453 = vshrl.u32 %v1452, 4
        %v1454 = vand.u32 %v1452, 15
        %v1455 = vsub.s32 0, %v1454
        %v1456 = vsel %vm1450, %v1455, %v1454
        %vm1457 = vcmp.lt.s32.totalorder %v1257, 0
        %v1458 = vsub.s32 0, %v1257
        %v1459 = vsel %vm1457, %v1458, %v1257
        %v1460 = vshrl.u32 %v1459, 4
        %v1461 = vand.u32 %v1459, 15
        %v1462 = vsub.s32 0, %v1461
        %v1463 = vsel %vm1457, %v1462, %v1461
        %vm1464 = vcmp.lt.s32.totalorder %v1258, 0
        %v1465 = vsub.s32 0, %v1258
        %v1466 = vsel %vm1464, %v1465, %v1258
        %v1467 = vshrl.u32 %v1466, 4
        %v1468 = vand.u32 %v1466, 15
        %v1469 = vsub.s32 0, %v1468
        %v1470 = vsel %vm1464, %v1469, %v1468
        %vm1471 = vcmp.lt.s32.totalorder %v1259, 0
        %v1472 = vsub.s32 0, %v1259
        %v1473 = vsel %vm1471, %v1472, %v1259
        %v1474 = vshrl.u32 %v1473, 4
        %v1475 = vand.u32 %v1473, 15
        %v1476 = vsub.s32 0, %v1475
        %v1477 = vsel %vm1471, %v1476, %v1475
        %vm1478 = vcmp.lt.s32.totalorder %v1260, 0
        %v1479 = vsub.s32 0, %v1260
        %v1480 = vsel %vm1478, %v1479, %v1260
        %v1481 = vshrl.u32 %v1480, 4
        %v1482 = vand.u32 %v1480, 15
        %v1483 = vsub.s32 0, %v1482
        %v1484 = vsel %vm1478, %v1483, %v1482
        %vm1485 = vcmp.ne.s32.totalorder %v1267, 0
        %vm1486 = vcmp.ne.s32.totalorder %v1274, 0
        %vm1487 = vcmp.ne.s32.totalorder %v1281, 0
        %vm1488 = vcmp.ne.s32.totalorder %v1288, 0
        %vm1489 = vcmp.ne.s32.totalorder %v1295, 0
        %vm1490 = vcmp.ne.s32.totalorder %v1302, 0
        %vm1491 = vcmp.ne.s32.totalorder %v1309, 0
        %vm1492 = vcmp.ne.s32.totalorder %v1316, 0
        %vm1493 = vcmp.ne.s32.totalorder %v1323, 0
        %vm1494 = vcmp.ne.s32.totalorder %v1330, 0
        %vm1495 = vcmp.ne.s32.totalorder %v1337, 0
        %vm1496 = vcmp.ne.s32.totalorder %v1344, 0
        %vm1497 = vcmp.ne.s32.totalorder %v1351, 0
        %vm1498 = vcmp.ne.s32.totalorder %v1358, 0
        %vm1499 = vcmp.ne.s32.totalorder %v1365, 0
        %vm1500 = vcmp.ne.s32.totalorder %v1372, 0
        %vm1501 = vcmp.ne.s32.totalorder %v1379, 0
        %vm1502 = vcmp.ne.s32.totalorder %v1386, 0
        %vm1503 = vcmp.ne.s32.totalorder %v1393, 0
        %vm1504 = vcmp.ne.s32.totalorder %v1400, 0
        %vm1505 = vcmp.ne.s32.totalorder %v1407, 0
        %vm1506 = vcmp.ne.s32.totalorder %v1414, 0
        %vm1507 = vcmp.ne.s32.totalorder %v1421, 0
        %vm1508 = vcmp.ne.s32.totalorder %v1428, 0
        %vm1509 = vcmp.ne.s32.totalorder %v1435, 0
        %vm1510 = vcmp.ne.s32.totalorder %v1442, 0
        %vm1511 = vcmp.ne.s32.totalorder %v1449, 0
        %vm1512 = vcmp.ne.s32.totalorder %v1456, 0
        %vm1513 = vcmp.ne.s32.totalorder %v1463, 0
        %vm1514 = vcmp.ne.s32.totalorder %v1470, 0
        %vm1515 = vcmp.ne.s32.totalorder %v1477, 0
        %vm1516 = vcmp.ne.s32.totalorder %v1484, 0
        %vm1517 = vcmp.lt.s32.totalorder %v1267, 0
        %vm1518 = vcmp.lt.s32.totalorder %v1274, 0
        %vm1519 = vcmp.lt.s32.totalorder %v1281, 0
        %vm1520 = vcmp.lt.s32.totalorder %v1288, 0
        %vm1521 = vcmp.lt.s32.totalorder %v1295, 0
        %vm1522 = vcmp.lt.s32.totalorder %v1302, 0
        %vm1523 = vcmp.lt.s32.totalorder %v1309, 0
        %vm1524 = vcmp.lt.s32.totalorder %v1316, 0
        %vm1525 = vcmp.lt.s32.totalorder %v1323, 0
        %vm1526 = vcmp.lt.s32.totalorder %v1330, 0
        %vm1527 = vcmp.lt.s32.totalorder %v1337, 0
        %vm1528 = vcmp.lt.s32.totalorder %v1344, 0
        %vm1529 = vcmp.lt.s32.totalorder %v1351, 0
        %vm1530 = vcmp.lt.s32.totalorder %v1358, 0
        %vm1531 = vcmp.lt.s32.totalorder %v1365, 0
        %vm1532 = vcmp.lt.s32.totalorder %v1372, 0
        %vm1533 = vcmp.lt.s32.totalorder %v1379, 0
        %vm1534 = vcmp.lt.s32.totalorder %v1386, 0
        %vm1535 = vcmp.lt.s32.totalorder %v1393, 0
        %vm1536 = vcmp.lt.s32.totalorder %v1400, 0
        %vm1537 = vcmp.lt.s32.totalorder %v1407, 0
        %vm1538 = vcmp.lt.s32.totalorder %v1414, 0
        %vm1539 = vcmp.lt.s32.totalorder %v1421, 0
        %vm1540 = vcmp.lt.s32.totalorder %v1428, 0
        %vm1541 = vcmp.lt.s32.totalorder %v1435, 0
        %vm1542 = vcmp.lt.s32.totalorder %v1442, 0
        %vm1543 = vcmp.lt.s32.totalorder %v1449, 0
        %vm1544 = vcmp.lt.s32.totalorder %v1456, 0
        %vm1545 = vcmp.lt.s32.totalorder %v1463, 0
        %vm1546 = vcmp.lt.s32.totalorder %v1470, 0
        %vm1547 = vcmp.lt.s32.totalorder %v1477, 0
        %vm1548 = vcmp.lt.s32.totalorder %v1484, 0
        %vm1549 = vmand %vm1517, %vm1485
        %vm1550 = vmand %vm1518, %vm1486
        %vm1551 = vmand %vm1519, %vm1487
        %vm1552 = vmand %vm1520, %vm1488
        %vm1553 = vmand %vm1521, %vm1489
        %vm1554 = vmand %vm1522, %vm1490
        %vm1555 = vmand %vm1523, %vm1491
        %vm1556 = vmand %vm1524, %vm1492
        %vm1557 = vmand %vm1525, %vm1493
        %vm1558 = vmand %vm1526, %vm1494
        %vm1559 = vmand %vm1527, %vm1495
        %vm1560 = vmand %vm1528, %vm1496
        %vm1561 = vmand %vm1529, %vm1497
        %vm1562 = vmand %vm1530, %vm1498
        %vm1563 = vmand %vm1531, %vm1499
        %vm1564 = vmand %vm1532, %vm1500
        %vm1565 = vmand %vm1533, %vm1501
        %vm1566 = vmand %vm1534, %vm1502
        %vm1567 = vmand %vm1535, %vm1503
        %vm1568 = vmand %vm1536, %vm1504
        %vm1569 = vmand %vm1537, %vm1505
        %vm1570 = vmand %vm1538, %vm1506
        %vm1571 = vmand %vm1539, %vm1507
        %vm1572 = vmand %vm1540, %vm1508
        %vm1573 = vmand %vm1541, %vm1509
        %vm1574 = vmand %vm1542, %vm1510
        %vm1575 = vmand %vm1543, %vm1511
        %vm1576 = vmand %vm1544, %vm1512
        %vm1577 = vmand %vm1545, %vm1513
        %vm1578 = vmand %vm1546, %vm1514
        %vm1579 = vmand %vm1547, %vm1515
        %vm1580 = vmand %vm1548, %vm1516
        %v1581 = vadd.s32 %v1267, 16
        %v1582 = vadd.s32 %v1274, 16
        %v1583 = vadd.s32 %v1281, 16
        %v1584 = vadd.s32 %v1288, 16
        %v1585 = vadd.s32 %v1295, 16
        %v1586 = vadd.s32 %v1302, 16
        %v1587 = vadd.s32 %v1309, 16
        %v1588 = vadd.s32 %v1316, 16
        %v1589 = vadd.s32 %v1323, 16
        %v1590 = vadd.s32 %v1330, 16
        %v1591 = vadd.s32 %v1337, 16
        %v1592 = vadd.s32 %v1344, 16
        %v1593 = vadd.s32 %v1351, 16
        %v1594 = vadd.s32 %v1358, 16
        %v1595 = vadd.s32 %v1365, 16
        %v1596 = vadd.s32 %v1372, 16
        %v1597 = vadd.s32 %v1379, 16
        %v1598 = vadd.s32 %v1386, 16
        %v1599 = vadd.s32 %v1393, 16
        %v1600 = vadd.s32 %v1400, 16
        %v1601 = vadd.s32 %v1407, 16
        %v1602 = vadd.s32 %v1414, 16
        %v1603 = vadd.s32 %v1421, 16
        %v1604 = vadd.s32 %v1428, 16
        %v1605 = vadd.s32 %v1435, 16
        %v1606 = vadd.s32 %v1442, 16
        %v1607 = vadd.s32 %v1449, 16
        %v1608 = vadd.s32 %v1456, 16
        %v1609 = vadd.s32 %v1463, 16
        %v1610 = vadd.s32 %v1470, 16
        %v1611 = vadd.s32 %v1477, 16
        %v1612 = vadd.s32 %v1484, 16
        %v1613 = vsel %vm1549, %v1581, %v1267
        %v1614 = vsel %vm1550, %v1582, %v1274
        %v1615 = vsel %vm1551, %v1583, %v1281
        %v1616 = vsel %vm1552, %v1584, %v1288
        %v1617 = vsel %vm1553, %v1585, %v1295
        %v1618 = vsel %vm1554, %v1586, %v1302
        %v1619 = vsel %vm1555, %v1587, %v1309
        %v1620 = vsel %vm1556, %v1588, %v1316
        %v1621 = vsel %vm1557, %v1589, %v1323
        %v1622 = vsel %vm1558, %v1590, %v1330
        %v1623 = vsel %vm1559, %v1591, %v1337
        %v1624 = vsel %vm1560, %v1592, %v1344
        %v1625 = vsel %vm1561, %v1593, %v1351
        %v1626 = vsel %vm1562, %v1594, %v1358
        %v1627 = vsel %vm1563, %v1595, %v1365
        %v1628 = vsel %vm1564, %v1596, %v1372
        %v1629 = vsel %vm1565, %v1597, %v1379
        %v1630 = vsel %vm1566, %v1598, %v1386
        %v1631 = vsel %vm1567, %v1599, %v1393
        %v1632 = vsel %vm1568, %v1600, %v1400
        %v1633 = vsel %vm1569, %v1601, %v1407
        %v1634 = vsel %vm1570, %v1602, %v1414
        %v1635 = vsel %vm1571, %v1603, %v1421
        %v1636 = vsel %vm1572, %v1604, %v1428
        %v1637 = vsel %vm1573, %v1605, %v1435
        %v1638 = vsel %vm1574, %v1606, %v1442
        %v1639 = vsel %vm1575, %v1607, %v1449
        %v1640 = vsel %vm1576, %v1608, %v1456
        %v1641 = vsel %vm1577, %v1609, %v1463
        %v1642 = vsel %vm1578, %v1610, %v1470
        %v1643 = vsel %vm1579, %v1611, %v1477
        %v1644 = vsel %vm1580, %v1612, %v1484
        %vm1675 = vcmask 1040384
        %v1676 = vrot.slane %v1196, 7
        %v1677 = vrot.slane %v1197, 7
        %v1678 = vsel %vm1675, %v1676, %v1677
        %v1679 = vrot.slane %v1198, 7
        %v1680 = vsel %vm1675, %v1677, %v1679
        %v1681 = vrot.slane %v1199, 7
        %v1682 = vsel %vm1675, %v1679, %v1681
        %v1683 = vrot.slane %v1200, 7
        %v1684 = vsel %vm1675, %v1681, %v1683
        %v1685 = vrot.slane %v1201, 7
        %v1686 = vsel %vm1675, %v1683, %v1685
        %v1687 = vrot.slane %v1202, 7
        %v1688 = vsel %vm1675, %v1685, %v1687
        %v1689 = vrot.slane %v1203, 7
        %v1690 = vsel %vm1675, %v1687, %v1689
        %v1691 = vrot.slane %v1204, 7
        %v1692 = vsel %vm1675, %v1689, %v1691
        %v1693 = vrot.slane %v1205, 7
        %v1694 = vsel %vm1675, %v1691, %v1693
        %v1695 = vrot.slane %v1206, 7
        %v1696 = vsel %vm1675, %v1693, %v1695
        %v1697 = vrot.slane %v1207, 7
        %v1698 = vsel %vm1675, %v1695, %v1697
        %v1699 = vrot.slane %v1208, 7
        %v1700 = vsel %vm1675, %v1697, %v1699
        %v1701 = vrot.slane %v1209, 7
        %v1702 = vsel %vm1675, %v1699, %v1701
        %v1703 = vrot.slane %v1210, 7
        %v1704 = vsel %vm1675, %v1701, %v1703
        %v1705 = vrot.slane %v1211, 7
        %v1706 = vsel %vm1675, %v1703, %v1705
        %v1707 = vrot.slane %v1212, 7
        %v1708 = vsel %vm1675, %v1705, %v1707
        %v1709 = vrot.slane %v1213, 7
        %v1710 = vsel %vm1675, %v1707, %v1709
        %v1711 = vrot.slane %v1214, 7
        %v1712 = vsel %vm1675, %v1709, %v1711
        %v1713 = vrot.slane %v1215, 7
        %v1714 = vsel %vm1675, %v1711, %v1713
        %v1715 = vrot.slane %v1216, 7
        %v1716 = vsel %vm1675, %v1713, %v1715
        %v1717 = vrot.slane %v1217, 7
        %v1718 = vsel %vm1675, %v1715, %v1717
        %v1719 = vrot.slane %v1218, 7
        %v1720 = vsel %vm1675, %v1717, %v1719
        %v1721 = vrot.slane %v1219, 7
        %v1722 = vsel %vm1675, %v1719, %v1721
        %v1723 = vrot.slane %v1220, 7
        %v1724 = vsel %vm1675, %v1721, %v1723
        %v1725 = vrot.slane %v1221, 7
        %v1726 = vsel %vm1675, %v1723, %v1725
        %v1727 = vrot.slane %v1222, 7
        %v1728 = vsel %vm1675, %v1725, %v1727
        %v1729 = vrot.slane %v1223, 7
        %v1730 = vsel %vm1675, %v1727, %v1729
        %v1731 = vrot.slane %v1224, 7
        %v1732 = vsel %vm1675, %v1729, %v1731
        %v1733 = vrot.slane %v1225, 7
        %v1734 = vsel %vm1675, %v1731, %v1733
        %v1765 = vsel %vm1675, 0.0, %v1676
        %v1766 = vadd.s32 %v1613, 4294967295
        %v1767 = vadd.s32 %v1614, 4294967295
        %v1768 = vadd.s32 %v1615, 4294967295
        %v1769 = vadd.s32 %v1616, 4294967295
        %v1770 = vadd.s32 %v1617, 4294967295
        %v1771 = vadd.s32 %v1618, 4294967295
        %v1772 = vadd.s32 %v1619, 4294967295
        %v1773 = vadd.s32 %v1620, 4294967295
        %v1774 = vadd.s32 %v1621, 4294967295
        %v1775 = vadd.s32 %v1622, 4294967295
        %v1776 = vadd.s32 %v1623, 4294967295
        %v1777 = vadd.s32 %v1624, 4294967295
        %v1778 = vadd.s32 %v1625, 4294967295
        %v1779 = vadd.s32 %v1626, 4294967295
        %v1780 = vadd.s32 %v1627, 4294967295
        %v1781 = vadd.s32 %v1628, 4294967295
        %v1782 = vadd.s32 %v1629, 4294967295
        %v1783 = vadd.s32 %v1630, 4294967295
        %v1784 = vadd.s32 %v1631, 4294967295
        %v1785 = vadd.s32 %v1632, 4294967295
        %v1786 = vadd.s32 %v1633, 4294967295
        %v1787 = vadd.s32 %v1634, 4294967295
        %v1788 = vadd.s32 %v1635, 4294967295
        %v1789 = vadd.s32 %v1636, 4294967295
        %v1790 = vadd.s32 %v1637, 4294967295
        %v1791 = vadd.s32 %v1638, 4294967295
        %v1792 = vadd.s32 %v1639, 4294967295
        %v1793 = vadd.s32 %v1640, 4294967295
        %v1794 = vadd.s32 %v1641, 4294967295
        %v1795 = vadd.s32 %v1642, 4294967295
        %v1796 = vadd.s32 %v1643, 4294967295
        %v1797 = vadd.s32 %v1644, 4294967295
        %vm1798 = vcmp.ge.s32.totalorder %v1766, 0
        %vm1799 = vcmp.ge.s32.totalorder %v1767, 0
        %vm1800 = vcmp.ge.s32.totalorder %v1768, 0
        %vm1801 = vcmp.ge.s32.totalorder %v1769, 0
        %vm1802 = vcmp.ge.s32.totalorder %v1770, 0
        %vm1803 = vcmp.ge.s32.totalorder %v1771, 0
        %vm1804 = vcmp.ge.s32.totalorder %v1772, 0
        %vm1805 = vcmp.ge.s32.totalorder %v1773, 0
        %vm1806 = vcmp.ge.s32.totalorder %v1774, 0
        %vm1807 = vcmp.ge.s32.totalorder %v1775, 0
        %vm1808 = vcmp.ge.s32.totalorder %v1776, 0
        %vm1809 = vcmp.ge.s32.totalorder %v1777, 0
        %vm1810 = vcmp.ge.s32.totalorder %v1778, 0
        %vm1811 = vcmp.ge.s32.totalorder %v1779, 0
        %vm1812 = vcmp.ge.s32.totalorder %v1780, 0
        %vm1813 = vcmp.ge.s32.totalorder %v1781, 0
        %vm1814 = vcmp.ge.s32.totalorder %v1782, 0
        %vm1815 = vcmp.ge.s32.totalorder %v1783, 0
        %vm1816 = vcmp.ge.s32.totalorder %v1784, 0
        %vm1817 = vcmp.ge.s32.totalorder %v1785, 0
        %vm1818 = vcmp.ge.s32.totalorder %v1786, 0
        %vm1819 = vcmp.ge.s32.totalorder %v1787, 0
        %vm1820 = vcmp.ge.s32.totalorder %v1788, 0
        %vm1821 = vcmp.ge.s32.totalorder %v1789, 0
        %vm1822 = vcmp.ge.s32.totalorder %v1790, 0
        %vm1823 = vcmp.ge.s32.totalorder %v1791, 0
        %vm1824 = vcmp.ge.s32.totalorder %v1792, 0
        %vm1825 = vcmp.ge.s32.totalorder %v1793, 0
        %vm1826 = vcmp.ge.s32.totalorder %v1794, 0
        %vm1827 = vcmp.ge.s32.totalorder %v1795, 0
        %vm1828 = vcmp.ge.s32.totalorder %v1796, 0
        %vm1829 = vcmp.ge.s32.totalorder %v1797, 0
        %vm1830 = vcmp.lt.s32.totalorder %v1766, 16
        %vm1831 = vcmp.lt.s32.totalorder %v1767, 16
        %vm1832 = vcmp.lt.s32.totalorder %v1768, 16
        %vm1833 = vcmp.lt.s32.totalorder %v1769, 16
        %vm1834 = vcmp.lt.s32.totalorder %v1770, 16
        %vm1835 = vcmp.lt.s32.totalorder %v1771, 16
        %vm1836 = vcmp.lt.s32.totalorder %v1772, 16
        %vm1837 = vcmp.lt.s32.totalorder %v1773, 16
        %vm1838 = vcmp.lt.s32.totalorder %v1774, 16
        %vm1839 = vcmp.lt.s32.totalorder %v1775, 16
        %vm1840 = vcmp.lt.s32.totalorder %v1776, 16
        %vm1841 = vcmp.lt.s32.totalorder %v1777, 16
        %vm1842 = vcmp.lt.s32.totalorder %v1778, 16
        %vm1843 = vcmp.lt.s32.totalorder %v1779, 16
        %vm1844 = vcmp.lt.s32.totalorder %v1780, 16
        %vm1845 = vcmp.lt.s32.totalorder %v1781, 16
        %vm1846 = vcmp.lt.s32.totalorder %v1782, 16
        %vm1847 = vcmp.lt.s32.totalorder %v1783, 16
        %vm1848 = vcmp.lt.s32.totalorder %v1784, 16
        %vm1849 = vcmp.lt.s32.totalorder %v1785, 16
        %vm1850 = vcmp.lt.s32.totalorder %v1786, 16
        %vm1851 = vcmp.lt.s32.totalorder %v1787, 16
        %vm1852 = vcmp.lt.s32.totalorder %v1788, 16
        %vm1853 = vcmp.lt.s32.totalorder %v1789, 16
        %vm1854 = vcmp.lt.s32.totalorder %v1790, 16
        %vm1855 = vcmp.lt.s32.totalorder %v1791, 16
        %vm1856 = vcmp.lt.s32.totalorder %v1792, 16
        %vm1857 = vcmp.lt.s32.totalorder %v1793, 16
        %vm1858 = vcmp.lt.s32.totalorder %v1794, 16
        %vm1859 = vcmp.lt.s32.totalorder %v1795, 16
        %vm1860 = vcmp.lt.s32.totalorder %v1796, 16
        %vm1861 = vcmp.lt.s32.totalorder %v1797, 16
        %vm1862 = vmand %vm1798, %vm1830
        %vm1863 = vmand %vm1799, %vm1831
        %vm1864 = vmand %vm1800, %vm1832
        %vm1865 = vmand %vm1801, %vm1833
        %vm1866 = vmand %vm1802, %vm1834
        %vm1867 = vmand %vm1803, %vm1835
        %vm1868 = vmand %vm1804, %vm1836
        %vm1869 = vmand %vm1805, %vm1837
        %vm1870 = vmand %vm1806, %vm1838
        %vm1871 = vmand %vm1807, %vm1839
        %vm1872 = vmand %vm1808, %vm1840
        %vm1873 = vmand %vm1809, %vm1841
        %vm1874 = vmand %vm1810, %vm1842
        %vm1875 = vmand %vm1811, %vm1843
        %vm1876 = vmand %vm1812, %vm1844
        %vm1877 = vmand %vm1813, %vm1845
        %vm1878 = vmand %vm1814, %vm1846
        %vm1879 = vmand %vm1815, %vm1847
        %vm1880 = vmand %vm1816, %vm1848
        %vm1881 = vmand %vm1817, %vm1849
        %vm1882 = vmand %vm1818, %vm1850
        %vm1883 = vmand %vm1819, %vm1851
        %vm1884 = vmand %vm1820, %vm1852
        %vm1885 = vmand %vm1821, %vm1853
        %vm1886 = vmand %vm1822, %vm1854
        %vm1887 = vmand %vm1823, %vm1855
        %vm1888 = vmand %vm1824, %vm1856
        %vm1889 = vmand %vm1825, %vm1857
        %vm1890 = vmand %vm1826, %vm1858
        %vm1891 = vmand %vm1827, %vm1859
        %vm1892 = vmand %vm1828, %vm1860
        %vm1893 = vmand %vm1829, %vm1861
        %v1894 = vsel %vm1864, %v1765, 0.0
        %v1895 = vsel %vm1865, %v1678, 0.0
        %v1896 = vsel %vm1866, %v1680, 0.0
        %v1897 = vsel %vm1867, %v1682, 0.0
        %v1898 = vsel %vm1868, %v1684, 0.0
        %v1899 = vsel %vm1869, %v1686, 0.0
        %v1900 = vsel %vm1870, %v1688, 0.0
        %v1901 = vsel %vm1871, %v1690, 0.0
        %v1902 = vsel %vm1872, %v1692, 0.0
        %v1903 = vsel %vm1873, %v1694, 0.0
        %v1904 = vsel %vm1874, %v1696, 0.0
        %v1905 = vsel %vm1875, %v1698, 0.0
        %v1906 = vsel %vm1876, %v1700, 0.0
        %v1907 = vsel %vm1877, %v1702, 0.0
        %v1908 = vsel %vm1878, %v1704, 0.0
        %v1909 = vsel %vm1879, %v1706, 0.0
        %v1910 = vsel %vm1880, %v1708, 0.0
        %v1911 = vsel %vm1881, %v1710, 0.0
        %v1912 = vsel %vm1882, %v1712, 0.0
        %v1913 = vsel %vm1883, %v1714, 0.0
        %v1914 = vsel %vm1884, %v1716, 0.0
        %v1915 = vsel %vm1885, %v1718, 0.0
        %v1916 = vsel %vm1886, %v1720, 0.0
        %v1917 = vsel %vm1887, %v1722, 0.0
        %v1918 = vsel %vm1888, %v1724, 0.0
        %v1919 = vsel %vm1889, %v1726, 0.0
        %v1920 = vsel %vm1890, %v1728, 0.0
        %v1921 = vsel %vm1891, %v1730, 0.0
        %v1922 = vsel %vm1892, %v1732, 0.0
        %v1923 = vsel %vm1893, %v1734, 0.0
        %vm1925 = vcmask 1046528
        %v1926 = vrot.slane %v1196, 1
        %v1927 = vrot.slane %v1197, 1
        %v1928 = vsel %vm1925, %v1926, %v1927
        %v1929 = vrot.slane %v1198, 1
        %v1930 = vsel %vm1925, %v1927, %v1929
        %v1931 = vrot.slane %v1199, 1
        %v1932 = vsel %vm1925, %v1929, %v1931
        %v1933 = vrot.slane %v1200, 1
        %v1934 = vsel %vm1925, %v1931, %v1933
        %v1935 = vrot.slane %v1201, 1
        %v1936 = vsel %vm1925, %v1933, %v1935
        %v1937 = vrot.slane %v1202, 1
        %v1938 = vsel %vm1925, %v1935, %v1937
        %v1939 = vrot.slane %v1203, 1
        %v1940 = vsel %vm1925, %v1937, %v1939
        %v1941 = vrot.slane %v1204, 1
        %v1942 = vsel %vm1925, %v1939, %v1941
        %v1943 = vrot.slane %v1205, 1
        %v1944 = vsel %vm1925, %v1941, %v1943
        %v1945 = vrot.slane %v1206, 1
        %v1946 = vsel %vm1925, %v1943, %v1945
        %v1947 = vrot.slane %v1207, 1
        %v1948 = vsel %vm1925, %v1945, %v1947
        %v1949 = vrot.slane %v1208, 1
        %v1950 = vsel %vm1925, %v1947, %v1949
        %v1951 = vrot.slane %v1209, 1
        %v1952 = vsel %vm1925, %v1949, %v1951
        %v1953 = vrot.slane %v1210, 1
        %v1954 = vsel %vm1925, %v1951, %v1953
        %v1955 = vrot.slane %v1211, 1
        %v1956 = vsel %vm1925, %v1953, %v1955
        %v1957 = vrot.slane %v1212, 1
        %v1958 = vsel %vm1925, %v1955, %v1957
        %v1959 = vrot.slane %v1213, 1
        %v1960 = vsel %vm1925, %v1957, %v1959
        %v1961 = vrot.slane %v1214, 1
        %v1962 = vsel %vm1925, %v1959, %v1961
        %v1963 = vrot.slane %v1215, 1
        %v1964 = vsel %vm1925, %v1961, %v1963
        %v1965 = vrot.slane %v1216, 1
        %v1966 = vsel %vm1925, %v1963, %v1965
        %v1967 = vrot.slane %v1217, 1
        %v1968 = vsel %vm1925, %v1965, %v1967
        %v1969 = vrot.slane %v1218, 1
        %v1970 = vsel %vm1925, %v1967, %v1969
        %v1971 = vrot.slane %v1219, 1
        %v1972 = vsel %vm1925, %v1969, %v1971
        %v1973 = vrot.slane %v1220, 1
        %v1974 = vsel %vm1925, %v1971, %v1973
        %v1975 = vrot.slane %v1221, 1
        %v1976 = vsel %vm1925, %v1973, %v1975
        %v1977 = vrot.slane %v1222, 1
        %v1978 = vsel %vm1925, %v1975, %v1977
        %v1979 = vrot.slane %v1223, 1
        %v1980 = vsel %vm1925, %v1977, %v1979
        %v1981 = vrot.slane %v1224, 1
        %v1982 = vsel %vm1925, %v1979, %v1981
        %v1983 = vrot.slane %v1225, 1
        %v1984 = vsel %vm1925, %v1981, %v1983
        %v1985 = vrot.slane %v1226, 1
        %v1986 = vsel %vm1925, %v1983, %v1985
        %v2018 = vsel %vm1925, 0.0, %v1926
        %v2019 = vadd.s32 %v1613, 1
        %v2020 = vadd.s32 %v1614, 1
        %v2021 = vadd.s32 %v1615, 1
        %v2022 = vadd.s32 %v1616, 1
        %v2023 = vadd.s32 %v1617, 1
        %v2024 = vadd.s32 %v1618, 1
        %v2025 = vadd.s32 %v1619, 1
        %v2026 = vadd.s32 %v1620, 1
        %v2027 = vadd.s32 %v1621, 1
        %v2028 = vadd.s32 %v1622, 1
        %v2029 = vadd.s32 %v1623, 1
        %v2030 = vadd.s32 %v1624, 1
        %v2031 = vadd.s32 %v1625, 1
        %v2032 = vadd.s32 %v1626, 1
        %v2033 = vadd.s32 %v1627, 1
        %v2034 = vadd.s32 %v1628, 1
        %v2035 = vadd.s32 %v1629, 1
        %v2036 = vadd.s32 %v1630, 1
        %v2037 = vadd.s32 %v1631, 1
        %v2038 = vadd.s32 %v1632, 1
        %v2039 = vadd.s32 %v1633, 1
        %v2040 = vadd.s32 %v1634, 1
        %v2041 = vadd.s32 %v1635, 1
        %v2042 = vadd.s32 %v1636, 1
        %v2043 = vadd.s32 %v1637, 1
        %v2044 = vadd.s32 %v1638, 1
        %v2045 = vadd.s32 %v1639, 1
        %v2046 = vadd.s32 %v1640, 1
        %v2047 = vadd.s32 %v1641, 1
        %v2048 = vadd.s32 %v1642, 1
        %v2049 = vadd.s32 %v1643, 1
        %v2050 = vadd.s32 %v1644, 1
        %vm2051 = vcmp.ge.s32.totalorder %v2019, 0
        %vm2052 = vcmp.ge.s32.totalorder %v2020, 0
        %vm2053 = vcmp.ge.s32.totalorder %v2021, 0
        %vm2054 = vcmp.ge.s32.totalorder %v2022, 0
        %vm2055 = vcmp.ge.s32.totalorder %v2023, 0
        %vm2056 = vcmp.ge.s32.totalorder %v2024, 0
        %vm2057 = vcmp.ge.s32.totalorder %v2025, 0
        %vm2058 = vcmp.ge.s32.totalorder %v2026, 0
        %vm2059 = vcmp.ge.s32.totalorder %v2027, 0
        %vm2060 = vcmp.ge.s32.totalorder %v2028, 0
        %vm2061 = vcmp.ge.s32.totalorder %v2029, 0
        %vm2062 = vcmp.ge.s32.totalorder %v2030, 0
        %vm2063 = vcmp.ge.s32.totalorder %v2031, 0
        %vm2064 = vcmp.ge.s32.totalorder %v2032, 0
        %vm2065 = vcmp.ge.s32.totalorder %v2033, 0
        %vm2066 = vcmp.ge.s32.totalorder %v2034, 0
        %vm2067 = vcmp.ge.s32.totalorder %v2035, 0
        %vm2068 = vcmp.ge.s32.totalorder %v2036, 0
        %vm2069 = vcmp.ge.s32.totalorder %v2037, 0
        %vm2070 = vcmp.ge.s32.totalorder %v2038, 0
        %vm2071 = vcmp.ge.s32.totalorder %v2039, 0
        %vm2072 = vcmp.ge.s32.totalorder %v2040, 0
        %vm2073 = vcmp.ge.s32.totalorder %v2041, 0
        %vm2074 = vcmp.ge.s32.totalorder %v2042, 0
        %vm2075 = vcmp.ge.s32.totalorder %v2043, 0
        %vm2076 = vcmp.ge.s32.totalorder %v2044, 0
        %vm2077 = vcmp.ge.s32.totalorder %v2045, 0
        %vm2078 = vcmp.ge.s32.totalorder %v2046, 0
        %vm2079 = vcmp.ge.s32.totalorder %v2047, 0
        %vm2080 = vcmp.ge.s32.totalorder %v2048, 0
        %vm2081 = vcmp.ge.s32.totalorder %v2049, 0
        %vm2082 = vcmp.ge.s32.totalorder %v2050, 0
        %vm2083 = vcmp.lt.s32.totalorder %v2019, 16
        %vm2084 = vcmp.lt.s32.totalorder %v2020, 16
        %vm2085 = vcmp.lt.s32.totalorder %v2021, 16
        %vm2086 = vcmp.lt.s32.totalorder %v2022, 16
        %vm2087 = vcmp.lt.s32.totalorder %v2023, 16
        %vm2088 = vcmp.lt.s32.totalorder %v2024, 16
        %vm2089 = vcmp.lt.s32.totalorder %v2025, 16
        %vm2090 = vcmp.lt.s32.totalorder %v2026, 16
        %vm2091 = vcmp.lt.s32.totalorder %v2027, 16
        %vm2092 = vcmp.lt.s32.totalorder %v2028, 16
        %vm2093 = vcmp.lt.s32.totalorder %v2029, 16
        %vm2094 = vcmp.lt.s32.totalorder %v2030, 16
        %vm2095 = vcmp.lt.s32.totalorder %v2031, 16
        %vm2096 = vcmp.lt.s32.totalorder %v2032, 16
        %vm2097 = vcmp.lt.s32.totalorder %v2033, 16
        %vm2098 = vcmp.lt.s32.totalorder %v2034, 16
        %vm2099 = vcmp.lt.s32.totalorder %v2035, 16
        %vm2100 = vcmp.lt.s32.totalorder %v2036, 16
        %vm2101 = vcmp.lt.s32.totalorder %v2037, 16
        %vm2102 = vcmp.lt.s32.totalorder %v2038, 16
        %vm2103 = vcmp.lt.s32.totalorder %v2039, 16
        %vm2104 = vcmp.lt.s32.totalorder %v2040, 16
        %vm2105 = vcmp.lt.s32.totalorder %v2041, 16
        %vm2106 = vcmp.lt.s32.totalorder %v2042, 16
        %vm2107 = vcmp.lt.s32.totalorder %v2043, 16
        %vm2108 = vcmp.lt.s32.totalorder %v2044, 16
        %vm2109 = vcmp.lt.s32.totalorder %v2045, 16
        %vm2110 = vcmp.lt.s32.totalorder %v2046, 16
        %vm2111 = vcmp.lt.s32.totalorder %v2047, 16
        %vm2112 = vcmp.lt.s32.totalorder %v2048, 16
        %vm2113 = vcmp.lt.s32.totalorder %v2049, 16
        %vm2114 = vcmp.lt.s32.totalorder %v2050, 16
        %vm2115 = vmand %vm2051, %vm2083
        %vm2116 = vmand %vm2052, %vm2084
        %vm2117 = vmand %vm2053, %vm2085
        %vm2118 = vmand %vm2054, %vm2086
        %vm2119 = vmand %vm2055, %vm2087
        %vm2120 = vmand %vm2056, %vm2088
        %vm2121 = vmand %vm2057, %vm2089
        %vm2122 = vmand %vm2058, %vm2090
        %vm2123 = vmand %vm2059, %vm2091
        %vm2124 = vmand %vm2060, %vm2092
        %vm2125 = vmand %vm2061, %vm2093
        %vm2126 = vmand %vm2062, %vm2094
        %vm2127 = vmand %vm2063, %vm2095
        %vm2128 = vmand %vm2064, %vm2096
        %vm2129 = vmand %vm2065, %vm2097
        %vm2130 = vmand %vm2066, %vm2098
        %vm2131 = vmand %vm2067, %vm2099
        %vm2132 = vmand %vm2068, %vm2100
        %vm2133 = vmand %vm2069, %vm2101
        %vm2134 = vmand %vm2070, %vm2102
        %vm2135 = vmand %vm2071, %vm2103
        %vm2136 = vmand %vm2072, %vm2104
        %vm2137 = vmand %vm2073, %vm2105
        %vm2138 = vmand %vm2074, %vm2106
        %vm2139 = vmand %vm2075, %vm2107
        %vm2140 = vmand %vm2076, %vm2108
        %vm2141 = vmand %vm2077, %vm2109
        %vm2142 = vmand %vm2078, %vm2110
        %vm2143 = vmand %vm2079, %vm2111
        %vm2144 = vmand %vm2080, %vm2112
        %vm2145 = vmand %vm2081, %vm2113
        %vm2146 = vmand %vm2082, %vm2114
        %v2147 = vsel %vm2116, %v2018, 0.0
        %v2148 = vsel %vm2117, %v1928, 0.0
        %v2149 = vsel %vm2118, %v1930, 0.0
        %v2150 = vsel %vm2119, %v1932, 0.0
        %v2151 = vsel %vm2120, %v1934, 0.0
        %v2152 = vsel %vm2121, %v1936, 0.0
        %v2153 = vsel %vm2122, %v1938, 0.0
        %v2154 = vsel %vm2123, %v1940, 0.0
        %v2155 = vsel %vm2124, %v1942, 0.0
        %v2156 = vsel %vm2125, %v1944, 0.0
        %v2157 = vsel %vm2126, %v1946, 0.0
        %v2158 = vsel %vm2127, %v1948, 0.0
        %v2159 = vsel %vm2128, %v1950, 0.0
        %v2160 = vsel %vm2129, %v1952, 0.0
        %v2161 = vsel %vm2130, %v1954, 0.0
        %v2162 = vsel %vm2131, %v1956, 0.0
        %v2163 = vsel %vm2132, %v1958, 0.0
        %v2164 = vsel %vm2133, %v1960, 0.0
        %v2165 = vsel %vm2134, %v1962, 0.0
        %v2166 = vsel %vm2135, %v1964, 0.0
        %v2167 = vsel %vm2136, %v1966, 0.0
        %v2168 = vsel %vm2137, %v1968, 0.0
        %v2169 = vsel %vm2138, %v1970, 0.0
        %v2170 = vsel %vm2139, %v1972, 0.0
        %v2171 = vsel %vm2140, %v1974, 0.0
        %v2172 = vsel %vm2141, %v1976, 0.0
        %v2173 = vsel %vm2142, %v1978, 0.0
        %v2174 = vsel %vm2143, %v1980, 0.0
        %v2175 = vsel %vm2144, %v1982, 0.0
        %v2176 = vsel %vm2145, %v1984, 0.0
        %v2177 = vsel %vm2146, %v1986, 0.0
        %v2179 = vrot.slane %v1226, 7
        %v2180 = vsel %vm1675, %v1733, %v2179
        %v2181 = vrot.slane %v1227, 7
        %v2182 = vsel %vm1675, %v2179, %v2181
        %v2185 = vsel %vm1862, %v1765, 0.0
        %v2186 = vsel %vm1863, %v1678, 0.0
        %v2187 = vsel %vm1864, %v1680, 0.0
        %v2188 = vsel %vm1865, %v1682, 0.0
        %v2189 = vsel %vm1866, %v1684, 0.0
        %v2190 = vsel %vm1867, %v1686, 0.0
        %v2191 = vsel %vm1868, %v1688, 0.0
        %v2192 = vsel %vm1869, %v1690, 0.0
        %v2193 = vsel %vm1870, %v1692, 0.0
        %v2194 = vsel %vm1871, %v1694, 0.0
        %v2195 = vsel %vm1872, %v1696, 0.0
        %v2196 = vsel %vm1873, %v1698, 0.0
        %v2197 = vsel %vm1874, %v1700, 0.0
        %v2198 = vsel %vm1875, %v1702, 0.0
        %v2199 = vsel %vm1876, %v1704, 0.0
        %v2200 = vsel %vm1877, %v1706, 0.0
        %v2201 = vsel %vm1878, %v1708, 0.0
        %v2202 = vsel %vm1879, %v1710, 0.0
        %v2203 = vsel %vm1880, %v1712, 0.0
        %v2204 = vsel %vm1881, %v1714, 0.0
        %v2205 = vsel %vm1882, %v1716, 0.0
        %v2206 = vsel %vm1883, %v1718, 0.0
        %v2207 = vsel %vm1884, %v1720, 0.0
        %v2208 = vsel %vm1885, %v1722, 0.0
        %v2209 = vsel %vm1886, %v1724, 0.0
        %v2210 = vsel %vm1887, %v1726, 0.0
        %v2211 = vsel %vm1888, %v1728, 0.0
        %v2212 = vsel %vm1889, %v1730, 0.0
        %v2213 = vsel %vm1890, %v1732, 0.0
        %v2214 = vsel %vm1891, %v1734, 0.0
        %v2215 = vsel %vm1892, %v2180, 0.0
        %v2216 = vsel %vm1893, %v2182, 0.0
        %v2217 = vrot.slane %v1227, 1
        %v2218 = vsel %vm1925, %v1985, %v2217
        %v2221 = vsel %vm1925, %v2217, 0.0
        %v2222 = vsel %vm2115, %v1928, 0.0
        %v2223 = vsel %vm2116, %v1930, 0.0
        %v2224 = vsel %vm2117, %v1932, 0.0
        %v2225 = vsel %vm2118, %v1934, 0.0
        %v2226 = vsel %vm2119, %v1936, 0.0
        %v2227 = vsel %vm2120, %v1938, 0.0
        %v2228 = vsel %vm2121, %v1940, 0.0
        %v2229 = vsel %vm2122, %v1942, 0.0
        %v2230 = vsel %vm2123, %v1944, 0.0
        %v2231 = vsel %vm2124, %v1946, 0.0
        %v2232 = vsel %vm2125, %v1948, 0.0
        %v2233 = vsel %vm2126, %v1950, 0.0
        %v2234 = vsel %vm2127, %v1952, 0.0
        %v2235 = vsel %vm2128, %v1954, 0.0
        %v2236 = vsel %vm2129, %v1956, 0.0
        %v2237 = vsel %vm2130, %v1958, 0.0
        %v2238 = vsel %vm2131, %v1960, 0.0
        %v2239 = vsel %vm2132, %v1962, 0.0
        %v2240 = vsel %vm2133, %v1964, 0.0
        %v2241 = vsel %vm2134, %v1966, 0.0
        %v2242 = vsel %vm2135, %v1968, 0.0
        %v2243 = vsel %vm2136, %v1970, 0.0
        %v2244 = vsel %vm2137, %v1972, 0.0
        %v2245 = vsel %vm2138, %v1974, 0.0
        %v2246 = vsel %vm2139, %v1976, 0.0
        %v2247 = vsel %vm2140, %v1978, 0.0
        %v2248 = vsel %vm2141, %v1980, 0.0
        %v2249 = vsel %vm2142, %v1982, 0.0
        %v2250 = vsel %vm2143, %v1984, 0.0
        %v2251 = vsel %vm2144, %v1986, 0.0
        %v2252 = vsel %vm2145, %v2218, 0.0
        %v2253 = vsel %vm2146, %v2221, 0.0
        %v2255 = vsel %vm1675, %v2181, 0.0
        %v2256 = vsel %vm1862, %v1680, 0.0
        %v2257 = vsel %vm1863, %v1682, 0.0
        %v2258 = vsel %vm1864, %v1684, 0.0
        %v2259 = vsel %vm1865, %v1686, 0.0
        %v2260 = vsel %vm1866, %v1688, 0.0
        %v2261 = vsel %vm1867, %v1690, 0.0
        %v2262 = vsel %vm1868, %v1692, 0.0
        %v2263 = vsel %vm1869, %v1694, 0.0
        %v2264 = vsel %vm1870, %v1696, 0.0
        %v2265 = vsel %vm1871, %v1698, 0.0
        %v2266 = vsel %vm1872, %v1700, 0.0
        %v2267 = vsel %vm1873, %v1702, 0.0
        %v2268 = vsel %vm1874, %v1704, 0.0
        %v2269 = vsel %vm1875, %v1706, 0.0
        %v2270 = vsel %vm1876, %v1708, 0.0
        %v2271 = vsel %vm1877, %v1710, 0.0
        %v2272 = vsel %vm1878, %v1712, 0.0
        %v2273 = vsel %vm1879, %v1714, 0.0
        %v2274 = vsel %vm1880, %v1716, 0.0
        %v2275 = vsel %vm1881, %v1718, 0.0
        %v2276 = vsel %vm1882, %v1720, 0.0
        %v2277 = vsel %vm1883, %v1722, 0.0
        %v2278 = vsel %vm1884, %v1724, 0.0
        %v2279 = vsel %vm1885, %v1726, 0.0
        %v2280 = vsel %vm1886, %v1728, 0.0
        %v2281 = vsel %vm1887, %v1730, 0.0
        %v2282 = vsel %vm1888, %v1732, 0.0
        %v2283 = vsel %vm1889, %v1734, 0.0
        %v2284 = vsel %vm1890, %v2180, 0.0
        %v2285 = vsel %vm1891, %v2182, 0.0
        %v2286 = vsel %vm1892, %v2255, 0.0
        %v2287 = vsel %vm2115, %v1932, 0.0
        %v2288 = vsel %vm2116, %v1934, 0.0
        %v2289 = vsel %vm2117, %v1936, 0.0
        %v2290 = vsel %vm2118, %v1938, 0.0
        %v2291 = vsel %vm2119, %v1940, 0.0
        %v2292 = vsel %vm2120, %v1942, 0.0
        %v2293 = vsel %vm2121, %v1944, 0.0
        %v2294 = vsel %vm2122, %v1946, 0.0
        %v2295 = vsel %vm2123, %v1948, 0.0
        %v2296 = vsel %vm2124, %v1950, 0.0
        %v2297 = vsel %vm2125, %v1952, 0.0
        %v2298 = vsel %vm2126, %v1954, 0.0
        %v2299 = vsel %vm2127, %v1956, 0.0
        %v2300 = vsel %vm2128, %v1958, 0.0
        %v2301 = vsel %vm2129, %v1960, 0.0
        %v2302 = vsel %vm2130, %v1962, 0.0
        %v2303 = vsel %vm2131, %v1964, 0.0
        %v2304 = vsel %vm2132, %v1966, 0.0
        %v2305 = vsel %vm2133, %v1968, 0.0
        %v2306 = vsel %vm2134, %v1970, 0.0
        %v2307 = vsel %vm2135, %v1972, 0.0
        %v2308 = vsel %vm2136, %v1974, 0.0
        %v2309 = vsel %vm2137, %v1976, 0.0
        %v2310 = vsel %vm2138, %v1978, 0.0
        %v2311 = vsel %vm2139, %v1980, 0.0
        %v2312 = vsel %vm2140, %v1982, 0.0
        %v2313 = vsel %vm2141, %v1984, 0.0
        %v2314 = vsel %vm2142, %v1986, 0.0
        %v2315 = vsel %vm2143, %v2218, 0.0
        %v2316 = vsel %vm2144, %v2221, 0.0
        %2318 = vrot.lane.b32.xlu0 0.0, 8
        %v2319 = vpop.permute.xlu0 %2318
        %2320 = vrot.lane.b32.xlu0 %v1196, 8
        %v2321 = vpop.permute.xlu0 %2320
        %2322 = vrot.lane.b32.xlu0 %v1197, 8
        %v2323 = vpop.permute.xlu0 %2322
        %2324 = vrot.lane.b32.xlu0 %v1198, 8
        %v2325 = vpop.permute.xlu0 %2324
        %2326 = vrot.lane.b32.xlu0 %v1199, 8
        %v2327 = vpop.permute.xlu0 %2326
        %2328 = vrot.lane.b32.xlu0 %v1200, 8
        %v2329 = vpop.permute.xlu0 %2328
        %2330 = vrot.lane.b32.xlu0 %v1201, 8
        %v2331 = vpop.permute.xlu0 %2330
        %2332 = vrot.lane.b32.xlu0 %v1202, 8
        %v2333 = vpop.permute.xlu0 %2332
        %2334 = vrot.lane.b32.xlu0 %v1203, 8
        %v2335 = vpop.permute.xlu0 %2334
        %2336 = vrot.lane.b32.xlu0 %v1204, 8
        %v2337 = vpop.permute.xlu0 %2336
        %2338 = vrot.lane.b32.xlu0 %v1205, 8
        %v2339 = vpop.permute.xlu0 %2338
        %2340 = vrot.lane.b32.xlu0 %v1206, 8
        %v2341 = vpop.permute.xlu0 %2340
        %2342 = vrot.lane.b32.xlu0 %v1207, 8
        %v2343 = vpop.permute.xlu0 %2342
        %2344 = vrot.lane.b32.xlu0 %v1208, 8
        %v2345 = vpop.permute.xlu0 %2344
        %2346 = vrot.lane.b32.xlu0 %v1209, 8
        %v2347 = vpop.permute.xlu0 %2346
        %2348 = vrot.lane.b32.xlu0 %v1210, 8
        %v2349 = vpop.permute.xlu0 %2348
        %2350 = vrot.lane.b32.xlu0 %v1211, 8
        %v2351 = vpop.permute.xlu0 %2350
        %2352 = vrot.lane.b32.xlu0 %v1212, 8
        %v2353 = vpop.permute.xlu0 %2352
        %2354 = vrot.lane.b32.xlu0 %v1213, 8
        %v2355 = vpop.permute.xlu0 %2354
        %2356 = vrot.lane.b32.xlu0 %v1214, 8
        %v2357 = vpop.permute.xlu0 %2356
        %2358 = vrot.lane.b32.xlu0 %v1215, 8
        %v2359 = vpop.permute.xlu0 %2358
        %2360 = vrot.lane.b32.xlu0 %v1216, 8
        %v2361 = vpop.permute.xlu0 %2360
        %2362 = vrot.lane.b32.xlu0 %v1217, 8
        %v2363 = vpop.permute.xlu0 %2362
        %2364 = vrot.lane.b32.xlu0 %v1218, 8
        %v2365 = vpop.permute.xlu0 %2364
        %2366 = vrot.lane.b32.xlu0 %v1219, 8
        %v2367 = vpop.permute.xlu0 %2366
        %2368 = vrot.lane.b32.xlu0 %v1220, 8
        %v2369 = vpop.permute.xlu0 %2368
        %2370 = vrot.lane.b32.xlu0 %v1221, 8
        %v2371 = vpop.permute.xlu0 %2370
        %2372 = vrot.lane.b32.xlu0 %v1222, 8
        %v2373 = vpop.permute.xlu0 %2372
        %2374 = vrot.lane.b32.xlu0 %v1223, 8
        %v2375 = vpop.permute.xlu0 %2374
        %2376 = vrot.lane.b32.xlu0 %v1224, 8
        %v2377 = vpop.permute.xlu0 %2376
        %2378 = vrot.lane.b32.xlu0 %v1225, 8
        %v2379 = vpop.permute.xlu0 %2378
        %2442 = vrot.lane.b32.xlu0 0.0, 16
        %v2443 = vpop.permute.xlu0 %2442
        %2444 = vrot.lane.b32.xlu0 %v2147, 16
        %v2445 = vpop.permute.xlu0 %2444
        %2446 = vrot.lane.b32.xlu0 %v2148, 16
        %v2447 = vpop.permute.xlu0 %2446
        %2448 = vrot.lane.b32.xlu0 %v2149, 16
        %v2449 = vpop.permute.xlu0 %2448
        %2450 = vrot.lane.b32.xlu0 %v2150, 16
        %v2451 = vpop.permute.xlu0 %2450
        %2452 = vrot.lane.b32.xlu0 %v2151, 16
        %v2453 = vpop.permute.xlu0 %2452
        %2454 = vrot.lane.b32.xlu0 %v2152, 16
        %v2455 = vpop.permute.xlu0 %2454
        %2456 = vrot.lane.b32.xlu0 %v2153, 16
        %v2457 = vpop.permute.xlu0 %2456
        %2458 = vrot.lane.b32.xlu0 %v2154, 16
        %v2459 = vpop.permute.xlu0 %2458
        %2460 = vrot.lane.b32.xlu0 %v2155, 16
        %v2461 = vpop.permute.xlu0 %2460
        %2462 = vrot.lane.b32.xlu0 %v2156, 16
        %v2463 = vpop.permute.xlu0 %2462
        %2464 = vrot.lane.b32.xlu0 %v2157, 16
        %v2465 = vpop.permute.xlu0 %2464
        %2466 = vrot.lane.b32.xlu0 %v2158, 16
        %v2467 = vpop.permute.xlu0 %2466
        %2468 = vrot.lane.b32.xlu0 %v2159, 16
        %v2469 = vpop.permute.xlu0 %2468
        %2470 = vrot.lane.b32.xlu0 %v2160, 16
        %v2471 = vpop.permute.xlu0 %2470
        %2472 = vrot.lane.b32.xlu0 %v2161, 16
        %v2473 = vpop.permute.xlu0 %2472
        %2474 = vrot.lane.b32.xlu0 %v2162, 16
        %v2475 = vpop.permute.xlu0 %2474
        %2476 = vrot.lane.b32.xlu0 %v2163, 16
        %v2477 = vpop.permute.xlu0 %2476
        %2478 = vrot.lane.b32.xlu0 %v2164, 16
        %v2479 = vpop.permute.xlu0 %2478
        %2480 = vrot.lane.b32.xlu0 %v2165, 16
        %v2481 = vpop.permute.xlu0 %2480
        %2482 = vrot.lane.b32.xlu0 %v2166, 16
        %v2483 = vpop.permute.xlu0 %2482
        %2484 = vrot.lane.b32.xlu0 %v2167, 16
        %v2485 = vpop.permute.xlu0 %2484
        %2486 = vrot.lane.b32.xlu0 %v2168, 16
        %v2487 = vpop.permute.xlu0 %2486
        %2488 = vrot.lane.b32.xlu0 %v2169, 16
        %v2489 = vpop.permute.xlu0 %2488
        %2490 = vrot.lane.b32.xlu0 %v2170, 16
        %v2491 = vpop.permute.xlu0 %2490
        %2492 = vrot.lane.b32.xlu0 %v2171, 16
        %v2493 = vpop.permute.xlu0 %2492
        %2494 = vrot.lane.b32.xlu0 %v2172, 16
        %v2495 = vpop.permute.xlu0 %2494
        %2496 = vrot.lane.b32.xlu0 %v2173, 16
        %v2497 = vpop.permute.xlu0 %2496
        %2498 = vrot.lane.b32.xlu0 %v2174, 16
        %v2499 = vpop.permute.xlu0 %2498
        %2500 = vrot.lane.b32.xlu0 %v2175, 16
        %v2501 = vpop.permute.xlu0 %2500
        %2502 = vrot.lane.b32.xlu0 %v2176, 16
        %v2503 = vpop.permute.xlu0 %2502
        %2504 = vrot.lane.b32.xlu0 %v2177, 16
        %v2505 = vpop.permute.xlu0 %2504
        %2570 = vrot.lane.b32.xlu0 %v2185, 24
        %v2571 = vpop.permute.xlu0 %2570
        %2572 = vrot.lane.b32.xlu0 %v2186, 24
        %v2573 = vpop.permute.xlu0 %2572
        %2574 = vrot.lane.b32.xlu0 %v2187, 24
        %v2575 = vpop.permute.xlu0 %2574
        %2576 = vrot.lane.b32.xlu0 %v2188, 24
        %v2577 = vpop.permute.xlu0 %2576
        %2578 = vrot.lane.b32.xlu0 %v2189, 24
        %v2579 = vpop.permute.xlu0 %2578
        %2580 = vrot.lane.b32.xlu0 %v2190, 24
        %v2581 = vpop.permute.xlu0 %2580
        %2582 = vrot.lane.b32.xlu0 %v2191, 24
        %v2583 = vpop.permute.xlu0 %2582
        %2584 = vrot.lane.b32.xlu0 %v2192, 24
        %v2585 = vpop.permute.xlu0 %2584
        %2586 = vrot.lane.b32.xlu0 %v2193, 24
        %v2587 = vpop.permute.xlu0 %2586
        %2588 = vrot.lane.b32.xlu0 %v2194, 24
        %v2589 = vpop.permute.xlu0 %2588
        %2590 = vrot.lane.b32.xlu0 %v2195, 24
        %v2591 = vpop.permute.xlu0 %2590
        %2592 = vrot.lane.b32.xlu0 %v2196, 24
        %v2593 = vpop.permute.xlu0 %2592
        %2594 = vrot.lane.b32.xlu0 %v2197, 24
        %v2595 = vpop.permute.xlu0 %2594
        %2596 = vrot.lane.b32.xlu0 %v2198, 24
        %v2597 = vpop.permute.xlu0 %2596
        %2598 = vrot.lane.b32.xlu0 %v2199, 24
        %v2599 = vpop.permute.xlu0 %2598
        %2600 = vrot.lane.b32.xlu0 %v2200, 24
        %v2601 = vpop.permute.xlu0 %2600
        %2602 = vrot.lane.b32.xlu0 %v2201, 24
        %v2603 = vpop.permute.xlu0 %2602
        %2604 = vrot.lane.b32.xlu0 %v2202, 24
        %v2605 = vpop.permute.xlu0 %2604
        %2606 = vrot.lane.b32.xlu0 %v2203, 24
        %v2607 = vpop.permute.xlu0 %2606
        %2608 = vrot.lane.b32.xlu0 %v2204, 24
        %v2609 = vpop.permute.xlu0 %2608
        %2610 = vrot.lane.b32.xlu0 %v2205, 24
        %v2611 = vpop.permute.xlu0 %2610
        %2612 = vrot.lane.b32.xlu0 %v2206, 24
        %v2613 = vpop.permute.xlu0 %2612
        %2614 = vrot.lane.b32.xlu0 %v2207, 24
        %v2615 = vpop.permute.xlu0 %2614
        %2616 = vrot.lane.b32.xlu0 %v2208, 24
        %v2617 = vpop.permute.xlu0 %2616
        %2618 = vrot.lane.b32.xlu0 %v2209, 24
        %v2619 = vpop.permute.xlu0 %2618
        %2620 = vrot.lane.b32.xlu0 %v2210, 24
        %v2621 = vpop.permute.xlu0 %2620
        %2622 = vrot.lane.b32.xlu0 %v2211, 24
        %v2623 = vpop.permute.xlu0 %2622
        %2624 = vrot.lane.b32.xlu0 %v2212, 24
        %v2625 = vpop.permute.xlu0 %2624
        %2626 = vrot.lane.b32.xlu0 %v2213, 24
        %v2627 = vpop.permute.xlu0 %2626
        %2628 = vrot.lane.b32.xlu0 %v2214, 24
        %v2629 = vpop.permute.xlu0 %2628
        %2630 = vrot.lane.b32.xlu0 %v2215, 24
        %v2631 = vpop.permute.xlu0 %2630
        %2632 = vrot.lane.b32.xlu0 %v2216, 24
        %v2633 = vpop.permute.xlu0 %2632
        %2666 = vrot.lane.b32.xlu0 %v1196, 32
        %v2667 = vpop.permute.xlu0 %2666
        %2668 = vrot.lane.b32.xlu0 %v1197, 32
        %v2669 = vpop.permute.xlu0 %2668
        %2670 = vrot.lane.b32.xlu0 %v1198, 32
        %v2671 = vpop.permute.xlu0 %2670
        %2672 = vrot.lane.b32.xlu0 %v1199, 32
        %v2673 = vpop.permute.xlu0 %2672
        %2674 = vrot.lane.b32.xlu0 %v1200, 32
        %v2675 = vpop.permute.xlu0 %2674
        %2676 = vrot.lane.b32.xlu0 %v1201, 32
        %v2677 = vpop.permute.xlu0 %2676
        %2678 = vrot.lane.b32.xlu0 %v1202, 32
        %v2679 = vpop.permute.xlu0 %2678
        %2680 = vrot.lane.b32.xlu0 %v1203, 32
        %v2681 = vpop.permute.xlu0 %2680
        %2682 = vrot.lane.b32.xlu0 %v1204, 32
        %v2683 = vpop.permute.xlu0 %2682
        %2684 = vrot.lane.b32.xlu0 %v1205, 32
        %v2685 = vpop.permute.xlu0 %2684
        %2686 = vrot.lane.b32.xlu0 %v1206, 32
        %v2687 = vpop.permute.xlu0 %2686
        %2688 = vrot.lane.b32.xlu0 %v1207, 32
        %v2689 = vpop.permute.xlu0 %2688
        %2690 = vrot.lane.b32.xlu0 %v1208, 32
        %v2691 = vpop.permute.xlu0 %2690
        %2692 = vrot.lane.b32.xlu0 %v1209, 32
        %v2693 = vpop.permute.xlu0 %2692
        %2694 = vrot.lane.b32.xlu0 %v1210, 32
        %v2695 = vpop.permute.xlu0 %2694
        %2696 = vrot.lane.b32.xlu0 %v1211, 32
        %v2697 = vpop.permute.xlu0 %2696
        %2698 = vrot.lane.b32.xlu0 %v1212, 32
        %v2699 = vpop.permute.xlu0 %2698
        %2700 = vrot.lane.b32.xlu0 %v1213, 32
        %v2701 = vpop.permute.xlu0 %2700
        %2702 = vrot.lane.b32.xlu0 %v1214, 32
        %v2703 = vpop.permute.xlu0 %2702
        %2704 = vrot.lane.b32.xlu0 %v1215, 32
        %v2705 = vpop.permute.xlu0 %2704
        %2706 = vrot.lane.b32.xlu0 %v1216, 32
        %v2707 = vpop.permute.xlu0 %2706
        %2708 = vrot.lane.b32.xlu0 %v1217, 32
        %v2709 = vpop.permute.xlu0 %2708
        %2710 = vrot.lane.b32.xlu0 %v1218, 32
        %v2711 = vpop.permute.xlu0 %2710
        %2712 = vrot.lane.b32.xlu0 %v1219, 32
        %v2713 = vpop.permute.xlu0 %2712
        %2714 = vrot.lane.b32.xlu0 %v1220, 32
        %v2715 = vpop.permute.xlu0 %2714
        %2716 = vrot.lane.b32.xlu0 %v1221, 32
        %v2717 = vpop.permute.xlu0 %2716
        %2718 = vrot.lane.b32.xlu0 %v1222, 32
        %v2719 = vpop.permute.xlu0 %2718
        %2720 = vrot.lane.b32.xlu0 %v1223, 32
        %v2721 = vpop.permute.xlu0 %2720
        %2722 = vrot.lane.b32.xlu0 %v1224, 32
        %v2723 = vpop.permute.xlu0 %2722
        %2724 = vrot.lane.b32.xlu0 %v1225, 32
        %v2725 = vpop.permute.xlu0 %2724
        %2726 = vrot.lane.b32.xlu0 %v1226, 32
        %v2727 = vpop.permute.xlu0 %2726
        %2728 = vrot.lane.b32.xlu0 %v1227, 32
        %v2729 = vpop.permute.xlu0 %2728
        %2794 = vrot.lane.b32.xlu0 %v2222, 40
        %v2795 = vpop.permute.xlu0 %2794
        %2796 = vrot.lane.b32.xlu0 %v2223, 40
        %v2797 = vpop.permute.xlu0 %2796
        %2798 = vrot.lane.b32.xlu0 %v2224, 40
        %v2799 = vpop.permute.xlu0 %2798
        %2800 = vrot.lane.b32.xlu0 %v2225, 40
        %v2801 = vpop.permute.xlu0 %2800
        %2802 = vrot.lane.b32.xlu0 %v2226, 40
        %v2803 = vpop.permute.xlu0 %2802
        %2804 = vrot.lane.b32.xlu0 %v2227, 40
        %v2805 = vpop.permute.xlu0 %2804
        %2806 = vrot.lane.b32.xlu0 %v2228, 40
        %v2807 = vpop.permute.xlu0 %2806
        %2808 = vrot.lane.b32.xlu0 %v2229, 40
        %v2809 = vpop.permute.xlu0 %2808
        %2810 = vrot.lane.b32.xlu0 %v2230, 40
        %v2811 = vpop.permute.xlu0 %2810
        %2812 = vrot.lane.b32.xlu0 %v2231, 40
        %v2813 = vpop.permute.xlu0 %2812
        %2814 = vrot.lane.b32.xlu0 %v2232, 40
        %v2815 = vpop.permute.xlu0 %2814
        %2816 = vrot.lane.b32.xlu0 %v2233, 40
        %v2817 = vpop.permute.xlu0 %2816
        %2818 = vrot.lane.b32.xlu0 %v2234, 40
        %v2819 = vpop.permute.xlu0 %2818
        %2820 = vrot.lane.b32.xlu0 %v2235, 40
        %v2821 = vpop.permute.xlu0 %2820
        %2822 = vrot.lane.b32.xlu0 %v2236, 40
        %v2823 = vpop.permute.xlu0 %2822
        %2824 = vrot.lane.b32.xlu0 %v2237, 40
        %v2825 = vpop.permute.xlu0 %2824
        %2826 = vrot.lane.b32.xlu0 %v2238, 40
        %v2827 = vpop.permute.xlu0 %2826
        %2828 = vrot.lane.b32.xlu0 %v2239, 40
        %v2829 = vpop.permute.xlu0 %2828
        %2830 = vrot.lane.b32.xlu0 %v2240, 40
        %v2831 = vpop.permute.xlu0 %2830
        %2832 = vrot.lane.b32.xlu0 %v2241, 40
        %v2833 = vpop.permute.xlu0 %2832
        %2834 = vrot.lane.b32.xlu0 %v2242, 40
        %v2835 = vpop.permute.xlu0 %2834
        %2836 = vrot.lane.b32.xlu0 %v2243, 40
        %v2837 = vpop.permute.xlu0 %2836
        %2838 = vrot.lane.b32.xlu0 %v2244, 40
        %v2839 = vpop.permute.xlu0 %2838
        %2840 = vrot.lane.b32.xlu0 %v2245, 40
        %v2841 = vpop.permute.xlu0 %2840
        %2842 = vrot.lane.b32.xlu0 %v2246, 40
        %v2843 = vpop.permute.xlu0 %2842
        %2844 = vrot.lane.b32.xlu0 %v2247, 40
        %v2845 = vpop.permute.xlu0 %2844
        %2846 = vrot.lane.b32.xlu0 %v2248, 40
        %v2847 = vpop.permute.xlu0 %2846
        %2848 = vrot.lane.b32.xlu0 %v2249, 40
        %v2849 = vpop.permute.xlu0 %2848
        %2850 = vrot.lane.b32.xlu0 %v2250, 40
        %v2851 = vpop.permute.xlu0 %2850
        %2852 = vrot.lane.b32.xlu0 %v2251, 40
        %v2853 = vpop.permute.xlu0 %2852
        %2854 = vrot.lane.b32.xlu0 %v2252, 40
        %v2855 = vpop.permute.xlu0 %2854
        %2856 = vrot.lane.b32.xlu0 %v2253, 40
        %v2857 = vpop.permute.xlu0 %2856
        %2921 = vrot.lane.b32.xlu0 %v2256, 48
        %v2922 = vpop.permute.xlu0 %2921
        %2923 = vrot.lane.b32.xlu0 %v2257, 48
        %v2924 = vpop.permute.xlu0 %2923
        %2925 = vrot.lane.b32.xlu0 %v2258, 48
        %v2926 = vpop.permute.xlu0 %2925
        %2927 = vrot.lane.b32.xlu0 %v2259, 48
        %v2928 = vpop.permute.xlu0 %2927
        %2929 = vrot.lane.b32.xlu0 %v2260, 48
        %v2930 = vpop.permute.xlu0 %2929
        %2931 = vrot.lane.b32.xlu0 %v2261, 48
        %v2932 = vpop.permute.xlu0 %2931
        %2933 = vrot.lane.b32.xlu0 %v2262, 48
        %v2934 = vpop.permute.xlu0 %2933
        %2935 = vrot.lane.b32.xlu0 %v2263, 48
        %v2936 = vpop.permute.xlu0 %2935
        %2937 = vrot.lane.b32.xlu0 %v2264, 48
        %v2938 = vpop.permute.xlu0 %2937
        %2939 = vrot.lane.b32.xlu0 %v2265, 48
        %v2940 = vpop.permute.xlu0 %2939
        %2941 = vrot.lane.b32.xlu0 %v2266, 48
        %v2942 = vpop.permute.xlu0 %2941
        %2943 = vrot.lane.b32.xlu0 %v2267, 48
        %v2944 = vpop.permute.xlu0 %2943
        %2945 = vrot.lane.b32.xlu0 %v2268, 48
        %v2946 = vpop.permute.xlu0 %2945
        %2947 = vrot.lane.b32.xlu0 %v2269, 48
        %v2948 = vpop.permute.xlu0 %2947
        %2949 = vrot.lane.b32.xlu0 %v2270, 48
        %v2950 = vpop.permute.xlu0 %2949
        %2951 = vrot.lane.b32.xlu0 %v2271, 48
        %v2952 = vpop.permute.xlu0 %2951
        %2953 = vrot.lane.b32.xlu0 %v2272, 48
        %v2954 = vpop.permute.xlu0 %2953
        %2955 = vrot.lane.b32.xlu0 %v2273, 48
        %v2956 = vpop.permute.xlu0 %2955
        %2957 = vrot.lane.b32.xlu0 %v2274, 48
        %v2958 = vpop.permute.xlu0 %2957
        %2959 = vrot.lane.b32.xlu0 %v2275, 48
        %v2960 = vpop.permute.xlu0 %2959
        %2961 = vrot.lane.b32.xlu0 %v2276, 48
        %v2962 = vpop.permute.xlu0 %2961
        %2963 = vrot.lane.b32.xlu0 %v2277, 48
        %v2964 = vpop.permute.xlu0 %2963
        %2965 = vrot.lane.b32.xlu0 %v2278, 48
        %v2966 = vpop.permute.xlu0 %2965
        %2967 = vrot.lane.b32.xlu0 %v2279, 48
        %v2968 = vpop.permute.xlu0 %2967
        %2969 = vrot.lane.b32.xlu0 %v2280, 48
        %v2970 = vpop.permute.xlu0 %2969
        %2971 = vrot.lane.b32.xlu0 %v2281, 48
        %v2972 = vpop.permute.xlu0 %2971
        %2973 = vrot.lane.b32.xlu0 %v2282, 48
        %v2974 = vpop.permute.xlu0 %2973
        %2975 = vrot.lane.b32.xlu0 %v2283, 48
        %v2976 = vpop.permute.xlu0 %2975
        %2977 = vrot.lane.b32.xlu0 %v2284, 48
        %v2978 = vpop.permute.xlu0 %2977
        %2979 = vrot.lane.b32.xlu0 %v2285, 48
        %v2980 = vpop.permute.xlu0 %2979
        %2981 = vrot.lane.b32.xlu0 %v2286, 48
        %v2982 = vpop.permute.xlu0 %2981
        %2983 = vrot.lane.b32.xlu0 0.0, 48
        %v2984 = vpop.permute.xlu0 %2983
        %3017 = vrot.lane.b32.xlu0 %v1198, 56
        %v3018 = vpop.permute.xlu0 %3017
        %3019 = vrot.lane.b32.xlu0 %v1199, 56
        %v3020 = vpop.permute.xlu0 %3019
        %3021 = vrot.lane.b32.xlu0 %v1200, 56
        %v3022 = vpop.permute.xlu0 %3021
        %3023 = vrot.lane.b32.xlu0 %v1201, 56
        %v3024 = vpop.permute.xlu0 %3023
        %3025 = vrot.lane.b32.xlu0 %v1202, 56
        %v3026 = vpop.permute.xlu0 %3025
        %3027 = vrot.lane.b32.xlu0 %v1203, 56
        %v3028 = vpop.permute.xlu0 %3027
        %3029 = vrot.lane.b32.xlu0 %v1204, 56
        %v3030 = vpop.permute.xlu0 %3029
        %3031 = vrot.lane.b32.xlu0 %v1205, 56
        %v3032 = vpop.permute.xlu0 %3031
        %3033 = vrot.lane.b32.xlu0 %v1206, 56
        %v3034 = vpop.permute.xlu0 %3033
        %3035 = vrot.lane.b32.xlu0 %v1207, 56
        %v3036 = vpop.permute.xlu0 %3035
        %3037 = vrot.lane.b32.xlu0 %v1208, 56
        %v3038 = vpop.permute.xlu0 %3037
        %3039 = vrot.lane.b32.xlu0 %v1209, 56
        %v3040 = vpop.permute.xlu0 %3039
        %3041 = vrot.lane.b32.xlu0 %v1210, 56
        %v3042 = vpop.permute.xlu0 %3041
        %3043 = vrot.lane.b32.xlu0 %v1211, 56
        %v3044 = vpop.permute.xlu0 %3043
        %3045 = vrot.lane.b32.xlu0 %v1212, 56
        %v3046 = vpop.permute.xlu0 %3045
        %3047 = vrot.lane.b32.xlu0 %v1213, 56
        %v3048 = vpop.permute.xlu0 %3047
        %3049 = vrot.lane.b32.xlu0 %v1214, 56
        %v3050 = vpop.permute.xlu0 %3049
        %3051 = vrot.lane.b32.xlu0 %v1215, 56
        %v3052 = vpop.permute.xlu0 %3051
        %3053 = vrot.lane.b32.xlu0 %v1216, 56
        %v3054 = vpop.permute.xlu0 %3053
        %3055 = vrot.lane.b32.xlu0 %v1217, 56
        %v3056 = vpop.permute.xlu0 %3055
        %3057 = vrot.lane.b32.xlu0 %v1218, 56
        %v3058 = vpop.permute.xlu0 %3057
        %3059 = vrot.lane.b32.xlu0 %v1219, 56
        %v3060 = vpop.permute.xlu0 %3059
        %3061 = vrot.lane.b32.xlu0 %v1220, 56
        %v3062 = vpop.permute.xlu0 %3061
        %3063 = vrot.lane.b32.xlu0 %v1221, 56
        %v3064 = vpop.permute.xlu0 %3063
        %3065 = vrot.lane.b32.xlu0 %v1222, 56
        %v3066 = vpop.permute.xlu0 %3065
        %3067 = vrot.lane.b32.xlu0 %v1223, 56
        %v3068 = vpop.permute.xlu0 %3067
        %3069 = vrot.lane.b32.xlu0 %v1224, 56
        %v3070 = vpop.permute.xlu0 %3069
        %3071 = vrot.lane.b32.xlu0 %v1225, 56
        %v3072 = vpop.permute.xlu0 %3071
        %3073 = vrot.lane.b32.xlu0 %v1226, 56
        %v3074 = vpop.permute.xlu0 %3073
        %3075 = vrot.lane.b32.xlu0 %v1227, 56
        %v3076 = vpop.permute.xlu0 %3075
        %3077 = vrot.lane.b32.xlu0 0.0, 56
        %v3078 = vpop.permute.xlu0 %3077
        %3140 = vrot.lane.b32.xlu0 %v2287, 64
        %v3141 = vpop.permute.xlu0 %3140
        %3142 = vrot.lane.b32.xlu0 %v2288, 64
        %v3143 = vpop.permute.xlu0 %3142
        %3144 = vrot.lane.b32.xlu0 %v2289, 64
        %v3145 = vpop.permute.xlu0 %3144
        %3146 = vrot.lane.b32.xlu0 %v2290, 64
        %v3147 = vpop.permute.xlu0 %3146
        %3148 = vrot.lane.b32.xlu0 %v2291, 64
        %v3149 = vpop.permute.xlu0 %3148
        %3150 = vrot.lane.b32.xlu0 %v2292, 64
        %v3151 = vpop.permute.xlu0 %3150
        %3152 = vrot.lane.b32.xlu0 %v2293, 64
        %v3153 = vpop.permute.xlu0 %3152
        %3154 = vrot.lane.b32.xlu0 %v2294, 64
        %v3155 = vpop.permute.xlu0 %3154
        %3156 = vrot.lane.b32.xlu0 %v2295, 64
        %v3157 = vpop.permute.xlu0 %3156
        %3158 = vrot.lane.b32.xlu0 %v2296, 64
        %v3159 = vpop.permute.xlu0 %3158
        %3160 = vrot.lane.b32.xlu0 %v2297, 64
        %v3161 = vpop.permute.xlu0 %3160
        %3162 = vrot.lane.b32.xlu0 %v2298, 64
        %v3163 = vpop.permute.xlu0 %3162
        %3164 = vrot.lane.b32.xlu0 %v2299, 64
        %v3165 = vpop.permute.xlu0 %3164
        %3166 = vrot.lane.b32.xlu0 %v2300, 64
        %v3167 = vpop.permute.xlu0 %3166
        %3168 = vrot.lane.b32.xlu0 %v2301, 64
        %v3169 = vpop.permute.xlu0 %3168
        %3170 = vrot.lane.b32.xlu0 %v2302, 64
        %v3171 = vpop.permute.xlu0 %3170
        %3172 = vrot.lane.b32.xlu0 %v2303, 64
        %v3173 = vpop.permute.xlu0 %3172
        %3174 = vrot.lane.b32.xlu0 %v2304, 64
        %v3175 = vpop.permute.xlu0 %3174
        %3176 = vrot.lane.b32.xlu0 %v2305, 64
        %v3177 = vpop.permute.xlu0 %3176
        %3178 = vrot.lane.b32.xlu0 %v2306, 64
        %v3179 = vpop.permute.xlu0 %3178
        %3180 = vrot.lane.b32.xlu0 %v2307, 64
        %v3181 = vpop.permute.xlu0 %3180
        %3182 = vrot.lane.b32.xlu0 %v2308, 64
        %v3183 = vpop.permute.xlu0 %3182
        %3184 = vrot.lane.b32.xlu0 %v2309, 64
        %v3185 = vpop.permute.xlu0 %3184
        %3186 = vrot.lane.b32.xlu0 %v2310, 64
        %v3187 = vpop.permute.xlu0 %3186
        %3188 = vrot.lane.b32.xlu0 %v2311, 64
        %v3189 = vpop.permute.xlu0 %3188
        %3190 = vrot.lane.b32.xlu0 %v2312, 64
        %v3191 = vpop.permute.xlu0 %3190
        %3192 = vrot.lane.b32.xlu0 %v2313, 64
        %v3193 = vpop.permute.xlu0 %3192
        %3194 = vrot.lane.b32.xlu0 %v2314, 64
        %v3195 = vpop.permute.xlu0 %3194
        %3196 = vrot.lane.b32.xlu0 %v2315, 64
        %v3197 = vpop.permute.xlu0 %3196
        %3198 = vrot.lane.b32.xlu0 %v2316, 64
        %v3199 = vpop.permute.xlu0 %3198
        %3200 = vrot.lane.b32.xlu0 0.0, 64
        %v3201 = vpop.permute.xlu0 %3200
        %v3233 = vsel %vm874, 0.0, %v2319
        %v3234 = vsel %vm874, %v1894, %v2321
        %v3235 = vsel %vm874, %v1895, %v2323
        %v3236 = vsel %vm874, %v1896, %v2325
        %v3237 = vsel %vm874, %v1897, %v2327
        %v3238 = vsel %vm874, %v1898, %v2329
        %v3239 = vsel %vm874, %v1899, %v2331
        %v3240 = vsel %vm874, %v1900, %v2333
        %v3241 = vsel %vm874, %v1901, %v2335
        %v3242 = vsel %vm874, %v1902, %v2337
        %v3243 = vsel %vm874, %v1903, %v2339
        %v3244 = vsel %vm874, %v1904, %v2341
        %v3245 = vsel %vm874, %v1905, %v2343
        %v3246 = vsel %vm874, %v1906, %v2345
        %v3247 = vsel %vm874, %v1907, %v2347
        %v3248 = vsel %vm874, %v1908, %v2349
        %v3249 = vsel %vm874, %v1909, %v2351
        %v3250 = vsel %vm874, %v1910, %v2353
        %v3251 = vsel %vm874, %v1911, %v2355
        %v3252 = vsel %vm874, %v1912, %v2357
        %v3253 = vsel %vm874, %v1913, %v2359
        %v3254 = vsel %vm874, %v1914, %v2361
        %v3255 = vsel %vm874, %v1915, %v2363
        %v3256 = vsel %vm874, %v1916, %v2365
        %v3257 = vsel %vm874, %v1917, %v2367
        %v3258 = vsel %vm874, %v1918, %v2369
        %v3259 = vsel %vm874, %v1919, %v2371
        %v3260 = vsel %vm874, %v1920, %v2373
        %v3261 = vsel %vm874, %v1921, %v2375
        %v3262 = vsel %vm874, %v1922, %v2377
        %v3263 = vsel %vm874, %v1923, %v2379
        %vm3264 = vcmask 130048
        %v3265 = vsel %vm3264, %v3233, %v2443
        %v3266 = vsel %vm3264, %v3233, %v2445
        %v3267 = vsel %vm3264, %v3234, %v2447
        %v3268 = vsel %vm3264, %v3235, %v2449
        %v3269 = vsel %vm3264, %v3236, %v2451
        %v3270 = vsel %vm3264, %v3237, %v2453
        %v3271 = vsel %vm3264, %v3238, %v2455
        %v3272 = vsel %vm3264, %v3239, %v2457
        %v3273 = vsel %vm3264, %v3240, %v2459
        %v3274 = vsel %vm3264, %v3241, %v2461
        %v3275 = vsel %vm3264, %v3242, %v2463
        %v3276 = vsel %vm3264, %v3243, %v2465
        %v3277 = vsel %vm3264, %v3244, %v2467
        %v3278 = vsel %vm3264, %v3245, %v2469
        %v3279 = vsel %vm3264, %v3246, %v2471
        %v3280 = vsel %vm3264, %v3247, %v2473
        %v3281 = vsel %vm3264, %v3248, %v2475
        %v3282 = vsel %vm3264, %v3249, %v2477
        %v3283 = vsel %vm3264, %v3250, %v2479
        %v3284 = vsel %vm3264, %v3251, %v2481
        %v3285 = vsel %vm3264, %v3252, %v2483
        %v3286 = vsel %vm3264, %v3253, %v2485
        %v3287 = vsel %vm3264, %v3254, %v2487
        %v3288 = vsel %vm3264, %v3255, %v2489
        %v3289 = vsel %vm3264, %v3256, %v2491
        %v3290 = vsel %vm3264, %v3257, %v2493
        %v3291 = vsel %vm3264, %v3258, %v2495
        %v3292 = vsel %vm3264, %v3259, %v2497
        %v3293 = vsel %vm3264, %v3260, %v2499
        %v3294 = vsel %vm3264, %v3261, %v2501
        %v3295 = vsel %vm3264, %v3262, %v2503
        %v3296 = vsel %vm3264, %v3263, %v2505
        %vm3297 = vcmask 195584
        %v3298 = vsel %vm3297, %v3265, %v2571
        %v3299 = vsel %vm3297, %v3266, %v2573
        %v3300 = vsel %vm3297, %v3267, %v2575
        %v3301 = vsel %vm3297, %v3268, %v2577
        %v3302 = vsel %vm3297, %v3269, %v2579
        %v3303 = vsel %vm3297, %v3270, %v2581
        %v3304 = vsel %vm3297, %v3271, %v2583
        %v3305 = vsel %vm3297, %v3272, %v2585
        %v3306 = vsel %vm3297, %v3273, %v2587
        %v3307 = vsel %vm3297, %v3274, %v2589
        %v3308 = vsel %vm3297, %v3275, %v2591
        %v3309 = vsel %vm3297, %v3276, %v2593
        %v3310 = vsel %vm3297, %v3277, %v2595
        %v3311 = vsel %vm3297, %v3278, %v2597
        %v3312 = vsel %vm3297, %v3279, %v2599
        %v3313 = vsel %vm3297, %v3280, %v2601
        %v3314 = vsel %vm3297, %v3281, %v2603
        %v3315 = vsel %vm3297, %v3282, %v2605
        %v3316 = vsel %vm3297, %v3283, %v2607
        %v3317 = vsel %vm3297, %v3284, %v2609
        %v3318 = vsel %vm3297, %v3285, %v2611
        %v3319 = vsel %vm3297, %v3286, %v2613
        %v3320 = vsel %vm3297, %v3287, %v2615
        %v3321 = vsel %vm3297, %v3288, %v2617
        %v3322 = vsel %vm3297, %v3289, %v2619
        %v3323 = vsel %vm3297, %v3290, %v2621
        %v3324 = vsel %vm3297, %v3291, %v2623
        %v3325 = vsel %vm3297, %v3292, %v2625
        %v3326 = vsel %vm3297, %v3293, %v2627
        %v3327 = vsel %vm3297, %v3294, %v2629
        %v3328 = vsel %vm3297, %v3295, %v2631
        %v3329 = vsel %vm3297, %v3296, %v2633
        %vm3330 = vcmask 261120
        %v3331 = vsel %vm3330, %v3298, %v2667
        %v3332 = vsel %vm3330, %v3299, %v2669
        %v3333 = vsel %vm3330, %v3300, %v2671
        %v3334 = vsel %vm3330, %v3301, %v2673
        %v3335 = vsel %vm3330, %v3302, %v2675
        %v3336 = vsel %vm3330, %v3303, %v2677
        %v3337 = vsel %vm3330, %v3304, %v2679
        %v3338 = vsel %vm3330, %v3305, %v2681
        %v3339 = vsel %vm3330, %v3306, %v2683
        %v3340 = vsel %vm3330, %v3307, %v2685
        %v3341 = vsel %vm3330, %v3308, %v2687
        %v3342 = vsel %vm3330, %v3309, %v2689
        %v3343 = vsel %vm3330, %v3310, %v2691
        %v3344 = vsel %vm3330, %v3311, %v2693
        %v3345 = vsel %vm3330, %v3312, %v2695
        %v3346 = vsel %vm3330, %v3313, %v2697
        %v3347 = vsel %vm3330, %v3314, %v2699
        %v3348 = vsel %vm3330, %v3315, %v2701
        %v3349 = vsel %vm3330, %v3316, %v2703
        %v3350 = vsel %vm3330, %v3317, %v2705
        %v3351 = vsel %vm3330, %v3318, %v2707
        %v3352 = vsel %vm3330, %v3319, %v2709
        %v3353 = vsel %vm3330, %v3320, %v2711
        %v3354 = vsel %vm3330, %v3321, %v2713
        %v3355 = vsel %vm3330, %v3322, %v2715
        %v3356 = vsel %vm3330, %v3323, %v2717
        %v3357 = vsel %vm3330, %v3324, %v2719
        %v3358 = vsel %vm3330, %v3325, %v2721
        %v3359 = vsel %vm3330, %v3326, %v2723
        %v3360 = vsel %vm3330, %v3327, %v2725
        %v3361 = vsel %vm3330, %v3328, %v2727
        %v3362 = vsel %vm3330, %v3329, %v2729
        %vm3363 = vcmask 326656
        %v3364 = vsel %vm3363, %v3331, %v2795
        %v3365 = vsel %vm3363, %v3332, %v2797
        %v3366 = vsel %vm3363, %v3333, %v2799
        %v3367 = vsel %vm3363, %v3334, %v2801
        %v3368 = vsel %vm3363, %v3335, %v2803
        %v3369 = vsel %vm3363, %v3336, %v2805
        %v3370 = vsel %vm3363, %v3337, %v2807
        %v3371 = vsel %vm3363, %v3338, %v2809
        %v3372 = vsel %vm3363, %v3339, %v2811
        %v3373 = vsel %vm3363, %v3340, %v2813
        %v3374 = vsel %vm3363, %v3341, %v2815
        %v3375 = vsel %vm3363, %v3342, %v2817
        %v3376 = vsel %vm3363, %v3343, %v2819
        %v3377 = vsel %vm3363, %v3344, %v2821
        %v3378 = vsel %vm3363, %v3345, %v2823
        %v3379 = vsel %vm3363, %v3346, %v2825
        %v3380 = vsel %vm3363, %v3347, %v2827
        %v3381 = vsel %vm3363, %v3348, %v2829
        %v3382 = vsel %vm3363, %v3349, %v2831
        %v3383 = vsel %vm3363, %v3350, %v2833
        %v3384 = vsel %vm3363, %v3351, %v2835
        %v3385 = vsel %vm3363, %v3352, %v2837
        %v3386 = vsel %vm3363, %v3353, %v2839
        %v3387 = vsel %vm3363, %v3354, %v2841
        %v3388 = vsel %vm3363, %v3355, %v2843
        %v3389 = vsel %vm3363, %v3356, %v2845
        %v3390 = vsel %vm3363, %v3357, %v2847
        %v3391 = vsel %vm3363, %v3358, %v2849
        %v3392 = vsel %vm3363, %v3359, %v2851
        %v3393 = vsel %vm3363, %v3360, %v2853
        %v3394 = vsel %vm3363, %v3361, %v2855
        %v3395 = vsel %vm3363, %v3362, %v2857
        %vm3396 = vcmask 392192
        %v3397 = vsel %vm3396, %v3364, %v2922
        %v3398 = vsel %vm3396, %v3365, %v2924
        %v3399 = vsel %vm3396, %v3366, %v2926
        %v3400 = vsel %vm3396, %v3367, %v2928
        %v3401 = vsel %vm3396, %v3368, %v2930
        %v3402 = vsel %vm3396, %v3369, %v2932
        %v3403 = vsel %vm3396, %v3370, %v2934
        %v3404 = vsel %vm3396, %v3371, %v2936
        %v3405 = vsel %vm3396, %v3372, %v2938
        %v3406 = vsel %vm3396, %v3373, %v2940
        %v3407 = vsel %vm3396, %v3374, %v2942
        %v3408 = vsel %vm3396, %v3375, %v2944
        %v3409 = vsel %vm3396, %v3376, %v2946
        %v3410 = vsel %vm3396, %v3377, %v2948
        %v3411 = vsel %vm3396, %v3378, %v2950
        %v3412 = vsel %vm3396, %v3379, %v2952
        %v3413 = vsel %vm3396, %v3380, %v2954
        %v3414 = vsel %vm3396, %v3381, %v2956
        %v3415 = vsel %vm3396, %v3382, %v2958
        %v3416 = vsel %vm3396, %v3383, %v2960
        %v3417 = vsel %vm3396, %v3384, %v2962
        %v3418 = vsel %vm3396, %v3385, %v2964
        %v3419 = vsel %vm3396, %v3386, %v2966
        %v3420 = vsel %vm3396, %v3387, %v2968
        %v3421 = vsel %vm3396, %v3388, %v2970
        %v3422 = vsel %vm3396, %v3389, %v2972
        %v3423 = vsel %vm3396, %v3390, %v2974
        %v3424 = vsel %vm3396, %v3391, %v2976
        %v3425 = vsel %vm3396, %v3392, %v2978
        %v3426 = vsel %vm3396, %v3393, %v2980
        %v3427 = vsel %vm3396, %v3394, %v2982
        %v3428 = vsel %vm3396, %v3395, %v2984
        %vm3429 = vcmask 457728
        %v3430 = vsel %vm3429, %v3397, %v3018
        %v3431 = vsel %vm3429, %v3398, %v3020
        %v3432 = vsel %vm3429, %v3399, %v3022
        %v3433 = vsel %vm3429, %v3400, %v3024
        %v3434 = vsel %vm3429, %v3401, %v3026
        %v3435 = vsel %vm3429, %v3402, %v3028
        %v3436 = vsel %vm3429, %v3403, %v3030
        %v3437 = vsel %vm3429, %v3404, %v3032
        %v3438 = vsel %vm3429, %v3405, %v3034
        %v3439 = vsel %vm3429, %v3406, %v3036
        %v3440 = vsel %vm3429, %v3407, %v3038
        %v3441 = vsel %vm3429, %v3408, %v3040
        %v3442 = vsel %vm3429, %v3409, %v3042
        %v3443 = vsel %vm3429, %v3410, %v3044
        %v3444 = vsel %vm3429, %v3411, %v3046
        %v3445 = vsel %vm3429, %v3412, %v3048
        %v3446 = vsel %vm3429, %v3413, %v3050
        %v3447 = vsel %vm3429, %v3414, %v3052
        %v3448 = vsel %vm3429, %v3415, %v3054
        %v3449 = vsel %vm3429, %v3416, %v3056
        %v3450 = vsel %vm3429, %v3417, %v3058
        %v3451 = vsel %vm3429, %v3418, %v3060
        %v3452 = vsel %vm3429, %v3419, %v3062
        %v3453 = vsel %vm3429, %v3420, %v3064
        %v3454 = vsel %vm3429, %v3421, %v3066
        %v3455 = vsel %vm3429, %v3422, %v3068
        %v3456 = vsel %vm3429, %v3423, %v3070
        %v3457 = vsel %vm3429, %v3424, %v3072
        %v3458 = vsel %vm3429, %v3425, %v3074
        %v3459 = vsel %vm3429, %v3426, %v3076
        %v3460 = vsel %vm3429, %v3427, %v3078
        %v3461 = vsel %vm3429, %v3428, %v3078
        %vm3462 = vcmask 523264
        %v3463 = vsel %vm3462, %v3430, %v3141
        %v3464 = vsel %vm3462, %v3431, %v3143
        %v3465 = vsel %vm3462, %v3432, %v3145
        %v3466 = vsel %vm3462, %v3433, %v3147
        %v3467 = vsel %vm3462, %v3434, %v3149
        %v3468 = vsel %vm3462, %v3435, %v3151
        %v3469 = vsel %vm3462, %v3436, %v3153
        %v3470 = vsel %vm3462, %v3437, %v3155
        %v3471 = vsel %vm3462, %v3438, %v3157
        %v3472 = vsel %vm3462, %v3439, %v3159
        %v3473 = vsel %vm3462, %v3440, %v3161
        %v3474 = vsel %vm3462, %v3441, %v3163
        %v3475 = vsel %vm3462, %v3442, %v3165
        %v3476 = vsel %vm3462, %v3443, %v3167
        %v3477 = vsel %vm3462, %v3444, %v3169
        %v3478 = vsel %vm3462, %v3445, %v3171
        %v3479 = vsel %vm3462, %v3446, %v3173
        %v3480 = vsel %vm3462, %v3447, %v3175
        %v3481 = vsel %vm3462, %v3448, %v3177
        %v3482 = vsel %vm3462, %v3449, %v3179
        %v3483 = vsel %vm3462, %v3450, %v3181
        %v3484 = vsel %vm3462, %v3451, %v3183
        %v3485 = vsel %vm3462, %v3452, %v3185
        %v3486 = vsel %vm3462, %v3453, %v3187
        %v3487 = vsel %vm3462, %v3454, %v3189
        %v3488 = vsel %vm3462, %v3455, %v3191
        %v3489 = vsel %vm3462, %v3456, %v3193
        %v3490 = vsel %vm3462, %v3457, %v3195
        %v3491 = vsel %vm3462, %v3458, %v3197
        %v3492 = vsel %vm3462, %v3459, %v3199
        %v3493 = vsel %vm3462, %v3460, %v3201
        %v3494 = vsel %vm3462, %v3461, %v3201
        %v3495 = vld [vmem:[%s5] sm:$0xff]
        %v3496 = vld [vmem:[%s5 + $0x8] sm:$0xff]
        %v3497 = vld [vmem:[%s5 + $0x10] sm:$0xff]
        %v3498 = vld [vmem:[%s5 + $0x18] sm:$0xff]
        %v3499 = vld [vmem:[%s5 + $0x20] sm:$0xff]
        %v3500 = vld [vmem:[%s5 + $0x28] sm:$0xff]
        %v3501 = vld [vmem:[%s5 + $0x30] sm:$0xff]
        %v3502 = vld [vmem:[%s5 + $0x38] sm:$0xff]
        %v3503 = vld [vmem:[%s5 + $0x40] sm:$0xff]
        %v3504 = vld [vmem:[%s6] sm:$0x1]
        %v3506 = vlaneseq
        %v3507 = vshrl.u32 %v3506, 7
        %v3508 = vsub.s32 0, %v3507
        %v3509 = vrot.slane %v3504, %v3508
        %vm3511 = vcmask 588800
        %v3513 = vsel %vm3511, %v3463, 0
        %v3516 = vsel %vm3511, %v3464, 0
        %v3519 = vsel %vm3511, %v3465, 0
        %v3522 = vsel %vm3511, %v3466, 0
        %v3525 = vsel %vm3511, %v3467, 0
        %v3528 = vsel %vm3511, %v3468, 0
        %v3531 = vsel %vm3511, %v3469, 0
        %v3534 = vsel %vm3511, %v3470, 0
        %v3537 = vsel %vm3511, %v3471, 0
        %v3540 = vsel %vm3511, %v3472, 0
        %v3543 = vsel %vm3511, %v3473, 0
        %v3546 = vsel %vm3511, %v3474, 0
        %v3549 = vsel %vm3511, %v3475, 0
        %v3552 = vsel %vm3511, %v3476, 0
        %v3555 = vsel %vm3511, %v3477, 0
        %v3558 = vsel %vm3511, %v3478, 0
        %v3561 = vsel %vm3511, %v3479, 0
        %v3564 = vsel %vm3511, %v3480, 0
        %v3567 = vsel %vm3511, %v3481, 0
        %v3570 = vsel %vm3511, %v3482, 0
        %v3573 = vsel %vm3511, %v3483, 0
        %v3576 = vsel %vm3511, %v3484, 0
        %v3579 = vsel %vm3511, %v3485, 0
        %v3582 = vsel %vm3511, %v3486, 0
        %v3585 = vsel %vm3511, %v3487, 0
        %v3588 = vsel %vm3511, %v3488, 0
        %v3591 = vsel %vm3511, %v3489, 0
        %v3594 = vsel %vm3511, %v3490, 0
        %v3597 = vsel %vm3511, %v3491, 0
        %v3600 = vsel %vm3511, %v3492, 0
        %v3603 = vsel %vm3511, %v3493, 0
        %v3606 = vsel %vm3511, %v3494, 0
        %3608 = vmatprep.subr.mxu0 0.0
        %3609 = vmatpush1.msra.mxu0 %v3495
        %3610 = vmatprep.subr.mxu0 0.0
        %3611 = vmatpush1.msra.mxu0 %v3496
        %3612 = vmatprep.subr.mxu0 0.0
        %3613 = vmatpush1.msra.mxu0 %v3497
        %3614 = vmatprep.subr.mxu0 0.0
        %3615 = vmatpush1.msra.mxu0 %v3498
        %3616 = vmatprep.subr.mxu0 0.0
        %3617 = vmatpush1.msra.mxu0 %v3499
        %3618 = vmatprep.subr.mxu0 0.0
        %3619 = vmatpush1.msra.mxu0 %v3500
        %3620 = vmatprep.subr.mxu0 0.0
        %3621 = vmatpush1.msra.mxu0 %v3501
        %3622 = vmatprep.subr.mxu0 0.0
        %3623 = vmatpush1.msra.mxu0 %v3502
        %3624 = vmatprep.subr.mxu0 0.0
        %3625 = vmatpush1.msra.mxu0 %v3503
        %3626 = vmatprep.subr.mxu0 0.0
        %3627 = vmatpush1.msra.mxu0 0.0
        %3628 = vmatprep.subr.mxu0 0.0
        %3629 = vmatpush1.msra.mxu0 0.0
        %3630 = vmatprep.subr.mxu0 0.0
        %3631 = vmatpush1.msra.mxu0 0.0
        %3632 = vmatprep.subr.mxu0 0.0
        %3633 = vmatpush1.msra.mxu0 0.0
        %3634 = vmatprep.subr.mxu0 0.0
        %3635 = vmatpush1.msra.mxu0 0.0
        %3636 = vmatprep.subr.mxu0 0.0
        %3637 = vmatpush1.msra.mxu0 0.0
        %3638 = vmatprep.subr.mxu0 0.0
        %3639 = vmatpush1.msra.mxu0 0.0
        %3640 = vmatprep.subr.mxu0 0.0
        %3641 = vmatpush1.msra.mxu0 0.0
        %3642 = vmatprep.subr.mxu0 0.0
        %3643 = vmatpush1.msra.mxu0 0.0
        %3644 = vmatprep.subr.mxu0 0.0
        %3645 = vmatpush1.msra.mxu0 0.0
        %3646 = vmatprep.subr.mxu0 0.0
        %3647 = vmatpush1.msra.mxu0 0.0
        %3648 = vmatprep.subr.mxu0 0.0
        %3649 = vmatpush1.msra.mxu0 0.0
        %3650 = vmatprep.subr.mxu0 0.0
        %3651 = vmatpush1.msra.mxu0 0.0
        %3652 = vmatprep.subr.mxu0 0.0
        %3653 = vmatpush1.msra.mxu0 0.0
        %3654 = vmatprep.subr.mxu0 0.0
        %3655 = vmatpush1.msra.mxu0 0.0
        %3656 = vmatprep.subr.mxu0 0.0
        %3657 = vmatpush1.msra.mxu0 0.0
        %3658 = vmatprep.subr.mxu0 0.0
        %3659 = vmatpush1.msra.mxu0 0.0
        %3660 = vmatprep.subr.mxu0 0.0
        %3661 = vmatpush1.msra.mxu0 0.0
        %3662 = vmatprep.subr.mxu0 0.0
        %3663 = vmatpush1.msra.mxu0 0.0
        %3664 = vmatprep.subr.mxu0 0.0
        %3665 = vmatpush1.msra.mxu0 0.0
        %3666 = vmatprep.subr.mxu0 0.0
        %3667 = vmatpush1.msra.mxu0 0.0
        %3668 = vmatprep.subr.mxu0 0.0
        %3669 = vmatpush1.msra.mxu0 0.0
        %3670 = vmatprep.subr.mxu0 0.0
        %3671 = vmatpush1.msra.mxu0 0.0
        %3672 = vmatprep.mubr.f32.mxu0 0.0
        %3673 = vmatmul.mubr.f32.gmra.mrb[0].mxu0 %v3513
        %v3674 = vpop.f32.mrb[0].mxu0
        %v3675 = vadd.f32 %v3509, %v3674
        %v3676 = vpop.f32.mrb[0].mxu0
        %3677 = vmatprep.mubr.f32.mxu0 0.0
        %3678 = vmatmul.mubr.f32.gmra.mrb[0].mxu0 %v3516
        %v3679 = vpop.f32.mrb[0].mxu0
        %v3680 = vadd.f32 %v3509, %v3679
        %v3681 = vpop.f32.mrb[0].mxu0
        %3682 = vmatprep.mubr.f32.mxu0 0.0
        %3683 = vmatmul.mubr.f32.gmra.mrb[0].mxu0 %v3519
        %v3684 = vpop.f32.mrb[0].mxu0
        %v3685 = vadd.f32 %v3509, %v3684
        %v3686 = vpop.f32.mrb[0].mxu0
        %3687 = vmatprep.mubr.f32.mxu0 0.0
        %3688 = vmatmul.mubr.f32.gmra.mrb[0].mxu0 %v3522
        %v3689 = vpop.f32.mrb[0].mxu0
        %v3690 = vadd.f32 %v3509, %v3689
        %v3691 = vpop.f32.mrb[0].mxu0
        %3692 = vmatprep.mubr.f32.mxu0 0.0
        %3693 = vmatmul.mubr.f32.gmra.mrb[0].mxu0 %v3525
        %v3694 = vpop.f32.mrb[0].mxu0
        %v3695 = vadd.f32 %v3509, %v3694
        %v3696 = vpop.f32.mrb[0].mxu0
        %3697 = vmatprep.mubr.f32.mxu0 0.0
        %3698 = vmatmul.mubr.f32.gmra.mrb[0].mxu0 %v3528
        %v3699 = vpop.f32.mrb[0].mxu0
        %v3700 = vadd.f32 %v3509, %v3699
        %v3701 = vpop.f32.mrb[0].mxu0
        %3702 = vmatprep.mubr.f32.mxu0 0.0
        %3703 = vmatmul.mubr.f32.gmra.mrb[0].mxu0 %v3531
        %v3704 = vpop.f32.mrb[0].mxu0
        %v3705 = vadd.f32 %v3509, %v3704
        %v3706 = vpop.f32.mrb[0].mxu0
        %3707 = vmatprep.mubr.f32.mxu0 0.0
        %3708 = vmatmul.mubr.f32.gmra.mrb[0].mxu0 %v3534
        %v3709 = vpop.f32.mrb[0].mxu0
        %v3710 = vadd.f32 %v3509, %v3709
        %v3711 = vpop.f32.mrb[0].mxu0
        %3712 = vmatprep.mubr.f32.mxu0 0.0
        %3713 = vmatmul.mubr.f32.gmra.mrb[0].mxu0 %v3537
        %v3714 = vpop.f32.mrb[0].mxu0
        %v3715 = vadd.f32 %v3509, %v3714
        %v3716 = vpop.f32.mrb[0].mxu0
        %3717 = vmatprep.mubr.f32.mxu0 0.0
        %3718 = vmatmul.mubr.f32.gmra.mrb[0].mxu0 %v3540
        %v3719 = vpop.f32.mrb[0].mxu0
        %v3720 = vadd.f32 %v3509, %v3719
        %v3721 = vpop.f32.mrb[0].mxu0
        %3722 = vmatprep.mubr.f32.mxu0 0.0
        %3723 = vmatmul.mubr.f32.gmra.mrb[0].mxu0 %v3543
        %v3724 = vpop.f32.mrb[0].mxu0
        %v3725 = vadd.f32 %v3509, %v3724
        %v3726 = vpop.f32.mrb[0].mxu0
        %3727 = vmatprep.mubr.f32.mxu0 0.0
        %3728 = vmatmul.mubr.f32.gmra.mrb[0].mxu0 %v3546
        %v3729 = vpop.f32.mrb[0].mxu0
        %v3730 = vadd.f32 %v3509, %v3729
        %v3731 = vpop.f32.mrb[0].mxu0
        %3732 = vmatprep.mubr.f32.mxu0 0.0
        %3733 = vmatmul.mubr.f32.gmra.mrb[0].mxu0 %v3549
        %v3734 = vpop.f32.mrb[0].mxu0
        %v3735 = vadd.f32 %v3509, %v3734
        %v3736 = vpop.f32.mrb[0].mxu0
        %3737 = vmatprep.mubr.f32.mxu0 0.0
        %3738 = vmatmul.mubr.f32.gmra.mrb[0].mxu0 %v3552
        %v3739 = vpop.f32.mrb[0].mxu0
        %v3740 = vadd.f32 %v3509, %v3739
        %v3741 = vpop.f32.mrb[0].mxu0
        %3742 = vmatprep.mubr.f32.mxu0 0.0
        %3743 = vmatmul.mubr.f32.gmra.mrb[0].mxu0 %v3555
        %v3744 = vpop.f32.mrb[0].mxu0
        %v3745 = vadd.f32 %v3509, %v3744
        %v3746 = vpop.f32.mrb[0].mxu0
        %3747 = vmatprep.mubr.f32.mxu0 0.0
        %3748 = vmatmul.mubr.f32.gmra.mrb[0].mxu0 %v3558
        %v3749 = vpop.f32.mrb[0].mxu0
        %v3750 = vadd.f32 %v3509, %v3749
        %v3751 = vpop.f32.mrb[0].mxu0
        %3752 = vmatprep.mubr.f32.mxu0 0.0
        %3753 = vmatmul.mubr.f32.gmra.mrb[0].mxu0 %v3561
        %v3754 = vpop.f32.mrb[0].mxu0
        %v3755 = vadd.f32 %v3509, %v3754
        %v3756 = vpop.f32.mrb[0].mxu0
        %3757 = vmatprep.mubr.f32.mxu0 0.0
        %3758 = vmatmul.mubr.f32.gmra.mrb[0].mxu0 %v3564
        %v3759 = vpop.f32.mrb[0].mxu0
        %v3760 = vadd.f32 %v3509, %v3759
        %v3761 = vpop.f32.mrb[0].mxu0
        %3762 = vmatprep.mubr.f32.mxu0 0.0
        %3763 = vmatmul.mubr.f32.gmra.mrb[0].mxu0 %v3567
        %v3764 = vpop.f32.mrb[0].mxu0
        %v3765 = vadd.f32 %v3509, %v3764
        %v3766 = vpop.f32.mrb[0].mxu0
        %3767 = vmatprep.mubr.f32.mxu0 0.0
        %3768 = vmatmul.mubr.f32.gmra.mrb[0].mxu0 %v3570
        %v3769 = vpop.f32.mrb[0].mxu0
        %v3770 = vadd.f32 %v3509, %v3769
        %v3771 = vpop.f32.mrb[0].mxu0
        %3772 = vmatprep.mubr.f32.mxu0 0.0
        %3773 = vmatmul.mubr.f32.gmra.mrb[0].mxu0 %v3573
        %v3774 = vpop.f32.mrb[0].mxu0
        %v3775 = vadd.f32 %v3509, %v3774
        %v3776 = vpop.f32.mrb[0].mxu0
        %3777 = vmatprep.mubr.f32.mxu0 0.0
        %3778 = vmatmul.mubr.f32.gmra.mrb[0].mxu0 %v3576
        %v3779 = vpop.f32.mrb[0].mxu0
        %v3780 = vadd.f32 %v3509, %v3779
        %v3781 = vpop.f32.mrb[0].mxu0
        %3782 = vmatprep.mubr.f32.mxu0 0.0
        %3783 = vmatmul.mubr.f32.gmra.mrb[0].mxu0 %v3579
        %v3784 = vpop.f32.mrb[0].mxu0
        %v3785 = vadd.f32 %v3509, %v3784
        %v3786 = vpop.f32.mrb[0].mxu0
        %3787 = vmatprep.mubr.f32.mxu0 0.0
        %3788 = vmatmul.mubr.f32.gmra.mrb[0].mxu0 %v3582
        %v3789 = vpop.f32.mrb[0].mxu0
        %v3790 = vadd.f32 %v3509, %v3789
        %v3791 = vpop.f32.mrb[0].mxu0
        %3792 = vmatprep.mubr.f32.mxu0 0.0
        %3793 = vmatmul.mubr.f32.gmra.mrb[0].mxu0 %v3585
        %v3794 = vpop.f32.mrb[0].mxu0
        %v3795 = vadd.f32 %v3509, %v3794
        %v3796 = vpop.f32.mrb[0].mxu0
        %3797 = vmatprep.mubr.f32.mxu0 0.0
        %3798 = vmatmul.mubr.f32.gmra.mrb[0].mxu0 %v3588
        %v3799 = vpop.f32.mrb[0].mxu0
        %v3800 = vadd.f32 %v3509, %v3799
        %v3801 = vpop.f32.mrb[0].mxu0
        %3802 = vmatprep.mubr.f32.mxu0 0.0
        %3803 = vmatmul.mubr.f32.gmra.mrb[0].mxu0 %v3591
        %v3804 = vpop.f32.mrb[0].mxu0
        %v3805 = vadd.f32 %v3509, %v3804
        %v3806 = vpop.f32.mrb[0].mxu0
        %3807 = vmatprep.mubr.f32.mxu0 0.0
        %3808 = vmatmul.mubr.f32.gmra.mrb[0].mxu0 %v3594
        %v3809 = vpop.f32.mrb[0].mxu0
        %v3810 = vadd.f32 %v3509, %v3809
        %v3811 = vpop.f32.mrb[0].mxu0
        %3812 = vmatprep.mubr.f32.mxu0 0.0
        %3813 = vmatmul.mubr.f32.gmra.mrb[0].mxu0 %v3597
        %v3814 = vpop.f32.mrb[0].mxu0
        %v3815 = vadd.f32 %v3509, %v3814
        %v3816 = vpop.f32.mrb[0].mxu0
        %3817 = vmatprep.mubr.f32.mxu0 0.0
        %3818 = vmatmul.mubr.f32.gmra.mrb[0].mxu0 %v3600
        %v3819 = vpop.f32.mrb[0].mxu0
        %v3820 = vadd.f32 %v3509, %v3819
        %v3821 = vpop.f32.mrb[0].mxu0
        %3822 = vmatprep.mubr.f32.mxu0 0.0
        %3823 = vmatmul.mubr.f32.gmra.mrb[0].mxu0 %v3603
        %v3824 = vpop.f32.mrb[0].mxu0
        %v3825 = vadd.f32 %v3509, %v3824
        %v3826 = vpop.f32.mrb[0].mxu0
        %3827 = vmatprep.mubr.f32.mxu0 0.0
        %3828 = vmatmul.mubr.f32.gmra.mrb[0].mxu0 %v3606
        %v3829 = vpop.f32.mrb[0].mxu0
        %v3830 = vadd.f32 %v3509, %v3829
        %v3831 = vpop.f32.mrb[0].mxu0
        %3832 = vdwg.mxu0
        %v3833 = vmax.f32 %v3675, 0.0
        %v3834 = vmax.f32 %v3680, 0.0
        %v3835 = vmax.f32 %v3685, 0.0
        %v3836 = vmax.f32 %v3690, 0.0
        %v3837 = vmax.f32 %v3695, 0.0
        %v3838 = vmax.f32 %v3700, 0.0
        %v3839 = vmax.f32 %v3705, 0.0
        %v3840 = vmax.f32 %v3710, 0.0
        %v3841 = vmax.f32 %v3715, 0.0
        %v3842 = vmax.f32 %v3720, 0.0
        %v3843 = vmax.f32 %v3725, 0.0
        %v3844 = vmax.f32 %v3730, 0.0
        %v3845 = vmax.f32 %v3735, 0.0
        %v3846 = vmax.f32 %v3740, 0.0
        %v3847 = vmax.f32 %v3745, 0.0
        %v3848 = vmax.f32 %v3750, 0.0
        %v3849 = vmax.f32 %v3755, 0.0
        %v3850 = vmax.f32 %v3760, 0.0
        %v3851 = vmax.f32 %v3765, 0.0
        %v3852 = vmax.f32 %v3770, 0.0
        %v3853 = vmax.f32 %v3775, 0.0
        %v3854 = vmax.f32 %v3780, 0.0
        %v3855 = vmax.f32 %v3785, 0.0
        %v3856 = vmax.f32 %v3790, 0.0
        %v3857 = vmax.f32 %v3795, 0.0
        %v3858 = vmax.f32 %v3800, 0.0
        %v3859 = vmax.f32 %v3805, 0.0
        %v3860 = vmax.f32 %v3810, 0.0
        %v3861 = vmax.f32 %v3815, 0.0
        %v3862 = vmax.f32 %v3820, 0.0
        %v3863 = vmax.f32 %v3825, 0.0
        %v3864 = vmax.f32 %v3830, 0.0
        %v3865 = vld [vmem:[%s1] sm:$0xff]
        %v3866 = vld [vmem:[%s1 + $0x8] sm:$0xff]
        %v3867 = vld [vmem:[%s1 + $0x10] sm:$0xff]
        %v3868 = vld [vmem:[%s1 + $0x18] sm:$0xff]
        %v3869 = vld [vmem:[%s1 + $0x20] sm:$0xff]
        %v3870 = vld [vmem:[%s1 + $0x28] sm:$0xff]
        %v3871 = vld [vmem:[%s1 + $0x30] sm:$0xff]
        %v3872 = vld [vmem:[%s1 + $0x38] sm:$0xff]
        %v3873 = vld [vmem:[%s1 + $0x40] sm:$0xff]
        %v3874 = vld [vmem:[%s1 + $0x48] sm:$0xff]
        %v3875 = vld [vmem:[%s1 + $0x50] sm:$0xff]
        %v3876 = vld [vmem:[%s1 + $0x58] sm:$0xff]
        %v3877 = vld [vmem:[%s1 + $0x60] sm:$0xff]
        %v3878 = vld [vmem:[%s1 + $0x68] sm:$0xff]
        %v3879 = vld [vmem:[%s1 + $0x70] sm:$0xff]
        %v3880 = vld [vmem:[%s1 + $0x78] sm:$0xff]
        %v3881 = vld [vmem:[%s1 + $0x80] sm:$0xff]
        %v3882 = vld [vmem:[%s1 + $0x88] sm:$0xff]
        %v3883 = vld [vmem:[%s1 + $0x90] sm:$0xff]
        %v3884 = vld [vmem:[%s1 + $0x98] sm:$0xff]
        %v3885 = vld [vmem:[%s1 + $0xa0] sm:$0xff]
        %v3886 = vld [vmem:[%s1 + $0xa8] sm:$0xff]
        %v3887 = vld [vmem:[%s1 + $0xb0] sm:$0xff]
        %v3888 = vld [vmem:[%s1 + $0xb8] sm:$0xff]
        %v3889 = vld [vmem:[%s1 + $0xc0] sm:$0xff]
        %v3890 = vld [vmem:[%s1 + $0xc8] sm:$0xff]
        %v3891 = vld [vmem:[%s1 + $0xd0] sm:$0xff]
        %v3892 = vld [vmem:[%s1 + $0xd8] sm:$0xff]
        %v3893 = vld [vmem:[%s1 + $0xe0] sm:$0xff]
        %v3894 = vld [vmem:[%s1 + $0xe8] sm:$0xff]
        %v3895 = vld [vmem:[%s1 + $0xf0] sm:$0xff]
        %v3896 = vld [vmem:[%s1 + $0xf8] sm:$0xff]
        %v3897 = vld [vmem:[%s1 + $0x100] sm:$0xff]
        %v3898 = vld [vmem:[%s1 + $0x108] sm:$0xff]
        %v3899 = vld [vmem:[%s1 + $0x110] sm:$0xff]
        %v3900 = vld [vmem:[%s1 + $0x118] sm:$0xff]
        %v3901 = vld [vmem:[%s1 + $0x120] sm:$0xff]
        %v3902 = vld [vmem:[%s1 + $0x128] sm:$0xff]
        %v3903 = vld [vmem:[%s1 + $0x130] sm:$0xff]
        %v3904 = vld [vmem:[%s1 + $0x138] sm:$0xff]
        %v3905 = vld [vmem:[%s1 + $0x140] sm:$0xff]
        %v3906 = vld [vmem:[%s1 + $0x148] sm:$0xff]
        %v3907 = vld [vmem:[%s1 + $0x150] sm:$0xff]
        %v3908 = vld [vmem:[%s1 + $0x158] sm:$0xff]
        %v3909 = vld [vmem:[%s1 + $0x160] sm:$0xff]
        %v3910 = vld [vmem:[%s1 + $0x168] sm:$0xff]
        %v3911 = vld [vmem:[%s1 + $0x170] sm:$0xff]
        %v3912 = vld [vmem:[%s1 + $0x178] sm:$0xff]
        %v3913 = vld [vmem:[%s1 + $0x180] sm:$0xff]
        %v3914 = vld [vmem:[%s1 + $0x188] sm:$0xff]
        %v3915 = vld [vmem:[%s1 + $0x190] sm:$0xff]
        %v3916 = vld [vmem:[%s1 + $0x198] sm:$0xff]
        %v3917 = vld [vmem:[%s1 + $0x1a0] sm:$0xff]
        %v3918 = vld [vmem:[%s1 + $0x1a8] sm:$0xff]
        %v3919 = vld [vmem:[%s1 + $0x1b0] sm:$0xff]
        %v3920 = vld [vmem:[%s1 + $0x1b8] sm:$0xff]
        %v3921 = vld [vmem:[%s1 + $0x1c0] sm:$0xff]
        %v3922 = vld [vmem:[%s1 + $0x1c8] sm:$0xff]
        %v3923 = vld [vmem:[%s1 + $0x1d0] sm:$0xff]
        %v3924 = vld [vmem:[%s1 + $0x1d8] sm:$0xff]
        %v3925 = vld [vmem:[%s1 + $0x1e0] sm:$0xff]
        %v3926 = vld [vmem:[%s1 + $0x1e8] sm:$0xff]
        %v3927 = vld [vmem:[%s1 + $0x1f0] sm:$0xff]
        %v3928 = vld [vmem:[%s1 + $0x1f8] sm:$0xff]
        %3929 = vmatprep.subr.mxu0 0.0
        %3930 = vmatpush1.msra.mxu0 %v3833
        %3931 = vmatprep.subr.mxu0 0.0
        %3932 = vmatpush1.msra.mxu0 %v3834
        %3933 = vmatprep.subr.mxu0 0.0
        %3934 = vmatpush1.msra.mxu0 %v3835
        %3935 = vmatprep.subr.mxu0 0.0
        %3936 = vmatpush1.msra.mxu0 %v3836
        %3937 = vmatprep.subr.mxu0 0.0
        %3938 = vmatpush1.msra.mxu0 %v3837
        %3939 = vmatprep.subr.mxu0 0.0
        %3940 = vmatpush1.msra.mxu0 %v3838
        %3941 = vmatprep.subr.mxu0 0.0
        %3942 = vmatpush1.msra.mxu0 %v3839
        %3943 = vmatprep.subr.mxu0 0.0
        %3944 = vmatpush1.msra.mxu0 %v3840
        %3945 = vmatprep.subr.mxu0 0.0
        %3946 = vmatpush1.msra.mxu0 %v3841
        %3947 = vmatprep.subr.mxu0 0.0
        %3948 = vmatpush1.msra.mxu0 %v3842
        %3949 = vmatprep.subr.mxu0 0.0
        %3950 = vmatpush1.msra.mxu0 %v3843
        %3951 = vmatprep.subr.mxu0 0.0
        %3952 = vmatpush1.msra.mxu0 %v3844
        %3953 = vmatprep.subr.mxu0 0.0
        %3954 = vmatpush1.msra.mxu0 %v3845
        %3955 = vmatprep.subr.mxu0 0.0
        %3956 = vmatpush1.msra.mxu0 %v3846
        %3957 = vmatprep.subr.mxu0 0.0
        %3958 = vmatpush1.msra.mxu0 %v3847
        %3959 = vmatprep.subr.mxu0 0.0
        %3960 = vmatpush1.msra.mxu0 %v3848
        %3961 = vmatprep.subr.mxu0 0.0
        %3962 = vmatpush1.msra.mxu0 %v3849
        %3963 = vmatprep.subr.mxu0 0.0
        %3964 = vmatpush1.msra.mxu0 %v3850
        %3965 = vmatprep.subr.mxu0 0.0
        %3966 = vmatpush1.msra.mxu0 %v3851
        %3967 = vmatprep.subr.mxu0 0.0
        %3968 = vmatpush1.msra.mxu0 %v3852
        %3969 = vmatprep.subr.mxu0 0.0
        %3970 = vmatpush1.msra.mxu0 %v3853
        %3971 = vmatprep.subr.mxu0 0.0
        %3972 = vmatpush1.msra.mxu0 %v3854
        %3973 = vmatprep.subr.mxu0 0.0
        %3974 = vmatpush1.msra.mxu0 %v3855
        %3975 = vmatprep.subr.mxu0 0.0
        %3976 = vmatpush1.msra.mxu0 %v3856
        %3977 = vmatprep.subr.mxu0 0.0
        %3978 = vmatpush1.msra.mxu0 %v3857
        %3979 = vmatprep.subr.mxu0 0.0
        %3980 = vmatpush1.msra.mxu0 %v3858
        %3981 = vmatprep.subr.mxu0 0.0
        %3982 = vmatpush1.msra.mxu0 %v3859
        %3983 = vmatprep.subr.mxu0 0.0
        %3984 = vmatpush1.msra.mxu0 %v3860
        %3985 = vmatprep.subr.mxu0 0.0
        %3986 = vmatpush1.msra.mxu0 %v3861
        %3987 = vmatprep.subr.mxu0 0.0
        %3988 = vmatpush1.msra.mxu0 %v3862
        %3989 = vmatprep.subr.mxu0 0.0
        %3990 = vmatpush1.msra.mxu0 %v3863
        %3991 = vmatprep.subr.mxu0 0.0
        %3992 = vmatpush1.msra.mxu0 %v3864
        %3993 = vmatprep.mubr.f32.mxu0 %v3866
        %3994 = vmatmul.mubr.f32.gmra.mrb[0].mxu0 %v3865
        %v3995 = vpop.f32.mrb[0].mxu0
        %v3996 = vadd.f32 0.0, %v3995
        %v3997 = vpop.f32.mrb[0].mxu0
        %3998 = vmatprep.mubr.f32.mxu0 %v3868
        %3999 = vmatmul.mubr.f32.gmra.mrb[0].mxu0 %v3867
        %v4000 = vpop.f32.mrb[0].mxu0
        %v4001 = vadd.f32 0.0, %v4000
        %v4002 = vpop.f32.mrb[0].mxu0
        %4003 = vmatprep.mubr.f32.mxu0 %v3870
        %4004 = vmatmul.mubr.f32.gmra.mrb[0].mxu0 %v3869
        %v4005 = vpop.f32.mrb[0].mxu0
        %v4006 = vadd.f32 0.0, %v4005
        %v4007 = vpop.f32.mrb[0].mxu0
        %4008 = vmatprep.mubr.f32.mxu0 %v3872
        %4009 = vmatmul.mubr.f32.gmra.mrb[0].mxu0 %v3871
        %v4010 = vpop.f32.mrb[0].mxu0
        %v4011 = vadd.f32 0.0, %v4010
        %v4012 = vpop.f32.mrb[0].mxu0
        %4013 = vmatprep.mubr.f32.mxu0 %v3874
        %4014 = vmatmul.mubr.f32.gmra.mrb[0].mxu0 %v3873
        %v4015 = vpop.f32.mrb[0].mxu0
        %v4016 = vadd.f32 0.0, %v4015
        %v4017 = vpop.f32.mrb[0].mxu0
        %4018 = vmatprep.mubr.f32.mxu0 %v3876
        %4019 = vmatmul.mubr.f32.gmra.mrb[0].mxu0 %v3875
        %v4020 = vpop.f32.mrb[0].mxu0
        %v4021 = vadd.f32 0.0, %v4020
        %v4022 = vpop.f32.mrb[0].mxu0
        %4023 = vmatprep.mubr.f32.mxu0 %v3878
        %4024 = vmatmul.mubr.f32.gmra.mrb[0].mxu0 %v3877
        %v4025 = vpop.f32.mrb[0].mxu0
        %v4026 = vadd.f32 0.0, %v4025
        %v4027 = vpop.f32.mrb[0].mxu0
        %4028 = vmatprep.mubr.f32.mxu0 %v3880
        %4029 = vmatmul.mubr.f32.gmra.mrb[0].mxu0 %v3879
        %v4030 = vpop.f32.mrb[0].mxu0
        %v4031 = vadd.f32 0.0, %v4030
        %v4032 = vpop.f32.mrb[0].mxu0
        %4033 = vmatprep.mubr.f32.mxu0 %v3882
        %4034 = vmatmul.mubr.f32.gmra.mrb[0].mxu0 %v3881
        %v4035 = vpop.f32.mrb[0].mxu0
        %v4036 = vadd.f32 0.0, %v4035
        %v4037 = vpop.f32.mrb[0].mxu0
        %4038 = vmatprep.mubr.f32.mxu0 %v3884
        %4039 = vmatmul.mubr.f32.gmra.mrb[0].mxu0 %v3883
        %v4040 = vpop.f32.mrb[0].mxu0
        %v4041 = vadd.f32 0.0, %v4040
        %v4042 = vpop.f32.mrb[0].mxu0
        %4043 = vmatprep.mubr.f32.mxu0 %v3886
        %4044 = vmatmul.mubr.f32.gmra.mrb[0].mxu0 %v3885
        %v4045 = vpop.f32.mrb[0].mxu0
        %v4046 = vadd.f32 0.0, %v4045
        %v4047 = vpop.f32.mrb[0].mxu0
        %4048 = vmatprep.mubr.f32.mxu0 %v3888
        %4049 = vmatmul.mubr.f32.gmra.mrb[0].mxu0 %v3887
        %v4050 = vpop.f32.mrb[0].mxu0
        %v4051 = vadd.f32 0.0, %v4050
        %v4052 = vpop.f32.mrb[0].mxu0
        %4053 = vmatprep.mubr.f32.mxu0 %v3890
        %4054 = vmatmul.mubr.f32.gmra.mrb[0].mxu0 %v3889
        %v4055 = vpop.f32.mrb[0].mxu0
        %v4056 = vadd.f32 0.0, %v4055
        %v4057 = vpop.f32.mrb[0].mxu0
        %4058 = vmatprep.mubr.f32.mxu0 %v3892
        %4059 = vmatmul.mubr.f32.gmra.mrb[0].mxu0 %v3891
        %v4060 = vpop.f32.mrb[0].mxu0
        %v4061 = vadd.f32 0.0, %v4060
        %v4062 = vpop.f32.mrb[0].mxu0
        %4063 = vmatprep.mubr.f32.mxu0 %v3894
        %4064 = vmatmul.mubr.f32.gmra.mrb[0].mxu0 %v3893
        %v4065 = vpop.f32.mrb[0].mxu0
        %v4066 = vadd.f32 0.0, %v4065
        %v4067 = vpop.f32.mrb[0].mxu0
        %4068 = vmatprep.mubr.f32.mxu0 %v3896
        %4069 = vmatmul.mubr.f32.gmra.mrb[0].mxu0 %v3895
        %v4070 = vpop.f32.mrb[0].mxu0
        %v4071 = vadd.f32 0.0, %v4070
        %v4072 = vpop.f32.mrb[0].mxu0
        %4073 = vmatprep.mubr.f32.mxu0 %v3898
        %4074 = vmatmul.mubr.f32.gmra.mrb[0].mxu0 %v3897
        %v4075 = vpop.f32.mrb[0].mxu0
        %v4076 = vadd.f32 0.0, %v4075
        %v4077 = vpop.f32.mrb[0].mxu0
        %4078 = vmatprep.mubr.f32.mxu0 %v3900
        %4079 = vmatmul.mubr.f32.gmra.mrb[0].mxu0 %v3899
        %v4080 = vpop.f32.mrb[0].mxu0
        %v4081 = vadd.f32 0.0, %v4080
        %v4082 = vpop.f32.mrb[0].mxu0
        %4083 = vmatprep.mubr.f32.mxu0 %v3902
        %4084 = vmatmul.mubr.f32.gmra.mrb[0].mxu0 %v3901
        %v4085 = vpop.f32.mrb[0].mxu0
        %v4086 = vadd.f32 0.0, %v4085
        %v4087 = vpop.f32.mrb[0].mxu0
        %4088 = vmatprep.mubr.f32.mxu0 %v3904
        %4089 = vmatmul.mubr.f32.gmra.mrb[0].mxu0 %v3903
        %v4090 = vpop.f32.mrb[0].mxu0
        %v4091 = vadd.f32 0.0, %v4090
        %v4092 = vpop.f32.mrb[0].mxu0
        %4093 = vmatprep.mubr.f32.mxu0 %v3906
        %4094 = vmatmul.mubr.f32.gmra.mrb[0].mxu0 %v3905
        %v4095 = vpop.f32.mrb[0].mxu0
        %v4096 = vadd.f32 0.0, %v4095
        %v4097 = vpop.f32.mrb[0].mxu0
        %4098 = vmatprep.mubr.f32.mxu0 %v3908
        %4099 = vmatmul.mubr.f32.gmra.mrb[0].mxu0 %v3907
        %v4100 = vpop.f32.mrb[0].mxu0
        %v4101 = vadd.f32 0.0, %v4100
        %v4102 = vpop.f32.mrb[0].mxu0
        %4103 = vmatprep.mubr.f32.mxu0 %v3910
        %4104 = vmatmul.mubr.f32.gmra.mrb[0].mxu0 %v3909
        %v4105 = vpop.f32.mrb[0].mxu0
        %v4106 = vadd.f32 0.0, %v4105
        %v4107 = vpop.f32.mrb[0].mxu0
        %4108 = vmatprep.mubr.f32.mxu0 %v3912
        %4109 = vmatmul.mubr.f32.gmra.mrb[0].mxu0 %v3911
        %v4110 = vpop.f32.mrb[0].mxu0
        %v4111 = vadd.f32 0.0, %v4110
        %v4112 = vpop.f32.mrb[0].mxu0
        %4113 = vmatprep.mubr.f32.mxu0 %v3914
        %4114 = vmatmul.mubr.f32.gmra.mrb[0].mxu0 %v3913
        %v4115 = vpop.f32.mrb[0].mxu0
        %v4116 = vadd.f32 0.0, %v4115
        %v4117 = vpop.f32.mrb[0].mxu0
        %4118 = vmatprep.mubr.f32.mxu0 %v3916
        %4119 = vmatmul.mubr.f32.gmra.mrb[0].mxu0 %v3915
        %v4120 = vpop.f32.mrb[0].mxu0
        %v4121 = vadd.f32 0.0, %v4120
        %v4122 = vpop.f32.mrb[0].mxu0
        %4123 = vmatprep.mubr.f32.mxu0 %v3918
        %4124 = vmatmul.mubr.f32.gmra.mrb[0].mxu0 %v3917
        %v4125 = vpop.f32.mrb[0].mxu0
        %v4126 = vadd.f32 0.0, %v4125
        %v4127 = vpop.f32.mrb[0].mxu0
        %4128 = vmatprep.mubr.f32.mxu0 %v3920
        %4129 = vmatmul.mubr.f32.gmra.mrb[0].mxu0 %v3919
        %v4130 = vpop.f32.mrb[0].mxu0
        %v4131 = vadd.f32 0.0, %v4130
        %v4132 = vpop.f32.mrb[0].mxu0
        %4133 = vmatprep.mubr.f32.mxu0 %v3922
        %4134 = vmatmul.mubr.f32.gmra.mrb[0].mxu0 %v3921
        %v4135 = vpop.f32.mrb[0].mxu0
        %v4136 = vadd.f32 0.0, %v4135
        %v4137 = vpop.f32.mrb[0].mxu0
        %4138 = vmatprep.mubr.f32.mxu0 %v3924
        %4139 = vmatmul.mubr.f32.gmra.mrb[0].mxu0 %v3923
        %v4140 = vpop.f32.mrb[0].mxu0
        %v4141 = vadd.f32 0.0, %v4140
        %v4142 = vpop.f32.mrb[0].mxu0
        %4143 = vmatprep.mubr.f32.mxu0 %v3926
        %4144 = vmatmul.mubr.f32.gmra.mrb[0].mxu0 %v3925
        %v4145 = vpop.f32.mrb[0].mxu0
        %v4146 = vadd.f32 0.0, %v4145
        %v4147 = vpop.f32.mrb[0].mxu0
        %4148 = vmatprep.mubr.f32.mxu0 %v3928
        %4149 = vmatmul.mubr.f32.gmra.mrb[0].mxu0 %v3927
        %v4150 = vpop.f32.mrb[0].mxu0
        %v4151 = vadd.f32 0.0, %v4150
        %v4152 = vpop.f32.mrb[0].mxu0
        %4153 = vdwg.mxu0
        %4156 = vrot.lane.b32.xlu0 %v4006, 16
        %v4157 = vpop.permute.xlu0 %4156
        %4158 = vrot.lane.b32.xlu0 %v4011, 16
        %v4159 = vpop.permute.xlu0 %4158
        %4164 = vrot.lane.b32.xlu0 %v4016, 32
        %v4165 = vpop.permute.xlu0 %4164
        %4166 = vrot.lane.b32.xlu0 %v4021, 32
        %v4167 = vpop.permute.xlu0 %4166
        %4172 = vrot.lane.b32.xlu0 %v4026, 48
        %v4173 = vpop.permute.xlu0 %4172
        %4174 = vrot.lane.b32.xlu0 %v4031, 48
        %v4175 = vpop.permute.xlu0 %4174
        %4180 = vrot.lane.b32.xlu0 %v4036, 64
        %v4181 = vpop.permute.xlu0 %4180
        %4182 = vrot.lane.b32.xlu0 %v4041, 64
        %v4183 = vpop.permute.xlu0 %4182
        %4188 = vrot.lane.b32.xlu0 %v4046, 80
        %v4189 = vpop.permute.xlu0 %4188
        %4190 = vrot.lane.b32.xlu0 %v4051, 80
        %v4191 = vpop.permute.xlu0 %4190
        %4196 = vrot.lane.b32.xlu0 %v4056, 96
        %v4197 = vpop.permute.xlu0 %4196
        %4198 = vrot.lane.b32.xlu0 %v4061, 96
        %v4199 = vpop.permute.xlu0 %4198
        %4204 = vrot.lane.b32.xlu0 %v4066, 112
        %v4205 = vpop.permute.xlu0 %4204
        %4206 = vrot.lane.b32.xlu0 %v4071, 112
        %v4207 = vpop.permute.xlu0 %4206
        %4212 = vrot.lane.b32.xlu0 %v4086, 16
        %v4213 = vpop.permute.xlu0 %4212
        %4214 = vrot.lane.b32.xlu0 %v4091, 16
        %v4215 = vpop.permute.xlu0 %4214
        %4220 = vrot.lane.b32.xlu0 %v4096, 32
        %v4221 = vpop.permute.xlu0 %4220
        %4222 = vrot.lane.b32.xlu0 %v4101, 32
        %v4223 = vpop.permute.xlu0 %4222
        %4228 = vrot.lane.b32.xlu0 %v4106, 48
        %v4229 = vpop.permute.xlu0 %4228
        %4230 = vrot.lane.b32.xlu0 %v4111, 48
        %v4231 = vpop.permute.xlu0 %4230
        %4236 = vrot.lane.b32.xlu0 %v4116, 64
        %v4237 = vpop.permute.xlu0 %4236
        %4238 = vrot.lane.b32.xlu0 %v4121, 64
        %v4239 = vpop.permute.xlu0 %4238
        %4244 = vrot.lane.b32.xlu0 %v4126, 80
        %v4245 = vpop.permute.xlu0 %4244
        %4246 = vrot.lane.b32.xlu0 %v4131, 80
        %v4247 = vpop.permute.xlu0 %4246
        %4252 = vrot.lane.b32.xlu0 %v4136, 96
        %v4253 = vpop.permute.xlu0 %4252
        %4254 = vrot.lane.b32.xlu0 %v4141, 96
        %v4255 = vpop.permute.xlu0 %4254
        %4260 = vrot.lane.b32.xlu0 %v4146, 112
        %v4261 = vpop.permute.xlu0 %4260
        %4262 = vrot.lane.b32.xlu0 %v4151, 112
        %v4263 = vpop.permute.xlu0 %4262
        %v4266 = vsel %vm3264, %v3996, %v4157
        %v4267 = vsel %vm3264, %v4001, %v4159
        %v4268 = vsel %vm3330, %v4266, %v4165
        %v4269 = vsel %vm3330, %v4267, %v4167
        %v4270 = vsel %vm3396, %v4268, %v4173
        %v4271 = vsel %vm3396, %v4269, %v4175
        %v4272 = vsel %vm3462, %v4270, %v4181
        %v4273 = vsel %vm3462, %v4271, %v4183
        %vm4274 = vcmask 654336
        %v4275 = vsel %vm4274, %v4272, %v4189
        %v4276 = vsel %vm4274, %v4273, %v4191
        %vm4277 = vcmask 785408
        %v4278 = vsel %vm4277, %v4275, %v4197
        %v4279 = vsel %vm4277, %v4276, %v4199
        %vm4280 = vcmask 916480
        %v4281 = vsel %vm4280, %v4278, %v4205
        %v4282 = vsel %vm4280, %v4279, %v4207
        %v4283 = vsel %vm3264, %v4076, %v4213
        %v4284 = vsel %vm3264, %v4081, %v4215
        %v4285 = vsel %vm3330, %v4283, %v4221
        %v4286 = vsel %vm3330, %v4284, %v4223
        %v4287 = vsel %vm3396, %v4285, %v4229
        %v4288 = vsel %vm3396, %v4286, %v4231
        %v4289 = vsel %vm3462, %v4287, %v4237
        %v4290 = vsel %vm3462, %v4288, %v4239
        %v4291 = vsel %vm4274, %v4289, %v4245
        %v4292 = vsel %vm4274, %v4290, %v4247
        %v4293 = vsel %vm4277, %v4291, %v4253
        %v4294 = vsel %vm4277, %v4292, %v4255
        %v4295 = vsel %vm4280, %v4293, %v4261
        %v4296 = vsel %vm4280, %v4294, %v4263
        %v4297 = vld [vmem:[%s7] sm:$0xff]
        %v4298 = vld [vmem:[%s7 + $0x8] sm:$0xff]
        %v4299 = vld [vmem:[%s7 + $0x10] sm:$0xff]
        %v4300 = vld [vmem:[%s7 + $0x18] sm:$0xff]
        %v4301 = vld [vmem:[%s7 + $0x20] sm:$0xff]
        %v4302 = vld [vmem:[%s7 + $0x28] sm:$0xff]
        %v4303 = vld [vmem:[%s7 + $0x30] sm:$0xff]
        %v4304 = vld [vmem:[%s7 + $0x38] sm:$0xff]
        %v4305 = vld [vmem:[%s7 + $0x40] sm:$0xff]
        %v4306 = vld [vmem:[%s7 + $0x48] sm:$0xff]
        %v4307 = vld [vmem:[%s7 + $0x50] sm:$0xff]
        %v4308 = vld [vmem:[%s7 + $0x58] sm:$0xff]
        %v4309 = vld [vmem:[%s7 + $0x60] sm:$0xff]
        %v4310 = vld [vmem:[%s7 + $0x68] sm:$0xff]
        %v4311 = vld [vmem:[%s7 + $0x70] sm:$0xff]
        %v4312 = vld [vmem:[%s7 + $0x78] sm:$0xff]
        %v4313 = vld [vmem:[%s7 + $0x80] sm:$0xff]
        %v4314 = vld [vmem:[%s7 + $0x88] sm:$0xff]
        %v4315 = vld [vmem:[%s7 + $0x90] sm:$0xff]
        %v4316 = vld [vmem:[%s7 + $0x98] sm:$0xff]
        %v4317 = vld [vmem:[%s7 + $0xa0] sm:$0xff]
        %v4318 = vld [vmem:[%s7 + $0xa8] sm:$0xff]
        %v4319 = vld [vmem:[%s7 + $0xb0] sm:$0xff]
        %v4320 = vld [vmem:[%s7 + $0xb8] sm:$0xff]
        %v4321 = vld [vmem:[%s7 + $0xc0] sm:$0xff]
        %v4322 = vld [vmem:[%s7 + $0xc8] sm:$0xff]
        %v4323 = vld [vmem:[%s7 + $0xd0] sm:$0xff]
        %v4324 = vld [vmem:[%s7 + $0xd8] sm:$0xff]
        %v4325 = vld [vmem:[%s7 + $0xe0] sm:$0xff]
        %v4326 = vld [vmem:[%s7 + $0xe8] sm:$0xff]
        %v4327 = vld [vmem:[%s7 + $0xf0] sm:$0xff]
        %v4328 = vld [vmem:[%s7 + $0xf8] sm:$0xff]
        %v4329 = vld [vmem:[#allocation2] sm:$0x1]
        %v4331 = vlaneseq
        %v4332 = vshrl.u32 %v4331, 7
        %v4333 = vsub.s32 0, %v4332
        %v4334 = vrot.slane %v4329, %v4333
        %4336 = vmatprep.subr.mxu0 0.0
        %4337 = vmatpush1.msra.mxu0 %v4297
        %4338 = vmatprep.subr.mxu0 0.0
        %4339 = vmatpush1.msra.mxu0 %v4298
        %4340 = vmatprep.subr.mxu0 0.0
        %4341 = vmatpush1.msra.mxu0 %v4299
        %4342 = vmatprep.subr.mxu0 0.0
        %4343 = vmatpush1.msra.mxu0 %v4300
        %4344 = vmatprep.subr.mxu0 0.0
        %4345 = vmatpush1.msra.mxu0 %v4301
        %4346 = vmatprep.subr.mxu0 0.0
        %4347 = vmatpush1.msra.mxu0 %v4302
        %4348 = vmatprep.subr.mxu0 0.0
        %4349 = vmatpush1.msra.mxu0 %v4303
        %4350 = vmatprep.subr.mxu0 0.0
        %4351 = vmatpush1.msra.mxu0 %v4304
        %4352 = vmatprep.subr.mxu0 0.0
        %4353 = vmatpush1.msra.mxu0 %v4305
        %4354 = vmatprep.subr.mxu0 0.0
        %4355 = vmatpush1.msra.mxu0 %v4306
        %4356 = vmatprep.subr.mxu0 0.0
        %4357 = vmatpush1.msra.mxu0 %v4307
        %4358 = vmatprep.subr.mxu0 0.0
        %4359 = vmatpush1.msra.mxu0 %v4308
        %4360 = vmatprep.subr.mxu0 0.0
        %4361 = vmatpush1.msra.mxu0 %v4309
        %4362 = vmatprep.subr.mxu0 0.0
        %4363 = vmatpush1.msra.mxu0 %v4310
        %4364 = vmatprep.subr.mxu0 0.0
        %4365 = vmatpush1.msra.mxu0 %v4311
        %4366 = vmatprep.subr.mxu0 0.0
        %4367 = vmatpush1.msra.mxu0 %v4312
        %4368 = vmatprep.subr.mxu0 0.0
        %4369 = vmatpush1.msra.mxu0 %v4313
        %4370 = vmatprep.subr.mxu0 0.0
        %4371 = vmatpush1.msra.mxu0 %v4314
        %4372 = vmatprep.subr.mxu0 0.0
        %4373 = vmatpush1.msra.mxu0 %v4315
        %4374 = vmatprep.subr.mxu0 0.0
        %4375 = vmatpush1.msra.mxu0 %v4316
        %4376 = vmatprep.subr.mxu0 0.0
        %4377 = vmatpush1.msra.mxu0 %v4317
        %4378 = vmatprep.subr.mxu0 0.0
        %4379 = vmatpush1.msra.mxu0 %v4318
        %4380 = vmatprep.subr.mxu0 0.0
        %4381 = vmatpush1.msra.mxu0 %v4319
        %4382 = vmatprep.subr.mxu0 0.0
        %4383 = vmatpush1.msra.mxu0 %v4320
        %4384 = vmatprep.subr.mxu0 0.0
        %4385 = vmatpush1.msra.mxu0 %v4321
        %4386 = vmatprep.subr.mxu0 0.0
        %4387 = vmatpush1.msra.mxu0 %v4322
        %4388 = vmatprep.subr.mxu0 0.0
        %4389 = vmatpush1.msra.mxu0 %v4323
        %4390 = vmatprep.subr.mxu0 0.0
        %4391 = vmatpush1.msra.mxu0 %v4324
        %4392 = vmatprep.subr.mxu0 0.0
        %4393 = vmatpush1.msra.mxu0 %v4325
        %4394 = vmatprep.subr.mxu0 0.0
        %4395 = vmatpush1.msra.mxu0 %v4326
        %4396 = vmatprep.subr.mxu0 0.0
        %4397 = vmatpush1.msra.mxu0 %v4327
        %4398 = vmatprep.subr.mxu0 0.0
        %4399 = vmatpush1.msra.mxu0 %v4328
        %4400 = vmatprep.mubr.f32.mxu0 %v4295
        %4401 = vmatmul.mubr.f32.gmra.mrb[0].mxu0 %v4281
        %v4402 = vpop.f32.mrb[0].mxu0
        %v4403 = vadd.f32 %v4334, %v4402
        %v4404 = vpop.f32.mrb[0].mxu0
        %4405 = vmatprep.mubr.f32.mxu0 %v4296
        %4406 = vmatmul.mubr.f32.gmra.mrb[0].mxu0 %v4282
        %v4407 = vpop.f32.mrb[0].mxu0
        %v4408 = vadd.f32 %v4334, %v4407
        %v4409 = vpop.f32.mrb[0].mxu0
        %4410 = vdwg.mxu0
        %v4411 = vld [vmem:[%s9] sm:$0xff]
        %v4412 = vld [vmem:[%s9 + $0x8] sm:$0xff]
        %v4413 = vadd.f32 %v4403, %v4411
        %v4414 = vadd.f32 %v4408, %v4412
        %v4415 = vld [vmem:[%s10] sm:$0x1]
        %v4416 = vld [vmem:[%s11] sm:$0x1]
        %v4417 = vsel %vm3330, %v4413, 0.0
        %4418 = vadd.xlane.f32.xlu0 %v4417
        %v4419 = vpop.xlane.xlu0 %4418
        %v4420 = vsel %vm3330, %v4414, 0.0
        %4421 = vadd.xlane.f32.xlu0 %v4420
        %v4422 = vpop.xlane.xlu0 %4421
        %v4423 = vrcp.pop 32.0
        %v4424 = vmul.f32 %v4419, %v4423
        %v4425 = vmul.f32 %v4422, %v4423
        %v4426 = vsub.f32 %v4413, %v4424
        %v4427 = vsub.f32 %v4414, %v4425
        %v4428 = vmul.f32 %v4426, %v4426
        %v4429 = vmul.f32 %v4427, %v4427
        %v4430 = vsel %vm3330, %v4428, 0.0
        %4431 = vadd.xlane.f32.xlu0 %v4430
        %v4432 = vpop.xlane.xlu0 %4431
        %v4433 = vsel %vm3330, %v4429, 0.0
        %4434 = vadd.xlane.f32.xlu0 %v4433
        %v4435 = vpop.xlane.xlu0 %4434
        %v4436 = vmul.f32 %v4432, %v4423
        %v4437 = vmul.f32 %v4435, %v4423
        %v4438 = vadd.f32 %v4436, 1e-05
        %v4439 = vadd.f32 %v4437, 1e-05
        %v4440 = vrsqrt.pop %v4438
        %v4441 = vrsqrt.pop %v4439
        %v4442 = vmul.f32 %v4426, %v4440
        %v4443 = vmul.f32 %v4427, %v4441
        %v4445 = vlaneseq
        %v4446 = vshrl.u32 %v4445, 7
        %v4447 = vsub.s32 0, %v4446
        %v4448 = vrot.slane %v4415, %v4447
        %v4450 = vmul.f32 %v4442, %v4448
        %v4451 = vmul.f32 %v4443, %v4448
        %v4453 = vlaneseq
        %v4454 = vshrl.u32 %v4453, 7
        %v4455 = vsub.s32 0, %v4454
        %v4456 = vrot.slane %v4416, %v4455
        %v4458 = vadd.f32 %v4450, %v4456
        %v4459 = vadd.f32 %v4451, %v4456
        %v4460 = vld [vmem:[%s12] sm:$0xff]
        %v4461 = vld [vmem:[%s12 + $0x8] sm:$0xff]
        %v4462 = vld [vmem:[%s12 + $0x10] sm:$0xff]
        %v4463 = vld [vmem:[%s12 + $0x18] sm:$0xff]
        %v4464 = vld [vmem:[#allocation4] sm:$0x1]
        %v4466 = vlaneseq
        %v4467 = vshrl.u32 %v4466, 7
        %v4468 = vsub.s32 0, %v4467
        %v4469 = vrot.slane %v4464, %v4468
        %v4472 = vsel %vm3330, %v4458, 0
        %v4475 = vsel %vm3330, %v4459, 0
        %4477 = vmatprep.subr.mxu0 0.0
        %4478 = vmatpush1.msra.mxu0 %v4460
        %4479 = vmatprep.subr.mxu0 0.0
        %4480 = vmatpush1.msra.mxu0 %v4461
        %4481 = vmatprep.subr.mxu0 0.0
        %4482 = vmatpush1.msra.mxu0 %v4462
        %4483 = vmatprep.subr.mxu0 0.0
        %4484 = vmatpush1.msra.mxu0 %v4463
        %4485 = vmatprep.subr.mxu0 0.0
        %4486 = vmatpush1.msra.mxu0 0.0
        %4487 = vmatprep.subr.mxu0 0.0
        %4488 = vmatpush1.msra.mxu0 0.0
        %4489 = vmatprep.subr.mxu0 0.0
        %4490 = vmatpush1.msra.mxu0 0.0
        %4491 = vmatprep.subr.mxu0 0.0
        %4492 = vmatpush1.msra.mxu0 0.0
        %4493 = vmatprep.subr.mxu0 0.0
        %4494 = vmatpush1.msra.mxu0 0.0
        %4495 = vmatprep.subr.mxu0 0.0
        %4496 = vmatpush1.msra.mxu0 0.0
        %4497 = vmatprep.subr.mxu0 0.0
        %4498 = vmatpush1.msra.mxu0 0.0
        %4499 = vmatprep.subr.mxu0 0.0
        %4500 = vmatpush1.msra.mxu0 0.0
        %4501 = vmatprep.subr.mxu0 0.0
        %4502 = vmatpush1.msra.mxu0 0.0
        %4503 = vmatprep.subr.mxu0 0.0
        %4504 = vmatpush1.msra.mxu0 0.0
        %4505 = vmatprep.subr.mxu0 0.0
        %4506 = vmatpush1.msra.mxu0 0.0
        %4507 = vmatprep.subr.mxu0 0.0
        %4508 = vmatpush1.msra.mxu0 0.0
        %4509 = vmatprep.subr.mxu0 0.0
        %4510 = vmatpush1.msra.mxu0 0.0
        %4511 = vmatprep.subr.mxu0 0.0
        %4512 = vmatpush1.msra.mxu0 0.0
        %4513 = vmatprep.subr.mxu0 0.0
        %4514 = vmatpush1.msra.mxu0 0.0
        %4515 = vmatprep.subr.mxu0 0.0
        %4516 = vmatpush1.msra.mxu0 0.0
        %4517 = vmatprep.subr.mxu0 0.0
        %4518 = vmatpush1.msra.mxu0 0.0
        %4519 = vmatprep.subr.mxu0 0.0
        %4520 = vmatpush1.msra.mxu0 0.0
        %4521 = vmatprep.subr.mxu0 0.0
        %4522 = vmatpush1.msra.mxu0 0.0
        %4523 = vmatprep.subr.mxu0 0.0
        %4524 = vmatpush1.msra.mxu0 0.0
        %4525 = vmatprep.subr.mxu0 0.0
        %4526 = vmatpush1.msra.mxu0 0.0
        %4527 = vmatprep.subr.mxu0 0.0
        %4528 = vmatpush1.msra.mxu0 0.0
        %4529 = vmatprep.subr.mxu0 0.0
        %4530 = vmatpush1.msra.mxu0 0.0
        %4531 = vmatprep.subr.mxu0 0.0
        %4532 = vmatpush1.msra.mxu0 0.0
        %4533 = vmatprep.subr.mxu0 0.0
        %4534 = vmatpush1.msra.mxu0 0.0
        %4535 = vmatprep.subr.mxu0 0.0
        %4536 = vmatpush1.msra.mxu0 0.0
        %4537 = vmatprep.subr.mxu0 0.0
        %4538 = vmatpush1.msra.mxu0 0.0
        %4539 = vmatprep.subr.mxu0 0.0
        %4540 = vmatpush1.msra.mxu0 0.0
        %4541 = vmatprep.mubr.f32.mxu0 0.0
        %4542 = vmatmul.mubr.f32.gmra.mrb[0].mxu0 %v4472
        %v4543 = vpop.f32.mrb[0].mxu0
        %v4544 = vadd.f32 %v4469, %v4543
        %v4545 = vpop.f32.mrb[0].mxu0
        %4546 = vmatprep.mubr.f32.mxu0 0.0
        %4547 = vmatmul.mubr.f32.gmra.mrb[0].mxu0 %v4475
        %v4548 = vpop.f32.mrb[0].mxu0
        %v4549 = vadd.f32 %v4469, %v4548
        %v4550 = vpop.f32.mrb[0].mxu0
        %4551 = vdwg.mxu0
        %4554 = vrot.lane.b32.xlu0 %v4544, 96
        %v4555 = vpop.permute.xlu0 %4554
        %4556 = vrot.lane.b32.xlu0 %v4549, 96
        %v4557 = vpop.permute.xlu0 %4556
        %v4558 = vsel %vm874, %v4544, 0
        %v4560 = vsel %vm874, %v4549, 0
        %v4562 = vsel %vm874, %v4555, 0
        %v4564 = vsel %vm874, %v4557, 0
        %4566 = vmatprep.subr.mxu0 0.0
        %4567 = vmatpush1.xpose.msra.mxu0 %v4562
        %4568 = vmatprep.subr.mxu0 0.0
        %4569 = vmatpush1.xpose.msra.mxu0 %v4564
        %4570 = vmatprep.subr.mxu0 0.0
        %4571 = vmatpush1.xpose.msra.mxu0 0.0
        %4572 = vmatprep.subr.mxu0 0.0
        %4573 = vmatpush1.xpose.msra.mxu0 0.0
        %4574 = vmatprep.subr.mxu0 0.0
        %4575 = vmatpush1.xpose.msra.mxu0 0.0
        %4576 = vmatprep.subr.mxu0 0.0
        %4577 = vmatpush1.xpose.msra.mxu0 0.0
        %4578 = vmatprep.subr.mxu0 0.0
        %4579 = vmatpush1.xpose.msra.mxu0 0.0
        %4580 = vmatprep.subr.mxu0 0.0
        %4581 = vmatpush1.xpose.msra.mxu0 0.0
        %4582 = vmatprep.subr.mxu0 0.0
        %4583 = vmatpush1.xpose.msra.mxu0 0.0
        %4584 = vmatprep.subr.mxu0 0.0
        %4585 = vmatpush1.xpose.msra.mxu0 0.0
        %4586 = vmatprep.subr.mxu0 0.0
        %4587 = vmatpush1.xpose.msra.mxu0 0.0
        %4588 = vmatprep.subr.mxu0 0.0
        %4589 = vmatpush1.xpose.msra.mxu0 0.0
        %4590 = vmatprep.subr.mxu0 0.0
        %4591 = vmatpush1.xpose.msra.mxu0 0.0
        %4592 = vmatprep.subr.mxu0 0.0
        %4593 = vmatpush1.xpose.msra.mxu0 0.0
        %4594 = vmatprep.subr.mxu0 0.0
        %4595 = vmatpush1.xpose.msra.mxu0 0.0
        %4596 = vmatprep.subr.mxu0 0.0
        %4597 = vmatpush1.xpose.msra.mxu0 0.0
        %4598 = vmatprep.subr.mxu0 0.0
        %4599 = vmatpush1.xpose.msra.mxu0 0.0
        %4600 = vmatprep.subr.mxu0 0.0
        %4601 = vmatpush1.xpose.msra.mxu0 0.0
        %4602 = vmatprep.subr.mxu0 0.0
        %4603 = vmatpush1.xpose.msra.mxu0 0.0
        %4604 = vmatprep.subr.mxu0 0.0
        %4605 = vmatpush1.xpose.msra.mxu0 0.0
        %4606 = vmatprep.subr.mxu0 0.0
        %4607 = vmatpush1.xpose.msra.mxu0 0.0
        %4608 = vmatprep.subr.mxu0 0.0
        %4609 = vmatpush1.xpose.msra.mxu0 0.0
        %4610 = vmatprep.subr.mxu0 0.0
        %4611 = vmatpush1.xpose.msra.mxu0 0.0
        %4612 = vmatprep.subr.mxu0 0.0
        %4613 = vmatpush1.xpose.msra.mxu0 0.0
        %4614 = vmatprep.subr.mxu0 0.0
        %4615 = vmatpush1.xpose.msra.mxu0 0.0
        %4616 = vmatprep.subr.mxu0 0.0
        %4617 = vmatpush1.xpose.msra.mxu0 0.0
        %4618 = vmatprep.subr.mxu0 0.0
        %4619 = vmatpush1.xpose.msra.mxu0 0.0
        %4620 = vmatprep.subr.mxu0 0.0
        %4621 = vmatpush1.xpose.msra.mxu0 0.0
        %4622 = vmatprep.subr.mxu0 0.0
        %4623 = vmatpush1.xpose.msra.mxu0 0.0
        %4624 = vmatprep.subr.mxu0 0.0
        %4625 = vmatpush1.xpose.msra.mxu0 0.0
        %4626 = vmatprep.subr.mxu0 0.0
        %4627 = vmatpush1.xpose.msra.mxu0 0.0
        %4628 = vmatprep.subr.mxu0 0.0
        %4629 = vmatpush1.xpose.msra.mxu0 0.0
        %4630 = vmatprep.mubr.f32.mxu0 0.0
        %4631 = vmatmul.mubr.f32.gmra.mrb[0].mxu0 %v4558
        %v4632 = vpop.f32.mrb[0].mxu0
        %v4633 = vadd.f32 0.0, %v4632
        %v4634 = vpop.f32.mrb[0].mxu0
        %4635 = vmatprep.mubr.f32.mxu0 0.0
        %4636 = vmatmul.mubr.f32.gmra.mrb[0].mxu0 %v4560
        %v4637 = vpop.f32.mrb[0].mxu0
        %v4638 = vadd.f32 0.0, %v4637
        %v4639 = vpop.f32.mrb[0].mxu0
        %4640 = vdwg.mxu0
        %v4641 = vmul.f32 %v4633, 0.35355338
        %v4642 = vmul.f32 %v4638, 0.35355338
        %v4643 = vsel %vm3264, %v4641, -inf
        %4644 = vmax.xlane.f32.xlu0 %v4643
        %v4645 = vpop.xlane.xlu0 %4644
        %v4646 = vsel %vm3264, %v4642, -inf
        %4647 = vmax.xlane.f32.xlu0 %v4646
        %v4648 = vpop.xlane.xlu0 %4647
        %v4649 = vsub.f32 %v4641, %v4645
        %v4650 = vsub.f32 %v4642, %v4648
        %v4651 = vmul.f32 %v4649, 1.442695
        %v4652 = vpow.pop %v4651
        %v4653 = vmul.f32 %v4650, 1.442695
        %v4654 = vpow.pop %v4653
        %v4655 = vsel %vm3264, %v4652, 0.0
        %4656 = vadd.xlane.f32.xlu0 %v4655
        %v4657 = vpop.xlane.xlu0 %4656
        %v4658 = vsel %vm3264, %v4654, 0.0
        %4659 = vadd.xlane.f32.xlu0 %v4658
        %v4660 = vpop.xlane.xlu0 %4659
        %v4661 = vrcp.pop %v4657
        %v4662 = vrcp.pop %v4660
        %v4663 = vmul.f32 %v4652, %v4661
        %v4664 = vmul.f32 %v4654, %v4662
        %4665 = vrot.lane.b32.xlu0 %v4544, 64
        %v4666 = vpop.permute.xlu0 %4665
        %4667 = vrot.lane.b32.xlu0 %v4549, 64
        %v4668 = vpop.permute.xlu0 %4667
        %v4672 = vsel %vm3264, %v4663, 0
        %v4675 = vsel %vm3264, %v4664, 0
        %4677 = vmatprep.subr.mxu0 0.0
        %4678 = vmatpush1.msra.mxu0 %v4666
        %4679 = vmatprep.subr.mxu0 0.0
        %4680 = vmatpush1.msra.mxu0 %v4668
        %4681 = vmatprep.subr.mxu0 0.0
        %4682 = vmatpush1.msra.mxu0 0.0
        %4683 = vmatprep.subr.mxu0 0.0
        %4684 = vmatpush1.msra.mxu0 0.0
        %4685 = vmatprep.subr.mxu0 0.0
        %4686 = vmatpush1.msra.mxu0 0.0
        %4687 = vmatprep.subr.mxu0 0.0
        %4688 = vmatpush1.msra.mxu0 0.0
        %4689 = vmatprep.subr.mxu0 0.0
        %4690 = vmatpush1.msra.mxu0 0.0
        %4691 = vmatprep.subr.mxu0 0.0
        %4692 = vmatpush1.msra.mxu0 0.0
        %4693 = vmatprep.subr.mxu0 0.0
        %4694 = vmatpush1.msra.mxu0 0.0
        %4695 = vmatprep.subr.mxu0 0.0
        %4696 = vmatpush1.msra.mxu0 0.0
        %4697 = vmatprep.subr.mxu0 0.0
        %4698 = vmatpush1.msra.mxu0 0.0
        %4699 = vmatprep.subr.mxu0 0.0
        %4700 = vmatpush1.msra.mxu0 0.0
        %4701 = vmatprep.subr.mxu0 0.0
        %4702 = vmatpush1.msra.mxu0 0.0
        %4703 = vmatprep.subr.mxu0 0.0
        %4704 = vmatpush1.msra.mxu0 0.0
        %4705 = vmatprep.subr.mxu0 0.0
        %4706 = vmatpush1.msra.mxu0 0.0
        %4707 = vmatprep.subr.mxu0 0.0
        %4708 = vmatpush1.msra.mxu0 0.0
        %4709 = vmatprep.subr.mxu0 0.0
        %4710 = vmatpush1.msra.mxu0 0.0
        %4711 = vmatprep.subr.mxu0 0.0
        %4712 = vmatpush1.msra.mxu0 0.0
        %4713 = vmatprep.subr.mxu0 0.0
        %4714 = vmatpush1.msra.mxu0 0.0
        %4715 = vmatprep.subr.mxu0 0.0
        %4716 = vmatpush1.msra.mxu0 0.0
        %4717 = vmatprep.subr.mxu0 0.0
        %4718 = vmatpush1.msra.mxu0 0.0
        %4719 = vmatprep.subr.mxu0 0.0
        %4720 = vmatpush1.msra.mxu0 0.0
        %4721 = vmatprep.subr.mxu0 0.0
        %4722 = vmatpush1.msra.mxu0 0.0
        %4723 = vmatprep.subr.mxu0 0.0
        %4724 = vmatpush1.msra.mxu0 0.0
        %4725 = vmatprep.subr.mxu0 0.0
        %4726 = vmatpush1.msra.mxu0 0.0
        %4727 = vmatprep.subr.mxu0 0.0
        %4728 = vmatpush1.msra.mxu0 0.0
        %4729 = vmatprep.subr.mxu0 0.0
        %4730 = vmatpush1.msra.mxu0 0.0
        %4731 = vmatprep.subr.mxu0 0.0
        %4732 = vmatpush1.msra.mxu0 0.0
        %4733 = vmatprep.subr.mxu0 0.0
        %4734 = vmatpush1.msra.mxu0 0.0
        %4735 = vmatprep.subr.mxu0 0.0
        %4736 = vmatpush1.msra.mxu0 0.0
        %4737 = vmatprep.subr.mxu0 0.0
        %4738 = vmatpush1.msra.mxu0 0.0
        %4739 = vmatprep.subr.mxu0 0.0
        %4740 = vmatpush1.msra.mxu0 0.0
        %4741 = vmatprep.mubr.f32.mxu0 0.0
        %4742 = vmatmul.mubr.f32.gmra.mrb[0].mxu0 %v4672
        %v4743 = vpop.f32.mrb[0].mxu0
        %v4744 = vadd.f32 0.0, %v4743
        %v4745 = vpop.f32.mrb[0].mxu0
        %4746 = vmatprep.mubr.f32.mxu0 0.0
        %4747 = vmatmul.mubr.f32.gmra.mrb[0].mxu0 %v4675
        %v4748 = vpop.f32.mrb[0].mxu0
        %v4749 = vadd.f32 0.0, %v4748
        %v4750 = vpop.f32.mrb[0].mxu0
        %4751 = vdwg.mxu0
        %4752 = vrot.lane.b32.xlu0 %v4544, 120
        %v4753 = vpop.permute.xlu0 %4752
        %4754 = vrot.lane.b32.xlu0 %v4549, 120
        %v4755 = vpop.permute.xlu0 %4754
        %4756 = vrot.lane.b32.xlu0 %v4544, 88
        %v4757 = vpop.permute.xlu0 %4756
        %4758 = vrot.lane.b32.xlu0 %v4549, 88
        %v4759 = vpop.permute.xlu0 %4758
        %v4760 = vsel %vm874, %v4753, 0
        %v4762 = vsel %vm874, %v4755, 0
        %v4764 = vsel %vm874, %v4757, 0
        %v4766 = vsel %vm874, %v4759, 0
        %4768 = vmatprep.subr.mxu0 0.0
        %4769 = vmatpush1.xpose.msra.mxu0 %v4764
        %4770 = vmatprep.subr.mxu0 0.0
        %4771 = vmatpush1.xpose.msra.mxu0 %v4766
        %4772 = vmatprep.subr.mxu0 0.0
        %4773 = vmatpush1.xpose.msra.mxu0 0.0
        %4774 = vmatprep.subr.mxu0 0.0
        %4775 = vmatpush1.xpose.msra.mxu0 0.0
        %4776 = vmatprep.subr.mxu0 0.0
        %4777 = vmatpush1.xpose.msra.mxu0 0.0
        %4778 = vmatprep.subr.mxu0 0.0
        %4779 = vmatpush1.xpose.msra.mxu0 0.0
        %4780 = vmatprep.subr.mxu0 0.0
        %4781 = vmatpush1.xpose.msra.mxu0 0.0
        %4782 = vmatprep.subr.mxu0 0.0
        %4783 = vmatpush1.xpose.msra.mxu0 0.0
        %4784 = vmatprep.subr.mxu0 0.0
        %4785 = vmatpush1.xpose.msra.mxu0 0.0
        %4786 = vmatprep.subr.mxu0 0.0
        %4787 = vmatpush1.xpose.msra.mxu0 0.0
        %4788 = vmatprep.subr.mxu0 0.0
        %4789 = vmatpush1.xpose.msra.mxu0 0.0
        %4790 = vmatprep.subr.mxu0 0.0
        %4791 = vmatpush1.xpose.msra.mxu0 0.0
        %4792 = vmatprep.subr.mxu0 0.0
        %4793 = vmatpush1.xpose.msra.mxu0 0.0
        %4794 = vmatprep.subr.mxu0 0.0
        %4795 = vmatpush1.xpose.msra.mxu0 0.0
        %4796 = vmatprep.subr.mxu0 0.0
        %4797 = vmatpush1.xpose.msra.mxu0 0.0
        %4798 = vmatprep.subr.mxu0 0.0
        %4799 = vmatpush1.xpose.msra.mxu0 0.0
        %4800 = vmatprep.subr.mxu0 0.0
        %4801 = vmatpush1.xpose.msra.mxu0 0.0
        %4802 = vmatprep.subr.mxu0 0.0
        %4803 = vmatpush1.xpose.msra.mxu0 0.0
        %4804 = vmatprep.subr.mxu0 0.0
        %4805 = vmatpush1.xpose.msra.mxu0 0.0
        %4806 = vmatprep.subr.mxu0 0.0
        %4807 = vmatpush1.xpose.msra.mxu0 0.0
        %4808 = vmatprep.subr.mxu0 0.0
        %4809 = vmatpush1.xpose.msra.mxu0 0.0
        %4810 = vmatprep.subr.mxu0 0.0
        %4811 = vmatpush1.xpose.msra.mxu0 0.0
        %4812 = vmatprep.subr.mxu0 0.0
        %4813 = vmatpush1.xpose.msra.mxu0 0.0
        %4814 = vmatprep.subr.mxu0 0.0
        %4815 = vmatpush1.xpose.msra.mxu0 0.0
        %4816 = vmatprep.subr.mxu0 0.0
        %4817 = vmatpush1.xpose.msra.mxu0 0.0
        %4818 = vmatprep.subr.mxu0 0.0
        %4819 = vmatpush1.xpose.msra.mxu0 0.0
        %4820 = vmatprep.subr.mxu0 0.0
        %4821 = vmatpush1.xpose.msra.mxu0 0.0
        %4822 = vmatprep.subr.mxu0 0.0
        %4823 = vmatpush1.xpose.msra.mxu0 0.0
        %4824 = vmatprep.subr.mxu0 0.0
        %4825 = vmatpush1.xpose.msra.mxu0 0.0
        %4826 = vmatprep.subr.mxu0 0.0
        %4827 = vmatpush1.xpose.msra.mxu0 0.0
        %4828 = vmatprep.subr.mxu0 0.0
        %4829 = vmatpush1.xpose.msra.mxu0 0.0
        %4830 = vmatprep.subr.mxu0 0.0
        %4831 = vmatpush1.xpose.msra.mxu0 0.0
        %4832 = vmatprep.mubr.f32.mxu0 0.0
        %4833 = vmatmul.mubr.f32.gmra.mrb[0].mxu0 %v4760
        %v4834 = vpop.f32.mrb[0].mxu0
        %v4835 = vadd.f32 0.0, %v4834
        %v4836 = vpop.f32.mrb[0].mxu0
        %4837 = vmatprep.mubr.f32.mxu0 0.0
        %4838 = vmatmul.mubr.f32.gmra.mrb[0].mxu0 %v4762
        %v4839 = vpop.f32.mrb[0].mxu0
        %v4840 = vadd.f32 0.0, %v4839
        %v4841 = vpop.f32.mrb[0].mxu0
        %4842 = vdwg.mxu0
        %v4843 = vmul.f32 %v4835, 0.35355338
        %v4844 = vmul.f32 %v4840, 0.35355338
        %v4845 = vsel %vm3264, %v4843, -inf
        %4846 = vmax.xlane.f32.xlu0 %v4845
        %v4847 = vpop.xlane.xlu0 %4846
        %v4848 = vsel %vm3264, %v4844, -inf
        %4849 = vmax.xlane.f32.xlu0 %v4848
        %v4850 = vpop.xlane.xlu0 %4849
        %v4851 = vsub.f32 %v4843, %v4847
        %v4852 = vsub.f32 %v4844, %v4850
        %v4853 = vmul.f32 %v4851, 1.442695
        %v4854 = vpow.pop %v4853
        %v4855 = vmul.f32 %v4852, 1.442695
        %v4856 = vpow.pop %v4855
        %v4857 = vsel %vm3264, %v4854, 0.0
        %4858 = vadd.xlane.f32.xlu0 %v4857
        %v4859 = vpop.xlane.xlu0 %4858
        %v4860 = vsel %vm3264, %v4856, 0.0
        %4861 = vadd.xlane.f32.xlu0 %v4860
        %v4862 = vpop.xlane.xlu0 %4861
        %v4863 = vrcp.pop %v4859
        %v4864 = vrcp.pop %v4862
        %v4865 = vmul.f32 %v4854, %v4863
        %v4866 = vmul.f32 %v4856, %v4864
        %4867 = vrot.lane.b32.xlu0 %v4544, 56
        %v4868 = vpop.permute.xlu0 %4867
        %4869 = vrot.lane.b32.xlu0 %v4549, 56
        %v4870 = vpop.permute.xlu0 %4869
        %v4874 = vsel %vm3264, %v4865, 0
        %v4877 = vsel %vm3264, %v4866, 0
        %4879 = vmatprep.subr.mxu0 0.0
        %4880 = vmatpush1.msra.mxu0 %v4868
        %4881 = vmatprep.subr.mxu0 0.0
        %4882 = vmatpush1.msra.mxu0 %v4870
        %4883 = vmatprep.subr.mxu0 0.0
        %4884 = vmatpush1.msra.mxu0 0.0
        %4885 = vmatprep.subr.mxu0 0.0
        %4886 = vmatpush1.msra.mxu0 0.0
        %4887 = vmatprep.subr.mxu0 0.0
        %4888 = vmatpush1.msra.mxu0 0.0
        %4889 = vmatprep.subr.mxu0 0.0
        %4890 = vmatpush1.msra.mxu0 0.0
        %4891 = vmatprep.subr.mxu0 0.0
        %4892 = vmatpush1.msra.mxu0 0.0
        %4893 = vmatprep.subr.mxu0 0.0
        %4894 = vmatpush1.msra.mxu0 0.0
        %4895 = vmatprep.subr.mxu0 0.0
        %4896 = vmatpush1.msra.mxu0 0.0
        %4897 = vmatprep.subr.mxu0 0.0
        %4898 = vmatpush1.msra.mxu0 0.0
        %4899 = vmatprep.subr.mxu0 0.0
        %4900 = vmatpush1.msra.mxu0 0.0
        %4901 = vmatprep.subr.mxu0 0.0
        %4902 = vmatpush1.msra.mxu0 0.0
        %4903 = vmatprep.subr.mxu0 0.0
        %4904 = vmatpush1.msra.mxu0 0.0
        %4905 = vmatprep.subr.mxu0 0.0
        %4906 = vmatpush1.msra.mxu0 0.0
        %4907 = vmatprep.subr.mxu0 0.0
        %4908 = vmatpush1.msra.mxu0 0.0
        %4909 = vmatprep.subr.mxu0 0.0
        %4910 = vmatpush1.msra.mxu0 0.0
        %4911 = vmatprep.subr.mxu0 0.0
        %4912 = vmatpush1.msra.mxu0 0.0
        %4913 = vmatprep.subr.mxu0 0.0
        %4914 = vmatpush1.msra.mxu0 0.0
        %4915 = vmatprep.subr.mxu0 0.0
        %4916 = vmatpush1.msra.mxu0 0.0
        %4917 = vmatprep.subr.mxu0 0.0
        %4918 = vmatpush1.msra.mxu0 0.0
        %4919 = vmatprep.subr.mxu0 0.0
        %4920 = vmatpush1.msra.mxu0 0.0
        %4921 = vmatprep.subr.mxu0 0.0
        %4922 = vmatpush1.msra.mxu0 0.0
        %4923 = vmatprep.subr.mxu0 0.0
        %4924 = vmatpush1.msra.mxu0 0.0
        %4925 = vmatprep.subr.mxu0 0.0
        %4926 = vmatpush1.msra.mxu0 0.0
        %4927 = vmatprep.subr.mxu0 0.0
        %4928 = vmatpush1.msra.mxu0 0.0
        %4929 = vmatprep.subr.mxu0 0.0
        %4930 = vmatpush1.msra.mxu0 0.0
        %4931 = vmatprep.subr.mxu0 0.0
        %4932 = vmatpush1.msra.mxu0 0.0
        %4933 = vmatprep.subr.mxu0 0.0
        %4934 = vmatpush1.msra.mxu0 0.0
        %4935 = vmatprep.subr.mxu0 0.0
        %4936 = vmatpush1.msra.mxu0 0.0
        %4937 = vmatprep.subr.mxu0 0.0
        %4938 = vmatpush1.msra.mxu0 0.0
        %4939 = vmatprep.subr.mxu0 0.0
        %4940 = vmatpush1.msra.mxu0 0.0
        %4941 = vmatprep.subr.mxu0 0.0
        %4942 = vmatpush1.msra.mxu0 0.0
        %4943 = vmatprep.mubr.f32.mxu0 0.0
        %4944 = vmatmul.mubr.f32.gmra.mrb[0].mxu0 %v4874
        %v4945 = vpop.f32.mrb[0].mxu0
        %v4946 = vadd.f32 0.0, %v4945
        %v4947 = vpop.f32.mrb[0].mxu0
        %4948 = vmatprep.mubr.f32.mxu0 0.0
        %4949 = vmatmul.mubr.f32.gmra.mrb[0].mxu0 %v4877
        %v4950 = vpop.f32.mrb[0].mxu0
        %v4951 = vadd.f32 0.0, %v4950
        %v4952 = vpop.f32.mrb[0].mxu0
        %4953 = vdwg.mxu0
        %4954 = vrot.lane.b32.xlu0 %v4544, 112
        %v4955 = vpop.permute.xlu0 %4954
        %4956 = vrot.lane.b32.xlu0 %v4549, 112
        %v4957 = vpop.permute.xlu0 %4956
        %4958 = vrot.lane.b32.xlu0 %v4544, 80
        %v4959 = vpop.permute.xlu0 %4958
        %4960 = vrot.lane.b32.xlu0 %v4549, 80
        %v4961 = vpop.permute.xlu0 %4960
        %v4962 = vsel %vm874, %v4955, 0
        %v4964 = vsel %vm874, %v4957, 0
        %v4966 = vsel %vm874, %v4959, 0
        %v4968 = vsel %vm874, %v4961, 0
        %4970 = vmatprep.subr.mxu0 0.0
        %4971 = vmatpush1.xpose.msra.mxu0 %v4966
        %4972 = vmatprep.subr.mxu0 0.0
        %4973 = vmatpush1.xpose.msra.mxu0 %v4968
        %4974 = vmatprep.subr.mxu0 0.0
        %4975 = vmatpush1.xpose.msra.mxu0 0.0
        %4976 = vmatprep.subr.mxu0 0.0
        %4977 = vmatpush1.xpose.msra.mxu0 0.0
        %4978 = vmatprep.subr.mxu0 0.0
        %4979 = vmatpush1.xpose.msra.mxu0 0.0
        %4980 = vmatprep.subr.mxu0 0.0
        %4981 = vmatpush1.xpose.msra.mxu0 0.0
        %4982 = vmatprep.subr.mxu0 0.0
        %4983 = vmatpush1.xpose.msra.mxu0 0.0
        %4984 = vmatprep.subr.mxu0 0.0
        %4985 = vmatpush1.xpose.msra.mxu0 0.0
        %4986 = vmatprep.subr.mxu0 0.0
        %4987 = vmatpush1.xpose.msra.mxu0 0.0
        %4988 = vmatprep.subr.mxu0 0.0
        %4989 = vmatpush1.xpose.msra.mxu0 0.0
        %4990 = vmatprep.subr.mxu0 0.0
        %4991 = vmatpush1.xpose.msra.mxu0 0.0
        %4992 = vmatprep.subr.mxu0 0.0
        %4993 = vmatpush1.xpose.msra.mxu0 0.0
        %4994 = vmatprep.subr.mxu0 0.0
        %4995 = vmatpush1.xpose.msra.mxu0 0.0
        %4996 = vmatprep.subr.mxu0 0.0
        %4997 = vmatpush1.xpose.msra.mxu0 0.0
        %4998 = vmatprep.subr.mxu0 0.0
        %4999 = vmatpush1.xpose.msra.mxu0 0.0
        %5000 = vmatprep.subr.mxu0 0.0
        %5001 = vmatpush1.xpose.msra.mxu0 0.0
        %5002 = vmatprep.subr.mxu0 0.0
        %5003 = vmatpush1.xpose.msra.mxu0 0.0
        %5004 = vmatprep.subr.mxu0 0.0
        %5005 = vmatpush1.xpose.msra.mxu0 0.0
        %5006 = vmatprep.subr.mxu0 0.0
        %5007 = vmatpush1.xpose.msra.mxu0 0.0
        %5008 = vmatprep.subr.mxu0 0.0
        %5009 = vmatpush1.xpose.msra.mxu0 0.0
        %5010 = vmatprep.subr.mxu0 0.0
        %5011 = vmatpush1.xpose.msra.mxu0 0.0
        %5012 = vmatprep.subr.mxu0 0.0
        %5013 = vmatpush1.xpose.msra.mxu0 0.0
        %5014 = vmatprep.subr.mxu0 0.0
        %5015 = vmatpush1.xpose.msra.mxu0 0.0
        %5016 = vmatprep.subr.mxu0 0.0
        %5017 = vmatpush1.xpose.msra.mxu0 0.0
        %5018 = vmatprep.subr.mxu0 0.0
        %5019 = vmatpush1.xpose.msra.mxu0 0.0
        %5020 = vmatprep.subr.mxu0 0.0
        %5021 = vmatpush1.xpose.msra.mxu0 0.0
        %5022 = vmatprep.subr.mxu0 0.0
        %5023 = vmatpush1.xpose.msra.mxu0 0.0
        %5024 = vmatprep.subr.mxu0 0.0
        %5025 = vmatpush1.xpose.msra.mxu0 0.0
        %5026 = vmatprep.subr.mxu0 0.0
        %5027 = vmatpush1.xpose.msra.mxu0 0.0
        %5028 = vmatprep.subr.mxu0 0.0
        %5029 = vmatpush1.xpose.msra.mxu0 0.0
        %5030 = vmatprep.subr.mxu0 0.0
        %5031 = vmatpush1.xpose.msra.mxu0 0.0
        %5032 = vmatprep.subr.mxu0 0.0
        %5033 = vmatpush1.xpose.msra.mxu0 0.0
        %5034 = vmatprep.mubr.f32.mxu0 0.0
        %5035 = vmatmul.mubr.f32.gmra.mrb[0].mxu0 %v4962
        %v5036 = vpop.f32.mrb[0].mxu0
        %v5037 = vadd.f32 0.0, %v5036
        %v5038 = vpop.f32.mrb[0].mxu0
        %5039 = vmatprep.mubr.f32.mxu0 0.0
        %5040 = vmatmul.mubr.f32.gmra.mrb[0].mxu0 %v4964
        %v5041 = vpop.f32.mrb[0].mxu0
        %v5042 = vadd.f32 0.0, %v5041
        %v5043 = vpop.f32.mrb[0].mxu0
        %5044 = vdwg.mxu0
        %v5045 = vmul.f32 %v5037, 0.35355338
        %v5046 = vmul.f32 %v5042, 0.35355338
        %v5047 = vsel %vm3264, %v5045, -inf
        %5048 = vmax.xlane.f32.xlu0 %v5047
        %v5049 = vpop.xlane.xlu0 %5048
        %v5050 = vsel %vm3264, %v5046, -inf
        %5051 = vmax.xlane.f32.xlu0 %v5050
        %v5052 = vpop.xlane.xlu0 %5051
        %v5053 = vsub.f32 %v5045, %v5049
        %v5054 = vsub.f32 %v5046, %v5052
        %v5055 = vmul.f32 %v5053, 1.442695
        %v5056 = vpow.pop %v5055
        %v5057 = vmul.f32 %v5054, 1.442695
        %v5058 = vpow.pop %v5057
        %v5059 = vsel %vm3264, %v5056, 0.0
        %5060 = vadd.xlane.f32.xlu0 %v5059
        %v5061 = vpop.xlane.xlu0 %5060
        %v5062 = vsel %vm3264, %v5058, 0.0
        %5063 = vadd.xlane.f32.xlu0 %v5062
        %v5064 = vpop.xlane.xlu0 %5063
        %v5065 = vrcp.pop %v5061
        %v5066 = vrcp.pop %v5064
        %v5067 = vmul.f32 %v5056, %v5065
        %v5068 = vmul.f32 %v5058, %v5066
        %5069 = vrot.lane.b32.xlu0 %v4544, 48
        %v5070 = vpop.permute.xlu0 %5069
        %5071 = vrot.lane.b32.xlu0 %v4549, 48
        %v5072 = vpop.permute.xlu0 %5071
        %v5076 = vsel %vm3264, %v5067, 0
        %v5079 = vsel %vm3264, %v5068, 0
        %5081 = vmatprep.subr.mxu0 0.0
        %5082 = vmatpush1.msra.mxu0 %v5070
        %5083 = vmatprep.subr.mxu0 0.0
        %5084 = vmatpush1.msra.mxu0 %v5072
        %5085 = vmatprep.subr.mxu0 0.0
        %5086 = vmatpush1.msra.mxu0 0.0
        %5087 = vmatprep.subr.mxu0 0.0
        %5088 = vmatpush1.msra.mxu0 0.0
        %5089 = vmatprep.subr.mxu0 0.0
        %5090 = vmatpush1.msra.mxu0 0.0
        %5091 = vmatprep.subr.mxu0 0.0
        %5092 = vmatpush1.msra.mxu0 0.0
        %5093 = vmatprep.subr.mxu0 0.0
        %5094 = vmatpush1.msra.mxu0 0.0
        %5095 = vmatprep.subr.mxu0 0.0
        %5096 = vmatpush1.msra.mxu0 0.0
        %5097 = vmatprep.subr.mxu0 0.0
        %5098 = vmatpush1.msra.mxu0 0.0
        %5099 = vmatprep.subr.mxu0 0.0
        %5100 = vmatpush1.msra.mxu0 0.0
        %5101 = vmatprep.subr.mxu0 0.0
        %5102 = vmatpush1.msra.mxu0 0.0
        %5103 = vmatprep.subr.mxu0 0.0
        %5104 = vmatpush1.msra.mxu0 0.0
        %5105 = vmatprep.subr.mxu0 0.0
        %5106 = vmatpush1.msra.mxu0 0.0
        %5107 = vmatprep.subr.mxu0 0.0
        %5108 = vmatpush1.msra.mxu0 0.0
        %5109 = vmatprep.subr.mxu0 0.0
        %5110 = vmatpush1.msra.mxu0 0.0
        %5111 = vmatprep.subr.mxu0 0.0
        %5112 = vmatpush1.msra.mxu0 0.0
        %5113 = vmatprep.subr.mxu0 0.0
        %5114 = vmatpush1.msra.mxu0 0.0
        %5115 = vmatprep.subr.mxu0 0.0
        %5116 = vmatpush1.msra.mxu0 0.0
        %5117 = vmatprep.subr.mxu0 0.0
        %5118 = vmatpush1.msra.mxu0 0.0
        %5119 = vmatprep.subr.mxu0 0.0
        %5120 = vmatpush1.msra.mxu0 0.0
        %5121 = vmatprep.subr.mxu0 0.0
        %5122 = vmatpush1.msra.mxu0 0.0
        %5123 = vmatprep.subr.mxu0 0.0
        %5124 = vmatpush1.msra.mxu0 0.0
        %5125 = vmatprep.subr.mxu0 0.0
        %5126 = vmatpush1.msra.mxu0 0.0
        %5127 = vmatprep.subr.mxu0 0.0
        %5128 = vmatpush1.msra.mxu0 0.0
        %5129 = vmatprep.subr.mxu0 0.0
        %5130 = vmatpush1.msra.mxu0 0.0
        %5131 = vmatprep.subr.mxu0 0.0
        %5132 = vmatpush1.msra.mxu0 0.0
        %5133 = vmatprep.subr.mxu0 0.0
        %5134 = vmatpush1.msra.mxu0 0.0
        %5135 = vmatprep.subr.mxu0 0.0
        %5136 = vmatpush1.msra.mxu0 0.0
        %5137 = vmatprep.subr.mxu0 0.0
        %5138 = vmatpush1.msra.mxu0 0.0
        %5139 = vmatprep.subr.mxu0 0.0
        %5140 = vmatpush1.msra.mxu0 0.0
        %5141 = vmatprep.subr.mxu0 0.0
        %5142 = vmatpush1.msra.mxu0 0.0
        %5143 = vmatprep.subr.mxu0 0.0
        %5144 = vmatpush1.msra.mxu0 0.0
        %5145 = vmatprep.mubr.f32.mxu0 0.0
        %5146 = vmatmul.mubr.f32.gmra.mrb[0].mxu0 %v5076
        %v5147 = vpop.f32.mrb[0].mxu0
        %v5148 = vadd.f32 0.0, %v5147
        %v5149 = vpop.f32.mrb[0].mxu0
        %5150 = vmatprep.mubr.f32.mxu0 0.0
        %5151 = vmatmul.mubr.f32.gmra.mrb[0].mxu0 %v5079
        %v5152 = vpop.f32.mrb[0].mxu0
        %v5153 = vadd.f32 0.0, %v5152
        %v5154 = vpop.f32.mrb[0].mxu0
        %5155 = vdwg.mxu0
        %5156 = vrot.lane.b32.xlu0 %v4544, 104
        %v5157 = vpop.permute.xlu0 %5156
        %5158 = vrot.lane.b32.xlu0 %v4549, 104
        %v5159 = vpop.permute.xlu0 %5158
        %5160 = vrot.lane.b32.xlu0 %v4544, 72
        %v5161 = vpop.permute.xlu0 %5160
        %5162 = vrot.lane.b32.xlu0 %v4549, 72
        %v5163 = vpop.permute.xlu0 %5162
        %v5164 = vsel %vm874, %v5157, 0
        %v5166 = vsel %vm874, %v5159, 0
        %v5168 = vsel %vm874, %v5161, 0
        %v5170 = vsel %vm874, %v5163, 0
        %5172 = vmatprep.subr.mxu0 0.0
        %5173 = vmatpush1.xpose.msra.mxu0 %v5168
        %5174 = vmatprep.subr.mxu0 0.0
        %5175 = vmatpush1.xpose.msra.mxu0 %v5170
        %5176 = vmatprep.subr.mxu0 0.0
        %5177 = vmatpush1.xpose.msra.mxu0 0.0
        %5178 = vmatprep.subr.mxu0 0.0
        %5179 = vmatpush1.xpose.msra.mxu0 0.0
        %5180 = vmatprep.subr.mxu0 0.0
        %5181 = vmatpush1.xpose.msra.mxu0 0.0
        %5182 = vmatprep.subr.mxu0 0.0
        %5183 = vmatpush1.xpose.msra.mxu0 0.0
        %5184 = vmatprep.subr.mxu0 0.0
        %5185 = vmatpush1.xpose.msra.mxu0 0.0
        %5186 = vmatprep.subr.mxu0 0.0
        %5187 = vmatpush1.xpose.msra.mxu0 0.0
        %5188 = vmatprep.subr.mxu0 0.0
        %5189 = vmatpush1.xpose.msra.mxu0 0.0
        %5190 = vmatprep.subr.mxu0 0.0
        %5191 = vmatpush1.xpose.msra.mxu0 0.0
        %5192 = vmatprep.subr.mxu0 0.0
        %5193 = vmatpush1.xpose.msra.mxu0 0.0
        %5194 = vmatprep.subr.mxu0 0.0
        %5195 = vmatpush1.xpose.msra.mxu0 0.0
        %5196 = vmatprep.subr.mxu0 0.0
        %5197 = vmatpush1.xpose.msra.mxu0 0.0
        %5198 = vmatprep.subr.mxu0 0.0
        %5199 = vmatpush1.xpose.msra.mxu0 0.0
        %5200 = vmatprep.subr.mxu0 0.0
        %5201 = vmatpush1.xpose.msra.mxu0 0.0
        %5202 = vmatprep.subr.mxu0 0.0
        %5203 = vmatpush1.xpose.msra.mxu0 0.0
        %5204 = vmatprep.subr.mxu0 0.0
        %5205 = vmatpush1.xpose.msra.mxu0 0.0
        %5206 = vmatprep.subr.mxu0 0.0
        %5207 = vmatpush1.xpose.msra.mxu0 0.0
        %5208 = vmatprep.subr.mxu0 0.0
        %5209 = vmatpush1.xpose.msra.mxu0 0.0
        %5210 = vmatprep.subr.mxu0 0.0
        %5211 = vmatpush1.xpose.msra.mxu0 0.0
        %5212 = vmatprep.subr.mxu0 0.0
        %5213 = vmatpush1.xpose.msra.mxu0 0.0
        %5214 = vmatprep.subr.mxu0 0.0
        %5215 = vmatpush1.xpose.msra.mxu0 0.0
        %5216 = vmatprep.subr.mxu0 0.0
        %5217 = vmatpush1.xpose.msra.mxu0 0.0
        %5218 = vmatprep.subr.mxu0 0.0
        %5219 = vmatpush1.xpose.msra.mxu0 0.0
        %5220 = vmatprep.subr.mxu0 0.0
        %5221 = vmatpush1.xpose.msra.mxu0 0.0
        %5222 = vmatprep.subr.mxu0 0.0
        %5223 = vmatpush1.xpose.msra.mxu0 0.0
        %5224 = vmatprep.subr.mxu0 0.0
        %5225 = vmatpush1.xpose.msra.mxu0 0.0
        %5226 = vmatprep.subr.mxu0 0.0
        %5227 = vmatpush1.xpose.msra.mxu0 0.0
        %5228 = vmatprep.subr.mxu0 0.0
        %5229 = vmatpush1.xpose.msra.mxu0 0.0
        %5230 = vmatprep.subr.mxu0 0.0
        %5231 = vmatpush1.xpose.msra.mxu0 0.0
        %5232 = vmatprep.subr.mxu0 0.0
        %5233 = vmatpush1.xpose.msra.mxu0 0.0
        %5234 = vmatprep.subr.mxu0 0.0
        %5235 = vmatpush1.xpose.msra.mxu0 0.0
        %5236 = vmatprep.mubr.f32.mxu0 0.0
        %5237 = vmatmul.mubr.f32.gmra.mrb[0].mxu0 %v5164
        %v5238 = vpop.f32.mrb[0].mxu0
        %v5239 = vadd.f32 0.0, %v5238
        %v5240 = vpop.f32.mrb[0].mxu0
        %5241 = vmatprep.mubr.f32.mxu0 0.0
        %5242 = vmatmul.mubr.f32.gmra.mrb[0].mxu0 %v5166
        %v5243 = vpop.f32.mrb[0].mxu0
        %v5244 = vadd.f32 0.0, %v5243
        %v5245 = vpop.f32.mrb[0].mxu0
        %5246 = vdwg.mxu0
        %v5247 = vmul.f32 %v5239, 0.35355338
        %v5248 = vmul.f32 %v5244, 0.35355338
        %v5249 = vsel %vm3264, %v5247, -inf
        %5250 = vmax.xlane.f32.xlu0 %v5249
        %v5251 = vpop.xlane.xlu0 %5250
        %v5252 = vsel %vm3264, %v5248, -inf
        %5253 = vmax.xlane.f32.xlu0 %v5252
        %v5254 = vpop.xlane.xlu0 %5253
        %v5255 = vsub.f32 %v5247, %v5251
        %v5256 = vsub.f32 %v5248, %v5254
        %v5257 = vmul.f32 %v5255, 1.442695
        %v5258 = vpow.pop %v5257
        %v5259 = vmul.f32 %v5256, 1.442695
        %v5260 = vpow.pop %v5259
        %v5261 = vsel %vm3264, %v5258, 0.0
        %5262 = vadd.xlane.f32.xlu0 %v5261
        %v5263 = vpop.xlane.xlu0 %5262
        %v5264 = vsel %vm3264, %v5260, 0.0
        %5265 = vadd.xlane.f32.xlu0 %v5264
        %v5266 = vpop.xlane.xlu0 %5265
        %v5267 = vrcp.pop %v5263
        %v5268 = vrcp.pop %v5266
        %v5269 = vmul.f32 %v5258, %v5267
        %v5270 = vmul.f32 %v5260, %v5268
        %5271 = vrot.lane.b32.xlu0 %v4544, 40
        %v5272 = vpop.permute.xlu0 %5271
        %5273 = vrot.lane.b32.xlu0 %v4549, 40
        %v5274 = vpop.permute.xlu0 %5273
        %v5278 = vsel %vm3264, %v5269, 0
        %v5281 = vsel %vm3264, %v5270, 0
        %5283 = vmatprep.subr.mxu0 0.0
        %5284 = vmatpush1.msra.mxu0 %v5272
        %5285 = vmatprep.subr.mxu0 0.0
        %5286 = vmatpush1.msra.mxu0 %v5274
        %5287 = vmatprep.subr.mxu0 0.0
        %5288 = vmatpush1.msra.mxu0 0.0
        %5289 = vmatprep.subr.mxu0 0.0
        %5290 = vmatpush1.msra.mxu0 0.0
        %5291 = vmatprep.subr.mxu0 0.0
        %5292 = vmatpush1.msra.mxu0 0.0
        %5293 = vmatprep.subr.mxu0 0.0
        %5294 = vmatpush1.msra.mxu0 0.0
        %5295 = vmatprep.subr.mxu0 0.0
        %5296 = vmatpush1.msra.mxu0 0.0
        %5297 = vmatprep.subr.mxu0 0.0
        %5298 = vmatpush1.msra.mxu0 0.0
        %5299 = vmatprep.subr.mxu0 0.0
        %5300 = vmatpush1.msra.mxu0 0.0
        %5301 = vmatprep.subr.mxu0 0.0
        %5302 = vmatpush1.msra.mxu0 0.0
        %5303 = vmatprep.subr.mxu0 0.0
        %5304 = vmatpush1.msra.mxu0 0.0
        %5305 = vmatprep.subr.mxu0 0.0
        %5306 = vmatpush1.msra.mxu0 0.0
        %5307 = vmatprep.subr.mxu0 0.0
        %5308 = vmatpush1.msra.mxu0 0.0
        %5309 = vmatprep.subr.mxu0 0.0
        %5310 = vmatpush1.msra.mxu0 0.0
        %5311 = vmatprep.subr.mxu0 0.0
        %5312 = vmatpush1.msra.mxu0 0.0
        %5313 = vmatprep.subr.mxu0 0.0
        %5314 = vmatpush1.msra.mxu0 0.0
        %5315 = vmatprep.subr.mxu0 0.0
        %5316 = vmatpush1.msra.mxu0 0.0
        %5317 = vmatprep.subr.mxu0 0.0
        %5318 = vmatpush1.msra.mxu0 0.0
        %5319 = vmatprep.subr.mxu0 0.0
        %5320 = vmatpush1.msra.mxu0 0.0
        %5321 = vmatprep.subr.mxu0 0.0
        %5322 = vmatpush1.msra.mxu0 0.0
        %5323 = vmatprep.subr.mxu0 0.0
        %5324 = vmatpush1.msra.mxu0 0.0
        %5325 = vmatprep.subr.mxu0 0.0
        %5326 = vmatpush1.msra.mxu0 0.0
        %5327 = vmatprep.subr.mxu0 0.0
        %5328 = vmatpush1.msra.mxu0 0.0
        %5329 = vmatprep.subr.mxu0 0.0
        %5330 = vmatpush1.msra.mxu0 0.0
        %5331 = vmatprep.subr.mxu0 0.0
        %5332 = vmatpush1.msra.mxu0 0.0
        %5333 = vmatprep.subr.mxu0 0.0
        %5334 = vmatpush1.msra.mxu0 0.0
        %5335 = vmatprep.subr.mxu0 0.0
        %5336 = vmatpush1.msra.mxu0 0.0
        %5337 = vmatprep.subr.mxu0 0.0
        %5338 = vmatpush1.msra.mxu0 0.0
        %5339 = vmatprep.subr.mxu0 0.0
        %5340 = vmatpush1.msra.mxu0 0.0
        %5341 = vmatprep.subr.mxu0 0.0
        %5342 = vmatpush1.msra.mxu0 0.0
        %5343 = vmatprep.subr.mxu0 0.0
        %5344 = vmatpush1.msra.mxu0 0.0
        %5345 = vmatprep.subr.mxu0 0.0
        %5346 = vmatpush1.msra.mxu0 0.0
        %5347 = vmatprep.mubr.f32.mxu0 0.0
        %5348 = vmatmul.mubr.f32.gmra.mrb[0].mxu0 %v5278
        %v5349 = vpop.f32.mrb[0].mxu0
        %v5350 = vadd.f32 0.0, %v5349
        %v5351 = vpop.f32.mrb[0].mxu0
        %5352 = vmatprep.mubr.f32.mxu0 0.0
        %5353 = vmatmul.mubr.f32.gmra.mrb[0].mxu0 %v5281
        %v5354 = vpop.f32.mrb[0].mxu0
        %v5355 = vadd.f32 0.0, %v5354
        %v5356 = vpop.f32.mrb[0].mxu0
        %5357 = vdwg.mxu0
        %5360 = vrot.lane.b32.xlu0 %v4946, 8
        %v5361 = vpop.permute.xlu0 %5360
        %5362 = vrot.lane.b32.xlu0 %v4951, 8
        %v5363 = vpop.permute.xlu0 %5362
        %5368 = vrot.lane.b32.xlu0 %v5148, 16
        %v5369 = vpop.permute.xlu0 %5368
        %5370 = vrot.lane.b32.xlu0 %v5153, 16
        %v5371 = vpop.permute.xlu0 %5370
        %5376 = vrot.lane.b32.xlu0 %v5350, 24
        %v5377 = vpop.permute.xlu0 %5376
        %5378 = vrot.lane.b32.xlu0 %v5355, 24
        %v5379 = vpop.permute.xlu0 %5378
        %v5382 = vsel %vm874, %v4744, %v5361
        %v5383 = vsel %vm874, %v4749, %v5363
        %v5384 = vsel %vm3264, %v5382, %v5369
        %v5385 = vsel %vm3264, %v5383, %v5371
        %v5386 = vsel %vm3297, %v5384, %v5377
        %v5387 = vsel %vm3297, %v5385, %v5379
        %v5388 = vld [vmem:[%s14] sm:$0xff]
        %v5389 = vld [vmem:[%s14 + $0x8] sm:$0xff]
        %v5390 = vld [vmem:[%s14 + $0x10] sm:$0xff]
        %v5391 = vld [vmem:[%s14 + $0x18] sm:$0xff]
        %v5392 = vld [vmem:[#allocation6] sm:$0x1]
        %v5394 = vlaneseq
        %v5395 = vshrl.u32 %v5394, 7
        %v5396 = vsub.s32 0, %v5395
        %v5397 = vrot.slane %v5392, %v5396
        %v5400 = vsel %vm3330, %v5386, 0
        %v5403 = vsel %vm3330, %v5387, 0
        %5405 = vmatprep.subr.mxu0 0.0
        %5406 = vmatpush1.msra.mxu0 %v5388
        %5407 = vmatprep.subr.mxu0 0.0
        %5408 = vmatpush1.msra.mxu0 %v5389
        %5409 = vmatprep.subr.mxu0 0.0
        %5410 = vmatpush1.msra.mxu0 %v5390
        %5411 = vmatprep.subr.mxu0 0.0
        %5412 = vmatpush1.msra.mxu0 %v5391
        %5413 = vmatprep.subr.mxu0 0.0
        %5414 = vmatpush1.msra.mxu0 0.0
        %5415 = vmatprep.subr.mxu0 0.0
        %5416 = vmatpush1.msra.mxu0 0.0
        %5417 = vmatprep.subr.mxu0 0.0
        %5418 = vmatpush1.msra.mxu0 0.0
        %5419 = vmatprep.subr.mxu0 0.0
        %5420 = vmatpush1.msra.mxu0 0.0
        %5421 = vmatprep.subr.mxu0 0.0
        %5422 = vmatpush1.msra.mxu0 0.0
        %5423 = vmatprep.subr.mxu0 0.0
        %5424 = vmatpush1.msra.mxu0 0.0
        %5425 = vmatprep.subr.mxu0 0.0
        %5426 = vmatpush1.msra.mxu0 0.0
        %5427 = vmatprep.subr.mxu0 0.0
        %5428 = vmatpush1.msra.mxu0 0.0
        %5429 = vmatprep.subr.mxu0 0.0
        %5430 = vmatpush1.msra.mxu0 0.0
        %5431 = vmatprep.subr.mxu0 0.0
        %5432 = vmatpush1.msra.mxu0 0.0
        %5433 = vmatprep.subr.mxu0 0.0
        %5434 = vmatpush1.msra.mxu0 0.0
        %5435 = vmatprep.subr.mxu0 0.0
        %5436 = vmatpush1.msra.mxu0 0.0
        %5437 = vmatprep.subr.mxu0 0.0
        %5438 = vmatpush1.msra.mxu0 0.0
        %5439 = vmatprep.subr.mxu0 0.0
        %5440 = vmatpush1.msra.mxu0 0.0
        %5441 = vmatprep.subr.mxu0 0.0
        %5442 = vmatpush1.msra.mxu0 0.0
        %5443 = vmatprep.subr.mxu0 0.0
        %5444 = vmatpush1.msra.mxu0 0.0
        %5445 = vmatprep.subr.mxu0 0.0
        %5446 = vmatpush1.msra.mxu0 0.0
        %5447 = vmatprep.subr.mxu0 0.0
        %5448 = vmatpush1.msra.mxu0 0.0
        %5449 = vmatprep.subr.mxu0 0.0
        %5450 = vmatpush1.msra.mxu0 0.0
        %5451 = vmatprep.subr.mxu0 0.0
        %5452 = vmatpush1.msra.mxu0 0.0
        %5453 = vmatprep.subr.mxu0 0.0
        %5454 = vmatpush1.msra.mxu0 0.0
        %5455 = vmatprep.subr.mxu0 0.0
        %5456 = vmatpush1.msra.mxu0 0.0
        %5457 = vmatprep.subr.mxu0 0.0
        %5458 = vmatpush1.msra.mxu0 0.0
        %5459 = vmatprep.subr.mxu0 0.0
        %5460 = vmatpush1.msra.mxu0 0.0
        %5461 = vmatprep.subr.mxu0 0.0
        %5462 = vmatpush1.msra.mxu0 0.0
        %5463 = vmatprep.subr.mxu0 0.0
        %5464 = vmatpush1.msra.mxu0 0.0
        %5465 = vmatprep.subr.mxu0 0.0
        %5466 = vmatpush1.msra.mxu0 0.0
        %5467 = vmatprep.subr.mxu0 0.0
        %5468 = vmatpush1.msra.mxu0 0.0
        %5469 = vmatprep.mubr.f32.mxu0 0.0
        %5470 = vmatmul.mubr.f32.gmra.mrb[0].mxu0 %v5400
        %v5471 = vpop.f32.mrb[0].mxu0
        %v5472 = vadd.f32 %v5397, %v5471
        %v5473 = vpop.f32.mrb[0].mxu0
        %5474 = vmatprep.mubr.f32.mxu0 0.0
        %5475 = vmatmul.mubr.f32.gmra.mrb[0].mxu0 %v5403
        %v5476 = vpop.f32.mrb[0].mxu0
        %v5477 = vadd.f32 %v5397, %v5476
        %v5478 = vpop.f32.mrb[0].mxu0
        %5479 = vdwg.mxu0
        %v5480 = vadd.f32 %v4413, %v5472
        %v5481 = vadd.f32 %v4414, %v5477
        %v5482 = vld [vmem:[%s16] sm:$0x1]
        %v5483 = vld [vmem:[%s17] sm:$0x1]
        %v5484 = vsel %vm3330, %v5480, 0.0
        %5485 = vadd.xlane.f32.xlu0 %v5484
        %v5486 = vpop.xlane.xlu0 %5485
        %v5487 = vsel %vm3330, %v5481, 0.0
        %5488 = vadd.xlane.f32.xlu0 %v5487
        %v5489 = vpop.xlane.xlu0 %5488
        %v5490 = vmul.f32 %v5486, %v4423
        %v5491 = vmul.f32 %v5489, %v4423
        %v5492 = vsub.f32 %v5480, %v5490
        %v5493 = vsub.f32 %v5481, %v5491
        %v5494 = vmul.f32 %v5492, %v5492
        %v5495 = vmul.f32 %v5493, %v5493
        %v5496 = vsel %vm3330, %v5494, 0.0
        %5497 = vadd.xlane.f32.xlu0 %v5496
        %v5498 = vpop.xlane.xlu0 %5497
        %v5499 = vsel %vm3330, %v5495, 0.0
        %5500 = vadd.xlane.f32.xlu0 %v5499
        %v5501 = vpop.xlane.xlu0 %5500
        %v5502 = vmul.f32 %v5498, %v4423
        %v5503 = vmul.f32 %v5501, %v4423
        %v5504 = vadd.f32 %v5502, 1e-05
        %v5505 = vadd.f32 %v5503, 1e-05
        %v5506 = vrsqrt.pop %v5504
        %v5507 = vrsqrt.pop %v5505
        %v5508 = vmul.f32 %v5492, %v5506
        %v5509 = vmul.f32 %v5493, %v5507
        %v5511 = vlaneseq
        %v5512 = vshrl.u32 %v5511, 7
        %v5513 = vsub.s32 0, %v5512
        %v5514 = vrot.slane %v5482, %v5513
        %v5516 = vmul.f32 %v5508, %v5514
        %v5517 = vmul.f32 %v5509, %v5514
        %v5519 = vlaneseq
        %v5520 = vshrl.u32 %v5519, 7
        %v5521 = vsub.s32 0, %v5520
        %v5522 = vrot.slane %v5483, %v5521
        %v5524 = vadd.f32 %v5516, %v5522
        %v5525 = vadd.f32 %v5517, %v5522
        %v5526 = vld [vmem:[%s18] sm:$0xff]
        %v5527 = vld [vmem:[%s18 + $0x8] sm:$0xff]
        %v5528 = vld [vmem:[%s18 + $0x10] sm:$0xff]
        %v5529 = vld [vmem:[%s18 + $0x18] sm:$0xff]
        %v5530 = vld [vmem:[%s19] sm:$0x1]
        %v5532 = vlaneseq
        %v5533 = vshrl.u32 %v5532, 7
        %v5534 = vsub.s32 0, %v5533
        %v5535 = vrot.slane %v5530, %v5534
        %v5538 = vsel %vm3330, %v5524, 0
        %v5541 = vsel %vm3330, %v5525, 0
        %5543 = vmatprep.subr.mxu0 0.0
        %5544 = vmatpush1.msra.mxu0 %v5526
        %5545 = vmatprep.subr.mxu0 0.0
        %5546 = vmatpush1.msra.mxu0 %v5527
        %5547 = vmatprep.subr.mxu0 0.0
        %5548 = vmatpush1.msra.mxu0 %v5528
        %5549 = vmatprep.subr.mxu0 0.0
        %5550 = vmatpush1.msra.mxu0 %v5529
        %5551 = vmatprep.subr.mxu0 0.0
        %5552 = vmatpush1.msra.mxu0 0.0
        %5553 = vmatprep.subr.mxu0 0.0
        %5554 = vmatpush1.msra.mxu0 0.0
        %5555 = vmatprep.subr.mxu0 0.0
        %5556 = vmatpush1.msra.mxu0 0.0
        %5557 = vmatprep.subr.mxu0 0.0
        %5558 = vmatpush1.msra.mxu0 0.0
        %5559 = vmatprep.subr.mxu0 0.0
        %5560 = vmatpush1.msra.mxu0 0.0
        %5561 = vmatprep.subr.mxu0 0.0
        %5562 = vmatpush1.msra.mxu0 0.0
        %5563 = vmatprep.subr.mxu0 0.0
        %5564 = vmatpush1.msra.mxu0 0.0
        %5565 = vmatprep.subr.mxu0 0.0
        %5566 = vmatpush1.msra.mxu0 0.0
        %5567 = vmatprep.subr.mxu0 0.0
        %5568 = vmatpush1.msra.mxu0 0.0
        %5569 = vmatprep.subr.mxu0 0.0
        %5570 = vmatpush1.msra.mxu0 0.0
        %5571 = vmatprep.subr.mxu0 0.0
        %5572 = vmatpush1.msra.mxu0 0.0
        %5573 = vmatprep.subr.mxu0 0.0
        %5574 = vmatpush1.msra.mxu0 0.0
        %5575 = vmatprep.subr.mxu0 0.0
        %5576 = vmatpush1.msra.mxu0 0.0
        %5577 = vmatprep.subr.mxu0 0.0
        %5578 = vmatpush1.msra.mxu0 0.0
        %5579 = vmatprep.subr.mxu0 0.0
        %5580 = vmatpush1.msra.mxu0 0.0
        %5581 = vmatprep.subr.mxu0 0.0
        %5582 = vmatpush1.msra.mxu0 0.0
        %5583 = vmatprep.subr.mxu0 0.0
        %5584 = vmatpush1.msra.mxu0 0.0
        %5585 = vmatprep.subr.mxu0 0.0
        %5586 = vmatpush1.msra.mxu0 0.0
        %5587 = vmatprep.subr.mxu0 0.0
        %5588 = vmatpush1.msra.mxu0 0.0
        %5589 = vmatprep.subr.mxu0 0.0
        %5590 = vmatpush1.msra.mxu0 0.0
        %5591 = vmatprep.subr.mxu0 0.0
        %5592 = vmatpush1.msra.mxu0 0.0
        %5593 = vmatprep.subr.mxu0 0.0
        %5594 = vmatpush1.msra.mxu0 0.0
        %5595 = vmatprep.subr.mxu0 0.0
        %5596 = vmatpush1.msra.mxu0 0.0
        %5597 = vmatprep.subr.mxu0 0.0
        %5598 = vmatpush1.msra.mxu0 0.0
        %5599 = vmatprep.subr.mxu0 0.0
        %5600 = vmatpush1.msra.mxu0 0.0
        %5601 = vmatprep.subr.mxu0 0.0
        %5602 = vmatpush1.msra.mxu0 0.0
        %5603 = vmatprep.subr.mxu0 0.0
        %5604 = vmatpush1.msra.mxu0 0.0
        %5605 = vmatprep.subr.mxu0 0.0
        %5606 = vmatpush1.msra.mxu0 0.0
        %5607 = vmatprep.mubr.f32.mxu0 0.0
        %5608 = vmatmul.mubr.f32.gmra.mrb[0].mxu0 %v5538
        %v5609 = vpop.f32.mrb[0].mxu0
        %v5610 = vadd.f32 %v5535, %v5609
        %v5611 = vpop.f32.mrb[0].mxu0
        %5612 = vmatprep.mubr.f32.mxu0 0.0
        %5613 = vmatmul.mubr.f32.gmra.mrb[0].mxu0 %v5541
        %v5614 = vpop.f32.mrb[0].mxu0
        %v5615 = vadd.f32 %v5535, %v5614
        %v5616 = vpop.f32.mrb[0].mxu0
        %5617 = vdwg.mxu0
        %v5618 = vmul.f32 %v5610, %v5610
        %v5619 = vmul.f32 %v5615, %v5615
        %v5620 = vmul.f32 %v5610, %v5618
        %v5621 = vmul.f32 %v5615, %v5619
        %v5622 = vmul.f32 %v5620, 0.044715
        %v5623 = vmul.f32 %v5621, 0.044715
        %v5624 = vadd.f32 %v5610, %v5622
        %v5625 = vadd.f32 %v5615, %v5623
        %v5626 = vmul.f32 %v5624, 0.7978846
        %v5627 = vmul.f32 %v5625, 0.7978846
        %v5628 = vtanh.pop %v5626
        %v5629 = vtanh.pop %v5627
        %v5630 = vadd.f32 %v5628, 1.0
        %v5631 = vadd.f32 %v5629, 1.0
        %v5632 = vmul.f32 %v5630, 0.5
        %v5633 = vmul.f32 %v5631, 0.5
        %v5634 = vmul.f32 %v5610, %v5632
        %v5635 = vmul.f32 %v5615, %v5633
        %v5636 = vld [vmem:[%s20] sm:$0xff]
        %v5637 = vld [vmem:[%s20 + $0x8] sm:$0xff]
        %v5638 = vld [vmem:[%s20 + $0x10] sm:$0xff]
        %v5639 = vld [vmem:[%s20 + $0x18] sm:$0xff]
        %v5640 = vld [vmem:[%s20 + $0x20] sm:$0xff]
        %v5641 = vld [vmem:[%s20 + $0x28] sm:$0xff]
        %v5642 = vld [vmem:[%s20 + $0x30] sm:$0xff]
        %v5643 = vld [vmem:[%s20 + $0x38] sm:$0xff]
        %v5644 = vld [vmem:[%s21] sm:$0x1]
        %v5646 = vlaneseq
        %v5647 = vshrl.u32 %v5646, 7
        %v5648 = vsub.s32 0, %v5647
        %v5649 = vrot.slane %v5644, %v5648
        %v5652 = vsel %vm3462, %v5634, 0
        %v5655 = vsel %vm3462, %v5635, 0
        %5657 = vmatprep.subr.mxu0 0.0
        %5658 = vmatpush1.msra.mxu0 %v5636
        %5659 = vmatprep.subr.mxu0 0.0
        %5660 = vmatpush1.msra.mxu0 %v5637
        %5661 = vmatprep.subr.mxu0 0.0
        %5662 = vmatpush1.msra.mxu0 %v5638
        %5663 = vmatprep.subr.mxu0 0.0
        %5664 = vmatpush1.msra.mxu0 %v5639
        %5665 = vmatprep.subr.mxu0 0.0
        %5666 = vmatpush1.msra.mxu0 %v5640
        %5667 = vmatprep.subr.mxu0 0.0
        %5668 = vmatpush1.msra.mxu0 %v5641
        %5669 = vmatprep.subr.mxu0 0.0
        %5670 = vmatpush1.msra.mxu0 %v5642
        %5671 = vmatprep.subr.mxu0 0.0
        %5672 = vmatpush1.msra.mxu0 %v5643
        %5673 = vmatprep.subr.mxu0 0.0
        %5674 = vmatpush1.msra.mxu0 0.0
        %5675 = vmatprep.subr.mxu0 0.0
        %5676 = vmatpush1.msra.mxu0 0.0
        %5677 = vmatprep.subr.mxu0 0.0
        %5678 = vmatpush1.msra.mxu0 0.0
        %5679 = vmatprep.subr.mxu0 0.0
        %5680 = vmatpush1.msra.mxu0 0.0
        %5681 = vmatprep.subr.mxu0 0.0
        %5682 = vmatpush1.msra.mxu0 0.0
        %5683 = vmatprep.subr.mxu0 0.0
        %5684 = vmatpush1.msra.mxu0 0.0
        %5685 = vmatprep.subr.mxu0 0.0
        %5686 = vmatpush1.msra.mxu0 0.0
        %5687 = vmatprep.subr.mxu0 0.0
        %5688 = vmatpush1.msra.mxu0 0.0
        %5689 = vmatprep.subr.mxu0 0.0
        %5690 = vmatpush1.msra.mxu0 0.0
        %5691 = vmatprep.subr.mxu0 0.0
        %5692 = vmatpush1.msra.mxu0 0.0
        %5693 = vmatprep.subr.mxu0 0.0
        %5694 = vmatpush1.msra.mxu0 0.0
        %5695 = vmatprep.subr.mxu0 0.0
        %5696 = vmatpush1.msra.mxu0 0.0
        %5697 = vmatprep.subr.mxu0 0.0
        %5698 = vmatpush1.msra.mxu0 0.0
        %5699 = vmatprep.subr.mxu0 0.0
        %5700 = vmatpush1.msra.mxu0 0.0
        %5701 = vmatprep.subr.mxu0 0.0
        %5702 = vmatpush1.msra.mxu0 0.0
        %5703 = vmatprep.subr.mxu0 0.0
        %5704 = vmatpush1.msra.mxu0 0.0
        %5705 = vmatprep.subr.mxu0 0.0
        %5706 = vmatpush1.msra.mxu0 0.0
        %5707 = vmatprep.subr.mxu0 0.0
        %5708 = vmatpush1.msra.mxu0 0.0
        %5709 = vmatprep.subr.mxu0 0.0
        %5710 = vmatpush1.msra.mxu0 0.0
        %5711 = vmatprep.subr.mxu0 0.0
        %5712 = vmatpush1.msra.mxu0 0.0
        %5713 = vmatprep.subr.mxu0 0.0
        %5714 = vmatpush1.msra.mxu0 0.0
        %5715 = vmatprep.subr.mxu0 0.0
        %5716 = vmatpush1.msra.mxu0 0.0
        %5717 = vmatprep.subr.mxu0 0.0
        %5718 = vmatpush1.msra.mxu0 0.0
        %5719 = vmatprep.subr.mxu0 0.0
        %5720 = vmatpush1.msra.mxu0 0.0
        %5721 = vmatprep.mubr.f32.mxu0 0.0
        %5722 = vmatmul.mubr.f32.gmra.mrb[0].mxu0 %v5652
        %v5723 = vpop.f32.mrb[0].mxu0
        %v5724 = vadd.f32 %v5649, %v5723
        %v5725 = vpop.f32.mrb[0].mxu0
        %5726 = vmatprep.mubr.f32.mxu0 0.0
        %5727 = vmatmul.mubr.f32.gmra.mrb[0].mxu0 %v5655
        %v5728 = vpop.f32.mrb[0].mxu0
        %v5729 = vadd.f32 %v5649, %v5728
        %v5730 = vpop.f32.mrb[0].mxu0
        %5731 = vdwg.mxu0
        %v5732 = vadd.f32 %v5480, %v5724
        %v5733 = vadd.f32 %v5481, %v5729
        %s5734 = scalar_lea.vmem %s10, 1
        %v5735 = vld [vmem:[%s5734] sm:$0x1]
        %s5736 = scalar_lea.vmem %s11, 1
        %v5737 = vld [vmem:[%s5736] sm:$0x1]
        %v5738 = vsel %vm3330, %v5732, 0.0
        %5739 = vadd.xlane.f32.xlu0 %v5738
        %v5740 = vpop.xlane.xlu0 %5739
        %v5741 = vsel %vm3330, %v5733, 0.0
        %5742 = vadd.xlane.f32.xlu0 %v5741
        %v5743 = vpop.xlane.xlu0 %5742
        %v5744 = vmul.f32 %v5740, %v4423
        %v5745 = vmul.f32 %v5743, %v4423
        %v5746 = vsub.f32 %v5732, %v5744
        %v5747 = vsub.f32 %v5733, %v5745
        %v5748 = vmul.f32 %v5746, %v5746
        %v5749 = vmul.f32 %v5747, %v5747
        %v5750 = vsel %vm3330, %v5748, 0.0
        %5751 = vadd.xlane.f32.xlu0 %v5750
        %v5752 = vpop.xlane.xlu0 %5751
        %v5753 = vsel %vm3330, %v5749, 0.0
        %5754 = vadd.xlane.f32.xlu0 %v5753
        %v5755 = vpop.xlane.xlu0 %5754
        %v5756 = vmul.f32 %v5752, %v4423
        %v5757 = vmul.f32 %v5755, %v4423
        %v5758 = vadd.f32 %v5756, 1e-05
        %v5759 = vadd.f32 %v5757, 1e-05
        %v5760 = vrsqrt.pop %v5758
        %v5761 = vrsqrt.pop %v5759
        %v5762 = vmul.f32 %v5746, %v5760
        %v5763 = vmul.f32 %v5747, %v5761
        %v5765 = vlaneseq
        %v5766 = vshrl.u32 %v5765, 7
        %v5767 = vsub.s32 0, %v5766
        %v5768 = vrot.slane %v5735, %v5767
        %v5770 = vmul.f32 %v5762, %v5768
        %v5771 = vmul.f32 %v5763, %v5768
        %v5773 = vlaneseq
        %v5774 = vshrl.u32 %v5773, 7
        %v5775 = vsub.s32 0, %v5774
        %v5776 = vrot.slane %v5737, %v5775
        %v5778 = vadd.f32 %v5770, %v5776
        %v5779 = vadd.f32 %v5771, %v5776
        %s5780 = scalar_lea.vmem %s12, 32
        %v5781 = vld [vmem:[%s5780] sm:$0xff]
        %v5782 = vld [vmem:[%s5780 + $0x8] sm:$0xff]
        %v5783 = vld [vmem:[%s5780 + $0x10] sm:$0xff]
        %v5784 = vld [vmem:[%s5780 + $0x18] sm:$0xff]
        %s5785 = scalar_lea.vmem [#allocation4], 1
        %v5786 = vld [vmem:[%s5785] sm:$0x1]
        %v5788 = vlaneseq
        %v5789 = vshrl.u32 %v5788, 7
        %v5790 = vsub.s32 0, %v5789
        %v5791 = vrot.slane %v5786, %v5790
        %v5794 = vsel %vm3330, %v5778, 0
        %v5797 = vsel %vm3330, %v5779, 0
        %5799 = vmatprep.subr.mxu0 0.0
        %5800 = vmatpush1.msra.mxu0 %v5781
        %5801 = vmatprep.subr.mxu0 0.0
        %5802 = vmatpush1.msra.mxu0 %v5782
        %5803 = vmatprep.subr.mxu0 0.0
        %5804 = vmatpush1.msra.mxu0 %v5783
        %5805 = vmatprep.subr.mxu0 0.0
        %5806 = vmatpush1.msra.mxu0 %v5784
        %5807 = vmatprep.subr.mxu0 0.0
        %5808 = vmatpush1.msra.mxu0 0.0
        %5809 = vmatprep.subr.mxu0 0.0
        %5810 = vmatpush1.msra.mxu0 0.0
        %5811 = vmatprep.subr.mxu0 0.0
        %5812 = vmatpush1.msra.mxu0 0.0
        %5813 = vmatprep.subr.mxu0 0.0
        %5814 = vmatpush1.msra.mxu0 0.0
        %5815 = vmatprep.subr.mxu0 0.0
        %5816 = vmatpush1.msra.mxu0 0.0
        %5817 = vmatprep.subr.mxu0 0.0
        %5818 = vmatpush1.msra.mxu0 0.0
        %5819 = vmatprep.subr.mxu0 0.0
        %5820 = vmatpush1.msra.mxu0 0.0
        %5821 = vmatprep.subr.mxu0 0.0
        %5822 = vmatpush1.msra.mxu0 0.0
        %5823 = vmatprep.subr.mxu0 0.0
        %5824 = vmatpush1.msra.mxu0 0.0
        %5825 = vmatprep.subr.mxu0 0.0
        %5826 = vmatpush1.msra.mxu0 0.0
        %5827 = vmatprep.subr.mxu0 0.0
        %5828 = vmatpush1.msra.mxu0 0.0
        %5829 = vmatprep.subr.mxu0 0.0
        %5830 = vmatpush1.msra.mxu0 0.0
        %5831 = vmatprep.subr.mxu0 0.0
        %5832 = vmatpush1.msra.mxu0 0.0
        %5833 = vmatprep.subr.mxu0 0.0
        %5834 = vmatpush1.msra.mxu0 0.0
        %5835 = vmatprep.subr.mxu0 0.0
        %5836 = vmatpush1.msra.mxu0 0.0
        %5837 = vmatprep.subr.mxu0 0.0
        %5838 = vmatpush1.msra.mxu0 0.0
        %5839 = vmatprep.subr.mxu0 0.0
        %5840 = vmatpush1.msra.mxu0 0.0
        %5841 = vmatprep.subr.mxu0 0.0
        %5842 = vmatpush1.msra.mxu0 0.0
        %5843 = vmatprep.subr.mxu0 0.0
        %5844 = vmatpush1.msra.mxu0 0.0
        %5845 = vmatprep.subr.mxu0 0.0
        %5846 = vmatpush1.msra.mxu0 0.0
        %5847 = vmatprep.subr.mxu0 0.0
        %5848 = vmatpush1.msra.mxu0 0.0
        %5849 = vmatprep.subr.mxu0 0.0
        %5850 = vmatpush1.msra.mxu0 0.0
        %5851 = vmatprep.subr.mxu0 0.0
        %5852 = vmatpush1.msra.mxu0 0.0
        %5853 = vmatprep.subr.mxu0 0.0
        %5854 = vmatpush1.msra.mxu0 0.0
        %5855 = vmatprep.subr.mxu0 0.0
        %5856 = vmatpush1.msra.mxu0 0.0
        %5857 = vmatprep.subr.mxu0 0.0
        %5858 = vmatpush1.msra.mxu0 0.0
        %5859 = vmatprep.subr.mxu0 0.0
        %5860 = vmatpush1.msra.mxu0 0.0
        %5861 = vmatprep.subr.mxu0 0.0
        %5862 = vmatpush1.msra.mxu0 0.0
        %5863 = vmatprep.mubr.f32.mxu0 0.0
        %5864 = vmatmul.mubr.f32.gmra.mrb[0].mxu0 %v5794
        %v5865 = vpop.f32.mrb[0].mxu0
        %v5866 = vadd.f32 %v5791, %v5865
        %v5867 = vpop.f32.mrb[0].mxu0
        %5868 = vmatprep.mubr.f32.mxu0 0.0
        %5869 = vmatmul.mubr.f32.gmra.mrb[0].mxu0 %v5797
        %v5870 = vpop.f32.mrb[0].mxu0
        %v5871 = vadd.f32 %v5791, %v5870
        %v5872 = vpop.f32.mrb[0].mxu0
        %5873 = vdwg.mxu0
        %5876 = vrot.lane.b32.xlu0 %v5866, 96
        %v5877 = vpop.permute.xlu0 %5876
        %5878 = vrot.lane.b32.xlu0 %v5871, 96
        %v5879 = vpop.permute.xlu0 %5878
        %v5880 = vsel %vm874, %v5866, 0
        %v5882 = vsel %vm874, %v5871, 0
        %v5884 = vsel %vm874, %v5877, 0
        %v5886 = vsel %vm874, %v5879, 0
        %5888 = vmatprep.subr.mxu0 0.0
        %5889 = vmatpush1.xpose.msra.mxu0 %v5884
        %5890 = vmatprep.subr.mxu0 0.0
        %5891 = vmatpush1.xpose.msra.mxu0 %v5886
        %5892 = vmatprep.subr.mxu0 0.0
        %5893 = vmatpush1.xpose.msra.mxu0 0.0
        %5894 = vmatprep.subr.mxu0 0.0
        %5895 = vmatpush1.xpose.msra.mxu0 0.0
        %5896 = vmatprep.subr.mxu0 0.0
        %5897 = vmatpush1.xpose.msra.mxu0 0.0
        %5898 = vmatprep.subr.mxu0 0.0
        %5899 = vmatpush1.xpose.msra.mxu0 0.0
        %5900 = vmatprep.subr.mxu0 0.0
        %5901 = vmatpush1.xpose.msra.mxu0 0.0
        %5902 = vmatprep.subr.mxu0 0.0
        %5903 = vmatpush1.xpose.msra.mxu0 0.0
        %5904 = vmatprep.subr.mxu0 0.0
        %5905 = vmatpush1.xpose.msra.mxu0 0.0
        %5906 = vmatprep.subr.mxu0 0.0
        %5907 = vmatpush1.xpose.msra.mxu0 0.0
        %5908 = vmatprep.subr.mxu0 0.0
        %5909 = vmatpush1.xpose.msra.mxu0 0.0
        %5910 = vmatprep.subr.mxu0 0.0
        %5911 = vmatpush1.xpose.msra.mxu0 0.0
        %5912 = vmatprep.subr.mxu0 0.0
        %5913 = vmatpush1.xpose.msra.mxu0 0.0
        %5914 = vmatprep.subr.mxu0 0.0
        %5915 = vmatpush1.xpose.msra.mxu0 0.0
        %5916 = vmatprep.subr.mxu0 0.0
        %5917 = vmatpush1.xpose.msra.mxu0 0.0
        %5918 = vmatprep.subr.mxu0 0.0
        %5919 = vmatpush1.xpose.msra.mxu0 0.0
        %5920 = vmatprep.subr.mxu0 0.0
        %5921 = vmatpush1.xpose.msra.mxu0 0.0
        %5922 = vmatprep.subr.mxu0 0.0
        %5923 = vmatpush1.xpose.msra.mxu0 0.0
        %5924 = vmatprep.subr.mxu0 0.0
        %5925 = vmatpush1.xpose.msra.mxu0 0.0
        %5926 = vmatprep.subr.mxu0 0.0
        %5927 = vmatpush1.xpose.msra.mxu0 0.0
        %5928 = vmatprep.subr.mxu0 0.0
        %5929 = vmatpush1.xpose.msra.mxu0 0.0
        %5930 = vmatprep.subr.mxu0 0.0
        %5931 = vmatpush1.xpose.msra.mxu0 0.0
        %5932 = vmatprep.subr.mxu0 0.0
        %5933 = vmatpush1.xpose.msra.mxu0 0.0
        %5934 = vmatprep.subr.mxu0 0.0
        %5935 = vmatpush1.xpose.msra.mxu0 0.0
        %5936 = vmatprep.subr.mxu0 0.0
        %5937 = vmatpush1.xpose.msra.mxu0 0.0
        %5938 = vmatprep.subr.mxu0 0.0
        %5939 = vmatpush1.xpose.msra.mxu0 0.0
        %5940 = vmatprep.subr.mxu0 0.0
        %5941 = vmatpush1.xpose.msra.mxu0 0.0
        %5942 = vmatprep.subr.mxu0 0.0
        %5943 = vmatpush1.xpose.msra.mxu0 0.0
        %5944 = vmatprep.subr.mxu0 0.0
        %5945 = vmatpush1.xpose.msra.mxu0 0.0
        %5946 = vmatprep.subr.mxu0 0.0
        %5947 = vmatpush1.xpose.msra.mxu0 0.0
        %5948 = vmatprep.subr.mxu0 0.0
        %5949 = vmatpush1.xpose.msra.mxu0 0.0
        %5950 = vmatprep.subr.mxu0 0.0
        %5951 = vmatpush1.xpose.msra.mxu0 0.0
        %5952 = vmatprep.mubr.f32.mxu0 0.0
        %5953 = vmatmul.mubr.f32.gmra.mrb[0].mxu0 %v5880
        %v5954 = vpop.f32.mrb[0].mxu0
        %v5955 = vadd.f32 0.0, %v5954
        %v5956 = vpop.f32.mrb[0].mxu0
        %5957 = vmatprep.mubr.f32.mxu0 0.0
        %5958 = vmatmul.mubr.f32.gmra.mrb[0].mxu0 %v5882
        %v5959 = vpop.f32.mrb[0].mxu0
        %v5960 = vadd.f32 0.0, %v5959
        %v5961 = vpop.f32.mrb[0].mxu0
        %5962 = vdwg.mxu0
        %v5963 = vmul.f32 %v5955, 0.35355338
        %v5964 = vmul.f32 %v5960, 0.35355338
        %v5965 = vsel %vm3264, %v5963, -inf
        %5966 = vmax.xlane.f32.xlu0 %v5965
        %v5967 = vpop.xlane.xlu0 %5966
        %v5968 = vsel %vm3264, %v5964, -inf
        %5969 = vmax.xlane.f32.xlu0 %v5968
        %v5970 = vpop.xlane.xlu0 %5969
        %v5971 = vsub.f32 %v5963, %v5967
        %v5972 = vsub.f32 %v5964, %v5970
        %v5973 = vmul.f32 %v5971, 1.442695
        %v5974 = vpow.pop %v5973
        %v5975 = vmul.f32 %v5972, 1.442695
        %v5976 = vpow.pop %v5975
        %v5977 = vsel %vm3264, %v5974, 0.0
        %5978 = vadd.xlane.f32.xlu0 %v5977
        %v5979 = vpop.xlane.xlu0 %5978
        %v5980 = vsel %vm3264, %v5976, 0.0
        %5981 = vadd.xlane.f32.xlu0 %v5980
        %v5982 = vpop.xlane.xlu0 %5981
        %v5983 = vrcp.pop %v5979
        %v5984 = vrcp.pop %v5982
        %v5985 = vmul.f32 %v5974, %v5983
        %v5986 = vmul.f32 %v5976, %v5984
        %5987 = vrot.lane.b32.xlu0 %v5866, 64
        %v5988 = vpop.permute.xlu0 %5987
        %5989 = vrot.lane.b32.xlu0 %v5871, 64
        %v5990 = vpop.permute.xlu0 %5989
        %v5994 = vsel %vm3264, %v5985, 0
        %v5997 = vsel %vm3264, %v5986, 0
        %5999 = vmatprep.subr.mxu0 0.0
        %6000 = vmatpush1.msra.mxu0 %v5988
        %6001 = vmatprep.subr.mxu0 0.0
        %6002 = vmatpush1.msra.mxu0 %v5990
        %6003 = vmatprep.subr.mxu0 0.0
        %6004 = vmatpush1.msra.mxu0 0.0
        %6005 = vmatprep.subr.mxu0 0.0
        %6006 = vmatpush1.msra.mxu0 0.0
        %6007 = vmatprep.subr.mxu0 0.0
        %6008 = vmatpush1.msra.mxu0 0.0
        %6009 = vmatprep.subr.mxu0 0.0
        %6010 = vmatpush1.msra.mxu0 0.0
        %6011 = vmatprep.subr.mxu0 0.0
        %6012 = vmatpush1.msra.mxu0 0.0
        %6013 = vmatprep.subr.mxu0 0.0
        %6014 = vmatpush1.msra.mxu0 0.0
        %6015 = vmatprep.subr.mxu0 0.0
        %6016 = vmatpush1.msra.mxu0 0.0
        %6017 = vmatprep.subr.mxu0 0.0
        %6018 = vmatpush1.msra.mxu0 0.0
        %6019 = vmatprep.subr.mxu0 0.0
        %6020 = vmatpush1.msra.mxu0 0.0
        %6021 = vmatprep.subr.mxu0 0.0
        %6022 = vmatpush1.msra.mxu0 0.0
        %6023 = vmatprep.subr.mxu0 0.0
        %6024 = vmatpush1.msra.mxu0 0.0
        %6025 = vmatprep.subr.mxu0 0.0
        %6026 = vmatpush1.msra.mxu0 0.0
        %6027 = vmatprep.subr.mxu0 0.0
        %6028 = vmatpush1.msra.mxu0 0.0
        %6029 = vmatprep.subr.mxu0 0.0
        %6030 = vmatpush1.msra.mxu0 0.0
        %6031 = vmatprep.subr.mxu0 0.0
        %6032 = vmatpush1.msra.mxu0 0.0
        %6033 = vmatprep.subr.mxu0 0.0
        %6034 = vmatpush1.msra.mxu0 0.0
        %6035 = vmatprep.subr.mxu0 0.0
        %6036 = vmatpush1.msra.mxu0 0.0
        %6037 = vmatprep.subr.mxu0 0.0
        %6038 = vmatpush1.msra.mxu0 0.0
        %6039 = vmatprep.subr.mxu0 0.0
        %6040 = vmatpush1.msra.mxu0 0.0
        %6041 = vmatprep.subr.mxu0 0.0
        %6042 = vmatpush1.msra.mxu0 0.0
        %6043 = vmatprep.subr.mxu0 0.0
        %6044 = vmatpush1.msra.mxu0 0.0
        %6045 = vmatprep.subr.mxu0 0.0
        %6046 = vmatpush1.msra.mxu0 0.0
        %6047 = vmatprep.subr.mxu0 0.0
        %6048 = vmatpush1.msra.mxu0 0.0
        %6049 = vmatprep.subr.mxu0 0.0
        %6050 = vmatpush1.msra.mxu0 0.0
        %6051 = vmatprep.subr.mxu0 0.0
        %6052 = vmatpush1.msra.mxu0 0.0
        %6053 = vmatprep.subr.mxu0 0.0
        %6054 = vmatpush1.msra.mxu0 0.0
        %6055 = vmatprep.subr.mxu0 0.0
        %6056 = vmatpush1.msra.mxu0 0.0
        %6057 = vmatprep.subr.mxu0 0.0
        %6058 = vmatpush1.msra.mxu0 0.0
        %6059 = vmatprep.subr.mxu0 0.0
        %6060 = vmatpush1.msra.mxu0 0.0
        %6061 = vmatprep.subr.mxu0 0.0
        %6062 = vmatpush1.msra.mxu0 0.0
        %6063 = vmatprep.mubr.f32.mxu0 0.0
        %6064 = vmatmul.mubr.f32.gmra.mrb[0].mxu0 %v5994
        %v6065 = vpop.f32.mrb[0].mxu0
        %v6066 = vadd.f32 0.0, %v6065
        %v6067 = vpop.f32.mrb[0].mxu0
        %6068 = vmatprep.mubr.f32.mxu0 0.0
        %6069 = vmatmul.mubr.f32.gmra.mrb[0].mxu0 %v5997
        %v6070 = vpop.f32.mrb[0].mxu0
        %v6071 = vadd.f32 0.0, %v6070
        %v6072 = vpop.f32.mrb[0].mxu0
        %6073 = vdwg.mxu0
        %6074 = vrot.lane.b32.xlu0 %v5866, 120
        %v6075 = vpop.permute.xlu0 %6074
        %6076 = vrot.lane.b32.xlu0 %v5871, 120
        %v6077 = vpop.permute.xlu0 %6076
        %6078 = vrot.lane.b32.xlu0 %v5866, 88
        %v6079 = vpop.permute.xlu0 %6078
        %6080 = vrot.lane.b32.xlu0 %v5871, 88
        %v6081 = vpop.permute.xlu0 %6080
        %v6082 = vsel %vm874, %v6075, 0
        %v6084 = vsel %vm874, %v6077, 0
        %v6086 = vsel %vm874, %v6079, 0
        %v6088 = vsel %vm874, %v6081, 0
        %6090 = vmatprep.subr.mxu0 0.0
        %6091 = vmatpush1.xpose.msra.mxu0 %v6086
        %6092 = vmatprep.subr.mxu0 0.0
        %6093 = vmatpush1.xpose.msra.mxu0 %v6088
        %6094 = vmatprep.subr.mxu0 0.0
        %6095 = vmatpush1.xpose.msra.mxu0 0.0
        %6096 = vmatprep.subr.mxu0 0.0
        %6097 = vmatpush1.xpose.msra.mxu0 0.0
        %6098 = vmatprep.subr.mxu0 0.0
        %6099 = vmatpush1.xpose.msra.mxu0 0.0
        %6100 = vmatprep.subr.mxu0 0.0
        %6101 = vmatpush1.xpose.msra.mxu0 0.0
        %6102 = vmatprep.subr.mxu0 0.0
        %6103 = vmatpush1.xpose.msra.mxu0 0.0
        %6104 = vmatprep.subr.mxu0 0.0
        %6105 = vmatpush1.xpose.msra.mxu0 0.0
        %6106 = vmatprep.subr.mxu0 0.0
        %6107 = vmatpush1.xpose.msra.mxu0 0.0
        %6108 = vmatprep.subr.mxu0 0.0
        %6109 = vmatpush1.xpose.msra.mxu0 0.0
        %6110 = vmatprep.subr.mxu0 0.0
        %6111 = vmatpush1.xpose.msra.mxu0 0.0
        %6112 = vmatprep.subr.mxu0 0.0
        %6113 = vmatpush1.xpose.msra.mxu0 0.0
        %6114 = vmatprep.subr.mxu0 0.0
        %6115 = vmatpush1.xpose.msra.mxu0 0.0
        %6116 = vmatprep.subr.mxu0 0.0
        %6117 = vmatpush1.xpose.msra.mxu0 0.0
        %6118 = vmatprep.subr.mxu0 0.0
        %6119 = vmatpush1.xpose.msra.mxu0 0.0
        %6120 = vmatprep.subr.mxu0 0.0
        %6121 = vmatpush1.xpose.msra.mxu0 0.0
        %6122 = vmatprep.subr.mxu0 0.0
        %6123 = vmatpush1.xpose.msra.mxu0 0.0
        %6124 = vmatprep.subr.mxu0 0.0
        %6125 = vmatpush1.xpose.msra.mxu0 0.0
        %6126 = vmatprep.subr.mxu0 0.0
        %6127 = vmatpush1.xpose.msra.mxu0 0.0
        %6128 = vmatprep.subr.mxu0 0.0
        %6129 = vmatpush1.xpose.msra.mxu0 0.0
        %6130 = vmatprep.subr.mxu0 0.0
        %6131 = vmatpush1.xpose.msra.mxu0 0.0
        %6132 = vmatprep.subr.mxu0 0.0
        %6133 = vmatpush1.xpose.msra.mxu0 0.0
        %6134 = vmatprep.subr.mxu0 0.0
        %6135 = vmatpush1.xpose.msra.mxu0 0.0
        %6136 = vmatprep.subr.mxu0 0.0
        %6137 = vmatpush1.xpose.msra.mxu0 0.0
        %6138 = vmatprep.subr.mxu0 0.0
        %6139 = vmatpush1.xpose.msra.mxu0 0.0
        %6140 = vmatprep.subr.mxu0 0.0
        %6141 = vmatpush1.xpose.msra.mxu0 0.0
        %6142 = vmatprep.subr.mxu0 0.0
        %6143 = vmatpush1.xpose.msra.mxu0 0.0
        %6144 = vmatprep.subr.mxu0 0.0
        %6145 = vmatpush1.xpose.msra.mxu0 0.0
        %6146 = vmatprep.subr.mxu0 0.0
        %6147 = vmatpush1.xpose.msra.mxu0 0.0
        %6148 = vmatprep.subr.mxu0 0.0
        %6149 = vmatpush1.xpose.msra.mxu0 0.0
        %6150 = vmatprep.subr.mxu0 0.0
        %6151 = vmatpush1.xpose.msra.mxu0 0.0
        %6152 = vmatprep.subr.mxu0 0.0
        %6153 = vmatpush1.xpose.msra.mxu0 0.0
        %6154 = vmatprep.mubr.f32.mxu0 0.0
        %6155 = vmatmul.mubr.f32.gmra.mrb[0].mxu0 %v6082
        %v6156 = vpop.f32.mrb[0].mxu0
        %v6157 = vadd.f32 0.0, %v6156
        %v6158 = vpop.f32.mrb[0].mxu0
        %6159 = vmatprep.mubr.f32.mxu0 0.0
        %6160 = vmatmul.mubr.f32.gmra.mrb[0].mxu0 %v6084
        %v6161 = vpop.f32.mrb[0].mxu0
        %v6162 = vadd.f32 0.0, %v6161
        %v6163 = vpop.f32.mrb[0].mxu0
        %6164 = vdwg.mxu0
        %v6165 = vmul.f32 %v6157, 0.35355338
        %v6166 = vmul.f32 %v6162, 0.35355338
        %v6167 = vsel %vm3264, %v6165, -inf
        %6168 = vmax.xlane.f32.xlu0 %v6167
        %v6169 = vpop.xlane.xlu0 %6168
        %v6170 = vsel %vm3264, %v6166, -inf
        %6171 = vmax.xlane.f32.xlu0 %v6170
        %v6172 = vpop.xlane.xlu0 %6171
        %v6173 = vsub.f32 %v6165, %v6169
        %v6174 = vsub.f32 %v6166, %v6172
        %v6175 = vmul.f32 %v6173, 1.442695
        %v6176 = vpow.pop %v6175
        %v6177 = vmul.f32 %v6174, 1.442695
        %v6178 = vpow.pop %v6177
        %v6179 = vsel %vm3264, %v6176, 0.0
        %6180 = vadd.xlane.f32.xlu0 %v6179
        %v6181 = vpop.xlane.xlu0 %6180
        %v6182 = vsel %vm3264, %v6178, 0.0
        %6183 = vadd.xlane.f32.xlu0 %v6182
        %v6184 = vpop.xlane.xlu0 %6183
        %v6185 = vrcp.pop %v6181
        %v6186 = vrcp.pop %v6184
        %v6187 = vmul.f32 %v6176, %v6185
        %v6188 = vmul.f32 %v6178, %v6186
        %6189 = vrot.lane.b32.xlu0 %v5866, 56
        %v6190 = vpop.permute.xlu0 %6189
        %6191 = vrot.lane.b32.xlu0 %v5871, 56
        %v6192 = vpop.permute.xlu0 %6191
        %v6196 = vsel %vm3264, %v6187, 0
        %v6199 = vsel %vm3264, %v6188, 0
        %6201 = vmatprep.subr.mxu0 0.0
        %6202 = vmatpush1.msra.mxu0 %v6190
        %6203 = vmatprep.subr.mxu0 0.0
        %6204 = vmatpush1.msra.mxu0 %v6192
        %6205 = vmatprep.subr.mxu0 0.0
        %6206 = vmatpush1.msra.mxu0 0.0
        %6207 = vmatprep.subr.mxu0 0.0
        %6208 = vmatpush1.msra.mxu0 0.0
        %6209 = vmatprep.subr.mxu0 0.0
        %6210 = vmatpush1.msra.mxu0 0.0
        %6211 = vmatprep.subr.mxu0 0.0
        %6212 = vmatpush1.msra.mxu0 0.0
        %6213 = vmatprep.subr.mxu0 0.0
        %6214 = vmatpush1.msra.mxu0 0.0
        %6215 = vmatprep.subr.mxu0 0.0
        %6216 = vmatpush1.msra.mxu0 0.0
        %6217 = vmatprep.subr.mxu0 0.0
        %6218 = vmatpush1.msra.mxu0 0.0
        %6219 = vmatprep.subr.mxu0 0.0
        %6220 = vmatpush1.msra.mxu0 0.0
        %6221 = vmatprep.subr.mxu0 0.0
        %6222 = vmatpush1.msra.mxu0 0.0
        %6223 = vmatprep.subr.mxu0 0.0
        %6224 = vmatpush1.msra.mxu0 0.0
        %6225 = vmatprep.subr.mxu0 0.0
        %6226 = vmatpush1.msra.mxu0 0.0
        %6227 = vmatprep.subr.mxu0 0.0
        %6228 = vmatpush1.msra.mxu0 0.0
        %6229 = vmatprep.subr.mxu0 0.0
        %6230 = vmatpush1.msra.mxu0 0.0
        %6231 = vmatprep.subr.mxu0 0.0
        %6232 = vmatpush1.msra.mxu0 0.0
        %6233 = vmatprep.subr.mxu0 0.0
        %6234 = vmatpush1.msra.mxu0 0.0
        %6235 = vmatprep.subr.mxu0 0.0
        %6236 = vmatpush1.msra.mxu0 0.0
        %6237 = vmatprep.subr.mxu0 0.0
        %6238 = vmatpush1.msra.mxu0 0.0
        %6239 = vmatprep.subr.mxu0 0.0
        %6240 = vmatpush1.msra.mxu0 0.0
        %6241 = vmatprep.subr.mxu0 0.0
        %6242 = vmatpush1.msra.mxu0 0.0
        %6243 = vmatprep.subr.mxu0 0.0
        %6244 = vmatpush1.msra.mxu0 0.0
        %6245 = vmatprep.subr.mxu0 0.0
        %6246 = vmatpush1.msra.mxu0 0.0
        %6247 = vmatprep.subr.mxu0 0.0
        %6248 = vmatpush1.msra.mxu0 0.0
        %6249 = vmatprep.subr.mxu0 0.0
        %6250 = vmatpush1.msra.mxu0 0.0
        %6251 = vmatprep.subr.mxu0 0.0
        %6252 = vmatpush1.msra.mxu0 0.0
        %6253 = vmatprep.subr.mxu0 0.0
        %6254 = vmatpush1.msra.mxu0 0.0
        %6255 = vmatprep.subr.mxu0 0.0
        %6256 = vmatpush1.msra.mxu0 0.0
        %6257 = vmatprep.subr.mxu0 0.0
        %6258 = vmatpush1.msra.mxu0 0.0
        %6259 = vmatprep.subr.mxu0 0.0
        %6260 = vmatpush1.msra.mxu0 0.0
        %6261 = vmatprep.subr.mxu0 0.0
        %6262 = vmatpush1.msra.mxu0 0.0
        %6263 = vmatprep.subr.mxu0 0.0
        %6264 = vmatpush1.msra.mxu0 0.0
        %6265 = vmatprep.mubr.f32.mxu0 0.0
        %6266 = vmatmul.mubr.f32.gmra.mrb[0].mxu0 %v6196
        %v6267 = vpop.f32.mrb[0].mxu0
        %v6268 = vadd.f32 0.0, %v6267
        %v6269 = vpop.f32.mrb[0].mxu0
        %6270 = vmatprep.mubr.f32.mxu0 0.0
        %6271 = vmatmul.mubr.f32.gmra.mrb[0].mxu0 %v6199
        %v6272 = vpop.f32.mrb[0].mxu0
        %v6273 = vadd.f32 0.0, %v6272
        %v6274 = vpop.f32.mrb[0].mxu0
        %6275 = vdwg.mxu0
        %6276 = vrot.lane.b32.xlu0 %v5866, 112
        %v6277 = vpop.permute.xlu0 %6276
        %6278 = vrot.lane.b32.xlu0 %v5871, 112
        %v6279 = vpop.permute.xlu0 %6278
        %6280 = vrot.lane.b32.xlu0 %v5866, 80
        %v6281 = vpop.permute.xlu0 %6280
        %6282 = vrot.lane.b32.xlu0 %v5871, 80
        %v6283 = vpop.permute.xlu0 %6282
        %v6284 = vsel %vm874, %v6277, 0
        %v6286 = vsel %vm874, %v6279, 0
        %v6288 = vsel %vm874, %v6281, 0
        %v6290 = vsel %vm874, %v6283, 0
        %6292 = vmatprep.subr.mxu0 0.0
        %6293 = vmatpush1.xpose.msra.mxu0 %v6288
        %6294 = vmatprep.subr.mxu0 0.0
        %6295 = vmatpush1.xpose.msra.mxu0 %v6290
        %6296 = vmatprep.subr.mxu0 0.0
        %6297 = vmatpush1.xpose.msra.mxu0 0.0
        %6298 = vmatprep.subr.mxu0 0.0
        %6299 = vmatpush1.xpose.msra.mxu0 0.0
        %6300 = vmatprep.subr.mxu0 0.0
        %6301 = vmatpush1.xpose.msra.mxu0 0.0
        %6302 = vmatprep.subr.mxu0 0.0
        %6303 = vmatpush1.xpose.msra.mxu0 0.0
        %6304 = vmatprep.subr.mxu0 0.0
        %6305 = vmatpush1.xpose.msra.mxu0 0.0
        %6306 = vmatprep.subr.mxu0 0.0
        %6307 = vmatpush1.xpose.msra.mxu0 0.0
        %6308 = vmatprep.subr.mxu0 0.0
        %6309 = vmatpush1.xpose.msra.mxu0 0.0
        %6310 = vmatprep.subr.mxu0 0.0
        %6311 = vmatpush1.xpose.msra.mxu0 0.0
        %6312 = vmatprep.subr.mxu0 0.0
        %6313 = vmatpush1.xpose.msra.mxu0 0.0
        %6314 = vmatprep.subr.mxu0 0.0
        %6315 = vmatpush1.xpose.msra.mxu0 0.0
        %6316 = vmatprep.subr.mxu0 0.0
        %6317 = vmatpush1.xpose.msra.mxu0 0.0
        %6318 = vmatprep.subr.mxu0 0.0
        %6319 = vmatpush1.xpose.msra.mxu0 0.0
        %6320 = vmatprep.subr.mxu0 0.0
        %6321 = vmatpush1.xpose.msra.mxu0 0.0
        %6322 = vmatprep.subr.mxu0 0.0
        %6323 = vmatpush1.xpose.msra.mxu0 0.0
        %6324 = vmatprep.subr.mxu0 0.0
        %6325 = vmatpush1.xpose.msra.mxu0 0.0
        %6326 = vmatprep.subr.mxu0 0.0
        %6327 = vmatpush1.xpose.msra.mxu0 0.0
        %6328 = vmatprep.subr.mxu0 0.0
        %6329 = vmatpush1.xpose.msra.mxu0 0.0
        %6330 = vmatprep.subr.mxu0 0.0
        %6331 = vmatpush1.xpose.msra.mxu0 0.0
        %6332 = vmatprep.subr.mxu0 0.0
        %6333 = vmatpush1.xpose.msra.mxu0 0.0
        %6334 = vmatprep.subr.mxu0 0.0
        %6335 = vmatpush1.xpose.msra.mxu0 0.0
        %6336 = vmatprep.subr.mxu0 0.0
        %6337 = vmatpush1.xpose.msra.mxu0 0.0
        %6338 = vmatprep.subr.mxu0 0.0
        %6339 = vmatpush1.xpose.msra.mxu0 0.0
        %6340 = vmatprep.subr.mxu0 0.0
        %6341 = vmatpush1.xpose.msra.mxu0 0.0
        %6342 = vmatprep.subr.mxu0 0.0
        %6343 = vmatpush1.xpose.msra.mxu0 0.0
        %6344 = vmatprep.subr.mxu0 0.0
        %6345 = vmatpush1.xpose.msra.mxu0 0.0
        %6346 = vmatprep.subr.mxu0 0.0
        %6347 = vmatpush1.xpose.msra.mxu0 0.0
        %6348 = vmatprep.subr.mxu0 0.0
        %6349 = vmatpush1.xpose.msra.mxu0 0.0
        %6350 = vmatprep.subr.mxu0 0.0
        %6351 = vmatpush1.xpose.msra.mxu0 0.0
        %6352 = vmatprep.subr.mxu0 0.0
        %6353 = vmatpush1.xpose.msra.mxu0 0.0
        %6354 = vmatprep.subr.mxu0 0.0
        %6355 = vmatpush1.xpose.msra.mxu0 0.0
        %6356 = vmatprep.mubr.f32.mxu0 0.0
        %6357 = vmatmul.mubr.f32.gmra.mrb[0].mxu0 %v6284
        %v6358 = vpop.f32.mrb[0].mxu0
        %v6359 = vadd.f32 0.0, %v6358
        %v6360 = vpop.f32.mrb[0].mxu0
        %6361 = vmatprep.mubr.f32.mxu0 0.0
        %6362 = vmatmul.mubr.f32.gmra.mrb[0].mxu0 %v6286
        %v6363 = vpop.f32.mrb[0].mxu0
        %v6364 = vadd.f32 0.0, %v6363
        %v6365 = vpop.f32.mrb[0].mxu0
        %6366 = vdwg.mxu0
        %v6367 = vmul.f32 %v6359, 0.35355338
        %v6368 = vmul.f32 %v6364, 0.35355338
        %v6369 = vsel %vm3264, %v6367, -inf
        %6370 = vmax.xlane.f32.xlu0 %v6369
        %v6371 = vpop.xlane.xlu0 %6370
        %v6372 = vsel %vm3264, %v6368, -inf
        %6373 = vmax.xlane.f32.xlu0 %v6372
        %v6374 = vpop.xlane.xlu0 %6373
        %v6375 = vsub.f32 %v6367, %v6371
        %v6376 = vsub.f32 %v6368, %v6374
        %v6377 = vmul.f32 %v6375, 1.442695
        %v6378 = vpow.pop %v6377
        %v6379 = vmul.f32 %v6376, 1.442695
        %v6380 = vpow.pop %v6379
        %v6381 = vsel %vm3264, %v6378, 0.0
        %6382 = vadd.xlane.f32.xlu0 %v6381
        %v6383 = vpop.xlane.xlu0 %6382
        %v6384 = vsel %vm3264, %v6380, 0.0
        %6385 = vadd.xlane.f32.xlu0 %v6384
        %v6386 = vpop.xlane.xlu0 %6385
        %v6387 = vrcp.pop %v6383
        %v6388 = vrcp.pop %v6386
        %v6389 = vmul.f32 %v6378, %v6387
        %v6390 = vmul.f32 %v6380, %v6388
        %6391 = vrot.lane.b32.xlu0 %v5866, 48
        %v6392 = vpop.permute.xlu0 %6391
        %6393 = vrot.lane.b32.xlu0 %v5871, 48
        %v6394 = vpop.permute.xlu0 %6393
        %v6398 = vsel %vm3264, %v6389, 0
        %v6401 = vsel %vm3264, %v6390, 0
        %6403 = vmatprep.subr.mxu0 0.0
        %6404 = vmatpush1.msra.mxu0 %v6392
        %6405 = vmatprep.subr.mxu0 0.0
        %6406 = vmatpush1.msra.mxu0 %v6394
        %6407 = vmatprep.subr.mxu0 0.0
        %6408 = vmatpush1.msra.mxu0 0.0
        %6409 = vmatprep.subr.mxu0 0.0
        %6410 = vmatpush1.msra.mxu0 0.0
        %6411 = vmatprep.subr.mxu0 0.0
        %6412 = vmatpush1.msra.mxu0 0.0
        %6413 = vmatprep.subr.mxu0 0.0
        %6414 = vmatpush1.msra.mxu0 0.0
        %6415 = vmatprep.subr.mxu0 0.0
        %6416 = vmatpush1.msra.mxu0 0.0
        %6417 = vmatprep.subr.mxu0 0.0
        %6418 = vmatpush1.msra.mxu0 0.0
        %6419 = vmatprep.subr.mxu0 0.0
        %6420 = vmatpush1.msra.mxu0 0.0
        %6421 = vmatprep.subr.mxu0 0.0
        %6422 = vmatpush1.msra.mxu0 0.0
        %6423 = vmatprep.subr.mxu0 0.0
        %6424 = vmatpush1.msra.mxu0 0.0
        %6425 = vmatprep.subr.mxu0 0.0
        %6426 = vmatpush1.msra.mxu0 0.0
        %6427 = vmatprep.subr.mxu0 0.0
        %6428 = vmatpush1.msra.mxu0 0.0
        %6429 = vmatprep.subr.mxu0 0.0
        %6430 = vmatpush1.msra.mxu0 0.0
        %6431 = vmatprep.subr.mxu0 0.0
        %6432 = vmatpush1.msra.mxu0 0.0
        %6433 = vmatprep.subr.mxu0 0.0
        %6434 = vmatpush1.msra.mxu0 0.0
        %6435 = vmatprep.subr.mxu0 0.0
        %6436 = vmatpush1.msra.mxu0 0.0
        %6437 = vmatprep.subr.mxu0 0.0
        %6438 = vmatpush1.msra.mxu0 0.0
        %6439 = vmatprep.subr.mxu0 0.0
        %6440 = vmatpush1.msra.mxu0 0.0
        %6441 = vmatprep.subr.mxu0 0.0
        %6442 = vmatpush1.msra.mxu0 0.0
        %6443 = vmatprep.subr.mxu0 0.0
        %6444 = vmatpush1.msra.mxu0 0.0
        %6445 = vmatprep.subr.mxu0 0.0
        %6446 = vmatpush1.msra.mxu0 0.0
        %6447 = vmatprep.subr.mxu0 0.0
        %6448 = vmatpush1.msra.mxu0 0.0
        %6449 = vmatprep.subr.mxu0 0.0
        %6450 = vmatpush1.msra.mxu0 0.0
        %6451 = vmatprep.subr.mxu0 0.0
        %6452 = vmatpush1.msra.mxu0 0.0
        %6453 = vmatprep.subr.mxu0 0.0
        %6454 = vmatpush1.msra.mxu0 0.0
        %6455 = vmatprep.subr.mxu0 0.0
        %6456 = vmatpush1.msra.mxu0 0.0
        %6457 = vmatprep.subr.mxu0 0.0
        %6458 = vmatpush1.msra.mxu0 0.0
        %6459 = vmatprep.subr.mxu0 0.0
        %6460 = vmatpush1.msra.mxu0 0.0
        %6461 = vmatprep.subr.mxu0 0.0
        %6462 = vmatpush1.msra.mxu0 0.0
        %6463 = vmatprep.subr.mxu0 0.0
        %6464 = vmatpush1.msra.mxu0 0.0
        %6465 = vmatprep.subr.mxu0 0.0
        %6466 = vmatpush1.msra.mxu0 0.0
        %6467 = vmatprep.mubr.f32.mxu0 0.0
        %6468 = vmatmul.mubr.f32.gmra.mrb[0].mxu0 %v6398
        %v6469 = vpop.f32.mrb[0].mxu0
        %v6470 = vadd.f32 0.0, %v6469
        %v6471 = vpop.f32.mrb[0].mxu0
        %6472 = vmatprep.mubr.f32.mxu0 0.0
        %6473 = vmatmul.mubr.f32.gmra.mrb[0].mxu0 %v6401
        %v6474 = vpop.f32.mrb[0].mxu0
        %v6475 = vadd.f32 0.0, %v6474
        %v6476 = vpop.f32.mrb[0].mxu0
        %6477 = vdwg.mxu0
        %6478 = vrot.lane.b32.xlu0 %v5866, 104
        %v6479 = vpop.permute.xlu0 %6478
        %6480 = vrot.lane.b32.xlu0 %v5871, 104
        %v6481 = vpop.permute.xlu0 %6480
        %6482 = vrot.lane.b32.xlu0 %v5866, 72
        %v6483 = vpop.permute.xlu0 %6482
        %6484 = vrot.lane.b32.xlu0 %v5871, 72
        %v6485 = vpop.permute.xlu0 %6484
        %v6486 = vsel %vm874, %v6479, 0
        %v6488 = vsel %vm874, %v6481, 0
        %v6490 = vsel %vm874, %v6483, 0
        %v6492 = vsel %vm874, %v6485, 0
        %6494 = vmatprep.subr.mxu0 0.0
        %6495 = vmatpush1.xpose.msra.mxu0 %v6490
        %6496 = vmatprep.subr.mxu0 0.0
        %6497 = vmatpush1.xpose.msra.mxu0 %v6492
        %6498 = vmatprep.subr.mxu0 0.0
        %6499 = vmatpush1.xpose.msra.mxu0 0.0
        %6500 = vmatprep.subr.mxu0 0.0
        %6501 = vmatpush1.xpose.msra.mxu0 0.0
        %6502 = vmatprep.subr.mxu0 0.0
        %6503 = vmatpush1.xpose.msra.mxu0 0.0
        %6504 = vmatprep.subr.mxu0 0.0
        %6505 = vmatpush1.xpose.msra.mxu0 0.0
        %6506 = vmatprep.subr.mxu0 0.0
        %6507 = vmatpush1.xpose.msra.mxu0 0.0
        %6508 = vmatprep.subr.mxu0 0.0
        %6509 = vmatpush1.xpose.msra.mxu0 0.0
        %6510 = vmatprep.subr.mxu0 0.0
        %6511 = vmatpush1.xpose.msra.mxu0 0.0
        %6512 = vmatprep.subr.mxu0 0.0
        %6513 = vmatpush1.xpose.msra.mxu0 0.0
        %6514 = vmatprep.subr.mxu0 0.0
        %6515 = vmatpush1.xpose.msra.mxu0 0.0
        %6516 = vmatprep.subr.mxu0 0.0
        %6517 = vmatpush1.xpose.msra.mxu0 0.0
        %6518 = vmatprep.subr.mxu0 0.0
        %6519 = vmatpush1.xpose.msra.mxu0 0.0
        %6520 = vmatprep.subr.mxu0 0.0
        %6521 = vmatpush1.xpose.msra.mxu0 0.0
        %6522 = vmatprep.subr.mxu0 0.0
        %6523 = vmatpush1.xpose.msra.mxu0 0.0
        %6524 = vmatprep.subr.mxu0 0.0
        %6525 = vmatpush1.xpose.msra.mxu0 0.0
        %6526 = vmatprep.subr.mxu0 0.0
        %6527 = vmatpush1.xpose.msra.mxu0 0.0
        %6528 = vmatprep.subr.mxu0 0.0
        %6529 = vmatpush1.xpose.msra.mxu0 0.0
        %6530 = vmatprep.subr.mxu0 0.0
        %6531 = vmatpush1.xpose.msra.mxu0 0.0
        %6532 = vmatprep.subr.mxu0 0.0
        %6533 = vmatpush1.xpose.msra.mxu0 0.0
        %6534 = vmatprep.subr.mxu0 0.0
        %6535 = vmatpush1.xpose.msra.mxu0 0.0
        %6536 = vmatprep.subr.mxu0 0.0
        %6537 = vmatpush1.xpose.msra.mxu0 0.0
        %6538 = vmatprep.subr.mxu0 0.0
        %6539 = vmatpush1.xpose.msra.mxu0 0.0
        %6540 = vmatprep.subr.mxu0 0.0
        %6541 = vmatpush1.xpose.msra.mxu0 0.0
        %6542 = vmatprep.subr.mxu0 0.0
        %6543 = vmatpush1.xpose.msra.mxu0 0.0
        %6544 = vmatprep.subr.mxu0 0.0
        %6545 = vmatpush1.xpose.msra.mxu0 0.0
        %6546 = vmatprep.subr.mxu0 0.0
        %6547 = vmatpush1.xpose.msra.mxu0 0.0
        %6548 = vmatprep.subr.mxu0 0.0
        %6549 = vmatpush1.xpose.msra.mxu0 0.0
        %6550 = vmatprep.subr.mxu0 0.0
        %6551 = vmatpush1.xpose.msra.mxu0 0.0
        %6552 = vmatprep.subr.mxu0 0.0
        %6553 = vmatpush1.xpose.msra.mxu0 0.0
        %6554 = vmatprep.subr.mxu0 0.0
        %6555 = vmatpush1.xpose.msra.mxu0 0.0
        %6556 = vmatprep.subr.mxu0 0.0
        %6557 = vmatpush1.xpose.msra.mxu0 0.0
        %6558 = vmatprep.mubr.f32.mxu0 0.0
        %6559 = vmatmul.mubr.f32.gmra.mrb[0].mxu0 %v6486
        %v6560 = vpop.f32.mrb[0].mxu0
        %v6561 = vadd.f32 0.0, %v6560
        %v6562 = vpop.f32.mrb[0].mxu0
        %6563 = vmatprep.mubr.f32.mxu0 0.0
        %6564 = vmatmul.mubr.f32.gmra.mrb[0].mxu0 %v6488
        %v6565 = vpop.f32.mrb[0].mxu0
        %v6566 = vadd.f32 0.0, %v6565
        %v6567 = vpop.f32.mrb[0].mxu0
        %6568 = vdwg.mxu0
        %v6569 = vmul.f32 %v6561, 0.35355338
        %v6570 = vmul.f32 %v6566, 0.35355338
        %v6571 = vsel %vm3264, %v6569, -inf
        %6572 = vmax.xlane.f32.xlu0 %v6571
        %v6573 = vpop.xlane.xlu0 %6572
        %v6574 = vsel %vm3264, %v6570, -inf
        %6575 = vmax.xlane.f32.xlu0 %v6574
        %v6576 = vpop.xlane.xlu0 %6575
        %v6577 = vsub.f32 %v6569, %v6573
        %v6578 = vsub.f32 %v6570, %v6576
        %v6579 = vmul.f32 %v6577, 1.442695
        %v6580 = vpow.pop %v6579
        %v6581 = vmul.f32 %v6578, 1.442695
        %v6582 = vpow.pop %v6581
        %v6583 = vsel %vm3264, %v6580, 0.0
        %6584 = vadd.xlane.f32.xlu0 %v6583
        %v6585 = vpop.xlane.xlu0 %6584
        %v6586 = vsel %vm3264, %v6582, 0.0
        %6587 = vadd.xlane.f32.xlu0 %v6586
        %v6588 = vpop.xlane.xlu0 %6587
        %v6589 = vrcp.pop %v6585
        %v6590 = vrcp.pop %v6588
        %v6591 = vmul.f32 %v6580, %v6589
        %v6592 = vmul.f32 %v6582, %v6590
        %6593 = vrot.lane.b32.xlu0 %v5866, 40
        %v6594 = vpop.permute.xlu0 %6593
        %6595 = vrot.lane.b32.xlu0 %v5871, 40
        %v6596 = vpop.permute.xlu0 %6595
        %v6600 = vsel %vm3264, %v6591, 0
        %v6603 = vsel %vm3264, %v6592, 0
        %6605 = vmatprep.subr.mxu0 0.0
        %6606 = vmatpush1.msra.mxu0 %v6594
        %6607 = vmatprep.subr.mxu0 0.0
        %6608 = vmatpush1.msra.mxu0 %v6596
        %6609 = vmatprep.subr.mxu0 0.0
        %6610 = vmatpush1.msra.mxu0 0.0
        %6611 = vmatprep.subr.mxu0 0.0
        %6612 = vmatpush1.msra.mxu0 0.0
        %6613 = vmatprep.subr.mxu0 0.0
        %6614 = vmatpush1.msra.mxu0 0.0
        %6615 = vmatprep.subr.mxu0 0.0
        %6616 = vmatpush1.msra.mxu0 0.0
        %6617 = vmatprep.subr.mxu0 0.0
        %6618 = vmatpush1.msra.mxu0 0.0
        %6619 = vmatprep.subr.mxu0 0.0
        %6620 = vmatpush1.msra.mxu0 0.0
        %6621 = vmatprep.subr.mxu0 0.0
        %6622 = vmatpush1.msra.mxu0 0.0
        %6623 = vmatprep.subr.mxu0 0.0
        %6624 = vmatpush1.msra.mxu0 0.0
        %6625 = vmatprep.subr.mxu0 0.0
        %6626 = vmatpush1.msra.mxu0 0.0
        %6627 = vmatprep.subr.mxu0 0.0
        %6628 = vmatpush1.msra.mxu0 0.0
        %6629 = vmatprep.subr.mxu0 0.0
        %6630 = vmatpush1.msra.mxu0 0.0
        %6631 = vmatprep.subr.mxu0 0.0
        %6632 = vmatpush1.msra.mxu0 0.0
        %6633 = vmatprep.subr.mxu0 0.0
        %6634 = vmatpush1.msra.mxu0 0.0
        %6635 = vmatprep.subr.mxu0 0.0
        %6636 = vmatpush1.msra.mxu0 0.0
        %6637 = vmatprep.subr.mxu0 0.0
        %6638 = vmatpush1.msra.mxu0 0.0
        %6639 = vmatprep.subr.mxu0 0.0
        %6640 = vmatpush1.msra.mxu0 0.0
        %6641 = vmatprep.subr.mxu0 0.0
        %6642 = vmatpush1.msra.mxu0 0.0
        %6643 = vmatprep.subr.mxu0 0.0
        %6644 = vmatpush1.msra.mxu0 0.0
        %6645 = vmatprep.subr.mxu0 0.0
        %6646 = vmatpush1.msra.mxu0 0.0
        %6647 = vmatprep.subr.mxu0 0.0
        %6648 = vmatpush1.msra.mxu0 0.0
        %6649 = vmatprep.subr.mxu0 0.0
        %6650 = vmatpush1.msra.mxu0 0.0
        %6651 = vmatprep.subr.mxu0 0.0
        %6652 = vmatpush1.msra.mxu0 0.0
        %6653 = vmatprep.subr.mxu0 0.0
        %6654 = vmatpush1.msra.mxu0 0.0
        %6655 = vmatprep.subr.mxu0 0.0
        %6656 = vmatpush1.msra.mxu0 0.0
        %6657 = vmatprep.subr.mxu0 0.0
        %6658 = vmatpush1.msra.mxu0 0.0
        %6659 = vmatprep.subr.mxu0 0.0
        %6660 = vmatpush1.msra.mxu0 0.0
        %6661 = vmatprep.subr.mxu0 0.0
        %6662 = vmatpush1.msra.mxu0 0.0
        %6663 = vmatprep.subr.mxu0 0.0
        %6664 = vmatpush1.msra.mxu0 0.0
        %6665 = vmatprep.subr.mxu0 0.0
        %6666 = vmatpush1.msra.mxu0 0.0
        %6667 = vmatprep.subr.mxu0 0.0
        %6668 = vmatpush1.msra.mxu0 0.0
        %6669 = vmatprep.mubr.f32.mxu0 0.0
        %6670 = vmatmul.mubr.f32.gmra.mrb[0].mxu0 %v6600
        %v6671 = vpop.f32.mrb[0].mxu0
        %v6672 = vadd.f32 0.0, %v6671
        %v6673 = vpop.f32.mrb[0].mxu0
        %6674 = vmatprep.mubr.f32.mxu0 0.0
        %6675 = vmatmul.mubr.f32.gmra.mrb[0].mxu0 %v6603
        %v6676 = vpop.f32.mrb[0].mxu0
        %v6677 = vadd.f32 0.0, %v6676
        %v6678 = vpop.f32.mrb[0].mxu0
        %6679 = vdwg.mxu0
        %6682 = vrot.lane.b32.xlu0 %v6268, 8
        %v6683 = vpop.permute.xlu0 %6682
        %6684 = vrot.lane.b32.xlu0 %v6273, 8
        %v6685 = vpop.permute.xlu0 %6684
        %6690 = vrot.lane.b32.xlu0 %v6470, 16
        %v6691 = vpop.permute.xlu0 %6690
        %6692 = vrot.lane.b32.xlu0 %v6475, 16
        %v6693 = vpop.permute.xlu0 %6692
        %6698 = vrot.lane.b32.xlu0 %v6672, 24
        %v6699 = vpop.permute.xlu0 %6698
        %6700 = vrot.lane.b32.xlu0 %v6677, 24
        %v6701 = vpop.permute.xlu0 %6700
        %v6704 = vsel %vm874, %v6066, %v6683
        %v6705 = vsel %vm874, %v6071, %v6685
        %v6706 = vsel %vm3264, %v6704, %v6691
        %v6707 = vsel %vm3264, %v6705, %v6693
        %v6708 = vsel %vm3297, %v6706, %v6699
        %v6709 = vsel %vm3297, %v6707, %v6701
        %s6710 = scalar_lea.vmem %s14, 32
        %v6711 = vld [vmem:[%s6710] sm:$0xff]
        %v6712 = vld [vmem:[%s6710 + $0x8] sm:$0xff]
        %v6713 = vld [vmem:[%s6710 + $0x10] sm:$0xff]
        %v6714 = vld [vmem:[%s6710 + $0x18] sm:$0xff]
        %s6715 = scalar_lea.vmem [#allocation6], 1
        %v6716 = vld [vmem:[%s6715] sm:$0x1]
        %v6718 = vlaneseq
        %v6719 = vshrl.u32 %v6718, 7
        %v6720 = vsub.s32 0, %v6719
        %v6721 = vrot.slane %v6716, %v6720
        %v6724 = vsel %vm3330, %v6708, 0
        %v6727 = vsel %vm3330, %v6709, 0
        %6729 = vmatprep.subr.mxu0 0.0
        %6730 = vmatpush1.msra.mxu0 %v6711
        %6731 = vmatprep.subr.mxu0 0.0
        %6732 = vmatpush1.msra.mxu0 %v6712
        %6733 = vmatprep.subr.mxu0 0.0
        %6734 = vmatpush1.msra.mxu0 %v6713
        %6735 = vmatprep.subr.mxu0 0.0
        %6736 = vmatpush1.msra.mxu0 %v6714
        %6737 = vmatprep.subr.mxu0 0.0
        %6738 = vmatpush1.msra.mxu0 0.0
        %6739 = vmatprep.subr.mxu0 0.0
        %6740 = vmatpush1.msra.mxu0 0.0
        %6741 = vmatprep.subr.mxu0 0.0
        %6742 = vmatpush1.msra.mxu0 0.0
        %6743 = vmatprep.subr.mxu0 0.0
        %6744 = vmatpush1.msra.mxu0 0.0
        %6745 = vmatprep.subr.mxu0 0.0
        %6746 = vmatpush1.msra.mxu0 0.0
        %6747 = vmatprep.subr.mxu0 0.0
        %6748 = vmatpush1.msra.mxu0 0.0
        %6749 = vmatprep.subr.mxu0 0.0
        %6750 = vmatpush1.msra.mxu0 0.0
        %6751 = vmatprep.subr.mxu0 0.0
        %6752 = vmatpush1.msra.mxu0 0.0
        %6753 = vmatprep.subr.mxu0 0.0
        %6754 = vmatpush1.msra.mxu0 0.0
        %6755 = vmatprep.subr.mxu0 0.0
        %6756 = vmatpush1.msra.mxu0 0.0
        %6757 = vmatprep.subr.mxu0 0.0
        %6758 = vmatpush1.msra.mxu0 0.0
        %6759 = vmatprep.subr.mxu0 0.0
        %6760 = vmatpush1.msra.mxu0 0.0
        %6761 = vmatprep.subr.mxu0 0.0
        %6762 = vmatpush1.msra.mxu0 0.0
        %6763 = vmatprep.subr.mxu0 0.0
        %6764 = vmatpush1.msra.mxu0 0.0
        %6765 = vmatprep.subr.mxu0 0.0
        %6766 = vmatpush1.msra.mxu0 0.0
        %6767 = vmatprep.subr.mxu0 0.0
        %6768 = vmatpush1.msra.mxu0 0.0
        %6769 = vmatprep.subr.mxu0 0.0
        %6770 = vmatpush1.msra.mxu0 0.0
        %6771 = vmatprep.subr.mxu0 0.0
        %6772 = vmatpush1.msra.mxu0 0.0
        %6773 = vmatprep.subr.mxu0 0.0
        %6774 = vmatpush1.msra.mxu0 0.0
        %6775 = vmatprep.subr.mxu0 0.0
        %6776 = vmatpush1.msra.mxu0 0.0
        %6777 = vmatprep.subr.mxu0 0.0
        %6778 = vmatpush1.msra.mxu0 0.0
        %6779 = vmatprep.subr.mxu0 0.0
        %6780 = vmatpush1.msra.mxu0 0.0
        %6781 = vmatprep.subr.mxu0 0.0
        %6782 = vmatpush1.msra.mxu0 0.0
        %6783 = vmatprep.subr.mxu0 0.0
        %6784 = vmatpush1.msra.mxu0 0.0
        %6785 = vmatprep.subr.mxu0 0.0
        %6786 = vmatpush1.msra.mxu0 0.0
        %6787 = vmatprep.subr.mxu0 0.0
        %6788 = vmatpush1.msra.mxu0 0.0
        %6789 = vmatprep.subr.mxu0 0.0
        %6790 = vmatpush1.msra.mxu0 0.0
        %6791 = vmatprep.subr.mxu0 0.0
        %6792 = vmatpush1.msra.mxu0 0.0
        %6793 = vmatprep.mubr.f32.mxu0 0.0
        %6794 = vmatmul.mubr.f32.gmra.mrb[0].mxu0 %v6724
        %v6795 = vpop.f32.mrb[0].mxu0
        %v6796 = vadd.f32 %v6721, %v6795
        %v6797 = vpop.f32.mrb[0].mxu0
        %6798 = vmatprep.mubr.f32.mxu0 0.0
        %6799 = vmatmul.mubr.f32.gmra.mrb[0].mxu0 %v6727
        %v6800 = vpop.f32.mrb[0].mxu0
        %v6801 = vadd.f32 %v6721, %v6800
        %v6802 = vpop.f32.mrb[0].mxu0
        %6803 = vdwg.mxu0
        %v6804 = vadd.f32 %v5732, %v6796
        %v6805 = vadd.f32 %v5733, %v6801
        %s6806 = scalar_lea.vmem %s16, 1
        %v6807 = vld [vmem:[%s6806] sm:$0x1]
        %s6808 = scalar_lea.vmem %s17, 1
        %v6809 = vld [vmem:[%s6808] sm:$0x1]
        %v6810 = vsel %vm3330, %v6804, 0.0
        %6811 = vadd.xlane.f32.xlu0 %v6810
        %v6812 = vpop.xlane.xlu0 %6811
        %v6813 = vsel %vm3330, %v6805, 0.0
        %6814 = vadd.xlane.f32.xlu0 %v6813
        %v6815 = vpop.xlane.xlu0 %6814
        %v6816 = vmul.f32 %v6812, %v4423
        %v6817 = vmul.f32 %v6815, %v4423
        %v6818 = vsub.f32 %v6804, %v6816
        %v6819 = vsub.f32 %v6805, %v6817
        %v6820 = vmul.f32 %v6818, %v6818
        %v6821 = vmul.f32 %v6819, %v6819
        %v6822 = vsel %vm3330, %v6820, 0.0
        %6823 = vadd.xlane.f32.xlu0 %v6822
        %v6824 = vpop.xlane.xlu0 %6823
        %v6825 = vsel %vm3330, %v6821, 0.0
        %6826 = vadd.xlane.f32.xlu0 %v6825
        %v6827 = vpop.xlane.xlu0 %6826
        %v6828 = vmul.f32 %v6824, %v4423
        %v6829 = vmul.f32 %v6827, %v4423
        %v6830 = vadd.f32 %v6828, 1e-05
        %v6831 = vadd.f32 %v6829, 1e-05
        %v6832 = vrsqrt.pop %v6830
        %v6833 = vrsqrt.pop %v6831
        %v6834 = vmul.f32 %v6818, %v6832
        %v6835 = vmul.f32 %v6819, %v6833
        %v6837 = vlaneseq
        %v6838 = vshrl.u32 %v6837, 7
        %v6839 = vsub.s32 0, %v6838
        %v6840 = vrot.slane %v6807, %v6839
        %v6842 = vmul.f32 %v6834, %v6840
        %v6843 = vmul.f32 %v6835, %v6840
        %v6845 = vlaneseq
        %v6846 = vshrl.u32 %v6845, 7
        %v6847 = vsub.s32 0, %v6846
        %v6848 = vrot.slane %v6809, %v6847
        %v6850 = vadd.f32 %v6842, %v6848
        %v6851 = vadd.f32 %v6843, %v6848
        %s6852 = scalar_lea.vmem %s18, 32
        %v6853 = vld [vmem:[%s6852] sm:$0xff]
        %v6854 = vld [vmem:[%s6852 + $0x8] sm:$0xff]
        %v6855 = vld [vmem:[%s6852 + $0x10] sm:$0xff]
        %v6856 = vld [vmem:[%s6852 + $0x18] sm:$0xff]
        %s6857 = scalar_lea.vmem %s19, 1
        %v6858 = vld [vmem:[%s6857] sm:$0x1]
        %v6860 = vlaneseq
        %v6861 = vshrl.u32 %v6860, 7
        %v6862 = vsub.s32 0, %v6861
        %v6863 = vrot.slane %v6858, %v6862
        %v6866 = vsel %vm3330, %v6850, 0
        %v6869 = vsel %vm3330, %v6851, 0
        %6871 = vmatprep.subr.mxu0 0.0
        %6872 = vmatpush1.msra.mxu0 %v6853
        %6873 = vmatprep.subr.mxu0 0.0
        %6874 = vmatpush1.msra.mxu0 %v6854
        %6875 = vmatprep.subr.mxu0 0.0
        %6876 = vmatpush1.msra.mxu0 %v6855
        %6877 = vmatprep.subr.mxu0 0.0
        %6878 = vmatpush1.msra.mxu0 %v6856
        %6879 = vmatprep.subr.mxu0 0.0
        %6880 = vmatpush1.msra.mxu0 0.0
        %6881 = vmatprep.subr.mxu0 0.0
        %6882 = vmatpush1.msra.mxu0 0.0
        %6883 = vmatprep.subr.mxu0 0.0
        %6884 = vmatpush1.msra.mxu0 0.0
        %6885 = vmatprep.subr.mxu0 0.0
        %6886 = vmatpush1.msra.mxu0 0.0
        %6887 = vmatprep.subr.mxu0 0.0
        %6888 = vmatpush1.msra.mxu0 0.0
        %6889 = vmatprep.subr.mxu0 0.0
        %6890 = vmatpush1.msra.mxu0 0.0
        %6891 = vmatprep.subr.mxu0 0.0
        %6892 = vmatpush1.msra.mxu0 0.0
        %6893 = vmatprep.subr.mxu0 0.0
        %6894 = vmatpush1.msra.mxu0 0.0
        %6895 = vmatprep.subr.mxu0 0.0
        %6896 = vmatpush1.msra.mxu0 0.0
        %6897 = vmatprep.subr.mxu0 0.0
        %6898 = vmatpush1.msra.mxu0 0.0
        %6899 = vmatprep.subr.mxu0 0.0
        %6900 = vmatpush1.msra.mxu0 0.0
        %6901 = vmatprep.subr.mxu0 0.0
        %6902 = vmatpush1.msra.mxu0 0.0
        %6903 = vmatprep.subr.mxu0 0.0
        %6904 = vmatpush1.msra.mxu0 0.0
        %6905 = vmatprep.subr.mxu0 0.0
        %6906 = vmatpush1.msra.mxu0 0.0
        %6907 = vmatprep.subr.mxu0 0.0
        %6908 = vmatpush1.msra.mxu0 0.0
        %6909 = vmatprep.subr.mxu0 0.0
        %6910 = vmatpush1.msra.mxu0 0.0
        %6911 = vmatprep.subr.mxu0 0.0
        %6912 = vmatpush1.msra.mxu0 0.0
        %6913 = vmatprep.subr.mxu0 0.0
        %6914 = vmatpush1.msra.mxu0 0.0
        %6915 = vmatprep.subr.mxu0 0.0
        %6916 = vmatpush1.msra.mxu0 0.0
        %6917 = vmatprep.subr.mxu0 0.0
        %6918 = vmatpush1.msra.mxu0 0.0
        %6919 = vmatprep.subr.mxu0 0.0
        %6920 = vmatpush1.msra.mxu0 0.0
        %6921 = vmatprep.subr.mxu0 0.0
        %6922 = vmatpush1.msra.mxu0 0.0
        %6923 = vmatprep.subr.mxu0 0.0
        %6924 = vmatpush1.msra.mxu0 0.0
        %6925 = vmatprep.subr.mxu0 0.0
        %6926 = vmatpush1.msra.mxu0 0.0
        %6927 = vmatprep.subr.mxu0 0.0
        %6928 = vmatpush1.msra.mxu0 0.0
        %6929 = vmatprep.subr.mxu0 0.0
        %6930 = vmatpush1.msra.mxu0 0.0
        %6931 = vmatprep.subr.mxu0 0.0
        %6932 = vmatpush1.msra.mxu0 0.0
        %6933 = vmatprep.subr.mxu0 0.0
        %6934 = vmatpush1.msra.mxu0 0.0
        %6935 = vmatprep.mubr.f32.mxu0 0.0
        %6936 = vmatmul.mubr.f32.gmra.mrb[0].mxu0 %v6866
        %v6937 = vpop.f32.mrb[0].mxu0
        %v6938 = vadd.f32 %v6863, %v6937
        %v6939 = vpop.f32.mrb[0].mxu0
        %6940 = vmatprep.mubr.f32.mxu0 0.0
        %6941 = vmatmul.mubr.f32.gmra.mrb[0].mxu0 %v6869
        %v6942 = vpop.f32.mrb[0].mxu0
        %v6943 = vadd.f32 %v6863, %v6942
        %v6944 = vpop.f32.mrb[0].mxu0
        %6945 = vdwg.mxu0
        %v6946 = vmul.f32 %v6938, %v6938
        %v6947 = vmul.f32 %v6943, %v6943
        %v6948 = vmul.f32 %v6938, %v6946
        %v6949 = vmul.f32 %v6943, %v6947
        %v6950 = vmul.f32 %v6948, 0.044715
        %v6951 = vmul.f32 %v6949, 0.044715
        %v6952 = vadd.f32 %v6938, %v6950
        %v6953 = vadd.f32 %v6943, %v6951
        %v6954 = vmul.f32 %v6952, 0.7978846
        %v6955 = vmul.f32 %v6953, 0.7978846
        %v6956 = vtanh.pop %v6954
        %v6957 = vtanh.pop %v6955
        %v6958 = vadd.f32 %v6956, 1.0
        %v6959 = vadd.f32 %v6957, 1.0
        %v6960 = vmul.f32 %v6958, 0.5
        %v6961 = vmul.f32 %v6959, 0.5
        %v6962 = vmul.f32 %v6938, %v6960
        %v6963 = vmul.f32 %v6943, %v6961
        %s6964 = scalar_lea.vmem %s20, 64
        %v6965 = vld [vmem:[%s6964] sm:$0xff]
        %v6966 = vld [vmem:[%s6964 + $0x8] sm:$0xff]
        %v6967 = vld [vmem:[%s6964 + $0x10] sm:$0xff]
        %v6968 = vld [vmem:[%s6964 + $0x18] sm:$0xff]
        %v6969 = vld [vmem:[%s6964 + $0x20] sm:$0xff]
        %v6970 = vld [vmem:[%s6964 + $0x28] sm:$0xff]
        %v6971 = vld [vmem:[%s6964 + $0x30] sm:$0xff]
        %v6972 = vld [vmem:[%s6964 + $0x38] sm:$0xff]
        %s6973 = scalar_lea.vmem %s21, 1
        %v6974 = vld [vmem:[%s6973] sm:$0x1]
        %v6976 = vlaneseq
        %v6977 = vshrl.u32 %v6976, 7
        %v6978 = vsub.s32 0, %v6977
        %v6979 = vrot.slane %v6974, %v6978
        %v6982 = vsel %vm3462, %v6962, 0
        %v6985 = vsel %vm3462, %v6963, 0
        %6987 = vmatprep.subr.mxu0 0.0
        %6988 = vmatpush1.msra.mxu0 %v6965
        %6989 = vmatprep.subr.mxu0 0.0
        %6990 = vmatpush1.msra.mxu0 %v6966
        %6991 = vmatprep.subr.mxu0 0.0
        %6992 = vmatpush1.msra.mxu0 %v6967
        %6993 = vmatprep.subr.mxu0 0.0
        %6994 = vmatpush1.msra.mxu0 %v6968
        %6995 = vmatprep.subr.mxu0 0.0
        %6996 = vmatpush1.msra.mxu0 %v6969
        %6997 = vmatprep.subr.mxu0 0.0
        %6998 = vmatpush1.msra.mxu0 %v6970
        %6999 = vmatprep.subr.mxu0 0.0
        %7000 = vmatpush1.msra.mxu0 %v6971
        %7001 = vmatprep.subr.mxu0 0.0
        %7002 = vmatpush1.msra.mxu0 %v6972
        %7003 = vmatprep.subr.mxu0 0.0
        %7004 = vmatpush1.msra.mxu0 0.0
        %7005 = vmatprep.subr.mxu0 0.0
        %7006 = vmatpush1.msra.mxu0 0.0
        %7007 = vmatprep.subr.mxu0 0.0
        %7008 = vmatpush1.msra.mxu0 0.0
        %7009 = vmatprep.subr.mxu0 0.0
        %7010 = vmatpush1.msra.mxu0 0.0
        %7011 = vmatprep.subr.mxu0 0.0
        %7012 = vmatpush1.msra.mxu0 0.0
        %7013 = vmatprep.subr.mxu0 0.0
        %7014 = vmatpush1.msra.mxu0 0.0
        %7015 = vmatprep.subr.mxu0 0.0
        %7016 = vmatpush1.msra.mxu0 0.0
        %7017 = vmatprep.subr.mxu0 0.0
        %7018 = vmatpush1.msra.mxu0 0.0
        %7019 = vmatprep.subr.mxu0 0.0
        %7020 = vmatpush1.msra.mxu0 0.0
        %7021 = vmatprep.subr.mxu0 0.0
        %7022 = vmatpush1.msra.mxu0 0.0
        %7023 = vmatprep.subr.mxu0 0.0
        %7024 = vmatpush1.msra.mxu0 0.0
        %7025 = vmatprep.subr.mxu0 0.0
        %7026 = vmatpush1.msra.mxu0 0.0
        %7027 = vmatprep.subr.mxu0 0.0
        %7028 = vmatpush1.msra.mxu0 0.0
        %7029 = vmatprep.subr.mxu0 0.0
        %7030 = vmatpush1.msra.mxu0 0.0
        %7031 = vmatprep.subr.mxu0 0.0
        %7032 = vmatpush1.msra.mxu0 0.0
        %7033 = vmatprep.subr.mxu0 0.0
        %7034 = vmatpush1.msra.mxu0 0.0
        %7035 = vmatprep.subr.mxu0 0.0
        %7036 = vmatpush1.msra.mxu0 0.0
        %7037 = vmatprep.subr.mxu0 0.0
        %7038 = vmatpush1.msra.mxu0 0.0
        %7039 = vmatprep.subr.mxu0 0.0
        %7040 = vmatpush1.msra.mxu0 0.0
        %7041 = vmatprep.subr.mxu0 0.0
        %7042 = vmatpush1.msra.mxu0 0.0
        %7043 = vmatprep.subr.mxu0 0.0
        %7044 = vmatpush1.msra.mxu0 0.0
        %7045 = vmatprep.subr.mxu0 0.0
        %7046 = vmatpush1.msra.mxu0 0.0
        %7047 = vmatprep.subr.mxu0 0.0
        %7048 = vmatpush1.msra.mxu0 0.0
        %7049 = vmatprep.subr.mxu0 0.0
        %7050 = vmatpush1.msra.mxu0 0.0
        %7051 = vmatprep.mubr.f32.mxu0 0.0
        %7052 = vmatmul.mubr.f32.gmra.mrb[0].mxu0 %v6982
        %v7053 = vpop.f32.mrb[0].mxu0
        %v7054 = vadd.f32 %v6979, %v7053
        %v7055 = vpop.f32.mrb[0].mxu0
        %7056 = vmatprep.mubr.f32.mxu0 0.0
        %7057 = vmatmul.mubr.f32.gmra.mrb[0].mxu0 %v6985
        %v7058 = vpop.f32.mrb[0].mxu0
        %v7059 = vadd.f32 %v6979, %v7058
        %v7060 = vpop.f32.mrb[0].mxu0
        %7061 = vdwg.mxu0
        %v7062 = vadd.f32 %v6804, %v7054
        %v7063 = vadd.f32 %v6805, %v7059
        %v7064 = vld [vmem:[%s22] sm:$0xff]
        %v7065 = vld [vmem:[%s22 + $0x8] sm:$0xff]
        %v7066 = vld [vmem:[%s22 + $0x10] sm:$0xff]
        %v7067 = vld [vmem:[%s22 + $0x18] sm:$0xff]
        %v7068 = vld [vmem:[%s22 + $0x20] sm:$0xff]
        %v7069 = vld [vmem:[%s22 + $0x28] sm:$0xff]
        %v7070 = vld [vmem:[%s22 + $0x30] sm:$0xff]
        %v7071 = vld [vmem:[%s22 + $0x38] sm:$0xff]
        %v7072 = vld [vmem:[%s23] sm:$0x3]
        %v7074 = vlaneseq
        %v7075 = vshrl.u32 %v7074, 7
        %v7076 = vsub.s32 0, %v7075
        %v7077 = vrot.slane %v7072, %v7076
        %v7078 = vlaneseq
        %v7079 = vshrl.u32 %v7078, 7
        %v7080 = vsub.s32 1, %v7079
        %v7081 = vrot.slane %v7072, %v7080
        %v7085 = vsel %vm3330, %v7062, 0
        %v7088 = vsel %vm3330, %v7063, 0
        %7090 = vmatprep.subr.mxu0 %v7065
        %7091 = vmatpush1.msra.mxu0 %v7064
        %7092 = vmatprep.subr.mxu0 %v7067
        %7093 = vmatpush1.msra.mxu0 %v7066
        %7094 = vmatprep.subr.mxu0 %v7069
        %7095 = vmatpush1.msra.mxu0 %v7068
        %7096 = vmatprep.subr.mxu0 %v7071
        %7097 = vmatpush1.msra.mxu0 %v7070
        %7098 = vmatprep.subr.mxu0 0.0
        %7099 = vmatpush1.msra.mxu0 0.0
        %7100 = vmatprep.subr.mxu0 0.0
        %7101 = vmatpush1.msra.mxu0 0.0
        %7102 = vmatprep.subr.mxu0 0.0
        %7103 = vmatpush1.msra.mxu0 0.0
        %7104 = vmatprep.subr.mxu0 0.0
        %7105 = vmatpush1.msra.mxu0 0.0
        %7106 = vmatprep.subr.mxu0 0.0
        %7107 = vmatpush1.msra.mxu0 0.0
        %7108 = vmatprep.subr.mxu0 0.0
        %7109 = vmatpush1.msra.mxu0 0.0
        %7110 = vmatprep.subr.mxu0 0.0
        %7111 = vmatpush1.msra.mxu0 0.0
        %7112 = vmatprep.subr.mxu0 0.0
        %7113 = vmatpush1.msra.mxu0 0.0
        %7114 = vmatprep.subr.mxu0 0.0
        %7115 = vmatpush1.msra.mxu0 0.0
        %7116 = vmatprep.subr.mxu0 0.0
        %7117 = vmatpush1.msra.mxu0 0.0
        %7118 = vmatprep.subr.mxu0 0.0
        %7119 = vmatpush1.msra.mxu0 0.0
        %7120 = vmatprep.subr.mxu0 0.0
        %7121 = vmatpush1.msra.mxu0 0.0
        %7122 = vmatprep.subr.mxu0 0.0
        %7123 = vmatpush1.msra.mxu0 0.0
        %7124 = vmatprep.subr.mxu0 0.0
        %7125 = vmatpush1.msra.mxu0 0.0
        %7126 = vmatprep.subr.mxu0 0.0
        %7127 = vmatpush1.msra.mxu0 0.0
        %7128 = vmatprep.subr.mxu0 0.0
        %7129 = vmatpush1.msra.mxu0 0.0
        %7130 = vmatprep.subr.mxu0 0.0
        %7131 = vmatpush1.msra.mxu0 0.0
        %7132 = vmatprep.subr.mxu0 0.0
        %7133 = vmatpush1.msra.mxu0 0.0
        %7134 = vmatprep.subr.mxu0 0.0
        %7135 = vmatpush1.msra.mxu0 0.0
        %7136 = vmatprep.subr.mxu0 0.0
        %7137 = vmatpush1.msra.mxu0 0.0
        %7138 = vmatprep.subr.mxu0 0.0
        %7139 = vmatpush1.msra.mxu0 0.0
        %7140 = vmatprep.subr.mxu0 0.0
        %7141 = vmatpush1.msra.mxu0 0.0
        %7142 = vmatprep.subr.mxu0 0.0
        %7143 = vmatpush1.msra.mxu0 0.0
        %7144 = vmatprep.subr.mxu0 0.0
        %7145 = vmatpush1.msra.mxu0 0.0
        %7146 = vmatprep.subr.mxu0 0.0
        %7147 = vmatpush1.msra.mxu0 0.0
        %7148 = vmatprep.subr.mxu0 0.0
        %7149 = vmatpush1.msra.mxu0 0.0
        %7150 = vmatprep.subr.mxu0 0.0
        %7151 = vmatpush1.msra.mxu0 0.0
        %7152 = vmatprep.subr.mxu0 0.0
        %7153 = vmatpush1.msra.mxu0 0.0
        %7154 = vmatprep.mubr.f32.mxu0 0.0
        %7155 = vmatmul.mubr.f32.gmra.mrb[0].mxu0 %v7085
        %v7156 = vpop.f32.mrb[0].mxu0
        %v7157 = vadd.f32 %v7077, %v7156
        %v7158 = vpop.f32.mrb[0].mxu0
        %v7159 = vadd.f32 %v7081, %v7158
        %7160 = vmatprep.mubr.f32.mxu0 0.0
        %7161 = vmatmul.mubr.f32.gmra.mrb[0].mxu0 %v7088
        %v7162 = vpop.f32.mrb[0].mxu0
        %v7163 = vadd.f32 %v7077, %v7162
        %v7164 = vpop.f32.mrb[0].mxu0
        %v7165 = vadd.f32 %v7081, %v7164
        %7166 = vdwg.mxu0
        %v7167 = vmax.f32 %v7157, 0.0
        %v7168 = vmax.f32 %v7159, 0.0
        %v7169 = vmax.f32 %v7163, 0.0
        %v7170 = vmax.f32 %v7165, 0.0
        %7173 = vrot.lane.b32.xlu0 %v7167, 112
        %v7174 = vpop.permute.xlu0 %7173
        %7175 = vrot.lane.b32.xlu0 %v7169, 112
        %v7176 = vpop.permute.xlu0 %7175
        %7179 = vrot.lane.b32.xlu0 %v7167, 96
        %v7180 = vpop.permute.xlu0 %7179
        %7181 = vrot.lane.b32.xlu0 %v7169, 96
        %v7182 = vpop.permute.xlu0 %7181
        %7185 = vrot.lane.b32.xlu0 %v7167, 80
        %v7186 = vpop.permute.xlu0 %7185
        %7187 = vrot.lane.b32.xlu0 %v7169, 80
        %v7188 = vpop.permute.xlu0 %7187
        %7191 = vrot.lane.b32.xlu0 %v7167, 64
        %v7192 = vpop.permute.xlu0 %7191
        %7193 = vrot.lane.b32.xlu0 %v7169, 64
        %v7194 = vpop.permute.xlu0 %7193
        %7197 = vrot.lane.b32.xlu0 %v7167, 48
        %v7198 = vpop.permute.xlu0 %7197
        %7199 = vrot.lane.b32.xlu0 %v7169, 48
        %v7200 = vpop.permute.xlu0 %7199
        %7203 = vrot.lane.b32.xlu0 %v7167, 32
        %v7204 = vpop.permute.xlu0 %7203
        %7205 = vrot.lane.b32.xlu0 %v7169, 32
        %v7206 = vpop.permute.xlu0 %7205
        %7209 = vrot.lane.b32.xlu0 %v7167, 16
        %v7210 = vpop.permute.xlu0 %7209
        %7211 = vrot.lane.b32.xlu0 %v7169, 16
        %v7212 = vpop.permute.xlu0 %7211
        %7217 = vrot.lane.b32.xlu0 %v7168, 112
        %v7218 = vpop.permute.xlu0 %7217
        %7219 = vrot.lane.b32.xlu0 %v7170, 112
        %v7220 = vpop.permute.xlu0 %7219
        %7223 = vrot.lane.b32.xlu0 %v7168, 96
        %v7224 = vpop.permute.xlu0 %7223
        %7225 = vrot.lane.b32.xlu0 %v7170, 96
        %v7226 = vpop.permute.xlu0 %7225
        %7229 = vrot.lane.b32.xlu0 %v7168, 80
        %v7230 = vpop.permute.xlu0 %7229
        %7231 = vrot.lane.b32.xlu0 %v7170, 80
        %v7232 = vpop.permute.xlu0 %7231
        %7235 = vrot.lane.b32.xlu0 %v7168, 64
        %v7236 = vpop.permute.xlu0 %7235
        %7237 = vrot.lane.b32.xlu0 %v7170, 64
        %v7238 = vpop.permute.xlu0 %7237
        %7241 = vrot.lane.b32.xlu0 %v7168, 48
        %v7242 = vpop.permute.xlu0 %7241
        %7243 = vrot.lane.b32.xlu0 %v7170, 48
        %v7244 = vpop.permute.xlu0 %7243
        %7247 = vrot.lane.b32.xlu0 %v7168, 32
        %v7248 = vpop.permute.xlu0 %7247
        %7249 = vrot.lane.b32.xlu0 %v7170, 32
        %v7250 = vpop.permute.xlu0 %7249
        %7253 = vrot.lane.b32.xlu0 %v7168, 16
        %v7254 = vpop.permute.xlu0 %7253
        %7255 = vrot.lane.b32.xlu0 %v7170, 16
        %v7256 = vpop.permute.xlu0 %7255
        %v7259 = vld [vmem:[%s2] sm:$0xff]
        %v7260 = vld [vmem:[%s2 + $0x8] sm:$0xff]
        %v7261 = vld [vmem:[%s2 + $0x10] sm:$0xff]
        %v7262 = vld [vmem:[%s2 + $0x18] sm:$0xff]
        %v7263 = vld [vmem:[%s2 + $0x20] sm:$0xff]
        %v7264 = vld [vmem:[%s2 + $0x28] sm:$0xff]
        %v7265 = vld [vmem:[%s2 + $0x30] sm:$0xff]
        %v7266 = vld [vmem:[%s2 + $0x38] sm:$0xff]
        %v7267 = vld [vmem:[%s2 + $0x40] sm:$0xff]
        %v7268 = vld [vmem:[%s2 + $0x48] sm:$0xff]
        %v7269 = vld [vmem:[%s2 + $0x50] sm:$0xff]
        %v7270 = vld [vmem:[%s2 + $0x58] sm:$0xff]
        %v7271 = vld [vmem:[%s2 + $0x60] sm:$0xff]
        %v7272 = vld [vmem:[%s2 + $0x68] sm:$0xff]
        %v7273 = vld [vmem:[%s2 + $0x70] sm:$0xff]
        %v7274 = vld [vmem:[%s2 + $0x78] sm:$0xff]
        %v7275 = vld [vmem:[%s2 + $0x80] sm:$0xff]
        %v7276 = vld [vmem:[%s2 + $0x88] sm:$0xff]
        %v7277 = vld [vmem:[%s2 + $0x90] sm:$0xff]
        %v7278 = vld [vmem:[%s2 + $0x98] sm:$0xff]
        %v7279 = vld [vmem:[%s2 + $0xa0] sm:$0xff]
        %v7280 = vld [vmem:[%s2 + $0xa8] sm:$0xff]
        %v7281 = vld [vmem:[%s2 + $0xb0] sm:$0xff]
        %v7282 = vld [vmem:[%s2 + $0xb8] sm:$0xff]
        %v7283 = vld [vmem:[%s2 + $0xc0] sm:$0xff]
        %v7284 = vld [vmem:[%s2 + $0xc8] sm:$0xff]
        %v7285 = vld [vmem:[%s2 + $0xd0] sm:$0xff]
        %v7286 = vld [vmem:[%s2 + $0xd8] sm:$0xff]
        %v7287 = vld [vmem:[%s2 + $0xe0] sm:$0xff]
        %v7288 = vld [vmem:[%s2 + $0xe8] sm:$0xff]
        %v7289 = vld [vmem:[%s2 + $0xf0] sm:$0xff]
        %v7290 = vld [vmem:[%s2 + $0xf8] sm:$0xff]
        %v7291 = vld [vmem:[%s2 + $0x100] sm:$0xff]
        %v7292 = vld [vmem:[%s2 + $0x108] sm:$0xff]
        %v7293 = vld [vmem:[%s2 + $0x110] sm:$0xff]
        %v7294 = vld [vmem:[%s2 + $0x118] sm:$0xff]
        %v7295 = vld [vmem:[%s2 + $0x120] sm:$0xff]
        %v7296 = vld [vmem:[%s2 + $0x128] sm:$0xff]
        %v7297 = vld [vmem:[%s2 + $0x130] sm:$0xff]
        %v7298 = vld [vmem:[%s2 + $0x138] sm:$0xff]
        %v7299 = vld [vmem:[%s2 + $0x140] sm:$0xff]
        %v7300 = vld [vmem:[%s2 + $0x148] sm:$0xff]
        %v7301 = vld [vmem:[%s2 + $0x150] sm:$0xff]
        %v7302 = vld [vmem:[%s2 + $0x158] sm:$0xff]
        %v7303 = vld [vmem:[%s2 + $0x160] sm:$0xff]
        %v7304 = vld [vmem:[%s2 + $0x168] sm:$0xff]
        %v7305 = vld [vmem:[%s2 + $0x170] sm:$0xff]
        %v7306 = vld [vmem:[%s2 + $0x178] sm:$0xff]
        %v7307 = vld [vmem:[%s2 + $0x180] sm:$0xff]
        %v7308 = vld [vmem:[%s2 + $0x188] sm:$0xff]
        %v7309 = vld [vmem:[%s2 + $0x190] sm:$0xff]
        %v7310 = vld [vmem:[%s2 + $0x198] sm:$0xff]
        %v7311 = vld [vmem:[%s2 + $0x1a0] sm:$0xff]
        %v7312 = vld [vmem:[%s2 + $0x1a8] sm:$0xff]
        %v7313 = vld [vmem:[%s2 + $0x1b0] sm:$0xff]
        %v7314 = vld [vmem:[%s2 + $0x1b8] sm:$0xff]
        %v7315 = vld [vmem:[%s2 + $0x1c0] sm:$0xff]
        %v7316 = vld [vmem:[%s2 + $0x1c8] sm:$0xff]
        %v7317 = vld [vmem:[%s2 + $0x1d0] sm:$0xff]
        %v7318 = vld [vmem:[%s2 + $0x1d8] sm:$0xff]
        %v7319 = vld [vmem:[%s2 + $0x1e0] sm:$0xff]
        %v7320 = vld [vmem:[%s2 + $0x1e8] sm:$0xff]
        %v7321 = vld [vmem:[%s2 + $0x1f0] sm:$0xff]
        %v7322 = vld [vmem:[%s2 + $0x1f8] sm:$0xff]
        %7323 = vmatprep.subr.mxu0 0.0
        %7324 = vmatpush1.msra.mxu0 %v7167
        %7325 = vmatprep.subr.mxu0 0.0
        %7326 = vmatpush1.msra.mxu0 %v7169
        %7327 = vmatprep.subr.mxu0 0.0
        %7328 = vmatpush1.msra.mxu0 %v7174
        %7329 = vmatprep.subr.mxu0 0.0
        %7330 = vmatpush1.msra.mxu0 %v7176
        %7331 = vmatprep.subr.mxu0 0.0
        %7332 = vmatpush1.msra.mxu0 %v7180
        %7333 = vmatprep.subr.mxu0 0.0
        %7334 = vmatpush1.msra.mxu0 %v7182
        %7335 = vmatprep.subr.mxu0 0.0
        %7336 = vmatpush1.msra.mxu0 %v7186
        %7337 = vmatprep.subr.mxu0 0.0
        %7338 = vmatpush1.msra.mxu0 %v7188
        %7339 = vmatprep.subr.mxu0 0.0
        %7340 = vmatpush1.msra.mxu0 %v7192
        %7341 = vmatprep.subr.mxu0 0.0
        %7342 = vmatpush1.msra.mxu0 %v7194
        %7343 = vmatprep.subr.mxu0 0.0
        %7344 = vmatpush1.msra.mxu0 %v7198
        %7345 = vmatprep.subr.mxu0 0.0
        %7346 = vmatpush1.msra.mxu0 %v7200
        %7347 = vmatprep.subr.mxu0 0.0
        %7348 = vmatpush1.msra.mxu0 %v7204
        %7349 = vmatprep.subr.mxu0 0.0
        %7350 = vmatpush1.msra.mxu0 %v7206
        %7351 = vmatprep.subr.mxu0 0.0
        %7352 = vmatpush1.msra.mxu0 %v7210
        %7353 = vmatprep.subr.mxu0 0.0
        %7354 = vmatpush1.msra.mxu0 %v7212
        %7355 = vmatprep.subr.mxu0 0.0
        %7356 = vmatpush1.msra.mxu0 %v7168
        %7357 = vmatprep.subr.mxu0 0.0
        %7358 = vmatpush1.msra.mxu0 %v7170
        %7359 = vmatprep.subr.mxu0 0.0
        %7360 = vmatpush1.msra.mxu0 %v7218
        %7361 = vmatprep.subr.mxu0 0.0
        %7362 = vmatpush1.msra.mxu0 %v7220
        %7363 = vmatprep.subr.mxu0 0.0
        %7364 = vmatpush1.msra.mxu0 %v7224
        %7365 = vmatprep.subr.mxu0 0.0
        %7366 = vmatpush1.msra.mxu0 %v7226
        %7367 = vmatprep.subr.mxu0 0.0
        %7368 = vmatpush1.msra.mxu0 %v7230
        %7369 = vmatprep.subr.mxu0 0.0
        %7370 = vmatpush1.msra.mxu0 %v7232
        %7371 = vmatprep.subr.mxu0 0.0
        %7372 = vmatpush1.msra.mxu0 %v7236
        %7373 = vmatprep.subr.mxu0 0.0
        %7374 = vmatpush1.msra.mxu0 %v7238
        %7375 = vmatprep.subr.mxu0 0.0
        %7376 = vmatpush1.msra.mxu0 %v7242
        %7377 = vmatprep.subr.mxu0 0.0
        %7378 = vmatpush1.msra.mxu0 %v7244
        %7379 = vmatprep.subr.mxu0 0.0
        %7380 = vmatpush1.msra.mxu0 %v7248
        %7381 = vmatprep.subr.mxu0 0.0
        %7382 = vmatpush1.msra.mxu0 %v7250
        %7383 = vmatprep.subr.mxu0 0.0
        %7384 = vmatpush1.msra.mxu0 %v7254
        %7385 = vmatprep.subr.mxu0 0.0
        %7386 = vmatpush1.msra.mxu0 %v7256
        %7387 = vmatprep.mubr.f32.mxu0 %v7260
        %7388 = vmatmul.mubr.f32.gmra.mrb[0].mxu0 %v7259
        %v7389 = vpop.f32.mrb[0].mxu0
        %v7390 = vadd.f32 %v3833, %v7389
        %v7391 = vpop.f32.mrb[0].mxu0
        %7392 = vmatprep.mubr.f32.mxu0 %v7262
        %7393 = vmatmul.mubr.f32.gmra.mrb[0].mxu0 %v7261
        %v7394 = vpop.f32.mrb[0].mxu0
        %v7395 = vadd.f32 %v3834, %v7394
        %v7396 = vpop.f32.mrb[0].mxu0
        %7397 = vmatprep.mubr.f32.mxu0 %v7264
        %7398 = vmatmul.mubr.f32.gmra.mrb[0].mxu0 %v7263
        %v7399 = vpop.f32.mrb[0].mxu0
        %v7400 = vadd.f32 %v3835, %v7399
        %v7401 = vpop.f32.mrb[0].mxu0
        %7402 = vmatprep.mubr.f32.mxu0 %v7266
        %7403 = vmatmul.mubr.f32.gmra.mrb[0].mxu0 %v7265
        %v7404 = vpop.f32.mrb[0].mxu0
        %v7405 = vadd.f32 %v3836, %v7404
        %v7406 = vpop.f32.mrb[0].mxu0
        %7407 = vmatprep.mubr.f32.mxu0 %v7268
        %7408 = vmatmul.mubr.f32.gmra.mrb[0].mxu0 %v7267
        %v7409 = vpop.f32.mrb[0].mxu0
        %v7410 = vadd.f32 %v3837, %v7409
        %v7411 = vpop.f32.mrb[0].mxu0
        %7412 = vmatprep.mubr.f32.mxu0 %v7270
        %7413 = vmatmul.mubr.f32.gmra.mrb[0].mxu0 %v7269
        %v7414 = vpop.f32.mrb[0].mxu0
        %v7415 = vadd.f32 %v3838, %v7414
        %v7416 = vpop.f32.mrb[0].mxu0
        %7417 = vmatprep.mubr.f32.mxu0 %v7272
        %7418 = vmatmul.mubr.f32.gmra.mrb[0].mxu0 %v7271
        %v7419 = vpop.f32.mrb[0].mxu0
        %v7420 = vadd.f32 %v3839, %v7419
        %v7421 = vpop.f32.mrb[0].mxu0
        %7422 = vmatprep.mubr.f32.mxu0 %v7274
        %7423 = vmatmul.mubr.f32.gmra.mrb[0].mxu0 %v7273
        %v7424 = vpop.f32.mrb[0].mxu0
        %v7425 = vadd.f32 %v3840, %v7424
        %v7426 = vpop.f32.mrb[0].mxu0
        %7427 = vmatprep.mubr.f32.mxu0 %v7276
        %7428 = vmatmul.mubr.f32.gmra.mrb[0].mxu0 %v7275
        %v7429 = vpop.f32.mrb[0].mxu0
        %v7430 = vadd.f32 %v3841, %v7429
        %v7431 = vpop.f32.mrb[0].mxu0
        %7432 = vmatprep.mubr.f32.mxu0 %v7278
        %7433 = vmatmul.mubr.f32.gmra.mrb[0].mxu0 %v7277
        %v7434 = vpop.f32.mrb[0].mxu0
        %v7435 = vadd.f32 %v3842, %v7434
        %v7436 = vpop.f32.mrb[0].mxu0
        %7437 = vmatprep.mubr.f32.mxu0 %v7280
        %7438 = vmatmul.mubr.f32.gmra.mrb[0].mxu0 %v7279
        %v7439 = vpop.f32.mrb[0].mxu0
        %v7440 = vadd.f32 %v3843, %v7439
        %v7441 = vpop.f32.mrb[0].mxu0
        %7442 = vmatprep.mubr.f32.mxu0 %v7282
        %7443 = vmatmul.mubr.f32.gmra.mrb[0].mxu0 %v7281
        %v7444 = vpop.f32.mrb[0].mxu0
        %v7445 = vadd.f32 %v3844, %v7444
        %v7446 = vpop.f32.mrb[0].mxu0
        %7447 = vmatprep.mubr.f32.mxu0 %v7284
        %7448 = vmatmul.mubr.f32.gmra.mrb[0].mxu0 %v7283
        %v7449 = vpop.f32.mrb[0].mxu0
        %v7450 = vadd.f32 %v3845, %v7449
        %v7451 = vpop.f32.mrb[0].mxu0
        %7452 = vmatprep.mubr.f32.mxu0 %v7286
        %7453 = vmatmul.mubr.f32.gmra.mrb[0].mxu0 %v7285
        %v7454 = vpop.f32.mrb[0].mxu0
        %v7455 = vadd.f32 %v3846, %v7454
        %v7456 = vpop.f32.mrb[0].mxu0
        %7457 = vmatprep.mubr.f32.mxu0 %v7288
        %7458 = vmatmul.mubr.f32.gmra.mrb[0].mxu0 %v7287
        %v7459 = vpop.f32.mrb[0].mxu0
        %v7460 = vadd.f32 %v3847, %v7459
        %v7461 = vpop.f32.mrb[0].mxu0
        %7462 = vmatprep.mubr.f32.mxu0 %v7290
        %7463 = vmatmul.mubr.f32.gmra.mrb[0].mxu0 %v7289
        %v7464 = vpop.f32.mrb[0].mxu0
        %v7465 = vadd.f32 %v3848, %v7464
        %v7466 = vpop.f32.mrb[0].mxu0
        %7467 = vmatprep.mubr.f32.mxu0 %v7292
        %7468 = vmatmul.mubr.f32.gmra.mrb[0].mxu0 %v7291
        %v7469 = vpop.f32.mrb[0].mxu0
        %v7470 = vadd.f32 %v3849, %v7469
        %v7471 = vpop.f32.mrb[0].mxu0
        %7472 = vmatprep.mubr.f32.mxu0 %v7294
        %7473 = vmatmul.mubr.f32.gmra.mrb[0].mxu0 %v7293
        %v7474 = vpop.f32.mrb[0].mxu0
        %v7475 = vadd.f32 %v3850, %v7474
        %v7476 = vpop.f32.mrb[0].mxu0
        %7477 = vmatprep.mubr.f32.mxu0 %v7296
        %7478 = vmatmul.mubr.f32.gmra.mrb[0].mxu0 %v7295
        %v7479 = vpop.f32.mrb[0].mxu0
        %v7480 = vadd.f32 %v3851, %v7479
        %v7481 = vpop.f32.mrb[0].mxu0
        %7482 = vmatprep.mubr.f32.mxu0 %v7298
        %7483 = vmatmul.mubr.f32.gmra.mrb[0].mxu0 %v7297
        %v7484 = vpop.f32.mrb[0].mxu0
        %v7485 = vadd.f32 %v3852, %v7484
        %v7486 = vpop.f32.mrb[0].mxu0
        %7487 = vmatprep.mubr.f32.mxu0 %v7300
        %7488 = vmatmul.mubr.f32.gmra.mrb[0].mxu0 %v7299
        %v7489 = vpop.f32.mrb[0].mxu0
        %v7490 = vadd.f32 %v3853, %v7489
        %v7491 = vpop.f32.mrb[0].mxu0
        %7492 = vmatprep.mubr.f32.mxu0 %v7302
        %7493 = vmatmul.mubr.f32.gmra.mrb[0].mxu0 %v7301
        %v7494 = vpop.f32.mrb[0].mxu0
        %v7495 = vadd.f32 %v3854, %v7494
        %v7496 = vpop.f32.mrb[0].mxu0
        %7497 = vmatprep.mubr.f32.mxu0 %v7304
        %7498 = vmatmul.mubr.f32.gmra.mrb[0].mxu0 %v7303
        %v7499 = vpop.f32.mrb[0].mxu0
        %v7500 = vadd.f32 %v3855, %v7499
        %v7501 = vpop.f32.mrb[0].mxu0
        %7502 = vmatprep.mubr.f32.mxu0 %v7306
        %7503 = vmatmul.mubr.f32.gmra.mrb[0].mxu0 %v7305
        %v7504 = vpop.f32.mrb[0].mxu0
        %v7505 = vadd.f32 %v3856, %v7504
        %v7506 = vpop.f32.mrb[0].mxu0
        %7507 = vmatprep.mubr.f32.mxu0 %v7308
        %7508 = vmatmul.mubr.f32.gmra.mrb[0].mxu0 %v7307
        %v7509 = vpop.f32.mrb[0].mxu0
        %v7510 = vadd.f32 %v3857, %v7509
        %v7511 = vpop.f32.mrb[0].mxu0
        %7512 = vmatprep.mubr.f32.mxu0 %v7310
        %7513 = vmatmul.mubr.f32.gmra.mrb[0].mxu0 %v7309
        %v7514 = vpop.f32.mrb[0].mxu0
        %v7515 = vadd.f32 %v3858, %v7514
        %v7516 = vpop.f32.mrb[0].mxu0
        %7517 = vmatprep.mubr.f32.mxu0 %v7312
        %7518 = vmatmul.mubr.f32.gmra.mrb[0].mxu0 %v7311
        %v7519 = vpop.f32.mrb[0].mxu0
        %v7520 = vadd.f32 %v3859, %v7519
        %v7521 = vpop.f32.mrb[0].mxu0
        %7522 = vmatprep.mubr.f32.mxu0 %v7314
        %7523 = vmatmul.mubr.f32.gmra.mrb[0].mxu0 %v7313
        %v7524 = vpop.f32.mrb[0].mxu0
        %v7525 = vadd.f32 %v3860, %v7524
        %v7526 = vpop.f32.mrb[0].mxu0
        %7527 = vmatprep.mubr.f32.mxu0 %v7316
        %7528 = vmatmul.mubr.f32.gmra.mrb[0].mxu0 %v7315
        %v7529 = vpop.f32.mrb[0].mxu0
        %v7530 = vadd.f32 %v3861, %v7529
        %v7531 = vpop.f32.mrb[0].mxu0
        %7532 = vmatprep.mubr.f32.mxu0 %v7318
        %7533 = vmatmul.mubr.f32.gmra.mrb[0].mxu0 %v7317
        %v7534 = vpop.f32.mrb[0].mxu0
        %v7535 = vadd.f32 %v3862, %v7534
        %v7536 = vpop.f32.mrb[0].mxu0
        %7537 = vmatprep.mubr.f32.mxu0 %v7320
        %7538 = vmatmul.mubr.f32.gmra.mrb[0].mxu0 %v7319
        %v7539 = vpop.f32.mrb[0].mxu0
        %v7540 = vadd.f32 %v3863, %v7539
        %v7541 = vpop.f32.mrb[0].mxu0
        %7542 = vmatprep.mubr.f32.mxu0 %v7322
        %7543 = vmatmul.mubr.f32.gmra.mrb[0].mxu0 %v7321
        %v7544 = vpop.f32.mrb[0].mxu0
        %v7545 = vadd.f32 %v3864, %v7544
        %v7546 = vpop.f32.mrb[0].mxu0
        %7547 = vdwg.mxu0
        %v7548 = vld [vmem:[%s24] sm:$0x7]
        %v7549 = vld [vmem:[%s25] sm:$0x7]
        %7551 = vset.pattern.permute.xlu0 0
        %7552 = vperm.xlu0 %7551, %v7549
        %v7553 = vpop.permute.xlu0 %7552
        %v7556 = vsel %vm3264, %v7548, 0
        %v7559 = vsel %vm3264, %v7390, 0
        %v7562 = vsel %vm3264, %v7395, 0
        %v7565 = vsel %vm3264, %v7400, 0
        %v7568 = vsel %vm3264, %v7405, 0
        %v7571 = vsel %vm3264, %v7410, 0
        %v7574 = vsel %vm3264, %v7415, 0
        %v7577 = vsel %vm3264, %v7420, 0
        %v7580 = vsel %vm3264, %v7425, 0
        %v7583 = vsel %vm3264, %v7430, 0
        %v7586 = vsel %vm3264, %v7435, 0
        %v7589 = vsel %vm3264, %v7440, 0
        %v7592 = vsel %vm3264, %v7445, 0
        %v7595 = vsel %vm3264, %v7450, 0
        %v7598 = vsel %vm3264, %v7455, 0
        %v7601 = vsel %vm3264, %v7460, 0
        %v7604 = vsel %vm3264, %v7465, 0
        %v7607 = vsel %vm3264, %v7470, 0
        %v7610 = vsel %vm3264, %v7475, 0
        %v7613 = vsel %vm3264, %v7480, 0
        %v7616 = vsel %vm3264, %v7485, 0
        %v7619 = vsel %vm3264, %v7490, 0
        %v7622 = vsel %vm3264, %v7495, 0
        %v7625 = vsel %vm3264, %v7500, 0
        %v7628 = vsel %vm3264, %v7505, 0
        %v7631 = vsel %vm3264, %v7510, 0
        %v7634 = vsel %vm3264, %v7515, 0
        %v7637 = vsel %vm3264, %v7520, 0
        %v7640 = vsel %vm3264, %v7525, 0
        %v7643 = vsel %vm3264, %v7530, 0
        %v7646 = vsel %vm3264, %v7535, 0
        %v7649 = vsel %vm3264, %v7540, 0
        %v7652 = vsel %vm3264, %v7545, 0
        %7654 = vmatprep.subr.mxu0 0.0
        %7655 = vmatpush1.xpose.msra.mxu0 %v7559
        %7656 = vmatprep.subr.mxu0 0.0
        %7657 = vmatpush1.xpose.msra.mxu0 %v7562
        %7658 = vmatprep.subr.mxu0 0.0
        %7659 = vmatpush1.xpose.msra.mxu0 %v7565
        %7660 = vmatprep.subr.mxu0 0.0
        %7661 = vmatpush1.xpose.msra.mxu0 %v7568
        %7662 = vmatprep.subr.mxu0 0.0
        %7663 = vmatpush1.xpose.msra.mxu0 %v7571
        %7664 = vmatprep.subr.mxu0 0.0
        %7665 = vmatpush1.xpose.msra.mxu0 %v7574
        %7666 = vmatprep.subr.mxu0 0.0
        %7667 = vmatpush1.xpose.msra.mxu0 %v7577
        %7668 = vmatprep.subr.mxu0 0.0
        %7669 = vmatpush1.xpose.msra.mxu0 %v7580
        %7670 = vmatprep.subr.mxu0 0.0
        %7671 = vmatpush1.xpose.msra.mxu0 %v7583
        %7672 = vmatprep.subr.mxu0 0.0
        %7673 = vmatpush1.xpose.msra.mxu0 %v7586
        %7674 = vmatprep.subr.mxu0 0.0
        %7675 = vmatpush1.xpose.msra.mxu0 %v7589
        %7676 = vmatprep.subr.mxu0 0.0
        %7677 = vmatpush1.xpose.msra.mxu0 %v7592
        %7678 = vmatprep.subr.mxu0 0.0
        %7679 = vmatpush1.xpose.msra.mxu0 %v7595
        %7680 = vmatprep.subr.mxu0 0.0
        %7681 = vmatpush1.xpose.msra.mxu0 %v7598
        %7682 = vmatprep.subr.mxu0 0.0
        %7683 = vmatpush1.xpose.msra.mxu0 %v7601
        %7684 = vmatprep.subr.mxu0 0.0
        %7685 = vmatpush1.xpose.msra.mxu0 %v7604
        %7686 = vmatprep.subr.mxu0 0.0
        %7687 = vmatpush1.xpose.msra.mxu0 %v7607
        %7688 = vmatprep.subr.mxu0 0.0
        %7689 = vmatpush1.xpose.msra.mxu0 %v7610
        %7690 = vmatprep.subr.mxu0 0.0
        %7691 = vmatpush1.xpose.msra.mxu0 %v7613
        %7692 = vmatprep.subr.mxu0 0.0
        %7693 = vmatpush1.xpose.msra.mxu0 %v7616
        %7694 = vmatprep.subr.mxu0 0.0
        %7695 = vmatpush1.xpose.msra.mxu0 %v7619
        %7696 = vmatprep.subr.mxu0 0.0
        %7697 = vmatpush1.xpose.msra.mxu0 %v7622
        %7698 = vmatprep.subr.mxu0 0.0
        %7699 = vmatpush1.xpose.msra.mxu0 %v7625
        %7700 = vmatprep.subr.mxu0 0.0
        %7701 = vmatpush1.xpose.msra.mxu0 %v7628
        %7702 = vmatprep.subr.mxu0 0.0
        %7703 = vmatpush1.xpose.msra.mxu0 %v7631
        %7704 = vmatprep.subr.mxu0 0.0
        %7705 = vmatpush1.xpose.msra.mxu0 %v7634
        %7706 = vmatprep.subr.mxu0 0.0
        %7707 = vmatpush1.xpose.msra.mxu0 %v7637
        %7708 = vmatprep.subr.mxu0 0.0
        %7709 = vmatpush1.xpose.msra.mxu0 %v7640
        %7710 = vmatprep.subr.mxu0 0.0
        %7711 = vmatpush1.xpose.msra.mxu0 %v7643
        %7712 = vmatprep.subr.mxu0 0.0
        %7713 = vmatpush1.xpose.msra.mxu0 %v7646
        %7714 = vmatprep.subr.mxu0 0.0
        %7715 = vmatpush1.xpose.msra.mxu0 %v7649
        %7716 = vmatprep.subr.mxu0 0.0
        %7717 = vmatpush1.xpose.msra.mxu0 %v7652
        %7718 = vmatprep.mubr.f32.mxu0 0.0
        %7719 = vmatmul.mubr.f32.gmra.mrb[0].mxu0 %v7556
        %v7720 = vpop.f32.mrb[0].mxu0
        %v7721 = vadd.f32 %v7553, %v7720
        %v7722 = vpop.f32.mrb[0].mxu0
        %v7723 = vadd.f32 %v7553, %v7722
        %7724 = vdwg.mxu0
        %v7725 = vxor.u32 %v7721, 2147483648
        %v7726 = vxor.u32 %v7723, 2147483648
        %v7727 = vmul.f32 %v7725, 1.442695
        %v7728 = vpow.pop %v7727
        %v7729 = vmul.f32 %v7726, 1.442695
        %v7730 = vpow.pop %v7729
        %v7731 = vadd.f32 %v7728, 1.0
        %v7732 = vadd.f32 %v7730, 1.0
        %v7733 = vrcp.pop %v7731
        %v7734 = vmul.f32 1.0, %v7733
        %v7735 = vrcp.pop %v7732
        %v7736 = vmul.f32 1.0, %v7735
        %v7739 = vcombine.low %v7734, %v7736
        %7741 = vst [vmem:[%s833] sm:$0x77] %v7739
        %p7742 = scmp.lt.s32.totalorder %s39, 1
        %s7743 = scalar_select %p7742, %s39, 1
        %s7744 = smul.addr %s7743, 2
        %s7745 = smul.addr %s7744, 4
        %s7746 = scalar_lea.vmem %s26, %s7745
        // Predicated region
        $region137: #{hrformer2d_forward.1} parent=123 // pred_check
          %p7747 = pneg %p608
        $region138: #{hrformer2d_forward.1} parent=123 // pred_check_branch
          %7749 = sbr.rel (%p7747) target = $region140
        $region139: #{hrformer2d_forward.1} parent=123 // pred_region
          _
        $region140: #{hrformer2d_forward.1} parent=123 // pred_fallthru
          _
      $region124: #{hrformer2d_forward.1} parent=5 // pred_fallthru
        _
      %p7750 = scmp.le.s32.totalorder 2, %s34
      // Predicated region
      $region141: #{hrformer2d_forward.1} parent=5 // pred_check
        %p7751 = pneg %p7750
      $region142: #{hrformer2d_forward.1} parent=5 // pred_check_branch
        %7753 = sbr.rel (%p7751) target = $region144
      $region143: #{hrformer2d_forward.1} parent=5 // pred_region
        %s7754 = ssub.s32 %s34, 2
        // Predicated region
        $region145: #{hrformer2d_forward.1} parent=143 // pred_check
          %p7755 = pneg %p614
        $region146: #{hrformer2d_forward.1} parent=143 // pred_check_branch
          %7757 = sbr.rel (%p7755) target = $region148
        $region147: #{hrformer2d_forward.1} parent=143 // pred_region
          %p7758 = scmp.lt.s32.totalorder %s40, 1
          %s7759 = scalar_select %p7758, %s40, 1
          %s7760 = smul.addr %s7759, 2
          %s7761 = smul.addr %s7760, 4
          %s7762 = scalar_lea.vmem %s26, %s7761
        $region148: #{hrformer2d_forward.1} parent=143 // pred_fallthru
          _
      $region144: #{hrformer2d_forward.1} parent=5 // pred_fallthru
        _
    $region6: #{hrformer2d_forward.1} parent=1 // loop_footer
      %s38 = sadd.s32 1, %s34
    $region7: #{hrformer2d_forward.1} parent=1 // loop_footer_branch
      %33 = sbr.rel target = $region3
    $region8: #{hrformer2d_forward.1} parent=1 // loop_exit
      _
    %7763 = vsyncpa [#allocation3], 1
    %s7764 = scalar_lea.sflag [#allocation3], 1
    %7765 = vsyncpa %s7764, 1
    %7766 = vsyncpa [#allocation5], 1

</llo_original>
